<compile_context>
chip_gen: v6e
topology: v6e:2x2x1
jax: 0.10.0
libtpu: 0.0.40
codegen_flags: <defaults>
</compile_context>

<pallas_src>
import jax
import jax.numpy as jnp
from jax import lax
from jax.experimental import pallas as pl
from jax.experimental.pallas import tpu as pltpu


def _default_vmem_limit():
    try:
        info = pltpu.get_tpu_info()
        cap = getattr(info, "vmem_capacity_bytes", None)
        if cap:
            # half of physical: 32 MiB on v7x (64 MiB phys), 64 MiB on v5e/v6e.
            return int(min(cap // 2, 96 * 1024 * 1024))
    except Exception:
        pass
    return 32 * 1024 * 1024


_VMEM_LIMIT = _default_vmem_limit()


# -----------------------------------------------------------------------------
# tiling helpers
# -----------------------------------------------------------------------------
def _round_up(x, m):
    return ((x + m - 1) // m) * m


def _choose_tile(dim, pref, align):
    """Largest tile <= pref, multiple of `align`, dividing `dim` (dim % align == 0)."""
    t = min(pref, dim)
    t -= t % align
    t = max(t, align)
    while dim % t:
        t -= align
    return t


def _plan_rows(M, pref=256):
    """Matmul row tiling: tm multiple of 16 (bf16 sublane packing); aim for
    >=2 M tiles when M is large enough so v7x can split across TensorCores."""
    if M < 16:
        return M, M, 1
    Mp = _round_up(M, 16)
    target = min(pref, Mp // 2) if Mp >= 64 else Mp
    tm = _choose_tile(Mp, target, 16)
    return tm, Mp, Mp // tm


def _plan_ew_rows(R, pref=1024):
    """Row tiling for lane-dense elementwise kernels."""
    if R <= pref:
        return R, R
    Rp = _round_up(R, 8)
    return _choose_tile(Rp, pref, 8), Rp


def _pad_rows(x2d, Rp):
    R = x2d.shape[0]
    if Rp == R:
        return x2d
    return jnp.pad(x2d, ((0, Rp - R), (0, 0)))


def _dense_rows(x2d):
    """(M, C) -> lane-dense (M*C/128, 128) view when the layout allows."""
    M, C = x2d.shape
    if C < 128 and 128 % C == 0 and (M * C) % 128 == 0:
        rep = 128 // C
        return x2d.reshape((M * C) // 128, 128), rep
    return x2d, 1


def _tile_chan(vec, C, rep):
    v = vec.reshape(1, C).astype(jnp.float32)
    if rep > 1:
        v = jnp.tile(v, (1, rep))
    return v


# -----------------------------------------------------------------------------
# matmul kernels (bf16 MXU inputs, f32 accumulation)
# -----------------------------------------------------------------------------
def _mm_kernel(a_ref, b_ref, o_ref, acc_ref):
    @pl.when(pl.program_id(2) == 0)
    def _init():
        acc_ref[...] = jnp.zeros_like(acc_ref)

    acc_ref[...] += jnp.dot(a_ref[...], b_ref[...],
                            preferred_element_type=jnp.float32)

    @pl.when(pl.program_id(2) == pl.num_programs(2) - 1)
    def _store():
        o_ref[...] = acc_ref[...].astype(o_ref.dtype)


def _mm_bias_kernel(a_ref, b_ref, bias_ref, o_ref, acc_ref):
    @pl.when(pl.program_id(2) == 0)
    def _init():
        acc_ref[...] = jnp.zeros_like(acc_ref)

    acc_ref[...] += jnp.dot(a_ref[...], b_ref[...],
                            preferred_element_type=jnp.float32)

    @pl.when(pl.program_id(2) == pl.num_programs(2) - 1)
    def _store():
        o_ref[...] = (acc_ref[...] + bias_ref[...]).astype(o_ref.dtype)


def _mm_stats_kernel(a_ref, b_ref, o_ref, sum_ref, sq_ref, acc_ref):
    """Tiled matmul with fused per-channel (column) sum / sum-of-squares.

    Each (i, j) tile writes its column sums into row 0 of its private 8-row
    stats block (rows 1..7 zero), so i/j stay 'parallel'; XLA reduces the tiny
    (n_tiles*8, N) partials afterwards.  Zero-padded A rows contribute zero."""
    @pl.when(pl.program_id(2) == 0)
    def _init():
        acc_ref[...] = jnp.zeros_like(acc_ref)

    acc_ref[...] += jnp.dot(a_ref[...], b_ref[...],
                            preferred_element_type=jnp.float32)

    @pl.when(pl.program_id(2) == pl.num_programs(2) - 1)
    def _store():
        y = acc_ref[...]
        o_ref[...] = y.astype(o_ref.dtype)
        row0 = lax.broadcasted_iota(jnp.int32, sum_ref.shape, 0) == 0
        cs = jnp.sum(y, axis=0, keepdims=True)
        cq = jnp.sum(y * y, axis=0, keepdims=True)
        sum_ref[...] = jnp.where(row0, cs, 0.0)
        sq_ref[...] = jnp.where(row0, cq, 0.0)


def pallas_matmul(a, b, bias=None, with_stats=False, out_dtype=jnp.bfloat16,
                  tm_pref=256, tn_pref=128, tk_pref=512):
    """a:(M,K) @ b:(K,N) (+bias) with optional fused per-column sum/sumsq."""
    M, K = a.shape
    K2, N = b.shape
    assert K == K2
    a = a.astype(jnp.bfloat16)
    b = b.astype(jnp.bfloat16)

    # N: keep Cout unpadded when it fits a single lane tile (full-dim blocks
    # are legal); only pad when N > 128 and misaligned.
    Np = N
    if N > 128 and N % 128:
        Np = _round_up(N, 128)
        b = jnp.pad(b, ((0, 0), (0, Np - N)))
        if bias is not None:
            bias = jnp.pad(bias, ((0, 0), (0, Np - N)))
    tn = Np if Np <= 128 else _choose_tile(Np, tn_pref, 128)

    # K: single full tile, no zero padding (MXU pads internally); only tile
    # when K is genuinely large.
    Kp, tk = K, K
    if K > 2048:
        if K % 128:
            Kp = _round_up(K, 128)
            a = jnp.pad(a, ((0, 0), (0, Kp - K)))
            b = jnp.pad(b, ((0, Kp - K), (0, 0)))
        tk = _choose_tile(Kp, tk_pref, 128)

    tm, Mp, n_mt = _plan_rows(M, tm_pref)
    if Mp != M:
        a = jnp.pad(a, ((0, Mp - M), (0, 0)))

    grid = (Mp // tm, Np // tn, Kp // tk)
    a_spec = pl.BlockSpec((tm, tk), lambda i, j, k: (i, k))
    b_spec = pl.BlockSpec((tk, tn), lambda i, j, k: (k, j))
    o_spec = pl.BlockSpec((tm, tn), lambda i, j, k: (i, j))
    cparams = pltpu.CompilerParams(
        dimension_semantics=("parallel", "parallel", "arbitrary"),
        vmem_limit_bytes=_VMEM_LIMIT)
    scratch = [pltpu.VMEM((tm, tn), jnp.float32)]

    if with_stats:
        s_spec = pl.BlockSpec((8, tn), lambda i, j, k: (i, j))
        out, psum, psq = pl.pallas_call(
            _mm_stats_kernel,
            out_shape=(jax.ShapeDtypeStruct((Mp, Np), out_dtype),
                       jax.ShapeDtypeStruct((n_mt * 8, Np), jnp.float32),
                       jax.ShapeDtypeStruct((n_mt * 8, Np), jnp.float32)),
            grid=grid,
            in_specs=[a_spec, b_spec],
            out_specs=(o_spec, s_spec, s_spec),
            scratch_shapes=scratch,
            compiler_params=cparams,
        )(a, b)
        if Mp != M or Np != N:
            out = out[:M, :N]
        ssum = jnp.sum(psum[:, :N], axis=0)
        ssq = jnp.sum(psq[:, :N], axis=0)
        return out, ssum, ssq

    if bias is not None:
        bias_spec = pl.BlockSpec((1, tn), lambda i, j, k: (0, j))
        out = pl.pallas_call(
            _mm_bias_kernel,
            out_shape=jax.ShapeDtypeStruct((Mp, Np), out_dtype),
            grid=grid,
            in_specs=[a_spec, b_spec, bias_spec],
            out_specs=o_spec,
            scratch_shapes=scratch,
            compiler_params=cparams,
        )(a, b, bias.astype(jnp.float32))
    else:
        out = pl.pallas_call(
            _mm_kernel,
            out_shape=jax.ShapeDtypeStruct((Mp, Np), out_dtype),
            grid=grid,
            in_specs=[a_spec, b_spec],
            out_specs=o_spec,
            scratch_shapes=scratch,
            compiler_params=cparams,
        )(a, b)
    if Mp != M or Np != N:
        out = out[:M, :N]
    return out


# -----------------------------------------------------------------------------
# BatchNorm coefficients from fused stats (training-mode batch statistics)
# -----------------------------------------------------------------------------
def _bn_coeffs(ssum, ssq, count, gamma, beta, eps=1e-5):
    # TODO(synk): E[x^2]-E[x]^2 in f32 is cancellation-prone for extreme
    # activations; a shifted/Welford accumulation would be numerically safer.
    mean = ssum / count
    var = jnp.maximum(ssq / count - mean * mean, 0.0)
    scale = gamma * lax.rsqrt(var + eps)
    shift = beta - mean * scale
    return scale, shift


# -----------------------------------------------------------------------------
# lane-dense elementwise kernels
# -----------------------------------------------------------------------------
def _scale_shift_relu_kernel(x_ref, s_ref, b_ref, o_ref):
    y = x_ref[...].astype(jnp.float32) * s_ref[...] + b_ref[...]
    o_ref[...] = jnp.maximum(y, 0.0).astype(o_ref.dtype)


def _dual_scale_shift_add_relu_kernel(x_ref, s1_ref, b1_ref,
                                      r_ref, s2_ref, b2_ref, o_ref):
    y = (x_ref[...].astype(jnp.float32) * s1_ref[...] + b1_ref[...]
         + r_ref[...].astype(jnp.float32) * s2_ref[...] + b2_ref[...])
    o_ref[...] = jnp.maximum(y, 0.0).astype(o_ref.dtype)


def _max9_kernel(*refs):
    o_ref = refs[-1]
    m = refs[0][...]
    for r in refs[1:-1]:
        m = jnp.maximum(m, r[...])
    o_ref[...] = m


def _ew_call(kernel, row_arrays, chan_arrays, out_dtype):
    """Run an elementwise kernel over lane-dense row tiles."""
    R, L = row_arrays[0].shape
    rt, Rp = _plan_ew_rows(R)
    row_arrays = [_pad_rows(x, Rp) for x in row_arrays]
    row_spec = pl.BlockSpec((rt, L), lambda i: (i, 0))
    chan_spec = pl.BlockSpec((1, L), lambda i: (0, 0))
    in_specs, args = [], []
    # interleave: (row, chan, chan) or (row, chan, chan, row, chan, chan) / rows only
    if chan_arrays:
        per_row = len(chan_arrays) // len(row_arrays)
        ci = 0
        for x in row_arrays:
            in_specs.append(row_spec)
            args.append(x)
            for _ in range(per_row):
                in_specs.append(chan_spec)
                args.append(chan_arrays[ci])
                ci += 1
    else:
        in_specs = [row_spec] * len(row_arrays)
        args = row_arrays
    out = pl.pallas_call(
        kernel,
        out_shape=jax.ShapeDtypeStruct((Rp, L), out_dtype),
        grid=(Rp // rt,),
        in_specs=in_specs,
        out_specs=row_spec,
        compiler_params=pltpu.CompilerParams(
            dimension_semantics=("parallel",),
            vmem_limit_bytes=_VMEM_LIMIT),
    )(*args)
    if Rp != R:
        out = out[:R]
    return out


def bn_relu_apply(x_nhwc, scale, shift):
    """relu(scale*x + shift), lane-dense, bf16 out."""
    N, H, W, C = x_nhwc.shape
    M = N * H * W
    xd, rep = _dense_rows(x_nhwc.reshape(M, C))
    s = _tile_chan(scale, C, rep)
    b = _tile_chan(shift, C, rep)
    out = _ew_call(_scale_shift_relu_kernel, [xd], [s, b], jnp.bfloat16)
    return out.reshape(N, H, W, C)


def bn_add_relu(x_nhwc, scale1, shift1, res_nhwc, scale2, shift2):
    """relu(scale1*x + shift1 + scale2*res + shift2), lane-dense, bf16 out."""
    N, H, W, C = x_nhwc.shape
    M = N * H * W
    xd, rep = _dense_rows(x_nhwc.reshape(M, C))
    rd, _ = _dense_rows(res_nhwc.reshape(M, C))
    s1 = _tile_chan(scale1, C, rep)
    b1 = _tile_chan(shift1, C, rep)
    s2 = _tile_chan(scale2, C, rep)
    b2 = _tile_chan(shift2, C, rep)
    out = _ew_call(_dual_scale_shift_add_relu_kernel,
                   [xd, rd], [s1, b1, s2, b2], jnp.bfloat16)
    return out.reshape(N, H, W, C)


# -----------------------------------------------------------------------------
# Convolution: im2col (XLA glue, bf16) + stats-fused tiled matmul
# -----------------------------------------------------------------------------
def _im2col(x, kh, kw, stride, pad):
    """x: (N,H,W,C) -> (N*Ho*Wo, kh*kw*C) with (kh, kw, cin) ordering (bf16)."""
    # TODO(synk): patches are still materialized by XLA in HBM (bf16); a fully
    # fused variant would walk the (kh,kw) taps on the matmul reduction axis
    # with shifted-window index maps / manual DMA.
    x = x.astype(jnp.bfloat16)
    N, H, W, C = x.shape
    if pad:
        x = jnp.pad(x, ((0, 0), (pad, pad), (pad, pad), (0, 0)))
    Ho = (H + 2 * pad - kh) // stride + 1
    Wo = (W + 2 * pad - kw) // stride + 1
    cols = []
    for i in range(kh):
        for j in range(kw):
            sl = lax.slice(
                x,
                (0, i, j, 0),
                (N, i + (Ho - 1) * stride + 1, j + (Wo - 1) * stride + 1, C),
                (1, stride, stride, 1))
            cols.append(sl)
    patches = cols[0] if len(cols) == 1 else jnp.concatenate(cols, axis=-1)
    return patches.reshape(N * Ho * Wo, kh * kw * C), (N, Ho, Wo)


def conv2d_stats(x, conv, stride, pad):
    """Conv (no bias; BN follows) returning bf16 output + fused BN batch stats."""
    kh, kw = conv["kh"], conv["kw"]
    w2d = conv["w2d"]
    patches, (N, Ho, Wo) = _im2col(x, kh, kw, stride, pad)
    out2d, ssum, ssq = pallas_matmul(patches, w2d, with_stats=True,
                                     out_dtype=jnp.bfloat16)
    Cout = w2d.shape[1]
    return out2d.reshape(N, Ho, Wo, Cout), ssum, ssq


# -----------------------------------------------------------------------------
# MaxPool 3x3 / stride 2 / pad 1 (lane-dense 9-way max; input is post-ReLU so
# zero spatial padding is equivalent to -inf padding)
# -----------------------------------------------------------------------------
def maxpool_3x3_s2_p1(x):
    # TODO(synk): the 9 shifted taps are still materialized by XLA; an
    # in-kernel strided window walk would remove that remaining HBM traffic.
    N, H, W, C = x.shape
    xp = jnp.pad(x, ((0, 0), (1, 1), (1, 1), (0, 0)))
    Ho = (H - 1) // 2 + 1
    Wo = (W - 1) // 2 + 1
    M = N * Ho * Wo
    taps = []
    for i in range(3):
        for j in range(3):
            sl = lax.slice(
                xp,
                (0, i, j, 0),
                (N, i + (Ho - 1) * 2 + 1, j + (Wo - 1) * 2 + 1, C),
                (1, 2, 2, 1))
            taps.append(_dense_rows(sl.reshape(M, C))[0])
    out = _ew_call(_max9_kernel, taps, [], x.dtype)
    return out.reshape(N, Ho, Wo, C)


# -----------------------------------------------------------------------------
# ResNet model (BasicBlock, expansion = 1)
# -----------------------------------------------------------------------------
def _prep_conv(w_hwio):
    """One-time weight prep: HWIO -> (KH*KW*Cin, Cout) bf16."""
    KH, KW, Cin, Cout = w_hwio.shape
    return {"w2d": w_hwio.reshape(KH * KW * Cin, Cout).astype(jnp.bfloat16),
            "kh": KH, "kw": KW}


def init_resnet_params(key, n_blocks, n_cls, in_planes=16, in_dim=3):
    keys = iter(jax.random.split(key, 256))

    def winit(shape, scale=0.05):
        return scale * jax.random.normal(next(keys), shape, jnp.float32)

    params = {
        "pre": {
            "conv": _prep_conv(winit((7, 7, in_dim, in_planes))),
            "gamma": jnp.ones((in_planes,), jnp.float32),
            "beta": jnp.zeros((in_planes,), jnp.float32),
        }
    }
    layers = []
    cin = in_planes
    for li, nb in enumerate(n_blocks):
        planes = in_planes * (2 ** li)
        strides = [1 if li == 0 else 2] + [1] * (nb - 1)
        blocks = []
        for s in strides:
            blk = {
                "stride": s,
                "conv1": _prep_conv(winit((3, 3, cin, planes))),
                "bn1_g": jnp.ones((planes,), jnp.float32),
                "bn1_b": jnp.zeros((planes,), jnp.float32),
                "conv2": _prep_conv(winit((3, 3, planes, planes))),
                "bn2_g": jnp.ones((planes,), jnp.float32),
                "bn2_b": jnp.zeros((planes,), jnp.float32),
            }
            if s != 1 or cin != planes:
                blk["sc"] = _prep_conv(winit((1, 1, cin, planes)))
                blk["sc_g"] = jnp.ones((planes,), jnp.float32)
                blk["sc_b"] = jnp.zeros((planes,), jnp.float32)
            blocks.append(blk)
            cin = planes
        layers.append(blocks)
    params["layers"] = layers
    params["fc_w"] = winit((cin, n_cls)).astype(jnp.bfloat16)
    params["fc_b"] = jnp.zeros((1, n_cls), jnp.float32)
    return params


def basic_block(x, p):
    s = p["stride"]
    c1, s1, q1 = conv2d_stats(x, p["conv1"], stride=s, pad=1)
    N, H, W, C = c1.shape
    M = N * H * W
    sc1, sh1 = _bn_coeffs(s1, q1, M, p["bn1_g"], p["bn1_b"])
    h = bn_relu_apply(c1, sc1, sh1)

    c2, s2, q2 = conv2d_stats(h, p["conv2"], stride=1, pad=1)
    sc2, sh2 = _bn_coeffs(s2, q2, M, p["bn2_g"], p["bn2_b"])

    if "sc" in p:
        cs, ss, qs = conv2d_stats(x, p["sc"], stride=s, pad=0)
        scs, shs = _bn_coeffs(ss, qs, M, p["sc_g"], p["sc_b"])
        res = cs
    else:
        res = x
        scs = jnp.ones((C,), jnp.float32)
        shs = jnp.zeros((C,), jnp.float32)
    # fused: bn2-apply + shortcut-bn-apply + residual add + ReLU (one pass)
    return bn_add_relu(c2, sc2, sh2, res, scs, shs)


def resnet_forward(params, x_nchw, tgt=None):
    """Matches ResNet.forward(x, tgt) for a plain nn.Linear head (pre_conv='full')."""
    del tgt  # head is nn.Linear (not Cosine/TVMF) -> target unused
    # NOTE: stem sees bf16 pixels (deliberate precision trade for MXU inputs).
    x = jnp.transpose(x_nchw, (0, 2, 3, 1)).astype(jnp.bfloat16)  # NCHW -> NHWC

    p = params["pre"]
    c, ssum, ssq = conv2d_stats(x, p["conv"], stride=2, pad=3)
    N, H, W, C = c.shape
    sc, sh = _bn_coeffs(ssum, ssq, N * H * W, p["gamma"], p["beta"])
    out = bn_relu_apply(c, sc, sh)
    out = maxpool_3x3_s2_p1(out)

    for layer in params["layers"]:
        for blk in layer:
            out = basic_block(out, blk)

    # F.avg_pool2d(out, out.size(-1)) + flatten, folded into the fc matmul.
    N, H, W, C = out.shape
    if H * W == 1:
        feat = out.reshape(N, C)
        w = params["fc_w"]
    else:
        feat = out.reshape(N, H * W * C).astype(jnp.float32) / float(H * W)
        w = jnp.tile(params["fc_w"].astype(jnp.float32), (H * W, 1))
    logits = pallas_matmul(feat, w, bias=params["fc_b"], out_dtype=jnp.float32)
    return logits


# -----------------------------------------------------------------------------
if __name__ == "__main__":
    key = jax.random.PRNGKey(0)
    k_param, k_x = jax.random.split(key)

    # small ResNet-ish config: BasicBlock, n_blocks=[1,1,1,1], n_cls=10,
    # in_planes=16, in_dim=3, pre_conv='full'
    params = init_resnet_params(k_param, n_blocks=[1, 1, 1, 1], n_cls=10,
                                in_planes=16, in_dim=3)

    x = jax.random.normal(k_x, (2, 3, 32, 32), jnp.float32)  # NCHW like PyTorch

    fwd = jax.jit(lambda inp: resnet_forward(params, inp))
    logits = jax.block_until_ready(fwd(x))
    assert logits.shape == (2, 10)
    assert bool(jnp.all(jnp.isfinite(logits)))
    # TODO(synk): adv_prop / attacker branch and Cosine/TVMF heads are not
    # exercised by this config (plain nn.Linear head, adv_prop=False).
    print("KERNEL_OK")
</pallas_src>

<mosaic_0001>
module attributes {stable_mosaic.version = 11 : i64} {
  func.func @_scale_shift_relu_kernel(%arg0: i32, %arg1: memref<64x128xbf16, #tpu.memory_space<vmem>>, %arg2: memref<1x128xf32, #tpu.memory_space<vmem>>, %arg3: memref<1x128xf32, #tpu.memory_space<vmem>>, %arg4: memref<64x128xbf16, #tpu.memory_space<vmem>>) attributes {dimension_semantics = [#tpu.dimension_semantics<parallel>], iteration_bounds = array<i64: 1>, scalar_prefetch = 0 : i64, scratch_operands = 0 : i64, tpu.core_type = #tpu.core_type<tc>, window_params = [{transform_indices = @transform_0, window_bounds = array<i64: 64, 128>}, {pipeline_mode = #tpu.pipeline_mode<synchronous>, transform_indices = @transform_1, window_bounds = array<i64: 1, 128>}, {pipeline_mode = #tpu.pipeline_mode<synchronous>, transform_indices = @transform_2, window_bounds = array<i64: 1, 128>}, {transform_indices = @transform_3, window_bounds = array<i64: 64, 128>}]} {
    %c0 = arith.constant 0 : index
    %c0_0 = arith.constant 0 : index
    %0 = vector.load %arg1[%c0, %c0_0] : memref<64x128xbf16, #tpu.memory_space<vmem>>, vector<64x128xbf16>
    %1 = arith.extf %0 : vector<64x128xbf16> to vector<64x128xf32>
    %c0_1 = arith.constant 0 : index
    %c0_2 = arith.constant 0 : index
    %2 = vector.load %arg2[%c0_1, %c0_2] : memref<1x128xf32, #tpu.memory_space<vmem>>, vector<1x128xf32>
    %3 = vector.broadcast %2 : vector<1x128xf32> to vector<64x128xf32>
    %4 = arith.mulf %1, %3 : vector<64x128xf32>
    %c0_3 = arith.constant 0 : index
    %c0_4 = arith.constant 0 : index
    %5 = vector.load %arg3[%c0_3, %c0_4] : memref<1x128xf32, #tpu.memory_space<vmem>>, vector<1x128xf32>
    %6 = vector.broadcast %5 : vector<1x128xf32> to vector<64x128xf32>
    %7 = arith.addf %4, %6 : vector<64x128xf32>
    %cst = arith.constant 0.000000e+00 : f32
    %8 = vector.broadcast %cst : f32 to vector<64x128xf32>
    %9 = arith.maximumf %7, %8 : vector<64x128xf32>
    %10 = arith.truncf %9 : vector<64x128xf32> to vector<64x128xbf16>
    %c0_5 = arith.constant 0 : index
    %c0_6 = arith.constant 0 : index
    %11 = vector.load %arg4[%c0_5, %c0_6] : memref<64x128xbf16, #tpu.memory_space<vmem>>, vector<64x128xbf16>
    tpu.vector_store %arg4[%c0_5, %c0_6], %10 {strides = array<i32>} : memref<64x128xbf16, #tpu.memory_space<vmem>>, vector<64x128xbf16>,
    return
  }
  func.func @transform_0(%arg0: i32) -> (i32, i32) {
    %c0_i32 = arith.constant 0 : i32
    %c0_i32_0 = arith.constant 0 : i32
    return %arg0, %c0_i32 : i32, i32
  }
  func.func @transform_1(%arg0: i32) -> (i32, i32) {
    %c0_i32 = arith.constant 0 : i32
    %c0_i32_0 = arith.constant 0 : i32
    %c0_i32_1 = arith.constant 0 : i32
    return %c0_i32, %c0_i32_0 : i32, i32
  }
  func.func @transform_2(%arg0: i32) -> (i32, i32) {
    %c0_i32 = arith.constant 0 : i32
    %c0_i32_0 = arith.constant 0 : i32
    %c0_i32_1 = arith.constant 0 : i32
    return %c0_i32, %c0_i32_0 : i32, i32
  }
  func.func @transform_3(%arg0: i32) -> (i32, i32) {
    %c0_i32 = arith.constant 0 : i32
    %c0_i32_0 = arith.constant 0 : i32
    return %arg0, %c0_i32 : i32, i32
  }
}

module attributes {stable_mosaic.version = 11 : i64} {
  func.func @_mm_stats_kernel(%arg0: i32, %arg1: i32, %arg2: i32, %arg3: memref<256x147xbf16, #tpu.memory_space<vmem>>, %arg4: memref<147x16xbf16, #tpu.memory_space<vmem>>, %arg5: memref<256x16xbf16, #tpu.memory_space<vmem>>, %arg6: memref<8x16xf32, #tpu.memory_space<vmem>>, %arg7: memref<8x16xf32, #tpu.memory_space<vmem>>, %arg8: memref<256x16xf32, #tpu.memory_space<vmem>>) attributes {dimension_semantics = [#tpu.dimension_semantics<parallel>, #tpu.dimension_semantics<parallel>, #tpu.dimension_semantics<arbitrary>], iteration_bounds = array<i64: 2, 1, 1>, scalar_prefetch = 0 : i64, scratch_operands = 1 : i64, tpu.core_type = #tpu.core_type<tc>, window_params = [{transform_indices = @transform_0, window_bounds = array<i64: 256, 147>}, {transform_indices = @transform_1, window_bounds = array<i64: 147, 16>}, {transform_indices = @transform_2, window_bounds = array<i64: 256, 16>}, {transform_indices = @transform_3, window_bounds = array<i64: 8, 16>}, {transform_indices = @transform_4, window_bounds = array<i64: 8, 16>}]} {
    %c0_i32 = arith.constant 0 : i32
    %0 = arith.cmpi eq, %arg2, %c0_i32 : i32
    %1 = arith.extui %0 : i1 to i32
    %c0_i32_0 = arith.constant 0 : i32
    %2 = arith.cmpi ne, %1, %c0_i32_0 : i32
    scf.if %2 {
      %cst_10 = arith.constant 0.000000e+00 : f32
      %12 = vector.broadcast %cst_10 : f32 to vector<256x16xf32>
      %c0_11 = arith.constant 0 : index
      %c0_12 = arith.constant 0 : index
      %13 = vector.load %arg8[%c0_11, %c0_12] : memref<256x16xf32, #tpu.memory_space<vmem>>, vector<256x16xf32>
      tpu.vector_store %arg8[%c0_11, %c0_12], %12 {strides = array<i32>} : memref<256x16xf32, #tpu.memory_space<vmem>>, vector<256x16xf32>,
    } else {
    }
    %c0 = arith.constant 0 : index
    %c0_1 = arith.constant 0 : index
    %3 = vector.load %arg8[%c0, %c0_1] : memref<256x16xf32, #tpu.memory_space<vmem>>, vector<256x16xf32>
    %c0_2 = arith.constant 0 : index
    %c0_3 = arith.constant 0 : index
    %4 = vector.load %arg3[%c0_2, %c0_3] : memref<256x147xbf16, #tpu.memory_space<vmem>>, vector<256x147xbf16>
    %c0_4 = arith.constant 0 : index
    %c0_5 = arith.constant 0 : index
    %5 = vector.load %arg4[%c0_4, %c0_5] : memref<147x16xbf16, #tpu.memory_space<vmem>>, vector<147x16xbf16>
    %cst = arith.constant dense<0.000000e+00> : vector<256x16xf32>
    %6 = tpu.matmul %4, %5, %cst {dimension_numbers = #tpu.dot_dimension_numbers<[1], [0], [0], [1], [0, 0, 1, 1], [], []>} : vector<256x147xbf16>, vector<147x16xbf16>, vector<256x16xf32> -> vector<256x16xf32>
    %7 = arith.addf %3, %6 : vector<256x16xf32>
    %c0_6 = arith.constant 0 : index
    %c0_7 = arith.constant 0 : index
    %8 = vector.load %arg8[%c0_6, %c0_7] : memref<256x16xf32, #tpu.memory_space<vmem>>, vector<256x16xf32>
    tpu.vector_store %arg8[%c0_6, %c0_7], %7 {strides = array<i32>} : memref<256x16xf32, #tpu.memory_space<vmem>>, vector<256x16xf32>,
    %c0_i32_8 = arith.constant 0 : i32
    %9 = arith.cmpi eq, %arg2, %c0_i32_8 : i32
    %10 = arith.extui %9 : i1 to i32
    %c0_i32_9 = arith.constant 0 : i32
    %11 = arith.cmpi ne, %10, %c0_i32_9 : i32
    scf.if %11 {
      %c0_10 = arith.constant 0 : index
      %c0_11 = arith.constant 0 : index
      %12 = vector.load %arg8[%c0_10, %c0_11] : memref<256x16xf32, #tpu.memory_space<vmem>>, vector<256x16xf32>
      %13 = arith.truncf %12 : vector<256x16xf32> to vector<256x16xbf16>
      %c0_12 = arith.constant 0 : index
      %c0_13 = arith.constant 0 : index
      %14 = vector.load %arg5[%c0_12, %c0_13] : memref<256x16xbf16, #tpu.memory_space<vmem>>, vector<256x16xbf16>
      tpu.vector_store %arg5[%c0_12, %c0_13], %13 {strides = array<i32>} : memref<256x16xbf16, #tpu.memory_space<vmem>>, vector<256x16xbf16>,
      %15 = tpu.iota {dimensions = array<i32: 0>} : vector<8x16xi32>
      %c0_i32_14 = arith.constant 0 : i32
      %16 = vector.broadcast %c0_i32_14 : i32 to vector<8x16xi32>
      %17 = arith.cmpi eq, %15, %16 : vector<8x16xi32>
      %cst_15 = arith.constant dense<0.000000e+00> : vector<16xf32>
      %18 = vector.multi_reduction <add>, %12, %cst_15 [0] : vector<256x16xf32> to vector<16xf32>
      %19 = vector.shape_cast %18 : vector<16xf32> to vector<1x16xf32>
      %20 = arith.mulf %12, %12 : vector<256x16xf32>
      %cst_16 = arith.constant dense<0.000000e+00> : vector<16xf32>
      %21 = vector.multi_reduction <add>, %20, %cst_16 [0] : vector<256x16xf32> to vector<16xf32>
      %22 = vector.shape_cast %21 : vector<16xf32> to vector<1x16xf32>
      %cst_17 = arith.constant 0.000000e+00 : f32
      %23 = vector.shape_cast %19 : vector<1x16xf32> to vector<1x16xf32>
      %24 = vector.broadcast %23 : vector<1x16xf32> to vector<8x16xf32>
      %25 = vector.broadcast %cst_17 : f32 to vector<8x16xf32>
      %26 = arith.select %17, %24, %25 : vector<8x16xi1>, vector<8x16xf32>
      %c0_18 = arith.constant 0 : index
      %c0_19 = arith.constant 0 : index
      %27 = vector.load %arg6[%c0_18, %c0_19] : memref<8x16xf32, #tpu.memory_space<vmem>>, vector<8x16xf32>
      tpu.vector_store %arg6[%c0_18, %c0_19], %26 {strides = array<i32>} : memref<8x16xf32, #tpu.memory_space<vmem>>, vector<8x16xf32>,
      %cst_20 = arith.constant 0.000000e+00 : f32
      %28 = vector.shape_cast %22 : vector<1x16xf32> to vector<1x16xf32>
      %29 = vector.broadcast %28 : vector<1x16xf32> to vector<8x16xf32>
      %30 = vector.broadcast %cst_20 : f32 to vector<8x16xf32>
      %31 = arith.select %17, %29, %30 : vector<8x16xi1>, vector<8x16xf32>
      %c0_21 = arith.constant 0 : index
      %c0_22 = arith.constant 0 : index
      %32 = vector.load %arg7[%c0_21, %c0_22] : memref<8x16xf32, #tpu.memory_space<vmem>>, vector<8x16xf32>
      tpu.vector_store %arg7[%c0_21, %c0_22], %31 {strides = array<i32>} : memref<8x16xf32, #tpu.memory_space<vmem>>, vector<8x16xf32>,
    } else {
    }
    return
  }
  func.func @transform_0(%arg0: i32, %arg1: i32, %arg2: i32) -> (i32, i32) {
    %c0_i32 = arith.constant 0 : i32
    return %arg0, %arg2 : i32, i32
  }
  func.func @transform_1(%arg0: i32, %arg1: i32, %arg2: i32) -> (i32, i32) {
    %c0_i32 = arith.constant 0 : i32
    return %arg2, %arg1 : i32, i32
  }
  func.func @transform_2(%arg0: i32, %arg1: i32, %arg2: i32) -> (i32, i32) {
    %c0_i32 = arith.constant 0 : i32
    return %arg0, %arg1 : i32, i32
  }
  func.func @transform_3(%arg0: i32, %arg1: i32, %arg2: i32) -> (i32, i32) {
    %c0_i32 = arith.constant 0 : i32
    return %arg0, %arg1 : i32, i32
  }
  func.func @transform_4(%arg0: i32, %arg1: i32, %arg2: i32) -> (i32, i32) {
    %c0_i32 = arith.constant 0 : i32
    return %arg0, %arg1 : i32, i32
  }
}

module attributes {stable_mosaic.version = 11 : i64} {
  func.func @_max9_kernel(%arg0: i32, %arg1: memref<16x128xbf16, #tpu.memory_space<vmem>>, %arg2: memref<16x128xbf16, #tpu.memory_space<vmem>>, %arg3: memref<16x128xbf16, #tpu.memory_space<vmem>>, %arg4: memref<16x128xbf16, #tpu.memory_space<vmem>>, %arg5: memref<16x128xbf16, #tpu.memory_space<vmem>>, %arg6: memref<16x128xbf16, #tpu.memory_space<vmem>>, %arg7: memref<16x128xbf16, #tpu.memory_space<vmem>>, %arg8: memref<16x128xbf16, #tpu.memory_space<vmem>>, %arg9: memref<16x128xbf16, #tpu.memory_space<vmem>>, %arg10: memref<16x128xbf16, #tpu.memory_space<vmem>>) attributes {dimension_semantics = [#tpu.dimension_semantics<parallel>], iteration_bounds = array<i64: 1>, scalar_prefetch = 0 : i64, scratch_operands = 0 : i64, tpu.core_type = #tpu.core_type<tc>, window_params = [{transform_indices = @transform_0, window_bounds = array<i64: 16, 128>}, {transform_indices = @transform_1, window_bounds = array<i64: 16, 128>}, {transform_indices = @transform_2, window_bounds = array<i64: 16, 128>}, {transform_indices = @transform_3, window_bounds = array<i64: 16, 128>}, {transform_indices = @transform_4, window_bounds = array<i64: 16, 128>}, {transform_indices = @transform_5, window_bounds = array<i64: 16, 128>}, {transform_indices = @transform_6, window_bounds = array<i64: 16, 128>}, {transform_indices = @transform_7, window_bounds = array<i64: 16, 128>}, {transform_indices = @transform_8, window_bounds = array<i64: 16, 128>}, {transform_indices = @transform_9, window_bounds = array<i64: 16, 128>}]} {
    %c0 = arith.constant 0 : index
    %c0_0 = arith.constant 0 : index
    %0 = vector.load %arg1[%c0, %c0_0] : memref<16x128xbf16, #tpu.memory_space<vmem>>, vector<16x128xbf16>
    %c0_1 = arith.constant 0 : index
    %c0_2 = arith.constant 0 : index
    %1 = vector.load %arg2[%c0_1, %c0_2] : memref<16x128xbf16, #tpu.memory_space<vmem>>, vector<16x128xbf16>
    %2 = arith.maximumf %0, %1 : vector<16x128xbf16>
    %c0_3 = arith.constant 0 : index
    %c0_4 = arith.constant 0 : index
    %3 = vector.load %arg3[%c0_3, %c0_4] : memref<16x128xbf16, #tpu.memory_space<vmem>>, vector<16x128xbf16>
    %4 = arith.maximumf %2, %3 : vector<16x128xbf16>
    %c0_5 = arith.constant 0 : index
    %c0_6 = arith.constant 0 : index
    %5 = vector.load %arg4[%c0_5, %c0_6] : memref<16x128xbf16, #tpu.memory_space<vmem>>, vector<16x128xbf16>
    %6 = arith.maximumf %4, %5 : vector<16x128xbf16>
    %c0_7 = arith.constant 0 : index
    %c0_8 = arith.constant 0 : index
    %7 = vector.load %arg5[%c0_7, %c0_8] : memref<16x128xbf16, #tpu.memory_space<vmem>>, vector<16x128xbf16>
    %8 = arith.maximumf %6, %7 : vector<16x128xbf16>
    %c0_9 = arith.constant 0 : index
    %c0_10 = arith.constant 0 : index
    %9 = vector.load %arg6[%c0_9, %c0_10] : memref<16x128xbf16, #tpu.memory_space<vmem>>, vector<16x128xbf16>
    %10 = arith.maximumf %8, %9 : vector<16x128xbf16>
    %c0_11 = arith.constant 0 : index
    %c0_12 = arith.constant 0 : index
    %11 = vector.load %arg7[%c0_11, %c0_12] : memref<16x128xbf16, #tpu.memory_space<vmem>>, vector<16x128xbf16>
    %12 = arith.maximumf %10, %11 : vector<16x128xbf16>
    %c0_13 = arith.constant 0 : index
    %c0_14 = arith.constant 0 : index
    %13 = vector.load %arg8[%c0_13, %c0_14] : memref<16x128xbf16, #tpu.memory_space<vmem>>, vector<16x128xbf16>
    %14 = arith.maximumf %12, %13 : vector<16x128xbf16>
    %c0_15 = arith.constant 0 : index
    %c0_16 = arith.constant 0 : index
    %15 = vector.load %arg9[%c0_15, %c0_16] : memref<16x128xbf16, #tpu.memory_space<vmem>>, vector<16x128xbf16>
    %16 = arith.maximumf %14, %15 : vector<16x128xbf16>
    %c0_17 = arith.constant 0 : index
    %c0_18 = arith.constant 0 : index
    %17 = vector.load %arg10[%c0_17, %c0_18] : memref<16x128xbf16, #tpu.memory_space<vmem>>, vector<16x128xbf16>
    tpu.vector_store %arg10[%c0_17, %c0_18], %16 {strides = array<i32>} : memref<16x128xbf16, #tpu.memory_space<vmem>>, vector<16x128xbf16>,
    return
  }
  func.func @transform_0(%arg0: i32) -> (i32, i32) {
    %c0_i32 = arith.constant 0 : i32
    %c0_i32_0 = arith.constant 0 : i32
    return %arg0, %c0_i32 : i32, i32
  }
  func.func @transform_1(%arg0: i32) -> (i32, i32) {
    %c0_i32 = arith.constant 0 : i32
    %c0_i32_0 = arith.constant 0 : i32
    return %arg0, %c0_i32 : i32, i32
  }
  func.func @transform_2(%arg0: i32) -> (i32, i32) {
    %c0_i32 = arith.constant 0 : i32
    %c0_i32_0 = arith.constant 0 : i32
    return %arg0, %c0_i32 : i32, i32
  }
  func.func @transform_3(%arg0: i32) -> (i32, i32) {
    %c0_i32 = arith.constant 0 : i32
    %c0_i32_0 = arith.constant 0 : i32
    return %arg0, %c0_i32 : i32, i32
  }
  func.func @transform_4(%arg0: i32) -> (i32, i32) {
    %c0_i32 = arith.constant 0 : i32
    %c0_i32_0 = arith.constant 0 : i32
    return %arg0, %c0_i32 : i32, i32
  }
  func.func @transform_5(%arg0: i32) -> (i32, i32) {
    %c0_i32 = arith.constant 0 : i32
    %c0_i32_0 = arith.constant 0 : i32
    return %arg0, %c0_i32 : i32, i32
  }
  func.func @transform_6(%arg0: i32) -> (i32, i32) {
    %c0_i32 = arith.constant 0 : i32
    %c0_i32_0 = arith.constant 0 : i32
    return %arg0, %c0_i32 : i32, i32
  }
  func.func @transform_7(%arg0: i32) -> (i32, i32) {
    %c0_i32 = arith.constant 0 : i32
    %c0_i32_0 = arith.constant 0 : i32
    return %arg0, %c0_i32 : i32, i32
  }
  func.func @transform_8(%arg0: i32) -> (i32, i32) {
    %c0_i32 = arith.constant 0 : i32
    %c0_i32_0 = arith.constant 0 : i32
    return %arg0, %c0_i32 : i32, i32
  }
  func.func @transform_9(%arg0: i32) -> (i32, i32) {
    %c0_i32 = arith.constant 0 : i32
    %c0_i32_0 = arith.constant 0 : i32
    return %arg0, %c0_i32 : i32, i32
  }
}

module attributes {stable_mosaic.version = 11 : i64} {
  func.func @_mm_stats_kernel(%arg0: i32, %arg1: i32, %arg2: i32, %arg3: memref<64x144xbf16, #tpu.memory_space<vmem>>, %arg4: memref<144x16xbf16, #tpu.memory_space<vmem>>, %arg5: memref<64x16xbf16, #tpu.memory_space<vmem>>, %arg6: memref<8x16xf32, #tpu.memory_space<vmem>>, %arg7: memref<8x16xf32, #tpu.memory_space<vmem>>, %arg8: memref<64x16xf32, #tpu.memory_space<vmem>>) attributes {dimension_semantics = [#tpu.dimension_semantics<parallel>, #tpu.dimension_semantics<parallel>, #tpu.dimension_semantics<arbitrary>], iteration_bounds = array<i64: 2, 1, 1>, scalar_prefetch = 0 : i64, scratch_operands = 1 : i64, tpu.core_type = #tpu.core_type<tc>, window_params = [{transform_indices = @transform_0, window_bounds = array<i64: 64, 144>}, {transform_indices = @transform_1, window_bounds = array<i64: 144, 16>}, {transform_indices = @transform_2, window_bounds = array<i64: 64, 16>}, {transform_indices = @transform_3, window_bounds = array<i64: 8, 16>}, {transform_indices = @transform_4, window_bounds = array<i64: 8, 16>}]} {
    %c0_i32 = arith.constant 0 : i32
    %0 = arith.cmpi eq, %arg2, %c0_i32 : i32
    %1 = arith.extui %0 : i1 to i32
    %c0_i32_0 = arith.constant 0 : i32
    %2 = arith.cmpi ne, %1, %c0_i32_0 : i32
    scf.if %2 {
      %cst_10 = arith.constant 0.000000e+00 : f32
      %12 = vector.broadcast %cst_10 : f32 to vector<64x16xf32>
      %c0_11 = arith.constant 0 : index
      %c0_12 = arith.constant 0 : index
      %13 = vector.load %arg8[%c0_11, %c0_12] : memref<64x16xf32, #tpu.memory_space<vmem>>, vector<64x16xf32>
      tpu.vector_store %arg8[%c0_11, %c0_12], %12 {strides = array<i32>} : memref<64x16xf32, #tpu.memory_space<vmem>>, vector<64x16xf32>,
    } else {
    }
    %c0 = arith.constant 0 : index
    %c0_1 = arith.constant 0 : index
    %3 = vector.load %arg8[%c0, %c0_1] : memref<64x16xf32, #tpu.memory_space<vmem>>, vector<64x16xf32>
    %c0_2 = arith.constant 0 : index
    %c0_3 = arith.constant 0 : index
    %4 = vector.load %arg3[%c0_2, %c0_3] : memref<64x144xbf16, #tpu.memory_space<vmem>>, vector<64x144xbf16>
    %c0_4 = arith.constant 0 : index
    %c0_5 = arith.constant 0 : index
    %5 = vector.load %arg4[%c0_4, %c0_5] : memref<144x16xbf16, #tpu.memory_space<vmem>>, vector<144x16xbf16>
    %cst = arith.constant dense<0.000000e+00> : vector<64x16xf32>
    %6 = tpu.matmul %4, %5, %cst {dimension_numbers = #tpu.dot_dimension_numbers<[1], [0], [0], [1], [0, 0, 1, 1], [], []>} : vector<64x144xbf16>, vector<144x16xbf16>, vector<64x16xf32> -> vector<64x16xf32>
    %7 = arith.addf %3, %6 : vector<64x16xf32>
    %c0_6 = arith.constant 0 : index
    %c0_7 = arith.constant 0 : index
    %8 = vector.load %arg8[%c0_6, %c0_7] : memref<64x16xf32, #tpu.memory_space<vmem>>, vector<64x16xf32>
    tpu.vector_store %arg8[%c0_6, %c0_7], %7 {strides = array<i32>} : memref<64x16xf32, #tpu.memory_space<vmem>>, vector<64x16xf32>,
    %c0_i32_8 = arith.constant 0 : i32
    %9 = arith.cmpi eq, %arg2, %c0_i32_8 : i32
    %10 = arith.extui %9 : i1 to i32
    %c0_i32_9 = arith.constant 0 : i32
    %11 = arith.cmpi ne, %10, %c0_i32_9 : i32
    scf.if %11 {
      %c0_10 = arith.constant 0 : index
      %c0_11 = arith.constant 0 : index
      %12 = vector.load %arg8[%c0_10, %c0_11] : memref<64x16xf32, #tpu.memory_space<vmem>>, vector<64x16xf32>
      %13 = arith.truncf %12 : vector<64x16xf32> to vector<64x16xbf16>
      %c0_12 = arith.constant 0 : index
      %c0_13 = arith.constant 0 : index
      %14 = vector.load %arg5[%c0_12, %c0_13] : memref<64x16xbf16, #tpu.memory_space<vmem>>, vector<64x16xbf16>
      tpu.vector_store %arg5[%c0_12, %c0_13], %13 {strides = array<i32>} : memref<64x16xbf16, #tpu.memory_space<vmem>>, vector<64x16xbf16>,
      %15 = tpu.iota {dimensions = array<i32: 0>} : vector<8x16xi32>
      %c0_i32_14 = arith.constant 0 : i32
      %16 = vector.broadcast %c0_i32_14 : i32 to vector<8x16xi32>
      %17 = arith.cmpi eq, %15, %16 : vector<8x16xi32>
      %cst_15 = arith.constant dense<0.000000e+00> : vector<16xf32>
      %18 = vector.multi_reduction <add>, %12, %cst_15 [0] : vector<64x16xf32> to vector<16xf32>
      %19 = vector.shape_cast %18 : vector<16xf32> to vector<1x16xf32>
      %20 = arith.mulf %12, %12 : vector<64x16xf32>
      %cst_16 = arith.constant dense<0.000000e+00> : vector<16xf32>
      %21 = vector.multi_reduction <add>, %20, %cst_16 [0] : vector<64x16xf32> to vector<16xf32>
      %22 = vector.shape_cast %21 : vector<16xf32> to vector<1x16xf32>
      %cst_17 = arith.constant 0.000000e+00 : f32
      %23 = vector.shape_cast %19 : vector<1x16xf32> to vector<1x16xf32>
      %24 = vector.broadcast %23 : vector<1x16xf32> to vector<8x16xf32>
      %25 = vector.broadcast %cst_17 : f32 to vector<8x16xf32>
      %26 = arith.select %17, %24, %25 : vector<8x16xi1>, vector<8x16xf32>
      %c0_18 = arith.constant 0 : index
      %c0_19 = arith.constant 0 : index
      %27 = vector.load %arg6[%c0_18, %c0_19] : memref<8x16xf32, #tpu.memory_space<vmem>>, vector<8x16xf32>
      tpu.vector_store %arg6[%c0_18, %c0_19], %26 {strides = array<i32>} : memref<8x16xf32, #tpu.memory_space<vmem>>, vector<8x16xf32>,
      %cst_20 = arith.constant 0.000000e+00 : f32
      %28 = vector.shape_cast %22 : vector<1x16xf32> to vector<1x16xf32>
      %29 = vector.broadcast %28 : vector<1x16xf32> to vector<8x16xf32>
      %30 = vector.broadcast %cst_20 : f32 to vector<8x16xf32>
      %31 = arith.select %17, %29, %30 : vector<8x16xi1>, vector<8x16xf32>
      %c0_21 = arith.constant 0 : index
      %c0_22 = arith.constant 0 : index
      %32 = vector.load %arg7[%c0_21, %c0_22] : memref<8x16xf32, #tpu.memory_space<vmem>>, vector<8x16xf32>
      tpu.vector_store %arg7[%c0_21, %c0_22], %31 {strides = array<i32>} : memref<8x16xf32, #tpu.memory_space<vmem>>, vector<8x16xf32>,
    } else {
    }
    return
  }
  func.func @transform_0(%arg0: i32, %arg1: i32, %arg2: i32) -> (i32, i32) {
    %c0_i32 = arith.constant 0 : i32
    return %arg0, %arg2 : i32, i32
  }
  func.func @transform_1(%arg0: i32, %arg1: i32, %arg2: i32) -> (i32, i32) {
    %c0_i32 = arith.constant 0 : i32
    return %arg2, %arg1 : i32, i32
  }
  func.func @transform_2(%arg0: i32, %arg1: i32, %arg2: i32) -> (i32, i32) {
    %c0_i32 = arith.constant 0 : i32
    return %arg0, %arg1 : i32, i32
  }
  func.func @transform_3(%arg0: i32, %arg1: i32, %arg2: i32) -> (i32, i32) {
    %c0_i32 = arith.constant 0 : i32
    return %arg0, %arg1 : i32, i32
  }
  func.func @transform_4(%arg0: i32, %arg1: i32, %arg2: i32) -> (i32, i32) {
    %c0_i32 = arith.constant 0 : i32
    return %arg0, %arg1 : i32, i32
  }
}

module attributes {stable_mosaic.version = 11 : i64} {
  func.func @_scale_shift_relu_kernel(%arg0: i32, %arg1: memref<16x128xbf16, #tpu.memory_space<vmem>>, %arg2: memref<1x128xf32, #tpu.memory_space<vmem>>, %arg3: memref<1x128xf32, #tpu.memory_space<vmem>>, %arg4: memref<16x128xbf16, #tpu.memory_space<vmem>>) attributes {dimension_semantics = [#tpu.dimension_semantics<parallel>], iteration_bounds = array<i64: 1>, scalar_prefetch = 0 : i64, scratch_operands = 0 : i64, tpu.core_type = #tpu.core_type<tc>, window_params = [{transform_indices = @transform_0, window_bounds = array<i64: 16, 128>}, {pipeline_mode = #tpu.pipeline_mode<synchronous>, transform_indices = @transform_1, window_bounds = array<i64: 1, 128>}, {pipeline_mode = #tpu.pipeline_mode<synchronous>, transform_indices = @transform_2, window_bounds = array<i64: 1, 128>}, {transform_indices = @transform_3, window_bounds = array<i64: 16, 128>}]} {
    %c0 = arith.constant 0 : index
    %c0_0 = arith.constant 0 : index
    %0 = vector.load %arg1[%c0, %c0_0] : memref<16x128xbf16, #tpu.memory_space<vmem>>, vector<16x128xbf16>
    %1 = arith.extf %0 : vector<16x128xbf16> to vector<16x128xf32>
    %c0_1 = arith.constant 0 : index
    %c0_2 = arith.constant 0 : index
    %2 = vector.load %arg2[%c0_1, %c0_2] : memref<1x128xf32, #tpu.memory_space<vmem>>, vector<1x128xf32>
    %3 = vector.broadcast %2 : vector<1x128xf32> to vector<16x128xf32>
    %4 = arith.mulf %1, %3 : vector<16x128xf32>
    %c0_3 = arith.constant 0 : index
    %c0_4 = arith.constant 0 : index
    %5 = vector.load %arg3[%c0_3, %c0_4] : memref<1x128xf32, #tpu.memory_space<vmem>>, vector<1x128xf32>
    %6 = vector.broadcast %5 : vector<1x128xf32> to vector<16x128xf32>
    %7 = arith.addf %4, %6 : vector<16x128xf32>
    %cst = arith.constant 0.000000e+00 : f32
    %8 = vector.broadcast %cst : f32 to vector<16x128xf32>
    %9 = arith.maximumf %7, %8 : vector<16x128xf32>
    %10 = arith.truncf %9 : vector<16x128xf32> to vector<16x128xbf16>
    %c0_5 = arith.constant 0 : index
    %c0_6 = arith.constant 0 : index
    %11 = vector.load %arg4[%c0_5, %c0_6] : memref<16x128xbf16, #tpu.memory_space<vmem>>, vector<16x128xbf16>
    tpu.vector_store %arg4[%c0_5, %c0_6], %10 {strides = array<i32>} : memref<16x128xbf16, #tpu.memory_space<vmem>>, vector<16x128xbf16>,
    return
  }
  func.func @transform_0(%arg0: i32) -> (i32, i32) {
    %c0_i32 = arith.constant 0 : i32
    %c0_i32_0 = arith.constant 0 : i32
    return %arg0, %c0_i32 : i32, i32
  }
  func.func @transform_1(%arg0: i32) -> (i32, i32) {
    %c0_i32 = arith.constant 0 : i32
    %c0_i32_0 = arith.constant 0 : i32
    %c0_i32_1 = arith.constant 0 : i32
    return %c0_i32, %c0_i32_0 : i32, i32
  }
  func.func @transform_2(%arg0: i32) -> (i32, i32) {
    %c0_i32 = arith.constant 0 : i32
    %c0_i32_0 = arith.constant 0 : i32
    %c0_i32_1 = arith.constant 0 : i32
    return %c0_i32, %c0_i32_0 : i32, i32
  }
  func.func @transform_3(%arg0: i32) -> (i32, i32) {
    %c0_i32 = arith.constant 0 : i32
    %c0_i32_0 = arith.constant 0 : i32
    return %arg0, %c0_i32 : i32, i32
  }
}

module attributes {stable_mosaic.version = 11 : i64} {
  func.func @_dual_scale_shift_add_relu_kernel(%arg0: i32, %arg1: memref<16x128xbf16, #tpu.memory_space<vmem>>, %arg2: memref<1x128xf32, #tpu.memory_space<vmem>>, %arg3: memref<1x128xf32, #tpu.memory_space<vmem>>, %arg4: memref<16x128xbf16, #tpu.memory_space<vmem>>, %arg5: memref<1x128xf32, #tpu.memory_space<vmem>>, %arg6: memref<1x128xf32, #tpu.memory_space<vmem>>, %arg7: memref<16x128xbf16, #tpu.memory_space<vmem>>) attributes {dimension_semantics = [#tpu.dimension_semantics<parallel>], iteration_bounds = array<i64: 1>, scalar_prefetch = 0 : i64, scratch_operands = 0 : i64, tpu.core_type = #tpu.core_type<tc>, window_params = [{transform_indices = @transform_0, window_bounds = array<i64: 16, 128>}, {pipeline_mode = #tpu.pipeline_mode<synchronous>, transform_indices = @transform_1, window_bounds = array<i64: 1, 128>}, {pipeline_mode = #tpu.pipeline_mode<synchronous>, transform_indices = @transform_2, window_bounds = array<i64: 1, 128>}, {transform_indices = @transform_3, window_bounds = array<i64: 16, 128>}, {pipeline_mode = #tpu.pipeline_mode<synchronous>, transform_indices = @transform_4, window_bounds = array<i64: 1, 128>}, {pipeline_mode = #tpu.pipeline_mode<synchronous>, transform_indices = @transform_5, window_bounds = array<i64: 1, 128>}, {transform_indices = @transform_6, window_bounds = array<i64: 16, 128>}]} {
    %c0 = arith.constant 0 : index
    %c0_0 = arith.constant 0 : index
    %0 = vector.load %arg1[%c0, %c0_0] : memref<16x128xbf16, #tpu.memory_space<vmem>>, vector<16x128xbf16>
    %1 = arith.extf %0 : vector<16x128xbf16> to vector<16x128xf32>
    %c0_1 = arith.constant 0 : index
    %c0_2 = arith.constant 0 : index
    %2 = vector.load %arg2[%c0_1, %c0_2] : memref<1x128xf32, #tpu.memory_space<vmem>>, vector<1x128xf32>
    %3 = vector.broadcast %2 : vector<1x128xf32> to vector<16x128xf32>
    %4 = arith.mulf %1, %3 : vector<16x128xf32>
    %c0_3 = arith.constant 0 : index
    %c0_4 = arith.constant 0 : index
    %5 = vector.load %arg3[%c0_3, %c0_4] : memref<1x128xf32, #tpu.memory_space<vmem>>, vector<1x128xf32>
    %6 = vector.broadcast %5 : vector<1x128xf32> to vector<16x128xf32>
    %7 = arith.addf %4, %6 : vector<16x128xf32>
    %c0_5 = arith.constant 0 : index
    %c0_6 = arith.constant 0 : index
    %8 = vector.load %arg4[%c0_5, %c0_6] : memref<16x128xbf16, #tpu.memory_space<vmem>>, vector<16x128xbf16>
    %9 = arith.extf %8 : vector<16x128xbf16> to vector<16x128xf32>
    %c0_7 = arith.constant 0 : index
    %c0_8 = arith.constant 0 : index
    %10 = vector.load %arg5[%c0_7, %c0_8] : memref<1x128xf32, #tpu.memory_space<vmem>>, vector<1x128xf32>
    %11 = vector.broadcast %10 : vector<1x128xf32> to vector<16x128xf32>
    %12 = arith.mulf %9, %11 : vector<16x128xf32>
    %13 = arith.addf %7, %12 : vector<16x128xf32>
    %c0_9 = arith.constant 0 : index
    %c0_10 = arith.constant 0 : index
    %14 = vector.load %arg6[%c0_9, %c0_10] : memref<1x128xf32, #tpu.memory_space<vmem>>, vector<1x128xf32>
    %15 = vector.broadcast %14 : vector<1x128xf32> to vector<16x128xf32>
    %16 = arith.addf %13, %15 : vector<16x128xf32>
    %cst = arith.constant 0.000000e+00 : f32
    %17 = vector.broadcast %cst : f32 to vector<16x128xf32>
    %18 = arith.maximumf %16, %17 : vector<16x128xf32>
    %19 = arith.truncf %18 : vector<16x128xf32> to vector<16x128xbf16>
    %c0_11 = arith.constant 0 : index
    %c0_12 = arith.constant 0 : index
    %20 = vector.load %arg7[%c0_11, %c0_12] : memref<16x128xbf16, #tpu.memory_space<vmem>>, vector<16x128xbf16>
    tpu.vector_store %arg7[%c0_11, %c0_12], %19 {strides = array<i32>} : memref<16x128xbf16, #tpu.memory_space<vmem>>, vector<16x128xbf16>,
    return
  }
  func.func @transform_0(%arg0: i32) -> (i32, i32) {
    %c0_i32 = arith.constant 0 : i32
    %c0_i32_0 = arith.constant 0 : i32
    return %arg0, %c0_i32 : i32, i32
  }
  func.func @transform_1(%arg0: i32) -> (i32, i32) {
    %c0_i32 = arith.constant 0 : i32
    %c0_i32_0 = arith.constant 0 : i32
    %c0_i32_1 = arith.constant 0 : i32
    return %c0_i32, %c0_i32_0 : i32, i32
  }
  func.func @transform_2(%arg0: i32) -> (i32, i32) {
    %c0_i32 = arith.constant 0 : i32
    %c0_i32_0 = arith.constant 0 : i32
    %c0_i32_1 = arith.constant 0 : i32
    return %c0_i32, %c0_i32_0 : i32, i32
  }
  func.func @transform_3(%arg0: i32) -> (i32, i32) {
    %c0_i32 = arith.constant 0 : i32
    %c0_i32_0 = arith.constant 0 : i32
    return %arg0, %c0_i32 : i32, i32
  }
  func.func @transform_4(%arg0: i32) -> (i32, i32) {
    %c0_i32 = arith.constant 0 : i32
    %c0_i32_0 = arith.constant 0 : i32
    %c0_i32_1 = arith.constant 0 : i32
    return %c0_i32, %c0_i32_0 : i32, i32
  }
  func.func @transform_5(%arg0: i32) -> (i32, i32) {
    %c0_i32 = arith.constant 0 : i32
    %c0_i32_0 = arith.constant 0 : i32
    %c0_i32_1 = arith.constant 0 : i32
    return %c0_i32, %c0_i32_0 : i32, i32
  }
  func.func @transform_6(%arg0: i32) -> (i32, i32) {
    %c0_i32 = arith.constant 0 : i32
    %c0_i32_0 = arith.constant 0 : i32
    return %arg0, %c0_i32 : i32, i32
  }
}

module attributes {stable_mosaic.version = 11 : i64} {
  func.func @_mm_stats_kernel(%arg0: i32, %arg1: i32, %arg2: i32, %arg3: memref<32x16xbf16, #tpu.memory_space<vmem>>, %arg4: memref<16x32xbf16, #tpu.memory_space<vmem>>, %arg5: memref<32x32xbf16, #tpu.memory_space<vmem>>, %arg6: memref<8x32xf32, #tpu.memory_space<vmem>>, %arg7: memref<8x32xf32, #tpu.memory_space<vmem>>, %arg8: memref<32x32xf32, #tpu.memory_space<vmem>>) attributes {dimension_semantics = [#tpu.dimension_semantics<parallel>, #tpu.dimension_semantics<parallel>, #tpu.dimension_semantics<arbitrary>], iteration_bounds = array<i64: 1, 1, 1>, scalar_prefetch = 0 : i64, scratch_operands = 1 : i64, tpu.core_type = #tpu.core_type<tc>, window_params = [{transform_indices = @transform_0, window_bounds = array<i64: 32, 16>}, {transform_indices = @transform_1, window_bounds = array<i64: 16, 32>}, {transform_indices = @transform_2, window_bounds = array<i64: 32, 32>}, {transform_indices = @transform_3, window_bounds = array<i64: 8, 32>}, {transform_indices = @transform_4, window_bounds = array<i64: 8, 32>}]} {
    %c0_i32 = arith.constant 0 : i32
    %0 = arith.cmpi eq, %arg2, %c0_i32 : i32
    %1 = arith.extui %0 : i1 to i32
    %c0_i32_0 = arith.constant 0 : i32
    %2 = arith.cmpi ne, %1, %c0_i32_0 : i32
    scf.if %2 {
      %cst_10 = arith.constant 0.000000e+00 : f32
      %12 = vector.broadcast %cst_10 : f32 to vector<32x32xf32>
      %c0_11 = arith.constant 0 : index
      %c0_12 = arith.constant 0 : index
      %13 = vector.load %arg8[%c0_11, %c0_12] : memref<32x32xf32, #tpu.memory_space<vmem>>, vector<32x32xf32>
      tpu.vector_store %arg8[%c0_11, %c0_12], %12 {strides = array<i32>} : memref<32x32xf32, #tpu.memory_space<vmem>>, vector<32x32xf32>,
    } else {
    }
    %c0 = arith.constant 0 : index
    %c0_1 = arith.constant 0 : index
    %3 = vector.load %arg8[%c0, %c0_1] : memref<32x32xf32, #tpu.memory_space<vmem>>, vector<32x32xf32>
    %c0_2 = arith.constant 0 : index
    %c0_3 = arith.constant 0 : index
    %4 = vector.load %arg3[%c0_2, %c0_3] : memref<32x16xbf16, #tpu.memory_space<vmem>>, vector<32x16xbf16>
    %c0_4 = arith.constant 0 : index
    %c0_5 = arith.constant 0 : index
    %5 = vector.load %arg4[%c0_4, %c0_5] : memref<16x32xbf16, #tpu.memory_space<vmem>>, vector<16x32xbf16>
    %cst = arith.constant dense<0.000000e+00> : vector<32x32xf32>
    %6 = tpu.matmul %4, %5, %cst {dimension_numbers = #tpu.dot_dimension_numbers<[1], [0], [0], [1], [0, 0, 1, 1], [], []>} : vector<32x16xbf16>, vector<16x32xbf16>, vector<32x32xf32> -> vector<32x32xf32>
    %7 = arith.addf %3, %6 : vector<32x32xf32>
    %c0_6 = arith.constant 0 : index
    %c0_7 = arith.constant 0 : index
    %8 = vector.load %arg8[%c0_6, %c0_7] : memref<32x32xf32, #tpu.memory_space<vmem>>, vector<32x32xf32>
    tpu.vector_store %arg8[%c0_6, %c0_7], %7 {strides = array<i32>} : memref<32x32xf32, #tpu.memory_space<vmem>>, vector<32x32xf32>,
    %c0_i32_8 = arith.constant 0 : i32
    %9 = arith.cmpi eq, %arg2, %c0_i32_8 : i32
    %10 = arith.extui %9 : i1 to i32
    %c0_i32_9 = arith.constant 0 : i32
    %11 = arith.cmpi ne, %10, %c0_i32_9 : i32
    scf.if %11 {
      %c0_10 = arith.constant 0 : index
      %c0_11 = arith.constant 0 : index
      %12 = vector.load %arg8[%c0_10, %c0_11] : memref<32x32xf32, #tpu.memory_space<vmem>>, vector<32x32xf32>
      %13 = arith.truncf %12 : vector<32x32xf32> to vector<32x32xbf16>
      %c0_12 = arith.constant 0 : index
      %c0_13 = arith.constant 0 : index
      %14 = vector.load %arg5[%c0_12, %c0_13] : memref<32x32xbf16, #tpu.memory_space<vmem>>, vector<32x32xbf16>
      tpu.vector_store %arg5[%c0_12, %c0_13], %13 {strides = array<i32>} : memref<32x32xbf16, #tpu.memory_space<vmem>>, vector<32x32xbf16>,
      %15 = tpu.iota {dimensions = array<i32: 0>} : vector<8x32xi32>
      %c0_i32_14 = arith.constant 0 : i32
      %16 = vector.broadcast %c0_i32_14 : i32 to vector<8x32xi32>
      %17 = arith.cmpi eq, %15, %16 : vector<8x32xi32>
      %cst_15 = arith.constant dense<0.000000e+00> : vector<32xf32>
      %18 = vector.multi_reduction <add>, %12, %cst_15 [0] : vector<32x32xf32> to vector<32xf32>
      %19 = vector.shape_cast %18 : vector<32xf32> to vector<1x32xf32>
      %20 = arith.mulf %12, %12 : vector<32x32xf32>
      %cst_16 = arith.constant dense<0.000000e+00> : vector<32xf32>
      %21 = vector.multi_reduction <add>, %20, %cst_16 [0] : vector<32x32xf32> to vector<32xf32>
      %22 = vector.shape_cast %21 : vector<32xf32> to vector<1x32xf32>
      %cst_17 = arith.constant 0.000000e+00 : f32
      %23 = vector.shape_cast %19 : vector<1x32xf32> to vector<1x32xf32>
      %24 = vector.broadcast %23 : vector<1x32xf32> to vector<8x32xf32>
      %25 = vector.broadcast %cst_17 : f32 to vector<8x32xf32>
      %26 = arith.select %17, %24, %25 : vector<8x32xi1>, vector<8x32xf32>
      %c0_18 = arith.constant 0 : index
      %c0_19 = arith.constant 0 : index
      %27 = vector.load %arg6[%c0_18, %c0_19] : memref<8x32xf32, #tpu.memory_space<vmem>>, vector<8x32xf32>
      tpu.vector_store %arg6[%c0_18, %c0_19], %26 {strides = array<i32>} : memref<8x32xf32, #tpu.memory_space<vmem>>, vector<8x32xf32>,
      %cst_20 = arith.constant 0.000000e+00 : f32
      %28 = vector.shape_cast %22 : vector<1x32xf32> to vector<1x32xf32>
      %29 = vector.broadcast %28 : vector<1x32xf32> to vector<8x32xf32>
      %30 = vector.broadcast %cst_20 : f32 to vector<8x32xf32>
      %31 = arith.select %17, %29, %30 : vector<8x32xi1>, vector<8x32xf32>
      %c0_21 = arith.constant 0 : index
      %c0_22 = arith.constant 0 : index
      %32 = vector.load %arg7[%c0_21, %c0_22] : memref<8x32xf32, #tpu.memory_space<vmem>>, vector<8x32xf32>
      tpu.vector_store %arg7[%c0_21, %c0_22], %31 {strides = array<i32>} : memref<8x32xf32, #tpu.memory_space<vmem>>, vector<8x32xf32>,
    } else {
    }
    return
  }
  func.func @transform_0(%arg0: i32, %arg1: i32, %arg2: i32) -> (i32, i32) {
    %c0_i32 = arith.constant 0 : i32
    return %arg0, %arg2 : i32, i32
  }
  func.func @transform_1(%arg0: i32, %arg1: i32, %arg2: i32) -> (i32, i32) {
    %c0_i32 = arith.constant 0 : i32
    return %arg2, %arg1 : i32, i32
  }
  func.func @transform_2(%arg0: i32, %arg1: i32, %arg2: i32) -> (i32, i32) {
    %c0_i32 = arith.constant 0 : i32
    return %arg0, %arg1 : i32, i32
  }
  func.func @transform_3(%arg0: i32, %arg1: i32, %arg2: i32) -> (i32, i32) {
    %c0_i32 = arith.constant 0 : i32
    return %arg0, %arg1 : i32, i32
  }
  func.func @transform_4(%arg0: i32, %arg1: i32, %arg2: i32) -> (i32, i32) {
    %c0_i32 = arith.constant 0 : i32
    return %arg0, %arg1 : i32, i32
  }
}

module attributes {stable_mosaic.version = 11 : i64} {
  func.func @_mm_stats_kernel(%arg0: i32, %arg1: i32, %arg2: i32, %arg3: memref<32x144xbf16, #tpu.memory_space<vmem>>, %arg4: memref<144x32xbf16, #tpu.memory_space<vmem>>, %arg5: memref<32x32xbf16, #tpu.memory_space<vmem>>, %arg6: memref<8x32xf32, #tpu.memory_space<vmem>>, %arg7: memref<8x32xf32, #tpu.memory_space<vmem>>, %arg8: memref<32x32xf32, #tpu.memory_space<vmem>>) attributes {dimension_semantics = [#tpu.dimension_semantics<parallel>, #tpu.dimension_semantics<parallel>, #tpu.dimension_semantics<arbitrary>], iteration_bounds = array<i64: 1, 1, 1>, scalar_prefetch = 0 : i64, scratch_operands = 1 : i64, tpu.core_type = #tpu.core_type<tc>, window_params = [{transform_indices = @transform_0, window_bounds = array<i64: 32, 144>}, {transform_indices = @transform_1, window_bounds = array<i64: 144, 32>}, {transform_indices = @transform_2, window_bounds = array<i64: 32, 32>}, {transform_indices = @transform_3, window_bounds = array<i64: 8, 32>}, {transform_indices = @transform_4, window_bounds = array<i64: 8, 32>}]} {
    %c0_i32 = arith.constant 0 : i32
    %0 = arith.cmpi eq, %arg2, %c0_i32 : i32
    %1 = arith.extui %0 : i1 to i32
    %c0_i32_0 = arith.constant 0 : i32
    %2 = arith.cmpi ne, %1, %c0_i32_0 : i32
    scf.if %2 {
      %cst_10 = arith.constant 0.000000e+00 : f32
      %12 = vector.broadcast %cst_10 : f32 to vector<32x32xf32>
      %c0_11 = arith.constant 0 : index
      %c0_12 = arith.constant 0 : index
      %13 = vector.load %arg8[%c0_11, %c0_12] : memref<32x32xf32, #tpu.memory_space<vmem>>, vector<32x32xf32>
      tpu.vector_store %arg8[%c0_11, %c0_12], %12 {strides = array<i32>} : memref<32x32xf32, #tpu.memory_space<vmem>>, vector<32x32xf32>,
    } else {
    }
    %c0 = arith.constant 0 : index
    %c0_1 = arith.constant 0 : index
    %3 = vector.load %arg8[%c0, %c0_1] : memref<32x32xf32, #tpu.memory_space<vmem>>, vector<32x32xf32>
    %c0_2 = arith.constant 0 : index
    %c0_3 = arith.constant 0 : index
    %4 = vector.load %arg3[%c0_2, %c0_3] : memref<32x144xbf16, #tpu.memory_space<vmem>>, vector<32x144xbf16>
    %c0_4 = arith.constant 0 : index
    %c0_5 = arith.constant 0 : index
    %5 = vector.load %arg4[%c0_4, %c0_5] : memref<144x32xbf16, #tpu.memory_space<vmem>>, vector<144x32xbf16>
    %cst = arith.constant dense<0.000000e+00> : vector<32x32xf32>
    %6 = tpu.matmul %4, %5, %cst {dimension_numbers = #tpu.dot_dimension_numbers<[1], [0], [0], [1], [0, 0, 1, 1], [], []>} : vector<32x144xbf16>, vector<144x32xbf16>, vector<32x32xf32> -> vector<32x32xf32>
    %7 = arith.addf %3, %6 : vector<32x32xf32>
    %c0_6 = arith.constant 0 : index
    %c0_7 = arith.constant 0 : index
    %8 = vector.load %arg8[%c0_6, %c0_7] : memref<32x32xf32, #tpu.memory_space<vmem>>, vector<32x32xf32>
    tpu.vector_store %arg8[%c0_6, %c0_7], %7 {strides = array<i32>} : memref<32x32xf32, #tpu.memory_space<vmem>>, vector<32x32xf32>,
    %c0_i32_8 = arith.constant 0 : i32
    %9 = arith.cmpi eq, %arg2, %c0_i32_8 : i32
    %10 = arith.extui %9 : i1 to i32
    %c0_i32_9 = arith.constant 0 : i32
    %11 = arith.cmpi ne, %10, %c0_i32_9 : i32
    scf.if %11 {
      %c0_10 = arith.constant 0 : index
      %c0_11 = arith.constant 0 : index
      %12 = vector.load %arg8[%c0_10, %c0_11] : memref<32x32xf32, #tpu.memory_space<vmem>>, vector<32x32xf32>
      %13 = arith.truncf %12 : vector<32x32xf32> to vector<32x32xbf16>
      %c0_12 = arith.constant 0 : index
      %c0_13 = arith.constant 0 : index
      %14 = vector.load %arg5[%c0_12, %c0_13] : memref<32x32xbf16, #tpu.memory_space<vmem>>, vector<32x32xbf16>
      tpu.vector_store %arg5[%c0_12, %c0_13], %13 {strides = array<i32>} : memref<32x32xbf16, #tpu.memory_space<vmem>>, vector<32x32xbf16>,
      %15 = tpu.iota {dimensions = array<i32: 0>} : vector<8x32xi32>
      %c0_i32_14 = arith.constant 0 : i32
      %16 = vector.broadcast %c0_i32_14 : i32 to vector<8x32xi32>
      %17 = arith.cmpi eq, %15, %16 : vector<8x32xi32>
      %cst_15 = arith.constant dense<0.000000e+00> : vector<32xf32>
      %18 = vector.multi_reduction <add>, %12, %cst_15 [0] : vector<32x32xf32> to vector<32xf32>
      %19 = vector.shape_cast %18 : vector<32xf32> to vector<1x32xf32>
      %20 = arith.mulf %12, %12 : vector<32x32xf32>
      %cst_16 = arith.constant dense<0.000000e+00> : vector<32xf32>
      %21 = vector.multi_reduction <add>, %20, %cst_16 [0] : vector<32x32xf32> to vector<32xf32>
      %22 = vector.shape_cast %21 : vector<32xf32> to vector<1x32xf32>
      %cst_17 = arith.constant 0.000000e+00 : f32
      %23 = vector.shape_cast %19 : vector<1x32xf32> to vector<1x32xf32>
      %24 = vector.broadcast %23 : vector<1x32xf32> to vector<8x32xf32>
      %25 = vector.broadcast %cst_17 : f32 to vector<8x32xf32>
      %26 = arith.select %17, %24, %25 : vector<8x32xi1>, vector<8x32xf32>
      %c0_18 = arith.constant 0 : index
      %c0_19 = arith.constant 0 : index
      %27 = vector.load %arg6[%c0_18, %c0_19] : memref<8x32xf32, #tpu.memory_space<vmem>>, vector<8x32xf32>
      tpu.vector_store %arg6[%c0_18, %c0_19], %26 {strides = array<i32>} : memref<8x32xf32, #tpu.memory_space<vmem>>, vector<8x32xf32>,
      %cst_20 = arith.constant 0.000000e+00 : f32
      %28 = vector.shape_cast %22 : vector<1x32xf32> to vector<1x32xf32>
      %29 = vector.broadcast %28 : vector<1x32xf32> to vector<8x32xf32>
      %30 = vector.broadcast %cst_20 : f32 to vector<8x32xf32>
      %31 = arith.select %17, %29, %30 : vector<8x32xi1>, vector<8x32xf32>
      %c0_21 = arith.constant 0 : index
      %c0_22 = arith.constant 0 : index
      %32 = vector.load %arg7[%c0_21, %c0_22] : memref<8x32xf32, #tpu.memory_space<vmem>>, vector<8x32xf32>
      tpu.vector_store %arg7[%c0_21, %c0_22], %31 {strides = array<i32>} : memref<8x32xf32, #tpu.memory_space<vmem>>, vector<8x32xf32>,
    } else {
    }
    return
  }
  func.func @transform_0(%arg0: i32, %arg1: i32, %arg2: i32) -> (i32, i32) {
    %c0_i32 = arith.constant 0 : i32
    return %arg0, %arg2 : i32, i32
  }
  func.func @transform_1(%arg0: i32, %arg1: i32, %arg2: i32) -> (i32, i32) {
    %c0_i32 = arith.constant 0 : i32
    return %arg2, %arg1 : i32, i32
  }
  func.func @transform_2(%arg0: i32, %arg1: i32, %arg2: i32) -> (i32, i32) {
    %c0_i32 = arith.constant 0 : i32
    return %arg0, %arg1 : i32, i32
  }
  func.func @transform_3(%arg0: i32, %arg1: i32, %arg2: i32) -> (i32, i32) {
    %c0_i32 = arith.constant 0 : i32
    return %arg0, %arg1 : i32, i32
  }
  func.func @transform_4(%arg0: i32, %arg1: i32, %arg2: i32) -> (i32, i32) {
    %c0_i32 = arith.constant 0 : i32
    return %arg0, %arg1 : i32, i32
  }
}

module attributes {stable_mosaic.version = 11 : i64} {
  func.func @_scale_shift_relu_kernel(%arg0: i32, %arg1: memref<8x128xbf16, #tpu.memory_space<vmem>>, %arg2: memref<1x128xf32, #tpu.memory_space<vmem>>, %arg3: memref<1x128xf32, #tpu.memory_space<vmem>>, %arg4: memref<8x128xbf16, #tpu.memory_space<vmem>>) attributes {dimension_semantics = [#tpu.dimension_semantics<parallel>], iteration_bounds = array<i64: 1>, scalar_prefetch = 0 : i64, scratch_operands = 0 : i64, tpu.core_type = #tpu.core_type<tc>, window_params = [{transform_indices = @transform_0, window_bounds = array<i64: 8, 128>}, {pipeline_mode = #tpu.pipeline_mode<synchronous>, transform_indices = @transform_1, window_bounds = array<i64: 1, 128>}, {pipeline_mode = #tpu.pipeline_mode<synchronous>, transform_indices = @transform_2, window_bounds = array<i64: 1, 128>}, {transform_indices = @transform_3, window_bounds = array<i64: 8, 128>}]} {
    %c0 = arith.constant 0 : index
    %c0_0 = arith.constant 0 : index
    %0 = vector.load %arg1[%c0, %c0_0] : memref<8x128xbf16, #tpu.memory_space<vmem>>, vector<8x128xbf16>
    %1 = arith.extf %0 : vector<8x128xbf16> to vector<8x128xf32>
    %c0_1 = arith.constant 0 : index
    %c0_2 = arith.constant 0 : index
    %2 = vector.load %arg2[%c0_1, %c0_2] : memref<1x128xf32, #tpu.memory_space<vmem>>, vector<1x128xf32>
    %3 = vector.broadcast %2 : vector<1x128xf32> to vector<8x128xf32>
    %4 = arith.mulf %1, %3 : vector<8x128xf32>
    %c0_3 = arith.constant 0 : index
    %c0_4 = arith.constant 0 : index
    %5 = vector.load %arg3[%c0_3, %c0_4] : memref<1x128xf32, #tpu.memory_space<vmem>>, vector<1x128xf32>
    %6 = vector.broadcast %5 : vector<1x128xf32> to vector<8x128xf32>
    %7 = arith.addf %4, %6 : vector<8x128xf32>
    %cst = arith.constant 0.000000e+00 : f32
    %8 = vector.broadcast %cst : f32 to vector<8x128xf32>
    %9 = arith.maximumf %7, %8 : vector<8x128xf32>
    %10 = arith.truncf %9 : vector<8x128xf32> to vector<8x128xbf16>
    %c0_5 = arith.constant 0 : index
    %c0_6 = arith.constant 0 : index
    %11 = vector.load %arg4[%c0_5, %c0_6] : memref<8x128xbf16, #tpu.memory_space<vmem>>, vector<8x128xbf16>
    tpu.vector_store %arg4[%c0_5, %c0_6], %10 {strides = array<i32>} : memref<8x128xbf16, #tpu.memory_space<vmem>>, vector<8x128xbf16>,
    return
  }
  func.func @transform_0(%arg0: i32) -> (i32, i32) {
    %c0_i32 = arith.constant 0 : i32
    %c0_i32_0 = arith.constant 0 : i32
    return %arg0, %c0_i32 : i32, i32
  }
  func.func @transform_1(%arg0: i32) -> (i32, i32) {
    %c0_i32 = arith.constant 0 : i32
    %c0_i32_0 = arith.constant 0 : i32
    %c0_i32_1 = arith.constant 0 : i32
    return %c0_i32, %c0_i32_0 : i32, i32
  }
  func.func @transform_2(%arg0: i32) -> (i32, i32) {
    %c0_i32 = arith.constant 0 : i32
    %c0_i32_0 = arith.constant 0 : i32
    %c0_i32_1 = arith.constant 0 : i32
    return %c0_i32, %c0_i32_0 : i32, i32
  }
  func.func @transform_3(%arg0: i32) -> (i32, i32) {
    %c0_i32 = arith.constant 0 : i32
    %c0_i32_0 = arith.constant 0 : i32
    return %arg0, %c0_i32 : i32, i32
  }
}

module attributes {stable_mosaic.version = 11 : i64} {
  func.func @_mm_stats_kernel(%arg0: i32, %arg1: i32, %arg2: i32, %arg3: memref<32x288xbf16, #tpu.memory_space<vmem>>, %arg4: memref<288x32xbf16, #tpu.memory_space<vmem>>, %arg5: memref<32x32xbf16, #tpu.memory_space<vmem>>, %arg6: memref<8x32xf32, #tpu.memory_space<vmem>>, %arg7: memref<8x32xf32, #tpu.memory_space<vmem>>, %arg8: memref<32x32xf32, #tpu.memory_space<vmem>>) attributes {dimension_semantics = [#tpu.dimension_semantics<parallel>, #tpu.dimension_semantics<parallel>, #tpu.dimension_semantics<arbitrary>], iteration_bounds = array<i64: 1, 1, 1>, scalar_prefetch = 0 : i64, scratch_operands = 1 : i64, tpu.core_type = #tpu.core_type<tc>, window_params = [{transform_indices = @transform_0, window_bounds = array<i64: 32, 288>}, {transform_indices = @transform_1, window_bounds = array<i64: 288, 32>}, {transform_indices = @transform_2, window_bounds = array<i64: 32, 32>}, {transform_indices = @transform_3, window_bounds = array<i64: 8, 32>}, {transform_indices = @transform_4, window_bounds = array<i64: 8, 32>}]} {
    %c0_i32 = arith.constant 0 : i32
    %0 = arith.cmpi eq, %arg2, %c0_i32 : i32
    %1 = arith.extui %0 : i1 to i32
    %c0_i32_0 = arith.constant 0 : i32
    %2 = arith.cmpi ne, %1, %c0_i32_0 : i32
    scf.if %2 {
      %cst_10 = arith.constant 0.000000e+00 : f32
      %12 = vector.broadcast %cst_10 : f32 to vector<32x32xf32>
      %c0_11 = arith.constant 0 : index
      %c0_12 = arith.constant 0 : index
      %13 = vector.load %arg8[%c0_11, %c0_12] : memref<32x32xf32, #tpu.memory_space<vmem>>, vector<32x32xf32>
      tpu.vector_store %arg8[%c0_11, %c0_12], %12 {strides = array<i32>} : memref<32x32xf32, #tpu.memory_space<vmem>>, vector<32x32xf32>,
    } else {
    }
    %c0 = arith.constant 0 : index
    %c0_1 = arith.constant 0 : index
    %3 = vector.load %arg8[%c0, %c0_1] : memref<32x32xf32, #tpu.memory_space<vmem>>, vector<32x32xf32>
    %c0_2 = arith.constant 0 : index
    %c0_3 = arith.constant 0 : index
    %4 = vector.load %arg3[%c0_2, %c0_3] : memref<32x288xbf16, #tpu.memory_space<vmem>>, vector<32x288xbf16>
    %c0_4 = arith.constant 0 : index
    %c0_5 = arith.constant 0 : index
    %5 = vector.load %arg4[%c0_4, %c0_5] : memref<288x32xbf16, #tpu.memory_space<vmem>>, vector<288x32xbf16>
    %cst = arith.constant dense<0.000000e+00> : vector<32x32xf32>
    %6 = tpu.matmul %4, %5, %cst {dimension_numbers = #tpu.dot_dimension_numbers<[1], [0], [0], [1], [0, 0, 1, 1], [], []>} : vector<32x288xbf16>, vector<288x32xbf16>, vector<32x32xf32> -> vector<32x32xf32>
    %7 = arith.addf %3, %6 : vector<32x32xf32>
    %c0_6 = arith.constant 0 : index
    %c0_7 = arith.constant 0 : index
    %8 = vector.load %arg8[%c0_6, %c0_7] : memref<32x32xf32, #tpu.memory_space<vmem>>, vector<32x32xf32>
    tpu.vector_store %arg8[%c0_6, %c0_7], %7 {strides = array<i32>} : memref<32x32xf32, #tpu.memory_space<vmem>>, vector<32x32xf32>,
    %c0_i32_8 = arith.constant 0 : i32
    %9 = arith.cmpi eq, %arg2, %c0_i32_8 : i32
    %10 = arith.extui %9 : i1 to i32
    %c0_i32_9 = arith.constant 0 : i32
    %11 = arith.cmpi ne, %10, %c0_i32_9 : i32
    scf.if %11 {
      %c0_10 = arith.constant 0 : index
      %c0_11 = arith.constant 0 : index
      %12 = vector.load %arg8[%c0_10, %c0_11] : memref<32x32xf32, #tpu.memory_space<vmem>>, vector<32x32xf32>
      %13 = arith.truncf %12 : vector<32x32xf32> to vector<32x32xbf16>
      %c0_12 = arith.constant 0 : index
      %c0_13 = arith.constant 0 : index
      %14 = vector.load %arg5[%c0_12, %c0_13] : memref<32x32xbf16, #tpu.memory_space<vmem>>, vector<32x32xbf16>
      tpu.vector_store %arg5[%c0_12, %c0_13], %13 {strides = array<i32>} : memref<32x32xbf16, #tpu.memory_space<vmem>>, vector<32x32xbf16>,
      %15 = tpu.iota {dimensions = array<i32: 0>} : vector<8x32xi32>
      %c0_i32_14 = arith.constant 0 : i32
      %16 = vector.broadcast %c0_i32_14 : i32 to vector<8x32xi32>
      %17 = arith.cmpi eq, %15, %16 : vector<8x32xi32>
      %cst_15 = arith.constant dense<0.000000e+00> : vector<32xf32>
      %18 = vector.multi_reduction <add>, %12, %cst_15 [0] : vector<32x32xf32> to vector<32xf32>
      %19 = vector.shape_cast %18 : vector<32xf32> to vector<1x32xf32>
      %20 = arith.mulf %12, %12 : vector<32x32xf32>
      %cst_16 = arith.constant dense<0.000000e+00> : vector<32xf32>
      %21 = vector.multi_reduction <add>, %20, %cst_16 [0] : vector<32x32xf32> to vector<32xf32>
      %22 = vector.shape_cast %21 : vector<32xf32> to vector<1x32xf32>
      %cst_17 = arith.constant 0.000000e+00 : f32
      %23 = vector.shape_cast %19 : vector<1x32xf32> to vector<1x32xf32>
      %24 = vector.broadcast %23 : vector<1x32xf32> to vector<8x32xf32>
      %25 = vector.broadcast %cst_17 : f32 to vector<8x32xf32>
      %26 = arith.select %17, %24, %25 : vector<8x32xi1>, vector<8x32xf32>
      %c0_18 = arith.constant 0 : index
      %c0_19 = arith.constant 0 : index
      %27 = vector.load %arg6[%c0_18, %c0_19] : memref<8x32xf32, #tpu.memory_space<vmem>>, vector<8x32xf32>
      tpu.vector_store %arg6[%c0_18, %c0_19], %26 {strides = array<i32>} : memref<8x32xf32, #tpu.memory_space<vmem>>, vector<8x32xf32>,
      %cst_20 = arith.constant 0.000000e+00 : f32
      %28 = vector.shape_cast %22 : vector<1x32xf32> to vector<1x32xf32>
      %29 = vector.broadcast %28 : vector<1x32xf32> to vector<8x32xf32>
      %30 = vector.broadcast %cst_20 : f32 to vector<8x32xf32>
      %31 = arith.select %17, %29, %30 : vector<8x32xi1>, vector<8x32xf32>
      %c0_21 = arith.constant 0 : index
      %c0_22 = arith.constant 0 : index
      %32 = vector.load %arg7[%c0_21, %c0_22] : memref<8x32xf32, #tpu.memory_space<vmem>>, vector<8x32xf32>
      tpu.vector_store %arg7[%c0_21, %c0_22], %31 {strides = array<i32>} : memref<8x32xf32, #tpu.memory_space<vmem>>, vector<8x32xf32>,
    } else {
    }
    return
  }
  func.func @transform_0(%arg0: i32, %arg1: i32, %arg2: i32) -> (i32, i32) {
    %c0_i32 = arith.constant 0 : i32
    return %arg0, %arg2 : i32, i32
  }
  func.func @transform_1(%arg0: i32, %arg1: i32, %arg2: i32) -> (i32, i32) {
    %c0_i32 = arith.constant 0 : i32
    return %arg2, %arg1 : i32, i32
  }
  func.func @transform_2(%arg0: i32, %arg1: i32, %arg2: i32) -> (i32, i32) {
    %c0_i32 = arith.constant 0 : i32
    return %arg0, %arg1 : i32, i32
  }
  func.func @transform_3(%arg0: i32, %arg1: i32, %arg2: i32) -> (i32, i32) {
    %c0_i32 = arith.constant 0 : i32
    return %arg0, %arg1 : i32, i32
  }
  func.func @transform_4(%arg0: i32, %arg1: i32, %arg2: i32) -> (i32, i32) {
    %c0_i32 = arith.constant 0 : i32
    return %arg0, %arg1 : i32, i32
  }
}

module attributes {stable_mosaic.version = 11 : i64} {
  func.func @_dual_scale_shift_add_relu_kernel(%arg0: i32, %arg1: memref<8x128xbf16, #tpu.memory_space<vmem>>, %arg2: memref<1x128xf32, #tpu.memory_space<vmem>>, %arg3: memref<1x128xf32, #tpu.memory_space<vmem>>, %arg4: memref<8x128xbf16, #tpu.memory_space<vmem>>, %arg5: memref<1x128xf32, #tpu.memory_space<vmem>>, %arg6: memref<1x128xf32, #tpu.memory_space<vmem>>, %arg7: memref<8x128xbf16, #tpu.memory_space<vmem>>) attributes {dimension_semantics = [#tpu.dimension_semantics<parallel>], iteration_bounds = array<i64: 1>, scalar_prefetch = 0 : i64, scratch_operands = 0 : i64, tpu.core_type = #tpu.core_type<tc>, window_params = [{transform_indices = @transform_0, window_bounds = array<i64: 8, 128>}, {pipeline_mode = #tpu.pipeline_mode<synchronous>, transform_indices = @transform_1, window_bounds = array<i64: 1, 128>}, {pipeline_mode = #tpu.pipeline_mode<synchronous>, transform_indices = @transform_2, window_bounds = array<i64: 1, 128>}, {transform_indices = @transform_3, window_bounds = array<i64: 8, 128>}, {pipeline_mode = #tpu.pipeline_mode<synchronous>, transform_indices = @transform_4, window_bounds = array<i64: 1, 128>}, {pipeline_mode = #tpu.pipeline_mode<synchronous>, transform_indices = @transform_5, window_bounds = array<i64: 1, 128>}, {transform_indices = @transform_6, window_bounds = array<i64: 8, 128>}]} {
    %c0 = arith.constant 0 : index
    %c0_0 = arith.constant 0 : index
    %0 = vector.load %arg1[%c0, %c0_0] : memref<8x128xbf16, #tpu.memory_space<vmem>>, vector<8x128xbf16>
    %1 = arith.extf %0 : vector<8x128xbf16> to vector<8x128xf32>
    %c0_1 = arith.constant 0 : index
    %c0_2 = arith.constant 0 : index
    %2 = vector.load %arg2[%c0_1, %c0_2] : memref<1x128xf32, #tpu.memory_space<vmem>>, vector<1x128xf32>
    %3 = vector.broadcast %2 : vector<1x128xf32> to vector<8x128xf32>
    %4 = arith.mulf %1, %3 : vector<8x128xf32>
    %c0_3 = arith.constant 0 : index
    %c0_4 = arith.constant 0 : index
    %5 = vector.load %arg3[%c0_3, %c0_4] : memref<1x128xf32, #tpu.memory_space<vmem>>, vector<1x128xf32>
    %6 = vector.broadcast %5 : vector<1x128xf32> to vector<8x128xf32>
    %7 = arith.addf %4, %6 : vector<8x128xf32>
    %c0_5 = arith.constant 0 : index
    %c0_6 = arith.constant 0 : index
    %8 = vector.load %arg4[%c0_5, %c0_6] : memref<8x128xbf16, #tpu.memory_space<vmem>>, vector<8x128xbf16>
    %9 = arith.extf %8 : vector<8x128xbf16> to vector<8x128xf32>
    %c0_7 = arith.constant 0 : index
    %c0_8 = arith.constant 0 : index
    %10 = vector.load %arg5[%c0_7, %c0_8] : memref<1x128xf32, #tpu.memory_space<vmem>>, vector<1x128xf32>
    %11 = vector.broadcast %10 : vector<1x128xf32> to vector<8x128xf32>
    %12 = arith.mulf %9, %11 : vector<8x128xf32>
    %13 = arith.addf %7, %12 : vector<8x128xf32>
    %c0_9 = arith.constant 0 : index
    %c0_10 = arith.constant 0 : index
    %14 = vector.load %arg6[%c0_9, %c0_10] : memref<1x128xf32, #tpu.memory_space<vmem>>, vector<1x128xf32>
    %15 = vector.broadcast %14 : vector<1x128xf32> to vector<8x128xf32>
    %16 = arith.addf %13, %15 : vector<8x128xf32>
    %cst = arith.constant 0.000000e+00 : f32
    %17 = vector.broadcast %cst : f32 to vector<8x128xf32>
    %18 = arith.maximumf %16, %17 : vector<8x128xf32>
    %19 = arith.truncf %18 : vector<8x128xf32> to vector<8x128xbf16>
    %c0_11 = arith.constant 0 : index
    %c0_12 = arith.constant 0 : index
    %20 = vector.load %arg7[%c0_11, %c0_12] : memref<8x128xbf16, #tpu.memory_space<vmem>>, vector<8x128xbf16>
    tpu.vector_store %arg7[%c0_11, %c0_12], %19 {strides = array<i32>} : memref<8x128xbf16, #tpu.memory_space<vmem>>, vector<8x128xbf16>,
    return
  }
  func.func @transform_0(%arg0: i32) -> (i32, i32) {
    %c0_i32 = arith.constant 0 : i32
    %c0_i32_0 = arith.constant 0 : i32
    return %arg0, %c0_i32 : i32, i32
  }
  func.func @transform_1(%arg0: i32) -> (i32, i32) {
    %c0_i32 = arith.constant 0 : i32
    %c0_i32_0 = arith.constant 0 : i32
    %c0_i32_1 = arith.constant 0 : i32
    return %c0_i32, %c0_i32_0 : i32, i32
  }
  func.func @transform_2(%arg0: i32) -> (i32, i32) {
    %c0_i32 = arith.constant 0 : i32
    %c0_i32_0 = arith.constant 0 : i32
    %c0_i32_1 = arith.constant 0 : i32
    return %c0_i32, %c0_i32_0 : i32, i32
  }
  func.func @transform_3(%arg0: i32) -> (i32, i32) {
    %c0_i32 = arith.constant 0 : i32
    %c0_i32_0 = arith.constant 0 : i32
    return %arg0, %c0_i32 : i32, i32
  }
  func.func @transform_4(%arg0: i32) -> (i32, i32) {
    %c0_i32 = arith.constant 0 : i32
    %c0_i32_0 = arith.constant 0 : i32
    %c0_i32_1 = arith.constant 0 : i32
    return %c0_i32, %c0_i32_0 : i32, i32
  }
  func.func @transform_5(%arg0: i32) -> (i32, i32) {
    %c0_i32 = arith.constant 0 : i32
    %c0_i32_0 = arith.constant 0 : i32
    %c0_i32_1 = arith.constant 0 : i32
    return %c0_i32, %c0_i32_0 : i32, i32
  }
  func.func @transform_6(%arg0: i32) -> (i32, i32) {
    %c0_i32 = arith.constant 0 : i32
    %c0_i32_0 = arith.constant 0 : i32
    return %arg0, %c0_i32 : i32, i32
  }
}

module attributes {stable_mosaic.version = 11 : i64} {
  func.func @_mm_stats_kernel(%arg0: i32, %arg1: i32, %arg2: i32, %arg3: memref<8x32xbf16, #tpu.memory_space<vmem>>, %arg4: memref<32x64xbf16, #tpu.memory_space<vmem>>, %arg5: memref<8x64xbf16, #tpu.memory_space<vmem>>, %arg6: memref<8x64xf32, #tpu.memory_space<vmem>>, %arg7: memref<8x64xf32, #tpu.memory_space<vmem>>, %arg8: memref<8x64xf32, #tpu.memory_space<vmem>>) attributes {dimension_semantics = [#tpu.dimension_semantics<parallel>, #tpu.dimension_semantics<parallel>, #tpu.dimension_semantics<arbitrary>], iteration_bounds = array<i64: 1, 1, 1>, scalar_prefetch = 0 : i64, scratch_operands = 1 : i64, tpu.core_type = #tpu.core_type<tc>, window_params = [{transform_indices = @transform_0, window_bounds = array<i64: 8, 32>}, {transform_indices = @transform_1, window_bounds = array<i64: 32, 64>}, {transform_indices = @transform_2, window_bounds = array<i64: 8, 64>}, {transform_indices = @transform_3, window_bounds = array<i64: 8, 64>}, {transform_indices = @transform_4, window_bounds = array<i64: 8, 64>}]} {
    %c0_i32 = arith.constant 0 : i32
    %0 = arith.cmpi eq, %arg2, %c0_i32 : i32
    %1 = arith.extui %0 : i1 to i32
    %c0_i32_0 = arith.constant 0 : i32
    %2 = arith.cmpi ne, %1, %c0_i32_0 : i32
    scf.if %2 {
      %cst_10 = arith.constant 0.000000e+00 : f32
      %12 = vector.broadcast %cst_10 : f32 to vector<8x64xf32>
      %c0_11 = arith.constant 0 : index
      %c0_12 = arith.constant 0 : index
      %13 = vector.load %arg8[%c0_11, %c0_12] : memref<8x64xf32, #tpu.memory_space<vmem>>, vector<8x64xf32>
      tpu.vector_store %arg8[%c0_11, %c0_12], %12 {strides = array<i32>} : memref<8x64xf32, #tpu.memory_space<vmem>>, vector<8x64xf32>,
    } else {
    }
    %c0 = arith.constant 0 : index
    %c0_1 = arith.constant 0 : index
    %3 = vector.load %arg8[%c0, %c0_1] : memref<8x64xf32, #tpu.memory_space<vmem>>, vector<8x64xf32>
    %c0_2 = arith.constant 0 : index
    %c0_3 = arith.constant 0 : index
    %4 = vector.load %arg3[%c0_2, %c0_3] : memref<8x32xbf16, #tpu.memory_space<vmem>>, vector<8x32xbf16>
    %c0_4 = arith.constant 0 : index
    %c0_5 = arith.constant 0 : index
    %5 = vector.load %arg4[%c0_4, %c0_5] : memref<32x64xbf16, #tpu.memory_space<vmem>>, vector<32x64xbf16>
    %cst = arith.constant dense<0.000000e+00> : vector<8x64xf32>
    %6 = tpu.matmul %4, %5, %cst {dimension_numbers = #tpu.dot_dimension_numbers<[1], [0], [0], [1], [0, 0, 1, 1], [], []>} : vector<8x32xbf16>, vector<32x64xbf16>, vector<8x64xf32> -> vector<8x64xf32>
    %7 = arith.addf %3, %6 : vector<8x64xf32>
    %c0_6 = arith.constant 0 : index
    %c0_7 = arith.constant 0 : index
    %8 = vector.load %arg8[%c0_6, %c0_7] : memref<8x64xf32, #tpu.memory_space<vmem>>, vector<8x64xf32>
    tpu.vector_store %arg8[%c0_6, %c0_7], %7 {strides = array<i32>} : memref<8x64xf32, #tpu.memory_space<vmem>>, vector<8x64xf32>,
    %c0_i32_8 = arith.constant 0 : i32
    %9 = arith.cmpi eq, %arg2, %c0_i32_8 : i32
    %10 = arith.extui %9 : i1 to i32
    %c0_i32_9 = arith.constant 0 : i32
    %11 = arith.cmpi ne, %10, %c0_i32_9 : i32
    scf.if %11 {
      %c0_10 = arith.constant 0 : index
      %c0_11 = arith.constant 0 : index
      %12 = vector.load %arg8[%c0_10, %c0_11] : memref<8x64xf32, #tpu.memory_space<vmem>>, vector<8x64xf32>
      %13 = arith.truncf %12 : vector<8x64xf32> to vector<8x64xbf16>
      %c0_12 = arith.constant 0 : index
      %c0_13 = arith.constant 0 : index
      %14 = vector.load %arg5[%c0_12, %c0_13] : memref<8x64xbf16, #tpu.memory_space<vmem>>, vector<8x64xbf16>
      tpu.vector_store %arg5[%c0_12, %c0_13], %13 {strides = array<i32>} : memref<8x64xbf16, #tpu.memory_space<vmem>>, vector<8x64xbf16>,
      %15 = tpu.iota {dimensions = array<i32: 0>} : vector<8x64xi32>
      %c0_i32_14 = arith.constant 0 : i32
      %16 = vector.broadcast %c0_i32_14 : i32 to vector<8x64xi32>
      %17 = arith.cmpi eq, %15, %16 : vector<8x64xi32>
      %cst_15 = arith.constant dense<0.000000e+00> : vector<64xf32>
      %18 = vector.multi_reduction <add>, %12, %cst_15 [0] : vector<8x64xf32> to vector<64xf32>
      %19 = vector.shape_cast %18 : vector<64xf32> to vector<1x64xf32>
      %20 = arith.mulf %12, %12 : vector<8x64xf32>
      %cst_16 = arith.constant dense<0.000000e+00> : vector<64xf32>
      %21 = vector.multi_reduction <add>, %20, %cst_16 [0] : vector<8x64xf32> to vector<64xf32>
      %22 = vector.shape_cast %21 : vector<64xf32> to vector<1x64xf32>
      %cst_17 = arith.constant 0.000000e+00 : f32
      %23 = vector.shape_cast %19 : vector<1x64xf32> to vector<1x64xf32>
      %24 = vector.broadcast %23 : vector<1x64xf32> to vector<8x64xf32>
      %25 = vector.broadcast %cst_17 : f32 to vector<8x64xf32>
      %26 = arith.select %17, %24, %25 : vector<8x64xi1>, vector<8x64xf32>
      %c0_18 = arith.constant 0 : index
      %c0_19 = arith.constant 0 : index
      %27 = vector.load %arg6[%c0_18, %c0_19] : memref<8x64xf32, #tpu.memory_space<vmem>>, vector<8x64xf32>
      tpu.vector_store %arg6[%c0_18, %c0_19], %26 {strides = array<i32>} : memref<8x64xf32, #tpu.memory_space<vmem>>, vector<8x64xf32>,
      %cst_20 = arith.constant 0.000000e+00 : f32
      %28 = vector.shape_cast %22 : vector<1x64xf32> to vector<1x64xf32>
      %29 = vector.broadcast %28 : vector<1x64xf32> to vector<8x64xf32>
      %30 = vector.broadcast %cst_20 : f32 to vector<8x64xf32>
      %31 = arith.select %17, %29, %30 : vector<8x64xi1>, vector<8x64xf32>
      %c0_21 = arith.constant 0 : index
      %c0_22 = arith.constant 0 : index
      %32 = vector.load %arg7[%c0_21, %c0_22] : memref<8x64xf32, #tpu.memory_space<vmem>>, vector<8x64xf32>
      tpu.vector_store %arg7[%c0_21, %c0_22], %31 {strides = array<i32>} : memref<8x64xf32, #tpu.memory_space<vmem>>, vector<8x64xf32>,
    } else {
    }
    return
  }
  func.func @transform_0(%arg0: i32, %arg1: i32, %arg2: i32) -> (i32, i32) {
    %c0_i32 = arith.constant 0 : i32
    return %arg0, %arg2 : i32, i32
  }
  func.func @transform_1(%arg0: i32, %arg1: i32, %arg2: i32) -> (i32, i32) {
    %c0_i32 = arith.constant 0 : i32
    return %arg2, %arg1 : i32, i32
  }
  func.func @transform_2(%arg0: i32, %arg1: i32, %arg2: i32) -> (i32, i32) {
    %c0_i32 = arith.constant 0 : i32
    return %arg0, %arg1 : i32, i32
  }
  func.func @transform_3(%arg0: i32, %arg1: i32, %arg2: i32) -> (i32, i32) {
    %c0_i32 = arith.constant 0 : i32
    return %arg0, %arg1 : i32, i32
  }
  func.func @transform_4(%arg0: i32, %arg1: i32, %arg2: i32) -> (i32, i32) {
    %c0_i32 = arith.constant 0 : i32
    return %arg0, %arg1 : i32, i32
  }
}

module attributes {stable_mosaic.version = 11 : i64} {
  func.func @_mm_stats_kernel(%arg0: i32, %arg1: i32, %arg2: i32, %arg3: memref<8x288xbf16, #tpu.memory_space<vmem>>, %arg4: memref<288x64xbf16, #tpu.memory_space<vmem>>, %arg5: memref<8x64xbf16, #tpu.memory_space<vmem>>, %arg6: memref<8x64xf32, #tpu.memory_space<vmem>>, %arg7: memref<8x64xf32, #tpu.memory_space<vmem>>, %arg8: memref<8x64xf32, #tpu.memory_space<vmem>>) attributes {dimension_semantics = [#tpu.dimension_semantics<parallel>, #tpu.dimension_semantics<parallel>, #tpu.dimension_semantics<arbitrary>], iteration_bounds = array<i64: 1, 1, 1>, scalar_prefetch = 0 : i64, scratch_operands = 1 : i64, tpu.core_type = #tpu.core_type<tc>, window_params = [{transform_indices = @transform_0, window_bounds = array<i64: 8, 288>}, {transform_indices = @transform_1, window_bounds = array<i64: 288, 64>}, {transform_indices = @transform_2, window_bounds = array<i64: 8, 64>}, {transform_indices = @transform_3, window_bounds = array<i64: 8, 64>}, {transform_indices = @transform_4, window_bounds = array<i64: 8, 64>}]} {
    %c0_i32 = arith.constant 0 : i32
    %0 = arith.cmpi eq, %arg2, %c0_i32 : i32
    %1 = arith.extui %0 : i1 to i32
    %c0_i32_0 = arith.constant 0 : i32
    %2 = arith.cmpi ne, %1, %c0_i32_0 : i32
    scf.if %2 {
      %cst_10 = arith.constant 0.000000e+00 : f32
      %12 = vector.broadcast %cst_10 : f32 to vector<8x64xf32>
      %c0_11 = arith.constant 0 : index
      %c0_12 = arith.constant 0 : index
      %13 = vector.load %arg8[%c0_11, %c0_12] : memref<8x64xf32, #tpu.memory_space<vmem>>, vector<8x64xf32>
      tpu.vector_store %arg8[%c0_11, %c0_12], %12 {strides = array<i32>} : memref<8x64xf32, #tpu.memory_space<vmem>>, vector<8x64xf32>,
    } else {
    }
    %c0 = arith.constant 0 : index
    %c0_1 = arith.constant 0 : index
    %3 = vector.load %arg8[%c0, %c0_1] : memref<8x64xf32, #tpu.memory_space<vmem>>, vector<8x64xf32>
    %c0_2 = arith.constant 0 : index
    %c0_3 = arith.constant 0 : index
    %4 = vector.load %arg3[%c0_2, %c0_3] : memref<8x288xbf16, #tpu.memory_space<vmem>>, vector<8x288xbf16>
    %c0_4 = arith.constant 0 : index
    %c0_5 = arith.constant 0 : index
    %5 = vector.load %arg4[%c0_4, %c0_5] : memref<288x64xbf16, #tpu.memory_space<vmem>>, vector<288x64xbf16>
    %cst = arith.constant dense<0.000000e+00> : vector<8x64xf32>
    %6 = tpu.matmul %4, %5, %cst {dimension_numbers = #tpu.dot_dimension_numbers<[1], [0], [0], [1], [0, 0, 1, 1], [], []>} : vector<8x288xbf16>, vector<288x64xbf16>, vector<8x64xf32> -> vector<8x64xf32>
    %7 = arith.addf %3, %6 : vector<8x64xf32>
    %c0_6 = arith.constant 0 : index
    %c0_7 = arith.constant 0 : index
    %8 = vector.load %arg8[%c0_6, %c0_7] : memref<8x64xf32, #tpu.memory_space<vmem>>, vector<8x64xf32>
    tpu.vector_store %arg8[%c0_6, %c0_7], %7 {strides = array<i32>} : memref<8x64xf32, #tpu.memory_space<vmem>>, vector<8x64xf32>,
    %c0_i32_8 = arith.constant 0 : i32
    %9 = arith.cmpi eq, %arg2, %c0_i32_8 : i32
    %10 = arith.extui %9 : i1 to i32
    %c0_i32_9 = arith.constant 0 : i32
    %11 = arith.cmpi ne, %10, %c0_i32_9 : i32
    scf.if %11 {
      %c0_10 = arith.constant 0 : index
      %c0_11 = arith.constant 0 : index
      %12 = vector.load %arg8[%c0_10, %c0_11] : memref<8x64xf32, #tpu.memory_space<vmem>>, vector<8x64xf32>
      %13 = arith.truncf %12 : vector<8x64xf32> to vector<8x64xbf16>
      %c0_12 = arith.constant 0 : index
      %c0_13 = arith.constant 0 : index
      %14 = vector.load %arg5[%c0_12, %c0_13] : memref<8x64xbf16, #tpu.memory_space<vmem>>, vector<8x64xbf16>
      tpu.vector_store %arg5[%c0_12, %c0_13], %13 {strides = array<i32>} : memref<8x64xbf16, #tpu.memory_space<vmem>>, vector<8x64xbf16>,
      %15 = tpu.iota {dimensions = array<i32: 0>} : vector<8x64xi32>
      %c0_i32_14 = arith.constant 0 : i32
      %16 = vector.broadcast %c0_i32_14 : i32 to vector<8x64xi32>
      %17 = arith.cmpi eq, %15, %16 : vector<8x64xi32>
      %cst_15 = arith.constant dense<0.000000e+00> : vector<64xf32>
      %18 = vector.multi_reduction <add>, %12, %cst_15 [0] : vector<8x64xf32> to vector<64xf32>
      %19 = vector.shape_cast %18 : vector<64xf32> to vector<1x64xf32>
      %20 = arith.mulf %12, %12 : vector<8x64xf32>
      %cst_16 = arith.constant dense<0.000000e+00> : vector<64xf32>
      %21 = vector.multi_reduction <add>, %20, %cst_16 [0] : vector<8x64xf32> to vector<64xf32>
      %22 = vector.shape_cast %21 : vector<64xf32> to vector<1x64xf32>
      %cst_17 = arith.constant 0.000000e+00 : f32
      %23 = vector.shape_cast %19 : vector<1x64xf32> to vector<1x64xf32>
      %24 = vector.broadcast %23 : vector<1x64xf32> to vector<8x64xf32>
      %25 = vector.broadcast %cst_17 : f32 to vector<8x64xf32>
      %26 = arith.select %17, %24, %25 : vector<8x64xi1>, vector<8x64xf32>
      %c0_18 = arith.constant 0 : index
      %c0_19 = arith.constant 0 : index
      %27 = vector.load %arg6[%c0_18, %c0_19] : memref<8x64xf32, #tpu.memory_space<vmem>>, vector<8x64xf32>
      tpu.vector_store %arg6[%c0_18, %c0_19], %26 {strides = array<i32>} : memref<8x64xf32, #tpu.memory_space<vmem>>, vector<8x64xf32>,
      %cst_20 = arith.constant 0.000000e+00 : f32
      %28 = vector.shape_cast %22 : vector<1x64xf32> to vector<1x64xf32>
      %29 = vector.broadcast %28 : vector<1x64xf32> to vector<8x64xf32>
      %30 = vector.broadcast %cst_20 : f32 to vector<8x64xf32>
      %31 = arith.select %17, %29, %30 : vector<8x64xi1>, vector<8x64xf32>
      %c0_21 = arith.constant 0 : index
      %c0_22 = arith.constant 0 : index
      %32 = vector.load %arg7[%c0_21, %c0_22] : memref<8x64xf32, #tpu.memory_space<vmem>>, vector<8x64xf32>
      tpu.vector_store %arg7[%c0_21, %c0_22], %31 {strides = array<i32>} : memref<8x64xf32, #tpu.memory_space<vmem>>, vector<8x64xf32>,
    } else {
    }
    return
  }
  func.func @transform_0(%arg0: i32, %arg1: i32, %arg2: i32) -> (i32, i32) {
    %c0_i32 = arith.constant 0 : i32
    return %arg0, %arg2 : i32, i32
  }
  func.func @transform_1(%arg0: i32, %arg1: i32, %arg2: i32) -> (i32, i32) {
    %c0_i32 = arith.constant 0 : i32
    return %arg2, %arg1 : i32, i32
  }
  func.func @transform_2(%arg0: i32, %arg1: i32, %arg2: i32) -> (i32, i32) {
    %c0_i32 = arith.constant 0 : i32
    return %arg0, %arg1 : i32, i32
  }
  func.func @transform_3(%arg0: i32, %arg1: i32, %arg2: i32) -> (i32, i32) {
    %c0_i32 = arith.constant 0 : i32
    return %arg0, %arg1 : i32, i32
  }
  func.func @transform_4(%arg0: i32, %arg1: i32, %arg2: i32) -> (i32, i32) {
    %c0_i32 = arith.constant 0 : i32
    return %arg0, %arg1 : i32, i32
  }
}

module attributes {stable_mosaic.version = 11 : i64} {
  func.func @_scale_shift_relu_kernel(%arg0: i32, %arg1: memref<4x128xbf16, #tpu.memory_space<vmem>>, %arg2: memref<1x128xf32, #tpu.memory_space<vmem>>, %arg3: memref<1x128xf32, #tpu.memory_space<vmem>>, %arg4: memref<4x128xbf16, #tpu.memory_space<vmem>>) attributes {dimension_semantics = [#tpu.dimension_semantics<parallel>], iteration_bounds = array<i64: 1>, scalar_prefetch = 0 : i64, scratch_operands = 0 : i64, tpu.core_type = #tpu.core_type<tc>, window_params = [{transform_indices = @transform_0, window_bounds = array<i64: 4, 128>}, {pipeline_mode = #tpu.pipeline_mode<synchronous>, transform_indices = @transform_1, window_bounds = array<i64: 1, 128>}, {pipeline_mode = #tpu.pipeline_mode<synchronous>, transform_indices = @transform_2, window_bounds = array<i64: 1, 128>}, {transform_indices = @transform_3, window_bounds = array<i64: 4, 128>}]} {
    %c0 = arith.constant 0 : index
    %c0_0 = arith.constant 0 : index
    %0 = vector.load %arg1[%c0, %c0_0] : memref<4x128xbf16, #tpu.memory_space<vmem>>, vector<4x128xbf16>
    %1 = arith.extf %0 : vector<4x128xbf16> to vector<4x128xf32>
    %c0_1 = arith.constant 0 : index
    %c0_2 = arith.constant 0 : index
    %2 = vector.load %arg2[%c0_1, %c0_2] : memref<1x128xf32, #tpu.memory_space<vmem>>, vector<1x128xf32>
    %3 = vector.broadcast %2 : vector<1x128xf32> to vector<4x128xf32>
    %4 = arith.mulf %1, %3 : vector<4x128xf32>
    %c0_3 = arith.constant 0 : index
    %c0_4 = arith.constant 0 : index
    %5 = vector.load %arg3[%c0_3, %c0_4] : memref<1x128xf32, #tpu.memory_space<vmem>>, vector<1x128xf32>
    %6 = vector.broadcast %5 : vector<1x128xf32> to vector<4x128xf32>
    %7 = arith.addf %4, %6 : vector<4x128xf32>
    %cst = arith.constant 0.000000e+00 : f32
    %8 = vector.broadcast %cst : f32 to vector<4x128xf32>
    %9 = arith.maximumf %7, %8 : vector<4x128xf32>
    %10 = arith.truncf %9 : vector<4x128xf32> to vector<4x128xbf16>
    %c0_5 = arith.constant 0 : index
    %c0_6 = arith.constant 0 : index
    %11 = vector.load %arg4[%c0_5, %c0_6] : memref<4x128xbf16, #tpu.memory_space<vmem>>, vector<4x128xbf16>
    tpu.vector_store %arg4[%c0_5, %c0_6], %10 {strides = array<i32>} : memref<4x128xbf16, #tpu.memory_space<vmem>>, vector<4x128xbf16>,
    return
  }
  func.func @transform_0(%arg0: i32) -> (i32, i32) {
    %c0_i32 = arith.constant 0 : i32
    %c0_i32_0 = arith.constant 0 : i32
    return %arg0, %c0_i32 : i32, i32
  }
  func.func @transform_1(%arg0: i32) -> (i32, i32) {
    %c0_i32 = arith.constant 0 : i32
    %c0_i32_0 = arith.constant 0 : i32
    %c0_i32_1 = arith.constant 0 : i32
    return %c0_i32, %c0_i32_0 : i32, i32
  }
  func.func @transform_2(%arg0: i32) -> (i32, i32) {
    %c0_i32 = arith.constant 0 : i32
    %c0_i32_0 = arith.constant 0 : i32
    %c0_i32_1 = arith.constant 0 : i32
    return %c0_i32, %c0_i32_0 : i32, i32
  }
  func.func @transform_3(%arg0: i32) -> (i32, i32) {
    %c0_i32 = arith.constant 0 : i32
    %c0_i32_0 = arith.constant 0 : i32
    return %arg0, %c0_i32 : i32, i32
  }
}

module attributes {stable_mosaic.version = 11 : i64} {
  func.func @_dual_scale_shift_add_relu_kernel(%arg0: i32, %arg1: memref<4x128xbf16, #tpu.memory_space<vmem>>, %arg2: memref<1x128xf32, #tpu.memory_space<vmem>>, %arg3: memref<1x128xf32, #tpu.memory_space<vmem>>, %arg4: memref<4x128xbf16, #tpu.memory_space<vmem>>, %arg5: memref<1x128xf32, #tpu.memory_space<vmem>>, %arg6: memref<1x128xf32, #tpu.memory_space<vmem>>, %arg7: memref<4x128xbf16, #tpu.memory_space<vmem>>) attributes {dimension_semantics = [#tpu.dimension_semantics<parallel>], iteration_bounds = array<i64: 1>, scalar_prefetch = 0 : i64, scratch_operands = 0 : i64, tpu.core_type = #tpu.core_type<tc>, window_params = [{transform_indices = @transform_0, window_bounds = array<i64: 4, 128>}, {pipeline_mode = #tpu.pipeline_mode<synchronous>, transform_indices = @transform_1, window_bounds = array<i64: 1, 128>}, {pipeline_mode = #tpu.pipeline_mode<synchronous>, transform_indices = @transform_2, window_bounds = array<i64: 1, 128>}, {transform_indices = @transform_3, window_bounds = array<i64: 4, 128>}, {pipeline_mode = #tpu.pipeline_mode<synchronous>, transform_indices = @transform_4, window_bounds = array<i64: 1, 128>}, {pipeline_mode = #tpu.pipeline_mode<synchronous>, transform_indices = @transform_5, window_bounds = array<i64: 1, 128>}, {transform_indices = @transform_6, window_bounds = array<i64: 4, 128>}]} {
    %c0 = arith.constant 0 : index
    %c0_0 = arith.constant 0 : index
    %0 = vector.load %arg1[%c0, %c0_0] : memref<4x128xbf16, #tpu.memory_space<vmem>>, vector<4x128xbf16>
    %1 = arith.extf %0 : vector<4x128xbf16> to vector<4x128xf32>
    %c0_1 = arith.constant 0 : index
    %c0_2 = arith.constant 0 : index
    %2 = vector.load %arg2[%c0_1, %c0_2] : memref<1x128xf32, #tpu.memory_space<vmem>>, vector<1x128xf32>
    %3 = vector.broadcast %2 : vector<1x128xf32> to vector<4x128xf32>
    %4 = arith.mulf %1, %3 : vector<4x128xf32>
    %c0_3 = arith.constant 0 : index
    %c0_4 = arith.constant 0 : index
    %5 = vector.load %arg3[%c0_3, %c0_4] : memref<1x128xf32, #tpu.memory_space<vmem>>, vector<1x128xf32>
    %6 = vector.broadcast %5 : vector<1x128xf32> to vector<4x128xf32>
    %7 = arith.addf %4, %6 : vector<4x128xf32>
    %c0_5 = arith.constant 0 : index
    %c0_6 = arith.constant 0 : index
    %8 = vector.load %arg4[%c0_5, %c0_6] : memref<4x128xbf16, #tpu.memory_space<vmem>>, vector<4x128xbf16>
    %9 = arith.extf %8 : vector<4x128xbf16> to vector<4x128xf32>
    %c0_7 = arith.constant 0 : index
    %c0_8 = arith.constant 0 : index
    %10 = vector.load %arg5[%c0_7, %c0_8] : memref<1x128xf32, #tpu.memory_space<vmem>>, vector<1x128xf32>
    %11 = vector.broadcast %10 : vector<1x128xf32> to vector<4x128xf32>
    %12 = arith.mulf %9, %11 : vector<4x128xf32>
    %13 = arith.addf %7, %12 : vector<4x128xf32>
    %c0_9 = arith.constant 0 : index
    %c0_10 = arith.constant 0 : index
    %14 = vector.load %arg6[%c0_9, %c0_10] : memref<1x128xf32, #tpu.memory_space<vmem>>, vector<1x128xf32>
    %15 = vector.broadcast %14 : vector<1x128xf32> to vector<4x128xf32>
    %16 = arith.addf %13, %15 : vector<4x128xf32>
    %cst = arith.constant 0.000000e+00 : f32
    %17 = vector.broadcast %cst : f32 to vector<4x128xf32>
    %18 = arith.maximumf %16, %17 : vector<4x128xf32>
    %19 = arith.truncf %18 : vector<4x128xf32> to vector<4x128xbf16>
    %c0_11 = arith.constant 0 : index
    %c0_12 = arith.constant 0 : index
    %20 = vector.load %arg7[%c0_11, %c0_12] : memref<4x128xbf16, #tpu.memory_space<vmem>>, vector<4x128xbf16>
    tpu.vector_store %arg7[%c0_11, %c0_12], %19 {strides = array<i32>} : memref<4x128xbf16, #tpu.memory_space<vmem>>, vector<4x128xbf16>,
    return
  }
  func.func @transform_0(%arg0: i32) -> (i32, i32) {
    %c0_i32 = arith.constant 0 : i32
    %c0_i32_0 = arith.constant 0 : i32
    return %arg0, %c0_i32 : i32, i32
  }
  func.func @transform_1(%arg0: i32) -> (i32, i32) {
    %c0_i32 = arith.constant 0 : i32
    %c0_i32_0 = arith.constant 0 : i32
    %c0_i32_1 = arith.constant 0 : i32
    return %c0_i32, %c0_i32_0 : i32, i32
  }
  func.func @transform_2(%arg0: i32) -> (i32, i32) {
    %c0_i32 = arith.constant 0 : i32
    %c0_i32_0 = arith.constant 0 : i32
    %c0_i32_1 = arith.constant 0 : i32
    return %c0_i32, %c0_i32_0 : i32, i32
  }
  func.func @transform_3(%arg0: i32) -> (i32, i32) {
    %c0_i32 = arith.constant 0 : i32
    %c0_i32_0 = arith.constant 0 : i32
    return %arg0, %c0_i32 : i32, i32
  }
  func.func @transform_4(%arg0: i32) -> (i32, i32) {
    %c0_i32 = arith.constant 0 : i32
    %c0_i32_0 = arith.constant 0 : i32
    %c0_i32_1 = arith.constant 0 : i32
    return %c0_i32, %c0_i32_0 : i32, i32
  }
  func.func @transform_5(%arg0: i32) -> (i32, i32) {
    %c0_i32 = arith.constant 0 : i32
    %c0_i32_0 = arith.constant 0 : i32
    %c0_i32_1 = arith.constant 0 : i32
    return %c0_i32, %c0_i32_0 : i32, i32
  }
  func.func @transform_6(%arg0: i32) -> (i32, i32) {
    %c0_i32 = arith.constant 0 : i32
    %c0_i32_0 = arith.constant 0 : i32
    return %arg0, %c0_i32 : i32, i32
  }
}

module attributes {stable_mosaic.version = 11 : i64} {
  func.func @_mm_stats_kernel(%arg0: i32, %arg1: i32, %arg2: i32, %arg3: memref<8x576xbf16, #tpu.memory_space<vmem>>, %arg4: memref<576x64xbf16, #tpu.memory_space<vmem>>, %arg5: memref<8x64xbf16, #tpu.memory_space<vmem>>, %arg6: memref<8x64xf32, #tpu.memory_space<vmem>>, %arg7: memref<8x64xf32, #tpu.memory_space<vmem>>, %arg8: memref<8x64xf32, #tpu.memory_space<vmem>>) attributes {dimension_semantics = [#tpu.dimension_semantics<parallel>, #tpu.dimension_semantics<parallel>, #tpu.dimension_semantics<arbitrary>], iteration_bounds = array<i64: 1, 1, 1>, scalar_prefetch = 0 : i64, scratch_operands = 1 : i64, tpu.core_type = #tpu.core_type<tc>, window_params = [{transform_indices = @transform_0, window_bounds = array<i64: 8, 576>}, {transform_indices = @transform_1, window_bounds = array<i64: 576, 64>}, {transform_indices = @transform_2, window_bounds = array<i64: 8, 64>}, {transform_indices = @transform_3, window_bounds = array<i64: 8, 64>}, {transform_indices = @transform_4, window_bounds = array<i64: 8, 64>}]} {
    %c0_i32 = arith.constant 0 : i32
    %0 = arith.cmpi eq, %arg2, %c0_i32 : i32
    %1 = arith.extui %0 : i1 to i32
    %c0_i32_0 = arith.constant 0 : i32
    %2 = arith.cmpi ne, %1, %c0_i32_0 : i32
    scf.if %2 {
      %cst_10 = arith.constant 0.000000e+00 : f32
      %12 = vector.broadcast %cst_10 : f32 to vector<8x64xf32>
      %c0_11 = arith.constant 0 : index
      %c0_12 = arith.constant 0 : index
      %13 = vector.load %arg8[%c0_11, %c0_12] : memref<8x64xf32, #tpu.memory_space<vmem>>, vector<8x64xf32>
      tpu.vector_store %arg8[%c0_11, %c0_12], %12 {strides = array<i32>} : memref<8x64xf32, #tpu.memory_space<vmem>>, vector<8x64xf32>,
    } else {
    }
    %c0 = arith.constant 0 : index
    %c0_1 = arith.constant 0 : index
    %3 = vector.load %arg8[%c0, %c0_1] : memref<8x64xf32, #tpu.memory_space<vmem>>, vector<8x64xf32>
    %c0_2 = arith.constant 0 : index
    %c0_3 = arith.constant 0 : index
    %4 = vector.load %arg3[%c0_2, %c0_3] : memref<8x576xbf16, #tpu.memory_space<vmem>>, vector<8x576xbf16>
    %c0_4 = arith.constant 0 : index
    %c0_5 = arith.constant 0 : index
    %5 = vector.load %arg4[%c0_4, %c0_5] : memref<576x64xbf16, #tpu.memory_space<vmem>>, vector<576x64xbf16>
    %cst = arith.constant dense<0.000000e+00> : vector<8x64xf32>
    %6 = tpu.matmul %4, %5, %cst {dimension_numbers = #tpu.dot_dimension_numbers<[1], [0], [0], [1], [0, 0, 1, 1], [], []>} : vector<8x576xbf16>, vector<576x64xbf16>, vector<8x64xf32> -> vector<8x64xf32>
    %7 = arith.addf %3, %6 : vector<8x64xf32>
    %c0_6 = arith.constant 0 : index
    %c0_7 = arith.constant 0 : index
    %8 = vector.load %arg8[%c0_6, %c0_7] : memref<8x64xf32, #tpu.memory_space<vmem>>, vector<8x64xf32>
    tpu.vector_store %arg8[%c0_6, %c0_7], %7 {strides = array<i32>} : memref<8x64xf32, #tpu.memory_space<vmem>>, vector<8x64xf32>,
    %c0_i32_8 = arith.constant 0 : i32
    %9 = arith.cmpi eq, %arg2, %c0_i32_8 : i32
    %10 = arith.extui %9 : i1 to i32
    %c0_i32_9 = arith.constant 0 : i32
    %11 = arith.cmpi ne, %10, %c0_i32_9 : i32
    scf.if %11 {
      %c0_10 = arith.constant 0 : index
      %c0_11 = arith.constant 0 : index
      %12 = vector.load %arg8[%c0_10, %c0_11] : memref<8x64xf32, #tpu.memory_space<vmem>>, vector<8x64xf32>
      %13 = arith.truncf %12 : vector<8x64xf32> to vector<8x64xbf16>
      %c0_12 = arith.constant 0 : index
      %c0_13 = arith.constant 0 : index
      %14 = vector.load %arg5[%c0_12, %c0_13] : memref<8x64xbf16, #tpu.memory_space<vmem>>, vector<8x64xbf16>
      tpu.vector_store %arg5[%c0_12, %c0_13], %13 {strides = array<i32>} : memref<8x64xbf16, #tpu.memory_space<vmem>>, vector<8x64xbf16>,
      %15 = tpu.iota {dimensions = array<i32: 0>} : vector<8x64xi32>
      %c0_i32_14 = arith.constant 0 : i32
      %16 = vector.broadcast %c0_i32_14 : i32 to vector<8x64xi32>
      %17 = arith.cmpi eq, %15, %16 : vector<8x64xi32>
      %cst_15 = arith.constant dense<0.000000e+00> : vector<64xf32>
      %18 = vector.multi_reduction <add>, %12, %cst_15 [0] : vector<8x64xf32> to vector<64xf32>
      %19 = vector.shape_cast %18 : vector<64xf32> to vector<1x64xf32>
      %20 = arith.mulf %12, %12 : vector<8x64xf32>
      %cst_16 = arith.constant dense<0.000000e+00> : vector<64xf32>
      %21 = vector.multi_reduction <add>, %20, %cst_16 [0] : vector<8x64xf32> to vector<64xf32>
      %22 = vector.shape_cast %21 : vector<64xf32> to vector<1x64xf32>
      %cst_17 = arith.constant 0.000000e+00 : f32
      %23 = vector.shape_cast %19 : vector<1x64xf32> to vector<1x64xf32>
      %24 = vector.broadcast %23 : vector<1x64xf32> to vector<8x64xf32>
      %25 = vector.broadcast %cst_17 : f32 to vector<8x64xf32>
      %26 = arith.select %17, %24, %25 : vector<8x64xi1>, vector<8x64xf32>
      %c0_18 = arith.constant 0 : index
      %c0_19 = arith.constant 0 : index
      %27 = vector.load %arg6[%c0_18, %c0_19] : memref<8x64xf32, #tpu.memory_space<vmem>>, vector<8x64xf32>
      tpu.vector_store %arg6[%c0_18, %c0_19], %26 {strides = array<i32>} : memref<8x64xf32, #tpu.memory_space<vmem>>, vector<8x64xf32>,
      %cst_20 = arith.constant 0.000000e+00 : f32
      %28 = vector.shape_cast %22 : vector<1x64xf32> to vector<1x64xf32>
      %29 = vector.broadcast %28 : vector<1x64xf32> to vector<8x64xf32>
      %30 = vector.broadcast %cst_20 : f32 to vector<8x64xf32>
      %31 = arith.select %17, %29, %30 : vector<8x64xi1>, vector<8x64xf32>
      %c0_21 = arith.constant 0 : index
      %c0_22 = arith.constant 0 : index
      %32 = vector.load %arg7[%c0_21, %c0_22] : memref<8x64xf32, #tpu.memory_space<vmem>>, vector<8x64xf32>
      tpu.vector_store %arg7[%c0_21, %c0_22], %31 {strides = array<i32>} : memref<8x64xf32, #tpu.memory_space<vmem>>, vector<8x64xf32>,
    } else {
    }
    return
  }
  func.func @transform_0(%arg0: i32, %arg1: i32, %arg2: i32) -> (i32, i32) {
    %c0_i32 = arith.constant 0 : i32
    return %arg0, %arg2 : i32, i32
  }
  func.func @transform_1(%arg0: i32, %arg1: i32, %arg2: i32) -> (i32, i32) {
    %c0_i32 = arith.constant 0 : i32
    return %arg2, %arg1 : i32, i32
  }
  func.func @transform_2(%arg0: i32, %arg1: i32, %arg2: i32) -> (i32, i32) {
    %c0_i32 = arith.constant 0 : i32
    return %arg0, %arg1 : i32, i32
  }
  func.func @transform_3(%arg0: i32, %arg1: i32, %arg2: i32) -> (i32, i32) {
    %c0_i32 = arith.constant 0 : i32
    return %arg0, %arg1 : i32, i32
  }
  func.func @transform_4(%arg0: i32, %arg1: i32, %arg2: i32) -> (i32, i32) {
    %c0_i32 = arith.constant 0 : i32
    return %arg0, %arg1 : i32, i32
  }
}

module attributes {stable_mosaic.version = 11 : i64} {
  func.func @_mm_stats_kernel(%arg0: i32, %arg1: i32, %arg2: i32, %arg3: memref<2x576xbf16, #tpu.memory_space<vmem>>, %arg4: memref<576x128xbf16, #tpu.memory_space<vmem>>, %arg5: memref<2x128xbf16, #tpu.memory_space<vmem>>, %arg6: memref<8x128xf32, #tpu.memory_space<vmem>>, %arg7: memref<8x128xf32, #tpu.memory_space<vmem>>, %arg8: memref<2x128xf32, #tpu.memory_space<vmem>>) attributes {dimension_semantics = [#tpu.dimension_semantics<parallel>, #tpu.dimension_semantics<parallel>, #tpu.dimension_semantics<arbitrary>], iteration_bounds = array<i64: 1, 1, 1>, scalar_prefetch = 0 : i64, scratch_operands = 1 : i64, tpu.core_type = #tpu.core_type<tc>, window_params = [{transform_indices = @transform_0, window_bounds = array<i64: 2, 576>}, {transform_indices = @transform_1, window_bounds = array<i64: 576, 128>}, {transform_indices = @transform_2, window_bounds = array<i64: 2, 128>}, {transform_indices = @transform_3, window_bounds = array<i64: 8, 128>}, {transform_indices = @transform_4, window_bounds = array<i64: 8, 128>}]} {
    %c0_i32 = arith.constant 0 : i32
    %0 = arith.cmpi eq, %arg2, %c0_i32 : i32
    %1 = arith.extui %0 : i1 to i32
    %c0_i32_0 = arith.constant 0 : i32
    %2 = arith.cmpi ne, %1, %c0_i32_0 : i32
    scf.if %2 {
      %cst_10 = arith.constant 0.000000e+00 : f32
      %12 = vector.broadcast %cst_10 : f32 to vector<2x128xf32>
      %c0_11 = arith.constant 0 : index
      %c0_12 = arith.constant 0 : index
      %13 = vector.load %arg8[%c0_11, %c0_12] : memref<2x128xf32, #tpu.memory_space<vmem>>, vector<2x128xf32>
      tpu.vector_store %arg8[%c0_11, %c0_12], %12 {strides = array<i32>} : memref<2x128xf32, #tpu.memory_space<vmem>>, vector<2x128xf32>,
    } else {
    }
    %c0 = arith.constant 0 : index
    %c0_1 = arith.constant 0 : index
    %3 = vector.load %arg8[%c0, %c0_1] : memref<2x128xf32, #tpu.memory_space<vmem>>, vector<2x128xf32>
    %c0_2 = arith.constant 0 : index
    %c0_3 = arith.constant 0 : index
    %4 = vector.load %arg3[%c0_2, %c0_3] : memref<2x576xbf16, #tpu.memory_space<vmem>>, vector<2x576xbf16>
    %c0_4 = arith.constant 0 : index
    %c0_5 = arith.constant 0 : index
    %5 = vector.load %arg4[%c0_4, %c0_5] : memref<576x128xbf16, #tpu.memory_space<vmem>>, vector<576x128xbf16>
    %cst = arith.constant dense<0.000000e+00> : vector<2x128xf32>
    %6 = tpu.matmul %4, %5, %cst {dimension_numbers = #tpu.dot_dimension_numbers<[1], [0], [0], [1], [0, 0, 1, 1], [], []>} : vector<2x576xbf16>, vector<576x128xbf16>, vector<2x128xf32> -> vector<2x128xf32>
    %7 = arith.addf %3, %6 : vector<2x128xf32>
    %c0_6 = arith.constant 0 : index
    %c0_7 = arith.constant 0 : index
    %8 = vector.load %arg8[%c0_6, %c0_7] : memref<2x128xf32, #tpu.memory_space<vmem>>, vector<2x128xf32>
    tpu.vector_store %arg8[%c0_6, %c0_7], %7 {strides = array<i32>} : memref<2x128xf32, #tpu.memory_space<vmem>>, vector<2x128xf32>,
    %c0_i32_8 = arith.constant 0 : i32
    %9 = arith.cmpi eq, %arg2, %c0_i32_8 : i32
    %10 = arith.extui %9 : i1 to i32
    %c0_i32_9 = arith.constant 0 : i32
    %11 = arith.cmpi ne, %10, %c0_i32_9 : i32
    scf.if %11 {
      %c0_10 = arith.constant 0 : index
      %c0_11 = arith.constant 0 : index
      %12 = vector.load %arg8[%c0_10, %c0_11] : memref<2x128xf32, #tpu.memory_space<vmem>>, vector<2x128xf32>
      %13 = arith.truncf %12 : vector<2x128xf32> to vector<2x128xbf16>
      %c0_12 = arith.constant 0 : index
      %c0_13 = arith.constant 0 : index
      %14 = vector.load %arg5[%c0_12, %c0_13] : memref<2x128xbf16, #tpu.memory_space<vmem>>, vector<2x128xbf16>
      tpu.vector_store %arg5[%c0_12, %c0_13], %13 {strides = array<i32>} : memref<2x128xbf16, #tpu.memory_space<vmem>>, vector<2x128xbf16>,
      %15 = tpu.iota {dimensions = array<i32: 0>} : vector<8x128xi32>
      %c0_i32_14 = arith.constant 0 : i32
      %16 = vector.broadcast %c0_i32_14 : i32 to vector<8x128xi32>
      %17 = arith.cmpi eq, %15, %16 : vector<8x128xi32>
      %cst_15 = arith.constant dense<0.000000e+00> : vector<128xf32>
      %18 = vector.multi_reduction <add>, %12, %cst_15 [0] : vector<2x128xf32> to vector<128xf32>
      %19 = vector.shape_cast %18 : vector<128xf32> to vector<1x128xf32>
      %20 = arith.mulf %12, %12 : vector<2x128xf32>
      %cst_16 = arith.constant dense<0.000000e+00> : vector<128xf32>
      %21 = vector.multi_reduction <add>, %20, %cst_16 [0] : vector<2x128xf32> to vector<128xf32>
      %22 = vector.shape_cast %21 : vector<128xf32> to vector<1x128xf32>
      %cst_17 = arith.constant 0.000000e+00 : f32
      %23 = vector.shape_cast %19 : vector<1x128xf32> to vector<1x128xf32>
      %24 = vector.broadcast %23 : vector<1x128xf32> to vector<8x128xf32>
      %25 = vector.broadcast %cst_17 : f32 to vector<8x128xf32>
      %26 = arith.select %17, %24, %25 : vector<8x128xi1>, vector<8x128xf32>
      %c0_18 = arith.constant 0 : index
      %c0_19 = arith.constant 0 : index
      %27 = vector.load %arg6[%c0_18, %c0_19] : memref<8x128xf32, #tpu.memory_space<vmem>>, vector<8x128xf32>
      tpu.vector_store %arg6[%c0_18, %c0_19], %26 {strides = array<i32>} : memref<8x128xf32, #tpu.memory_space<vmem>>, vector<8x128xf32>,
      %cst_20 = arith.constant 0.000000e+00 : f32
      %28 = vector.shape_cast %22 : vector<1x128xf32> to vector<1x128xf32>
      %29 = vector.broadcast %28 : vector<1x128xf32> to vector<8x128xf32>
      %30 = vector.broadcast %cst_20 : f32 to vector<8x128xf32>
      %31 = arith.select %17, %29, %30 : vector<8x128xi1>, vector<8x128xf32>
      %c0_21 = arith.constant 0 : index
      %c0_22 = arith.constant 0 : index
      %32 = vector.load %arg7[%c0_21, %c0_22] : memref<8x128xf32, #tpu.memory_space<vmem>>, vector<8x128xf32>
      tpu.vector_store %arg7[%c0_21, %c0_22], %31 {strides = array<i32>} : memref<8x128xf32, #tpu.memory_space<vmem>>, vector<8x128xf32>,
    } else {
    }
    return
  }
  func.func @transform_0(%arg0: i32, %arg1: i32, %arg2: i32) -> (i32, i32) {
    %c0_i32 = arith.constant 0 : i32
    return %arg0, %arg2 : i32, i32
  }
  func.func @transform_1(%arg0: i32, %arg1: i32, %arg2: i32) -> (i32, i32) {
    %c0_i32 = arith.constant 0 : i32
    return %arg2, %arg1 : i32, i32
  }
  func.func @transform_2(%arg0: i32, %arg1: i32, %arg2: i32) -> (i32, i32) {
    %c0_i32 = arith.constant 0 : i32
    return %arg0, %arg1 : i32, i32
  }
  func.func @transform_3(%arg0: i32, %arg1: i32, %arg2: i32) -> (i32, i32) {
    %c0_i32 = arith.constant 0 : i32
    return %arg0, %arg1 : i32, i32
  }
  func.func @transform_4(%arg0: i32, %arg1: i32, %arg2: i32) -> (i32, i32) {
    %c0_i32 = arith.constant 0 : i32
    return %arg0, %arg1 : i32, i32
  }
}

module attributes {stable_mosaic.version = 11 : i64} {
  func.func @_scale_shift_relu_kernel(%arg0: i32, %arg1: memref<2x128xbf16, #tpu.memory_space<vmem>>, %arg2: memref<1x128xf32, #tpu.memory_space<vmem>>, %arg3: memref<1x128xf32, #tpu.memory_space<vmem>>, %arg4: memref<2x128xbf16, #tpu.memory_space<vmem>>) attributes {dimension_semantics = [#tpu.dimension_semantics<parallel>], iteration_bounds = array<i64: 1>, scalar_prefetch = 0 : i64, scratch_operands = 0 : i64, tpu.core_type = #tpu.core_type<tc>, window_params = [{transform_indices = @transform_0, window_bounds = array<i64: 2, 128>}, {pipeline_mode = #tpu.pipeline_mode<synchronous>, transform_indices = @transform_1, window_bounds = array<i64: 1, 128>}, {pipeline_mode = #tpu.pipeline_mode<synchronous>, transform_indices = @transform_2, window_bounds = array<i64: 1, 128>}, {transform_indices = @transform_3, window_bounds = array<i64: 2, 128>}]} {
    %c0 = arith.constant 0 : index
    %c0_0 = arith.constant 0 : index
    %0 = vector.load %arg1[%c0, %c0_0] : memref<2x128xbf16, #tpu.memory_space<vmem>>, vector<2x128xbf16>
    %1 = arith.extf %0 : vector<2x128xbf16> to vector<2x128xf32>
    %c0_1 = arith.constant 0 : index
    %c0_2 = arith.constant 0 : index
    %2 = vector.load %arg2[%c0_1, %c0_2] : memref<1x128xf32, #tpu.memory_space<vmem>>, vector<1x128xf32>
    %3 = vector.broadcast %2 : vector<1x128xf32> to vector<2x128xf32>
    %4 = arith.mulf %1, %3 : vector<2x128xf32>
    %c0_3 = arith.constant 0 : index
    %c0_4 = arith.constant 0 : index
    %5 = vector.load %arg3[%c0_3, %c0_4] : memref<1x128xf32, #tpu.memory_space<vmem>>, vector<1x128xf32>
    %6 = vector.broadcast %5 : vector<1x128xf32> to vector<2x128xf32>
    %7 = arith.addf %4, %6 : vector<2x128xf32>
    %cst = arith.constant 0.000000e+00 : f32
    %8 = vector.broadcast %cst : f32 to vector<2x128xf32>
    %9 = arith.maximumf %7, %8 : vector<2x128xf32>
    %10 = arith.truncf %9 : vector<2x128xf32> to vector<2x128xbf16>
    %c0_5 = arith.constant 0 : index
    %c0_6 = arith.constant 0 : index
    %11 = vector.load %arg4[%c0_5, %c0_6] : memref<2x128xbf16, #tpu.memory_space<vmem>>, vector<2x128xbf16>
    tpu.vector_store %arg4[%c0_5, %c0_6], %10 {strides = array<i32>} : memref<2x128xbf16, #tpu.memory_space<vmem>>, vector<2x128xbf16>,
    return
  }
  func.func @transform_0(%arg0: i32) -> (i32, i32) {
    %c0_i32 = arith.constant 0 : i32
    %c0_i32_0 = arith.constant 0 : i32
    return %arg0, %c0_i32 : i32, i32
  }
  func.func @transform_1(%arg0: i32) -> (i32, i32) {
    %c0_i32 = arith.constant 0 : i32
    %c0_i32_0 = arith.constant 0 : i32
    %c0_i32_1 = arith.constant 0 : i32
    return %c0_i32, %c0_i32_0 : i32, i32
  }
  func.func @transform_2(%arg0: i32) -> (i32, i32) {
    %c0_i32 = arith.constant 0 : i32
    %c0_i32_0 = arith.constant 0 : i32
    %c0_i32_1 = arith.constant 0 : i32
    return %c0_i32, %c0_i32_0 : i32, i32
  }
  func.func @transform_3(%arg0: i32) -> (i32, i32) {
    %c0_i32 = arith.constant 0 : i32
    %c0_i32_0 = arith.constant 0 : i32
    return %arg0, %c0_i32 : i32, i32
  }
}

module attributes {stable_mosaic.version = 11 : i64} {
  func.func @_mm_stats_kernel(%arg0: i32, %arg1: i32, %arg2: i32, %arg3: memref<2x1152xbf16, #tpu.memory_space<vmem>>, %arg4: memref<1152x128xbf16, #tpu.memory_space<vmem>>, %arg5: memref<2x128xbf16, #tpu.memory_space<vmem>>, %arg6: memref<8x128xf32, #tpu.memory_space<vmem>>, %arg7: memref<8x128xf32, #tpu.memory_space<vmem>>, %arg8: memref<2x128xf32, #tpu.memory_space<vmem>>) attributes {dimension_semantics = [#tpu.dimension_semantics<parallel>, #tpu.dimension_semantics<parallel>, #tpu.dimension_semantics<arbitrary>], iteration_bounds = array<i64: 1, 1, 1>, scalar_prefetch = 0 : i64, scratch_operands = 1 : i64, tpu.core_type = #tpu.core_type<tc>, window_params = [{transform_indices = @transform_0, window_bounds = array<i64: 2, 1152>}, {transform_indices = @transform_1, window_bounds = array<i64: 1152, 128>}, {transform_indices = @transform_2, window_bounds = array<i64: 2, 128>}, {transform_indices = @transform_3, window_bounds = array<i64: 8, 128>}, {transform_indices = @transform_4, window_bounds = array<i64: 8, 128>}]} {
    %c0_i32 = arith.constant 0 : i32
    %0 = arith.cmpi eq, %arg2, %c0_i32 : i32
    %1 = arith.extui %0 : i1 to i32
    %c0_i32_0 = arith.constant 0 : i32
    %2 = arith.cmpi ne, %1, %c0_i32_0 : i32
    scf.if %2 {
      %cst_10 = arith.constant 0.000000e+00 : f32
      %12 = vector.broadcast %cst_10 : f32 to vector<2x128xf32>
      %c0_11 = arith.constant 0 : index
      %c0_12 = arith.constant 0 : index
      %13 = vector.load %arg8[%c0_11, %c0_12] : memref<2x128xf32, #tpu.memory_space<vmem>>, vector<2x128xf32>
      tpu.vector_store %arg8[%c0_11, %c0_12], %12 {strides = array<i32>} : memref<2x128xf32, #tpu.memory_space<vmem>>, vector<2x128xf32>,
    } else {
    }
    %c0 = arith.constant 0 : index
    %c0_1 = arith.constant 0 : index
    %3 = vector.load %arg8[%c0, %c0_1] : memref<2x128xf32, #tpu.memory_space<vmem>>, vector<2x128xf32>
    %c0_2 = arith.constant 0 : index
    %c0_3 = arith.constant 0 : index
    %4 = vector.load %arg3[%c0_2, %c0_3] : memref<2x1152xbf16, #tpu.memory_space<vmem>>, vector<2x1152xbf16>
    %c0_4 = arith.constant 0 : index
    %c0_5 = arith.constant 0 : index
    %5 = vector.load %arg4[%c0_4, %c0_5] : memref<1152x128xbf16, #tpu.memory_space<vmem>>, vector<1152x128xbf16>
    %cst = arith.constant dense<0.000000e+00> : vector<2x128xf32>
    %6 = tpu.matmul %4, %5, %cst {dimension_numbers = #tpu.dot_dimension_numbers<[1], [0], [0], [1], [0, 0, 1, 1], [], []>} : vector<2x1152xbf16>, vector<1152x128xbf16>, vector<2x128xf32> -> vector<2x128xf32>
    %7 = arith.addf %3, %6 : vector<2x128xf32>
    %c0_6 = arith.constant 0 : index
    %c0_7 = arith.constant 0 : index
    %8 = vector.load %arg8[%c0_6, %c0_7] : memref<2x128xf32, #tpu.memory_space<vmem>>, vector<2x128xf32>
    tpu.vector_store %arg8[%c0_6, %c0_7], %7 {strides = array<i32>} : memref<2x128xf32, #tpu.memory_space<vmem>>, vector<2x128xf32>,
    %c0_i32_8 = arith.constant 0 : i32
    %9 = arith.cmpi eq, %arg2, %c0_i32_8 : i32
    %10 = arith.extui %9 : i1 to i32
    %c0_i32_9 = arith.constant 0 : i32
    %11 = arith.cmpi ne, %10, %c0_i32_9 : i32
    scf.if %11 {
      %c0_10 = arith.constant 0 : index
      %c0_11 = arith.constant 0 : index
      %12 = vector.load %arg8[%c0_10, %c0_11] : memref<2x128xf32, #tpu.memory_space<vmem>>, vector<2x128xf32>
      %13 = arith.truncf %12 : vector<2x128xf32> to vector<2x128xbf16>
      %c0_12 = arith.constant 0 : index
      %c0_13 = arith.constant 0 : index
      %14 = vector.load %arg5[%c0_12, %c0_13] : memref<2x128xbf16, #tpu.memory_space<vmem>>, vector<2x128xbf16>
      tpu.vector_store %arg5[%c0_12, %c0_13], %13 {strides = array<i32>} : memref<2x128xbf16, #tpu.memory_space<vmem>>, vector<2x128xbf16>,
      %15 = tpu.iota {dimensions = array<i32: 0>} : vector<8x128xi32>
      %c0_i32_14 = arith.constant 0 : i32
      %16 = vector.broadcast %c0_i32_14 : i32 to vector<8x128xi32>
      %17 = arith.cmpi eq, %15, %16 : vector<8x128xi32>
      %cst_15 = arith.constant dense<0.000000e+00> : vector<128xf32>
      %18 = vector.multi_reduction <add>, %12, %cst_15 [0] : vector<2x128xf32> to vector<128xf32>
      %19 = vector.shape_cast %18 : vector<128xf32> to vector<1x128xf32>
      %20 = arith.mulf %12, %12 : vector<2x128xf32>
      %cst_16 = arith.constant dense<0.000000e+00> : vector<128xf32>
      %21 = vector.multi_reduction <add>, %20, %cst_16 [0] : vector<2x128xf32> to vector<128xf32>
      %22 = vector.shape_cast %21 : vector<128xf32> to vector<1x128xf32>
      %cst_17 = arith.constant 0.000000e+00 : f32
      %23 = vector.shape_cast %19 : vector<1x128xf32> to vector<1x128xf32>
      %24 = vector.broadcast %23 : vector<1x128xf32> to vector<8x128xf32>
      %25 = vector.broadcast %cst_17 : f32 to vector<8x128xf32>
      %26 = arith.select %17, %24, %25 : vector<8x128xi1>, vector<8x128xf32>
      %c0_18 = arith.constant 0 : index
      %c0_19 = arith.constant 0 : index
      %27 = vector.load %arg6[%c0_18, %c0_19] : memref<8x128xf32, #tpu.memory_space<vmem>>, vector<8x128xf32>
      tpu.vector_store %arg6[%c0_18, %c0_19], %26 {strides = array<i32>} : memref<8x128xf32, #tpu.memory_space<vmem>>, vector<8x128xf32>,
      %cst_20 = arith.constant 0.000000e+00 : f32
      %28 = vector.shape_cast %22 : vector<1x128xf32> to vector<1x128xf32>
      %29 = vector.broadcast %28 : vector<1x128xf32> to vector<8x128xf32>
      %30 = vector.broadcast %cst_20 : f32 to vector<8x128xf32>
      %31 = arith.select %17, %29, %30 : vector<8x128xi1>, vector<8x128xf32>
      %c0_21 = arith.constant 0 : index
      %c0_22 = arith.constant 0 : index
      %32 = vector.load %arg7[%c0_21, %c0_22] : memref<8x128xf32, #tpu.memory_space<vmem>>, vector<8x128xf32>
      tpu.vector_store %arg7[%c0_21, %c0_22], %31 {strides = array<i32>} : memref<8x128xf32, #tpu.memory_space<vmem>>, vector<8x128xf32>,
    } else {
    }
    return
  }
  func.func @transform_0(%arg0: i32, %arg1: i32, %arg2: i32) -> (i32, i32) {
    %c0_i32 = arith.constant 0 : i32
    return %arg0, %arg2 : i32, i32
  }
  func.func @transform_1(%arg0: i32, %arg1: i32, %arg2: i32) -> (i32, i32) {
    %c0_i32 = arith.constant 0 : i32
    return %arg2, %arg1 : i32, i32
  }
  func.func @transform_2(%arg0: i32, %arg1: i32, %arg2: i32) -> (i32, i32) {
    %c0_i32 = arith.constant 0 : i32
    return %arg0, %arg1 : i32, i32
  }
  func.func @transform_3(%arg0: i32, %arg1: i32, %arg2: i32) -> (i32, i32) {
    %c0_i32 = arith.constant 0 : i32
    return %arg0, %arg1 : i32, i32
  }
  func.func @transform_4(%arg0: i32, %arg1: i32, %arg2: i32) -> (i32, i32) {
    %c0_i32 = arith.constant 0 : i32
    return %arg0, %arg1 : i32, i32
  }
}

module attributes {stable_mosaic.version = 11 : i64} {
  func.func @_mm_stats_kernel(%arg0: i32, %arg1: i32, %arg2: i32, %arg3: memref<2x64xbf16, #tpu.memory_space<vmem>>, %arg4: memref<64x128xbf16, #tpu.memory_space<vmem>>, %arg5: memref<2x128xbf16, #tpu.memory_space<vmem>>, %arg6: memref<8x128xf32, #tpu.memory_space<vmem>>, %arg7: memref<8x128xf32, #tpu.memory_space<vmem>>, %arg8: memref<2x128xf32, #tpu.memory_space<vmem>>) attributes {dimension_semantics = [#tpu.dimension_semantics<parallel>, #tpu.dimension_semantics<parallel>, #tpu.dimension_semantics<arbitrary>], iteration_bounds = array<i64: 1, 1, 1>, scalar_prefetch = 0 : i64, scratch_operands = 1 : i64, tpu.core_type = #tpu.core_type<tc>, window_params = [{transform_indices = @transform_0, window_bounds = array<i64: 2, 64>}, {transform_indices = @transform_1, window_bounds = array<i64: 64, 128>}, {transform_indices = @transform_2, window_bounds = array<i64: 2, 128>}, {transform_indices = @transform_3, window_bounds = array<i64: 8, 128>}, {transform_indices = @transform_4, window_bounds = array<i64: 8, 128>}]} {
    %c0_i32 = arith.constant 0 : i32
    %0 = arith.cmpi eq, %arg2, %c0_i32 : i32
    %1 = arith.extui %0 : i1 to i32
    %c0_i32_0 = arith.constant 0 : i32
    %2 = arith.cmpi ne, %1, %c0_i32_0 : i32
    scf.if %2 {
      %cst_10 = arith.constant 0.000000e+00 : f32
      %12 = vector.broadcast %cst_10 : f32 to vector<2x128xf32>
      %c0_11 = arith.constant 0 : index
      %c0_12 = arith.constant 0 : index
      %13 = vector.load %arg8[%c0_11, %c0_12] : memref<2x128xf32, #tpu.memory_space<vmem>>, vector<2x128xf32>
      tpu.vector_store %arg8[%c0_11, %c0_12], %12 {strides = array<i32>} : memref<2x128xf32, #tpu.memory_space<vmem>>, vector<2x128xf32>,
    } else {
    }
    %c0 = arith.constant 0 : index
    %c0_1 = arith.constant 0 : index
    %3 = vector.load %arg8[%c0, %c0_1] : memref<2x128xf32, #tpu.memory_space<vmem>>, vector<2x128xf32>
    %c0_2 = arith.constant 0 : index
    %c0_3 = arith.constant 0 : index
    %4 = vector.load %arg3[%c0_2, %c0_3] : memref<2x64xbf16, #tpu.memory_space<vmem>>, vector<2x64xbf16>
    %c0_4 = arith.constant 0 : index
    %c0_5 = arith.constant 0 : index
    %5 = vector.load %arg4[%c0_4, %c0_5] : memref<64x128xbf16, #tpu.memory_space<vmem>>, vector<64x128xbf16>
    %cst = arith.constant dense<0.000000e+00> : vector<2x128xf32>
    %6 = tpu.matmul %4, %5, %cst {dimension_numbers = #tpu.dot_dimension_numbers<[1], [0], [0], [1], [0, 0, 1, 1], [], []>} : vector<2x64xbf16>, vector<64x128xbf16>, vector<2x128xf32> -> vector<2x128xf32>
    %7 = arith.addf %3, %6 : vector<2x128xf32>
    %c0_6 = arith.constant 0 : index
    %c0_7 = arith.constant 0 : index
    %8 = vector.load %arg8[%c0_6, %c0_7] : memref<2x128xf32, #tpu.memory_space<vmem>>, vector<2x128xf32>
    tpu.vector_store %arg8[%c0_6, %c0_7], %7 {strides = array<i32>} : memref<2x128xf32, #tpu.memory_space<vmem>>, vector<2x128xf32>,
    %c0_i32_8 = arith.constant 0 : i32
    %9 = arith.cmpi eq, %arg2, %c0_i32_8 : i32
    %10 = arith.extui %9 : i1 to i32
    %c0_i32_9 = arith.constant 0 : i32
    %11 = arith.cmpi ne, %10, %c0_i32_9 : i32
    scf.if %11 {
      %c0_10 = arith.constant 0 : index
      %c0_11 = arith.constant 0 : index
      %12 = vector.load %arg8[%c0_10, %c0_11] : memref<2x128xf32, #tpu.memory_space<vmem>>, vector<2x128xf32>
      %13 = arith.truncf %12 : vector<2x128xf32> to vector<2x128xbf16>
      %c0_12 = arith.constant 0 : index
      %c0_13 = arith.constant 0 : index
      %14 = vector.load %arg5[%c0_12, %c0_13] : memref<2x128xbf16, #tpu.memory_space<vmem>>, vector<2x128xbf16>
      tpu.vector_store %arg5[%c0_12, %c0_13], %13 {strides = array<i32>} : memref<2x128xbf16, #tpu.memory_space<vmem>>, vector<2x128xbf16>,
      %15 = tpu.iota {dimensions = array<i32: 0>} : vector<8x128xi32>
      %c0_i32_14 = arith.constant 0 : i32
      %16 = vector.broadcast %c0_i32_14 : i32 to vector<8x128xi32>
      %17 = arith.cmpi eq, %15, %16 : vector<8x128xi32>
      %cst_15 = arith.constant dense<0.000000e+00> : vector<128xf32>
      %18 = vector.multi_reduction <add>, %12, %cst_15 [0] : vector<2x128xf32> to vector<128xf32>
      %19 = vector.shape_cast %18 : vector<128xf32> to vector<1x128xf32>
      %20 = arith.mulf %12, %12 : vector<2x128xf32>
      %cst_16 = arith.constant dense<0.000000e+00> : vector<128xf32>
      %21 = vector.multi_reduction <add>, %20, %cst_16 [0] : vector<2x128xf32> to vector<128xf32>
      %22 = vector.shape_cast %21 : vector<128xf32> to vector<1x128xf32>
      %cst_17 = arith.constant 0.000000e+00 : f32
      %23 = vector.shape_cast %19 : vector<1x128xf32> to vector<1x128xf32>
      %24 = vector.broadcast %23 : vector<1x128xf32> to vector<8x128xf32>
      %25 = vector.broadcast %cst_17 : f32 to vector<8x128xf32>
      %26 = arith.select %17, %24, %25 : vector<8x128xi1>, vector<8x128xf32>
      %c0_18 = arith.constant 0 : index
      %c0_19 = arith.constant 0 : index
      %27 = vector.load %arg6[%c0_18, %c0_19] : memref<8x128xf32, #tpu.memory_space<vmem>>, vector<8x128xf32>
      tpu.vector_store %arg6[%c0_18, %c0_19], %26 {strides = array<i32>} : memref<8x128xf32, #tpu.memory_space<vmem>>, vector<8x128xf32>,
      %cst_20 = arith.constant 0.000000e+00 : f32
      %28 = vector.shape_cast %22 : vector<1x128xf32> to vector<1x128xf32>
      %29 = vector.broadcast %28 : vector<1x128xf32> to vector<8x128xf32>
      %30 = vector.broadcast %cst_20 : f32 to vector<8x128xf32>
      %31 = arith.select %17, %29, %30 : vector<8x128xi1>, vector<8x128xf32>
      %c0_21 = arith.constant 0 : index
      %c0_22 = arith.constant 0 : index
      %32 = vector.load %arg7[%c0_21, %c0_22] : memref<8x128xf32, #tpu.memory_space<vmem>>, vector<8x128xf32>
      tpu.vector_store %arg7[%c0_21, %c0_22], %31 {strides = array<i32>} : memref<8x128xf32, #tpu.memory_space<vmem>>, vector<8x128xf32>,
    } else {
    }
    return
  }
  func.func @transform_0(%arg0: i32, %arg1: i32, %arg2: i32) -> (i32, i32) {
    %c0_i32 = arith.constant 0 : i32
    return %arg0, %arg2 : i32, i32
  }
  func.func @transform_1(%arg0: i32, %arg1: i32, %arg2: i32) -> (i32, i32) {
    %c0_i32 = arith.constant 0 : i32
    return %arg2, %arg1 : i32, i32
  }
  func.func @transform_2(%arg0: i32, %arg1: i32, %arg2: i32) -> (i32, i32) {
    %c0_i32 = arith.constant 0 : i32
    return %arg0, %arg1 : i32, i32
  }
  func.func @transform_3(%arg0: i32, %arg1: i32, %arg2: i32) -> (i32, i32) {
    %c0_i32 = arith.constant 0 : i32
    return %arg0, %arg1 : i32, i32
  }
  func.func @transform_4(%arg0: i32, %arg1: i32, %arg2: i32) -> (i32, i32) {
    %c0_i32 = arith.constant 0 : i32
    return %arg0, %arg1 : i32, i32
  }
}

module attributes {stable_mosaic.version = 11 : i64} {
  func.func @_dual_scale_shift_add_relu_kernel(%arg0: i32, %arg1: memref<2x128xbf16, #tpu.memory_space<vmem>>, %arg2: memref<1x128xf32, #tpu.memory_space<vmem>>, %arg3: memref<1x128xf32, #tpu.memory_space<vmem>>, %arg4: memref<2x128xbf16, #tpu.memory_space<vmem>>, %arg5: memref<1x128xf32, #tpu.memory_space<vmem>>, %arg6: memref<1x128xf32, #tpu.memory_space<vmem>>, %arg7: memref<2x128xbf16, #tpu.memory_space<vmem>>) attributes {dimension_semantics = [#tpu.dimension_semantics<parallel>], iteration_bounds = array<i64: 1>, scalar_prefetch = 0 : i64, scratch_operands = 0 : i64, tpu.core_type = #tpu.core_type<tc>, window_params = [{transform_indices = @transform_0, window_bounds = array<i64: 2, 128>}, {pipeline_mode = #tpu.pipeline_mode<synchronous>, transform_indices = @transform_1, window_bounds = array<i64: 1, 128>}, {pipeline_mode = #tpu.pipeline_mode<synchronous>, transform_indices = @transform_2, window_bounds = array<i64: 1, 128>}, {transform_indices = @transform_3, window_bounds = array<i64: 2, 128>}, {pipeline_mode = #tpu.pipeline_mode<synchronous>, transform_indices = @transform_4, window_bounds = array<i64: 1, 128>}, {pipeline_mode = #tpu.pipeline_mode<synchronous>, transform_indices = @transform_5, window_bounds = array<i64: 1, 128>}, {transform_indices = @transform_6, window_bounds = array<i64: 2, 128>}]} {
    %c0 = arith.constant 0 : index
    %c0_0 = arith.constant 0 : index
    %0 = vector.load %arg1[%c0, %c0_0] : memref<2x128xbf16, #tpu.memory_space<vmem>>, vector<2x128xbf16>
    %1 = arith.extf %0 : vector<2x128xbf16> to vector<2x128xf32>
    %c0_1 = arith.constant 0 : index
    %c0_2 = arith.constant 0 : index
    %2 = vector.load %arg2[%c0_1, %c0_2] : memref<1x128xf32, #tpu.memory_space<vmem>>, vector<1x128xf32>
    %3 = vector.broadcast %2 : vector<1x128xf32> to vector<2x128xf32>
    %4 = arith.mulf %1, %3 : vector<2x128xf32>
    %c0_3 = arith.constant 0 : index
    %c0_4 = arith.constant 0 : index
    %5 = vector.load %arg3[%c0_3, %c0_4] : memref<1x128xf32, #tpu.memory_space<vmem>>, vector<1x128xf32>
    %6 = vector.broadcast %5 : vector<1x128xf32> to vector<2x128xf32>
    %7 = arith.addf %4, %6 : vector<2x128xf32>
    %c0_5 = arith.constant 0 : index
    %c0_6 = arith.constant 0 : index
    %8 = vector.load %arg4[%c0_5, %c0_6] : memref<2x128xbf16, #tpu.memory_space<vmem>>, vector<2x128xbf16>
    %9 = arith.extf %8 : vector<2x128xbf16> to vector<2x128xf32>
    %c0_7 = arith.constant 0 : index
    %c0_8 = arith.constant 0 : index
    %10 = vector.load %arg5[%c0_7, %c0_8] : memref<1x128xf32, #tpu.memory_space<vmem>>, vector<1x128xf32>
    %11 = vector.broadcast %10 : vector<1x128xf32> to vector<2x128xf32>
    %12 = arith.mulf %9, %11 : vector<2x128xf32>
    %13 = arith.addf %7, %12 : vector<2x128xf32>
    %c0_9 = arith.constant 0 : index
    %c0_10 = arith.constant 0 : index
    %14 = vector.load %arg6[%c0_9, %c0_10] : memref<1x128xf32, #tpu.memory_space<vmem>>, vector<1x128xf32>
    %15 = vector.broadcast %14 : vector<1x128xf32> to vector<2x128xf32>
    %16 = arith.addf %13, %15 : vector<2x128xf32>
    %cst = arith.constant 0.000000e+00 : f32
    %17 = vector.broadcast %cst : f32 to vector<2x128xf32>
    %18 = arith.maximumf %16, %17 : vector<2x128xf32>
    %19 = arith.truncf %18 : vector<2x128xf32> to vector<2x128xbf16>
    %c0_11 = arith.constant 0 : index
    %c0_12 = arith.constant 0 : index
    %20 = vector.load %arg7[%c0_11, %c0_12] : memref<2x128xbf16, #tpu.memory_space<vmem>>, vector<2x128xbf16>
    tpu.vector_store %arg7[%c0_11, %c0_12], %19 {strides = array<i32>} : memref<2x128xbf16, #tpu.memory_space<vmem>>, vector<2x128xbf16>,
    return
  }
  func.func @transform_0(%arg0: i32) -> (i32, i32) {
    %c0_i32 = arith.constant 0 : i32
    %c0_i32_0 = arith.constant 0 : i32
    return %arg0, %c0_i32 : i32, i32
  }
  func.func @transform_1(%arg0: i32) -> (i32, i32) {
    %c0_i32 = arith.constant 0 : i32
    %c0_i32_0 = arith.constant 0 : i32
    %c0_i32_1 = arith.constant 0 : i32
    return %c0_i32, %c0_i32_0 : i32, i32
  }
  func.func @transform_2(%arg0: i32) -> (i32, i32) {
    %c0_i32 = arith.constant 0 : i32
    %c0_i32_0 = arith.constant 0 : i32
    %c0_i32_1 = arith.constant 0 : i32
    return %c0_i32, %c0_i32_0 : i32, i32
  }
  func.func @transform_3(%arg0: i32) -> (i32, i32) {
    %c0_i32 = arith.constant 0 : i32
    %c0_i32_0 = arith.constant 0 : i32
    return %arg0, %c0_i32 : i32, i32
  }
  func.func @transform_4(%arg0: i32) -> (i32, i32) {
    %c0_i32 = arith.constant 0 : i32
    %c0_i32_0 = arith.constant 0 : i32
    %c0_i32_1 = arith.constant 0 : i32
    return %c0_i32, %c0_i32_0 : i32, i32
  }
  func.func @transform_5(%arg0: i32) -> (i32, i32) {
    %c0_i32 = arith.constant 0 : i32
    %c0_i32_0 = arith.constant 0 : i32
    %c0_i32_1 = arith.constant 0 : i32
    return %c0_i32, %c0_i32_0 : i32, i32
  }
  func.func @transform_6(%arg0: i32) -> (i32, i32) {
    %c0_i32 = arith.constant 0 : i32
    %c0_i32_0 = arith.constant 0 : i32
    return %arg0, %c0_i32 : i32, i32
  }
}

module attributes {stable_mosaic.version = 11 : i64} {
  func.func @_mm_bias_kernel(%arg0: i32, %arg1: i32, %arg2: i32, %arg3: memref<2x128xbf16, #tpu.memory_space<vmem>>, %arg4: memref<128x10xbf16, #tpu.memory_space<vmem>>, %arg5: memref<1x10xf32, #tpu.memory_space<vmem>>, %arg6: memref<2x10xf32, #tpu.memory_space<vmem>>, %arg7: memref<2x10xf32, #tpu.memory_space<vmem>>) attributes {dimension_semantics = [#tpu.dimension_semantics<parallel>, #tpu.dimension_semantics<parallel>, #tpu.dimension_semantics<arbitrary>], iteration_bounds = array<i64: 1, 1, 1>, scalar_prefetch = 0 : i64, scratch_operands = 1 : i64, tpu.core_type = #tpu.core_type<tc>, window_params = [{transform_indices = @transform_0, window_bounds = array<i64: 2, 128>}, {transform_indices = @transform_1, window_bounds = array<i64: 128, 10>}, {transform_indices = @transform_2, window_bounds = array<i64: 1, 10>}, {transform_indices = @transform_3, window_bounds = array<i64: 2, 10>}]} {
    %c0_i32 = arith.constant 0 : i32
    %0 = arith.cmpi eq, %arg2, %c0_i32 : i32
    %1 = arith.extui %0 : i1 to i32
    %c0_i32_0 = arith.constant 0 : i32
    %2 = arith.cmpi ne, %1, %c0_i32_0 : i32
    scf.if %2 {
      %cst_10 = arith.constant 0.000000e+00 : f32
      %12 = vector.broadcast %cst_10 : f32 to vector<2x10xf32>
      %c0_11 = arith.constant 0 : index
      %c0_12 = arith.constant 0 : index
      %13 = vector.load %arg7[%c0_11, %c0_12] : memref<2x10xf32, #tpu.memory_space<vmem>>, vector<2x10xf32>
      tpu.vector_store %arg7[%c0_11, %c0_12], %12 {strides = array<i32>} : memref<2x10xf32, #tpu.memory_space<vmem>>, vector<2x10xf32>,
    } else {
    }
    %c0 = arith.constant 0 : index
    %c0_1 = arith.constant 0 : index
    %3 = vector.load %arg7[%c0, %c0_1] : memref<2x10xf32, #tpu.memory_space<vmem>>, vector<2x10xf32>
    %c0_2 = arith.constant 0 : index
    %c0_3 = arith.constant 0 : index
    %4 = vector.load %arg3[%c0_2, %c0_3] : memref<2x128xbf16, #tpu.memory_space<vmem>>, vector<2x128xbf16>
    %c0_4 = arith.constant 0 : index
    %c0_5 = arith.constant 0 : index
    %5 = vector.load %arg4[%c0_4, %c0_5] : memref<128x10xbf16, #tpu.memory_space<vmem>>, vector<128x10xbf16>
    %cst = arith.constant dense<0.000000e+00> : vector<2x10xf32>
    %6 = tpu.matmul %4, %5, %cst {dimension_numbers = #tpu.dot_dimension_numbers<[1], [0], [0], [1], [0, 0, 1, 1], [], []>} : vector<2x128xbf16>, vector<128x10xbf16>, vector<2x10xf32> -> vector<2x10xf32>
    %7 = arith.addf %3, %6 : vector<2x10xf32>
    %c0_6 = arith.constant 0 : index
    %c0_7 = arith.constant 0 : index
    %8 = vector.load %arg7[%c0_6, %c0_7] : memref<2x10xf32, #tpu.memory_space<vmem>>, vector<2x10xf32>
    tpu.vector_store %arg7[%c0_6, %c0_7], %7 {strides = array<i32>} : memref<2x10xf32, #tpu.memory_space<vmem>>, vector<2x10xf32>,
    %c0_i32_8 = arith.constant 0 : i32
    %9 = arith.cmpi eq, %arg2, %c0_i32_8 : i32
    %10 = arith.extui %9 : i1 to i32
    %c0_i32_9 = arith.constant 0 : i32
    %11 = arith.cmpi ne, %10, %c0_i32_9 : i32
    scf.if %11 {
      %c0_10 = arith.constant 0 : index
      %c0_11 = arith.constant 0 : index
      %12 = vector.load %arg7[%c0_10, %c0_11] : memref<2x10xf32, #tpu.memory_space<vmem>>, vector<2x10xf32>
      %c0_12 = arith.constant 0 : index
      %c0_13 = arith.constant 0 : index
      %13 = vector.load %arg5[%c0_12, %c0_13] : memref<1x10xf32, #tpu.memory_space<vmem>>, vector<1x10xf32>
      %14 = vector.broadcast %13 : vector<1x10xf32> to vector<2x10xf32>
      %15 = arith.addf %12, %14 : vector<2x10xf32>
      %c0_14 = arith.constant 0 : index
      %c0_15 = arith.constant 0 : index
      %16 = vector.load %arg6[%c0_14, %c0_15] : memref<2x10xf32, #tpu.memory_space<vmem>>, vector<2x10xf32>
      tpu.vector_store %arg6[%c0_14, %c0_15], %15 {strides = array<i32>} : memref<2x10xf32, #tpu.memory_space<vmem>>, vector<2x10xf32>,
    } else {
    }
    return
  }
  func.func @transform_0(%arg0: i32, %arg1: i32, %arg2: i32) -> (i32, i32) {
    %c0_i32 = arith.constant 0 : i32
    return %arg0, %arg2 : i32, i32
  }
  func.func @transform_1(%arg0: i32, %arg1: i32, %arg2: i32) -> (i32, i32) {
    %c0_i32 = arith.constant 0 : i32
    return %arg2, %arg1 : i32, i32
  }
  func.func @transform_2(%arg0: i32, %arg1: i32, %arg2: i32) -> (i32, i32) {
    %c0_i32 = arith.constant 0 : i32
    %c0_i32_0 = arith.constant 0 : i32
    return %c0_i32, %arg1 : i32, i32
  }
  func.func @transform_3(%arg0: i32, %arg1: i32, %arg2: i32) -> (i32, i32) {
    %c0_i32 = arith.constant 0 : i32
    return %arg0, %arg1 : i32, i32
  }
}

</mosaic_0001>

<llo_original>
// kernel: _lambda_.24
$region0: #{_lambda_.24}
  #allocation0 [shape = 'u32[]', space=smem, size = 0x4, offset = 0x4, fixed_abs, tag = 'smem constant byte address 0x4 - core index']
  #allocation1 [shape = 'u32[144,128]{1,0:T(1,128)}', space=vmem, size = 0x12000, scoped, tag = 'internal scratch']
  %s0 = inlined_call_operand.vmem [shape: bf16[64,128], index: 0, kind: input, shape index: {}]
  %s1 = inlined_call_operand.vmem [shape: f32[1,128], index: 1, kind: input, shape index: {}]
  %s2 = inlined_call_operand.vmem [shape: f32[1,128], index: 2, kind: input, shape index: {}]
  %s3 = inlined_call_operand.vmem [shape: bf16[64,128], index: 3, kind: output, shape index: {}]
  %s4 = sld [smem:[#allocation0]]
  $region22: #{_lambda_.24} parent=0
    _
  %s6 = ssub.s32 1, %s4
  %s7 = scalar_select 0, %s6, %s4
  // Predicated region
  $region2: #{_lambda_.24} parent=0 // pred_check
    _
  $region3: #{_lambda_.24} parent=0 // pred_check_branch
    %9 = sbr.rel (0) target = $region5
  $region4: #{_lambda_.24} parent=0 // pred_region
    _
  $region5: #{_lambda_.24} parent=0 // pred_fallthru
    _
  // Predicated region
  $region6: #{_lambda_.24} parent=0 // pred_check
    _
  $region7: #{_lambda_.24} parent=0 // pred_check_branch
    %11 = sbr.rel (0) target = $region9
  $region8: #{_lambda_.24} parent=0 // pred_region
    _
  $region9: #{_lambda_.24} parent=0 // pred_fallthru
    _
  // Predicated region
  $region10: #{_lambda_.24} parent=0 // pred_check
    _
  $region11: #{_lambda_.24} parent=0 // pred_check_branch
    %13 = sbr.rel (0) target = $region13
  $region12: #{_lambda_.24} parent=0 // pred_region
    _
  $region13: #{_lambda_.24} parent=0 // pred_fallthru
    _
  %v14 = vld [vmem:[%s0] sm:$0xf]
  %v15 = vld [vmem:[%s0 + $0x4] sm:$0xf]
  %v16 = vld [vmem:[%s0 + $0x8] sm:$0xf]
  %v17 = vld [vmem:[%s0 + $0xc] sm:$0xf]
  %v18 = vld [vmem:[%s0 + $0x10] sm:$0xf]
  %v19 = vld [vmem:[%s0 + $0x14] sm:$0xf]
  %v20 = vld [vmem:[%s0 + $0x18] sm:$0xf]
  %v21 = vld [vmem:[%s0 + $0x1c] sm:$0xf]
  %v22 = vunpack.c.l.bf16 %v14
  %v23 = vunpack.c.l.bf16 %v15
  %v24 = vunpack.c.l.bf16 %v16
  %v25 = vunpack.c.l.bf16 %v17
  %v26 = vunpack.c.l.bf16 %v18
  %v27 = vunpack.c.l.bf16 %v19
  %v28 = vunpack.c.l.bf16 %v20
  %v29 = vunpack.c.l.bf16 %v21
  %v30 = vld [vmem:[%s1] sm:$0x1]
  %v32 = vlaneseq
  %v33 = vshrl.u32 %v32, 7
  %v34 = vsub.s32 0, %v33
  %v35 = vrot.slane %v30, %v34
  %v37 = vmul.f32 %v22, %v35
  %v38 = vmul.f32 %v23, %v35
  %v39 = vmul.f32 %v24, %v35
  %v40 = vmul.f32 %v25, %v35
  %v41 = vmul.f32 %v26, %v35
  %v42 = vmul.f32 %v27, %v35
  %v43 = vmul.f32 %v28, %v35
  %v44 = vmul.f32 %v29, %v35
  %v45 = vld [vmem:[%s2] sm:$0x1]
  %v47 = vlaneseq
  %v48 = vshrl.u32 %v47, 7
  %v49 = vsub.s32 0, %v48
  %v50 = vrot.slane %v45, %v49
  %v52 = vadd.f32 %v37, %v50
  %v53 = vadd.f32 %v38, %v50
  %v54 = vadd.f32 %v39, %v50
  %v55 = vadd.f32 %v40, %v50
  %v56 = vadd.f32 %v41, %v50
  %v57 = vadd.f32 %v42, %v50
  %v58 = vadd.f32 %v43, %v50
  %v59 = vadd.f32 %v44, %v50
  %v60 = vmax.f32 %v52, 0.0
  %v61 = vmax.f32 %v53, 0.0
  %v62 = vmax.f32 %v54, 0.0
  %v63 = vmax.f32 %v55, 0.0
  %v64 = vmax.f32 %v56, 0.0
  %v65 = vmax.f32 %v57, 0.0
  %v66 = vmax.f32 %v58, 0.0
  %v67 = vmax.f32 %v59, 0.0
  %v68 = vpack.c.bf16 %v61, %v60
  %v69 = vpack.c.bf16 %v63, %v62
  %v70 = vpack.c.bf16 %v65, %v64
  %v71 = vpack.c.bf16 %v67, %v66
  %v76 = vunpack.c.l.b16 %v68
  %v77 = vunpack.c.h.b16 %v68
  %v78 = vunpack.c.l.b16 %v69
  %v79 = vunpack.c.h.b16 %v69
  %v80 = vunpack.c.l.b16 %v70
  %v81 = vunpack.c.h.b16 %v70
  %v82 = vunpack.c.l.b16 %v71
  %v83 = vunpack.c.h.b16 %v71
  %v84 = vpack.c.b16 %v76, %v76
  %v85 = vpack.c.b16 %v77, %v77
  %v86 = vpack.c.b16 %v78, %v78
  %v87 = vpack.c.b16 %v79, %v79
  %v88 = vpack.c.b16 %v80, %v80
  %v89 = vpack.c.b16 %v81, %v81
  %v90 = vpack.c.b16 %v82, %v82
  %v91 = vpack.c.b16 %v83, %v83
  %100 = vst [vmem:[%s3] sm:$0xf] %v84
  %101 = vst [vmem:[%s3 + $0x4] sm:$0xf] %v85
  %102 = vst [vmem:[%s3 + $0x8] sm:$0xf] %v86
  %103 = vst [vmem:[%s3 + $0xc] sm:$0xf] %v87
  %104 = vst [vmem:[%s3 + $0x10] sm:$0xf] %v88
  %105 = vst [vmem:[%s3 + $0x14] sm:$0xf] %v89
  %106 = vst [vmem:[%s3 + $0x18] sm:$0xf] %v90
  %107 = vst [vmem:[%s3 + $0x1c] sm:$0xf] %v91
  // Predicated region
  $region14: #{_lambda_.24} parent=0 // pred_check
    _
  $region15: #{_lambda_.24} parent=0 // pred_check_branch
    %109 = sbr.rel (0) target = $region17
  $region16: #{_lambda_.24} parent=0 // pred_region
    _
  $region17: #{_lambda_.24} parent=0 // pred_fallthru
    _
  // Predicated region
  $region18: #{_lambda_.24} parent=0 // pred_check
    _
  $region19: #{_lambda_.24} parent=0 // pred_check_branch
    %111 = sbr.rel (0) target = $region21
  $region20: #{_lambda_.24} parent=0 // pred_region
    _
  $region21: #{_lambda_.24} parent=0 // pred_fallthru
    _

// kernel: _lambda_.23
$region0: #{_lambda_.23}
  #allocation0 [shape = 'u32[]', space=smem, size = 0x4, offset = 0x4, fixed_abs, tag = 'smem constant byte address 0x4 - core index']
  #allocation1 [shape = 'u32[144,128]{1,0:T(1,128)}', space=vmem, size = 0x12000, scoped, tag = 'internal scratch']
  #allocation2 [shape = 'f32[256,16]{1,0:T(8,128)}', space=vmem, size = 0x20000, scoped, tag = 'scratch operand']
  %s0 = inlined_call_operand.vmem [shape: bf16[512,147], index: 0, kind: input, shape index: {}]
  %s1 = inlined_call_operand.vmem [shape: bf16[147,16], index: 1, kind: input, shape index: {}]
  %s2 = inlined_call_operand.vmem [shape: bf16[512,16], index: 2, kind: output, shape index: {0}]
  %s3 = inlined_call_operand.vmem [shape: f32[16,16], index: 3, kind: output, shape index: {1}]
  %s4 = inlined_call_operand.vmem [shape: f32[16,16], index: 4, kind: output, shape index: {2}]
  %5 = xla_tuple %s2, %s3, %s4
  %s6 = sld [smem:[#allocation0]]
  $region65: #{_lambda_.23} parent=0
    _
  %s8 = ssub.s32 1, %s6
  %s9 = scalar_select 0, %s8, %s6
  loop: start=0, step=1, limit=4
  $region2: #{_lambda_.23} parent=0 // loop_pre_header
    _
  $region3: #{_lambda_.23} parent=0 // loop_header
    %s11 = sphi 0, %s15
    %p12 = scmp.ge.s32.totalorder %s11, 4
    %s18 = sphi 0, %s37
    %s19 = sphi 0, %s33
    %s20 = sphi 0, %s29
    %s21 = sphi 0, %s18
    %s22 = sphi 0, %s19
    %s23 = sphi 0, %s20
    %s24 = sphi 0, %s21
    %s25 = sphi 0, %s22
    %s26 = sphi 0, %s23
    %s42 = sphi 0, %s44
    %s45 = sphi 0, %s42
    %s46 = sphi 0, %s45
    %s62 = sphi 0, %s46
    %s70 = sphi 0, %s72
    %s73 = sphi 0, %s70
    %s74 = sphi 0, %s73
    %s90 = sphi 0, %s74
    %s98 = sphi 0, %s100
    %s101 = sphi 0, %s98
    %s102 = sphi 0, %s101
    %s118 = sphi 0, %s102
    %s126 = sphi 0, %s128
    %s129 = sphi 0, %s126
    %s130 = sphi 0, %s129
    %s146 = sphi 0, %s130
    %s154 = sphi 0, %s156
    %s157 = sphi 0, %s154
    %s158 = sphi 0, %s157
    %s174 = sphi 0, %s158
  $region4: #{_lambda_.23} parent=0 // loop_header_branch
    %14 = sbr.rel (%p12) target = $region8
  $region5: #{_lambda_.23} parent=0 // loop_body
    %s16 = ssub.s32 %s11, 1
    %s17 = ssub.s32 %s11, 2
    %s27 = sadd.s32 1, %s20
    %p28 = scmp.ge.s32.totalorder %s27, 1
    %s29 = scalar_select %p28, 0, %s27
    %s30 = sadd.s32 1, %s19
    %s31 = scalar_select %p28, %s30, %s19
    %p32 = scmp.ge.s32.totalorder %s31, 1
    %s33 = scalar_select %p32, 0, %s31
    %s34 = sadd.s32 1, %s18
    %s35 = scalar_select %p32, %s34, %s18
    %p36 = scmp.ge.s32.totalorder %s35, 2
    %s37 = scalar_select %p36, 0, %s35
    %s38 = ssub.s32 %s18, %s37
    %s39 = ssub.s32 %s20, %s29
    %s40 = sor.u32 %s38, %s39
    %p41 = scmp.eq.s32.totalorder %s40, 0
    %s43 = sadd.s32 %s42, 1
    %s44 = scalar_select %p41, %s42, %s43
    %p47 = pneg %p41
    %p48 = scmp.eq.s32.totalorder %s11, 1
    %p49 = por %p47, %p48
    %p50 = scmp.ne.s32.totalorder %s42, %s45
    %p51 = scmp.eq.s32.totalorder %s11, 0
    %p52 = por %p50, %p51
    %p53 = scmp.ne.s32.totalorder %s42, %s45
    %p54 = scmp.eq.s32.totalorder %s16, 1
    %p55 = por %p53, %p54
    %p56 = scmp.ne.s32.totalorder %s45, %s46
    %p57 = scmp.eq.s32.totalorder %s16, 0
    %p58 = por %p56, %p57
    %p59 = scmp.ne.s32.totalorder %s45, %s46
    %p60 = scmp.eq.s32.totalorder %s17, 1
    %p61 = por %p59, %p60
    %p63 = scmp.ne.s32.totalorder %s46, %s62
    %p64 = scmp.eq.s32.totalorder %s17, 0
    %p65 = por %p63, %p64
    %s66 = ssub.s32 %s20, %s29
    %s67 = ssub.s32 %s19, %s33
    %s68 = sor.u32 %s66, %s67
    %p69 = scmp.eq.s32.totalorder %s68, 0
    %s71 = sadd.s32 %s70, 1
    %s72 = scalar_select %p69, %s70, %s71
    %p75 = pneg %p69
    %p76 = scmp.eq.s32.totalorder %s11, 1
    %p77 = por %p75, %p76
    %p78 = scmp.ne.s32.totalorder %s70, %s73
    %p79 = scmp.eq.s32.totalorder %s11, 0
    %p80 = por %p78, %p79
    %p81 = scmp.ne.s32.totalorder %s70, %s73
    %p82 = scmp.eq.s32.totalorder %s16, 1
    %p83 = por %p81, %p82
    %p84 = scmp.ne.s32.totalorder %s73, %s74
    %p85 = scmp.eq.s32.totalorder %s16, 0
    %p86 = por %p84, %p85
    %p87 = scmp.ne.s32.totalorder %s73, %s74
    %p88 = scmp.eq.s32.totalorder %s17, 1
    %p89 = por %p87, %p88
    %p91 = scmp.ne.s32.totalorder %s74, %s90
    %p92 = scmp.eq.s32.totalorder %s17, 0
    %p93 = por %p91, %p92
    %s94 = ssub.s32 %s18, %s37
    %s95 = ssub.s32 %s19, %s33
    %s96 = sor.u32 %s94, %s95
    %p97 = scmp.eq.s32.totalorder %s96, 0
    %s99 = sadd.s32 %s98, 1
    %s100 = scalar_select %p97, %s98, %s99
    %p103 = pneg %p97
    %p104 = scmp.eq.s32.totalorder %s11, 1
    %p105 = por %p103, %p104
    %p106 = scmp.ne.s32.totalorder %s98, %s101
    %p107 = scmp.eq.s32.totalorder %s11, 0
    %p108 = por %p106, %p107
    %p109 = scmp.ne.s32.totalorder %s98, %s101
    %p110 = scmp.eq.s32.totalorder %s16, 1
    %p111 = por %p109, %p110
    %p112 = scmp.ne.s32.totalorder %s101, %s102
    %p113 = scmp.eq.s32.totalorder %s16, 0
    %p114 = por %p112, %p113
    %p115 = scmp.ne.s32.totalorder %s101, %s102
    %p116 = scmp.eq.s32.totalorder %s17, 1
    %p117 = por %p115, %p116
    %p119 = scmp.ne.s32.totalorder %s102, %s118
    %p120 = scmp.eq.s32.totalorder %s17, 0
    %p121 = por %p119, %p120
    %s122 = ssub.s32 %s18, %s37
    %s123 = ssub.s32 %s19, %s33
    %s124 = sor.u32 %s122, %s123
    %p125 = scmp.eq.s32.totalorder %s124, 0
    %s127 = sadd.s32 %s126, 1
    %s128 = scalar_select %p125, %s126, %s127
    %p131 = pneg %p125
    %p132 = scmp.eq.s32.totalorder %s11, 1
    %p133 = por %p131, %p132
    %p134 = scmp.ne.s32.totalorder %s126, %s129
    %p135 = scmp.eq.s32.totalorder %s11, 0
    %p136 = por %p134, %p135
    %p137 = scmp.ne.s32.totalorder %s126, %s129
    %p138 = scmp.eq.s32.totalorder %s16, 1
    %p139 = por %p137, %p138
    %p140 = scmp.ne.s32.totalorder %s129, %s130
    %p141 = scmp.eq.s32.totalorder %s16, 0
    %p142 = por %p140, %p141
    %p143 = scmp.ne.s32.totalorder %s129, %s130
    %p144 = scmp.eq.s32.totalorder %s17, 1
    %p145 = por %p143, %p144
    %p147 = scmp.ne.s32.totalorder %s130, %s146
    %p148 = scmp.eq.s32.totalorder %s17, 0
    %p149 = por %p147, %p148
    %s150 = ssub.s32 %s18, %s37
    %s151 = ssub.s32 %s19, %s33
    %s152 = sor.u32 %s150, %s151
    %p153 = scmp.eq.s32.totalorder %s152, 0
    %s155 = sadd.s32 %s154, 1
    %s156 = scalar_select %p153, %s154, %s155
    %p159 = pneg %p153
    %p160 = scmp.eq.s32.totalorder %s11, 1
    %p161 = por %p159, %p160
    %p162 = scmp.ne.s32.totalorder %s154, %s157
    %p163 = scmp.eq.s32.totalorder %s11, 0
    %p164 = por %p162, %p163
    %p165 = scmp.ne.s32.totalorder %s154, %s157
    %p166 = scmp.eq.s32.totalorder %s16, 1
    %p167 = por %p165, %p166
    %p168 = scmp.ne.s32.totalorder %s157, %s158
    %p169 = scmp.eq.s32.totalorder %s16, 0
    %p170 = por %p168, %p169
    %p171 = scmp.ne.s32.totalorder %s157, %s158
    %p172 = scmp.eq.s32.totalorder %s17, 1
    %p173 = por %p171, %p172
    %p175 = scmp.ne.s32.totalorder %s158, %s174
    %p176 = scmp.eq.s32.totalorder %s17, 0
    %p177 = por %p175, %p176
    %p178 = scmp.le.s32.totalorder 1, %s11
    %p179 = scmp.lt.s32.totalorder %s11, 3
    %p180 = pnand %p178, %p179
    %p181 = pneg %p180
    // Predicated region
    $region9: #{_lambda_.23} parent=5 // pred_check
      _
    $region10: #{_lambda_.23} parent=5 // pred_check_branch
      %183 = sbr.rel (%p180) target = $region12
    $region11: #{_lambda_.23} parent=5 // pred_region
      %s184 = ssub.s32 %s11, 1
      // Predicated region
      $region13: #{_lambda_.23} parent=11 // pred_check
        %p185 = pneg %p86
      $region14: #{_lambda_.23} parent=11 // pred_check_branch
        %187 = sbr.rel (%p185) target = $region16
      $region15: #{_lambda_.23} parent=11 // pred_region
        %s188 = smul.u32 19, %s23
        %p189 = scmp.lt.s32.totalorder %s188, 18
        %s190 = scalar_select %p189, %s188, 18
        %p191 = scmp.lt.s32.totalorder %s22, 0
        %s192 = scalar_select %p191, %s22, 0
        %s193 = sadd.s32 %s192, %s190
        %s194 = smul.addr %s193, 4
        %s195 = scalar_lea.vmem %s1, %s194
        %s196 = smul.u32 19, %s23
      $region16: #{_lambda_.23} parent=11 // pred_fallthru
        _
    $region12: #{_lambda_.23} parent=5 // pred_fallthru
      _
    %p197 = scmp.lt.s32.totalorder %s11, 2
    // Predicated region
    $region17: #{_lambda_.23} parent=5 // pred_check
      %p198 = pneg %p197
    $region18: #{_lambda_.23} parent=5 // pred_check_branch
      %200 = sbr.rel (%p198) target = $region20
    $region19: #{_lambda_.23} parent=5 // pred_region
      // Predicated region
      $region21: #{_lambda_.23} parent=19 // pred_check
        %p201 = pneg %p52
      $region22: #{_lambda_.23} parent=19 // pred_check_branch
        %203 = sbr.rel (%p201) target = $region24
      $region23: #{_lambda_.23} parent=19 // pred_region
        %s204 = smul.u32 32, %s18
        %s205 = smul.u32 2, %s20
        %p206 = scmp.lt.s32.totalorder %s204, 63
        %s207 = scalar_select %p206, %s204, 63
        %p208 = scmp.lt.s32.totalorder %s205, 1
        %s209 = scalar_select %p208, %s205, 1
        %s210 = smul.addr %s207, 2
        %s211 = sadd.s32 %s209, %s210
        %s212 = smul.addr %s211, 4
        %s213 = scalar_lea.vmem %s0, %s212
        %s214 = smul.u32 32, %s18
        %s215 = smul.u32 2, %s20
      $region24: #{_lambda_.23} parent=19 // pred_fallthru
        _
    $region20: #{_lambda_.23} parent=5 // pred_fallthru
      _
    %p216 = scmp.le.s32.totalorder 1, %s11
    %p217 = scmp.lt.s32.totalorder %s11, 3
    %p218 = pnand %p216, %p217
    %p219 = pneg %p218
    // Predicated region
    $region25: #{_lambda_.23} parent=5 // pred_check
      _
    $region26: #{_lambda_.23} parent=5 // pred_check_branch
      %221 = sbr.rel (%p218) target = $region28
    $region27: #{_lambda_.23} parent=5 // pred_region
      %s222 = ssub.s32 %s11, 1
      %s223 = smul.u32 32, %s21
      %s224 = smul.u32 2, %s23
      %p225 = scmp.lt.s32.totalorder %s223, 63
      %s226 = scalar_select %p225, %s223, 63
      %p227 = scmp.lt.s32.totalorder %s224, 1
      %s228 = scalar_select %p227, %s224, 1
      %s229 = smul.addr %s226, 2
      %s230 = sadd.s32 %s228, %s229
      %s231 = smul.addr %s230, 4
      %s232 = scalar_lea.vmem %s0, %s231
      %p233 = pneg %p58
      %p234 = pneg %p55
      %s235 = smul.u32 19, %s23
      %p236 = scmp.lt.s32.totalorder %s235, 18
      %s237 = scalar_select %p236, %s235, 18
      %p238 = scmp.lt.s32.totalorder %s22, 0
      %s239 = scalar_select %p238, %s22, 0
      %s240 = sadd.s32 %s239, %s237
      %s241 = smul.addr %s240, 4
      %s242 = scalar_lea.vmem %s1, %s241
      %p243 = pneg %p86
      %p244 = pneg %p83
      %p245 = pneg %p114
      %p246 = pneg %p111
      %s247 = smul.u32 32, %s21
      %p248 = scmp.lt.s32.totalorder %s247, 63
      %s249 = scalar_select %p248, %s247, 63
      %p250 = scmp.lt.s32.totalorder %s22, 0
      %s251 = scalar_select %p250, %s22, 0
      %s252 = sadd.s32 %s251, %s249
      %s253 = smul.addr %s252, 4
      %s254 = scalar_lea.vmem %s2, %s253
      %p255 = pneg %p142
      %p256 = pneg %p139
      %p257 = scmp.lt.s32.totalorder %s21, 1
      %s258 = scalar_select %p257, %s21, 1
      %p259 = scmp.lt.s32.totalorder %s22, 0
      %s260 = scalar_select %p259, %s22, 0
      %s261 = sadd.s32 %s260, %s258
      %s262 = smul.addr %s261, 8
      %s263 = scalar_lea.vmem %s3, %s262
      %p264 = pneg %p170
      %p265 = pneg %p167
      %p266 = scmp.lt.s32.totalorder %s21, 1
      %s267 = scalar_select %p266, %s21, 1
      %p268 = scmp.lt.s32.totalorder %s22, 0
      %s269 = scalar_select %p268, %s22, 0
      %s270 = sadd.s32 %s269, %s267
      %s271 = smul.addr %s270, 8
      %s272 = scalar_lea.vmem %s4, %s271
      %s273 = smul.u32 32, %s21
      %s274 = smul.u32 2, %s23
      %p275 = scmp.lt.s32.totalorder %s273, 63
      %s276 = scalar_select %p275, %s273, 63
      %p277 = scmp.lt.s32.totalorder %s274, 1
      %s278 = scalar_select %p277, %s274, 1
      %s279 = smul.addr %s276, 2
      %s280 = sadd.s32 %s278, %s279
      %s281 = smul.addr %s280, 4
      %s282 = scalar_lea.vmem %s0, %s281
      %s283 = smul.u32 32, %s21
      %s284 = smul.u32 2, %s23
      %s285 = smul.u32 19, %s23
      %p286 = scmp.lt.s32.totalorder %s285, 18
      %s287 = scalar_select %p286, %s285, 18
      %p288 = scmp.lt.s32.totalorder %s22, 0
      %s289 = scalar_select %p288, %s22, 0
      %s290 = sadd.s32 %s289, %s287
      %s291 = smul.addr %s290, 4
      %s292 = scalar_lea.vmem %s1, %s291
      %s293 = smul.u32 19, %s23
      %s294 = smul.u32 32, %s21
      %p295 = scmp.lt.s32.totalorder %s294, 63
      %s296 = scalar_select %p295, %s294, 63
      %p297 = scmp.lt.s32.totalorder %s22, 0
      %s298 = scalar_select %p297, %s22, 0
      %s299 = sadd.s32 %s298, %s296
      %s300 = smul.addr %s299, 4
      %s301 = scalar_lea.vmem %s2, %s300
      %s302 = smul.u32 32, %s21
      %p303 = scmp.lt.s32.totalorder %s21, 1
      %s304 = scalar_select %p303, %s21, 1
      %p305 = scmp.lt.s32.totalorder %s22, 0
      %s306 = scalar_select %p305, %s22, 0
      %s307 = sadd.s32 %s306, %s304
      %s308 = smul.addr %s307, 8
      %s309 = scalar_lea.vmem %s3, %s308
      %p310 = scmp.lt.s32.totalorder %s21, 1
      %s311 = scalar_select %p310, %s21, 1
      %p312 = scmp.lt.s32.totalorder %s22, 0
      %s313 = scalar_select %p312, %s22, 0
      %s314 = sadd.s32 %s313, %s311
      %s315 = smul.addr %s314, 8
      %s316 = scalar_lea.vmem %s4, %s315
      %p318 = scmp.eq.s32.totalorder %s23, 0
      // Predicated region
      $region29: #{_lambda_.23} parent=27 // pred_check
        %p319 = pneg %p318
      $region30: #{_lambda_.23} parent=27 // pred_check_branch
        %321 = sbr.rel (%p319) target = $region32
      $region31: #{_lambda_.23} parent=27 // pred_region
        %vm322 = vcmask 130048
        %323 = vst.msk [vmem:[#allocation2] sm:$0xff] %vm322, 0.0
        %324 = vst.msk [vmem:[#allocation2 + $0x8] sm:$0xff] %vm322, 0.0
        %325 = vst.msk [vmem:[#allocation2 + $0x10] sm:$0xff] %vm322, 0.0
        %326 = vst.msk [vmem:[#allocation2 + $0x18] sm:$0xff] %vm322, 0.0
        %327 = vst.msk [vmem:[#allocation2 + $0x20] sm:$0xff] %vm322, 0.0
        %328 = vst.msk [vmem:[#allocation2 + $0x28] sm:$0xff] %vm322, 0.0
        %329 = vst.msk [vmem:[#allocation2 + $0x30] sm:$0xff] %vm322, 0.0
        %330 = vst.msk [vmem:[#allocation2 + $0x38] sm:$0xff] %vm322, 0.0
        %331 = vst.msk [vmem:[#allocation2 + $0x40] sm:$0xff] %vm322, 0.0
        %332 = vst.msk [vmem:[#allocation2 + $0x48] sm:$0xff] %vm322, 0.0
        %333 = vst.msk [vmem:[#allocation2 + $0x50] sm:$0xff] %vm322, 0.0
        %334 = vst.msk [vmem:[#allocation2 + $0x58] sm:$0xff] %vm322, 0.0
        %335 = vst.msk [vmem:[#allocation2 + $0x60] sm:$0xff] %vm322, 0.0
        %336 = vst.msk [vmem:[#allocation2 + $0x68] sm:$0xff] %vm322, 0.0
        %337 = vst.msk [vmem:[#allocation2 + $0x70] sm:$0xff] %vm322, 0.0
        %338 = vst.msk [vmem:[#allocation2 + $0x78] sm:$0xff] %vm322, 0.0
        %339 = vst.msk [vmem:[#allocation2 + $0x80] sm:$0xff] %vm322, 0.0
        %340 = vst.msk [vmem:[#allocation2 + $0x88] sm:$0xff] %vm322, 0.0
        %341 = vst.msk [vmem:[#allocation2 + $0x90] sm:$0xff] %vm322, 0.0
        %342 = vst.msk [vmem:[#allocation2 + $0x98] sm:$0xff] %vm322, 0.0
        %343 = vst.msk [vmem:[#allocation2 + $0xa0] sm:$0xff] %vm322, 0.0
        %344 = vst.msk [vmem:[#allocation2 + $0xa8] sm:$0xff] %vm322, 0.0
        %345 = vst.msk [vmem:[#allocation2 + $0xb0] sm:$0xff] %vm322, 0.0
        %346 = vst.msk [vmem:[#allocation2 + $0xb8] sm:$0xff] %vm322, 0.0
        %347 = vst.msk [vmem:[#allocation2 + $0xc0] sm:$0xff] %vm322, 0.0
        %348 = vst.msk [vmem:[#allocation2 + $0xc8] sm:$0xff] %vm322, 0.0
        %349 = vst.msk [vmem:[#allocation2 + $0xd0] sm:$0xff] %vm322, 0.0
        %350 = vst.msk [vmem:[#allocation2 + $0xd8] sm:$0xff] %vm322, 0.0
        %351 = vst.msk [vmem:[#allocation2 + $0xe0] sm:$0xff] %vm322, 0.0
        %352 = vst.msk [vmem:[#allocation2 + $0xe8] sm:$0xff] %vm322, 0.0
        %353 = vst.msk [vmem:[#allocation2 + $0xf0] sm:$0xff] %vm322, 0.0
        %354 = vst.msk [vmem:[#allocation2 + $0xf8] sm:$0xff] %vm322, 0.0
      $region32: #{_lambda_.23} parent=27 // pred_fallthru
        _
      %v355 = vld [vmem:[#allocation2] sm:$0xff]
      %v356 = vld [vmem:[#allocation2 + $0x8] sm:$0xff]
      %v357 = vld [vmem:[#allocation2 + $0x10] sm:$0xff]
      %v358 = vld [vmem:[#allocation2 + $0x18] sm:$0xff]
      %v359 = vld [vmem:[#allocation2 + $0x20] sm:$0xff]
      %v360 = vld [vmem:[#allocation2 + $0x28] sm:$0xff]
      %v361 = vld [vmem:[#allocation2 + $0x30] sm:$0xff]
      %v362 = vld [vmem:[#allocation2 + $0x38] sm:$0xff]
      %v363 = vld [vmem:[#allocation2 + $0x40] sm:$0xff]
      %v364 = vld [vmem:[#allocation2 + $0x48] sm:$0xff]
      %v365 = vld [vmem:[#allocation2 + $0x50] sm:$0xff]
      %v366 = vld [vmem:[#allocation2 + $0x58] sm:$0xff]
      %v367 = vld [vmem:[#allocation2 + $0x60] sm:$0xff]
      %v368 = vld [vmem:[#allocation2 + $0x68] sm:$0xff]
      %v369 = vld [vmem:[#allocation2 + $0x70] sm:$0xff]
      %v370 = vld [vmem:[#allocation2 + $0x78] sm:$0xff]
      %v371 = vld [vmem:[#allocation2 + $0x80] sm:$0xff]
      %v372 = vld [vmem:[#allocation2 + $0x88] sm:$0xff]
      %v373 = vld [vmem:[#allocation2 + $0x90] sm:$0xff]
      %v374 = vld [vmem:[#allocation2 + $0x98] sm:$0xff]
      %v375 = vld [vmem:[#allocation2 + $0xa0] sm:$0xff]
      %v376 = vld [vmem:[#allocation2 + $0xa8] sm:$0xff]
      %v377 = vld [vmem:[#allocation2 + $0xb0] sm:$0xff]
      %v378 = vld [vmem:[#allocation2 + $0xb8] sm:$0xff]
      %v379 = vld [vmem:[#allocation2 + $0xc0] sm:$0xff]
      %v380 = vld [vmem:[#allocation2 + $0xc8] sm:$0xff]
      %v381 = vld [vmem:[#allocation2 + $0xd0] sm:$0xff]
      %v382 = vld [vmem:[#allocation2 + $0xd8] sm:$0xff]
      %v383 = vld [vmem:[#allocation2 + $0xe0] sm:$0xff]
      %v384 = vld [vmem:[#allocation2 + $0xe8] sm:$0xff]
      %v385 = vld [vmem:[#allocation2 + $0xf0] sm:$0xff]
      %v386 = vld [vmem:[#allocation2 + $0xf8] sm:$0xff]
      %v387 = vld [vmem:[%s282] sm:$0xff]
      %v388 = vld [vmem:[%s282 + $0x8] sm:$0xff]
      %v389 = vld [vmem:[%s282 + $0x10] sm:$0xff]
      %v390 = vld [vmem:[%s282 + $0x18] sm:$0xff]
      %v391 = vld [vmem:[%s282 + $0x20] sm:$0xff]
      %v392 = vld [vmem:[%s282 + $0x28] sm:$0xff]
      %v393 = vld [vmem:[%s282 + $0x30] sm:$0xff]
      %v394 = vld [vmem:[%s282 + $0x38] sm:$0xff]
      %v395 = vld [vmem:[%s282 + $0x40] sm:$0xff]
      %v396 = vld [vmem:[%s282 + $0x48] sm:$0xff]
      %v397 = vld [vmem:[%s282 + $0x50] sm:$0xff]
      %v398 = vld [vmem:[%s282 + $0x58] sm:$0xff]
      %v399 = vld [vmem:[%s282 + $0x60] sm:$0xff]
      %v400 = vld [vmem:[%s282 + $0x68] sm:$0xff]
      %v401 = vld [vmem:[%s282 + $0x70] sm:$0xff]
      %v402 = vld [vmem:[%s282 + $0x78] sm:$0xff]
      %v403 = vld [vmem:[%s282 + $0x80] sm:$0xff]
      %v404 = vld [vmem:[%s282 + $0x88] sm:$0xff]
      %v405 = vld [vmem:[%s282 + $0x90] sm:$0xff]
      %v406 = vld [vmem:[%s282 + $0x98] sm:$0xff]
      %v407 = vld [vmem:[%s282 + $0xa0] sm:$0xff]
      %v408 = vld [vmem:[%s282 + $0xa8] sm:$0xff]
      %v409 = vld [vmem:[%s282 + $0xb0] sm:$0xff]
      %v410 = vld [vmem:[%s282 + $0xb8] sm:$0xff]
      %v411 = vld [vmem:[%s282 + $0xc0] sm:$0xff]
      %v412 = vld [vmem:[%s282 + $0xc8] sm:$0xff]
      %v413 = vld [vmem:[%s282 + $0xd0] sm:$0xff]
      %v414 = vld [vmem:[%s282 + $0xd8] sm:$0xff]
      %v415 = vld [vmem:[%s282 + $0xe0] sm:$0xff]
      %v416 = vld [vmem:[%s282 + $0xe8] sm:$0xff]
      %v417 = vld [vmem:[%s282 + $0xf0] sm:$0xff]
      %v418 = vld [vmem:[%s282 + $0xf8] sm:$0xff]
      %v419 = vld [vmem:[%s292] sm:$0xf]
      %v420 = vld [vmem:[%s292 + $0x4] sm:$0xf]
      %v421 = vld [vmem:[%s292 + $0x8] sm:$0xf]
      %v422 = vld [vmem:[%s292 + $0xc] sm:$0xf]
      %v423 = vld [vmem:[%s292 + $0x10] sm:$0xf]
      %v424 = vld [vmem:[%s292 + $0x14] sm:$0xf]
      %v425 = vld [vmem:[%s292 + $0x18] sm:$0xf]
      %v426 = vld [vmem:[%s292 + $0x1c] sm:$0xf]
      %v427 = vld [vmem:[%s292 + $0x20] sm:$0xf]
      %v428 = vld [vmem:[%s292 + $0x24] sm:$0xf]
      %v429 = vld [vmem:[%s292 + $0x28] sm:$0xf]
      %v430 = vld [vmem:[%s292 + $0x2c] sm:$0xf]
      %v431 = vld [vmem:[%s292 + $0x30] sm:$0xf]
      %v432 = vld [vmem:[%s292 + $0x34] sm:$0xf]
      %v433 = vld [vmem:[%s292 + $0x38] sm:$0xf]
      %v434 = vld [vmem:[%s292 + $0x3c] sm:$0xf]
      %v435 = vld [vmem:[%s292 + $0x40] sm:$0xf]
      %v436 = vld [vmem:[%s292 + $0x44] sm:$0xf]
      %v437 = vld [vmem:[%s292 + $0x48] sm:$0x3]
      %v470 = vunpack.c.l.b16 %v387
      %v471 = vunpack.c.h.b16 %v387
      %v472 = vunpack.c.l.b16 %v388
      %v473 = vunpack.c.h.b16 %v388
      %v474 = vunpack.c.l.b16 %v389
      %v475 = vunpack.c.h.b16 %v389
      %v476 = vunpack.c.l.b16 %v390
      %v477 = vunpack.c.h.b16 %v390
      %v478 = vunpack.c.l.b16 %v391
      %v479 = vunpack.c.h.b16 %v391
      %v480 = vunpack.c.l.b16 %v392
      %v481 = vunpack.c.h.b16 %v392
      %v482 = vunpack.c.l.b16 %v393
      %v483 = vunpack.c.h.b16 %v393
      %v484 = vunpack.c.l.b16 %v394
      %v485 = vunpack.c.h.b16 %v394
      %v486 = vunpack.c.l.b16 %v395
      %v487 = vunpack.c.h.b16 %v395
      %v488 = vunpack.c.l.b16 %v396
      %v489 = vunpack.c.h.b16 %v396
      %v490 = vunpack.c.l.b16 %v397
      %v491 = vunpack.c.h.b16 %v397
      %v492 = vunpack.c.l.b16 %v398
      %v493 = vunpack.c.h.b16 %v398
      %v494 = vunpack.c.l.b16 %v399
      %v495 = vunpack.c.h.b16 %v399
      %v496 = vunpack.c.l.b16 %v400
      %v497 = vunpack.c.h.b16 %v400
      %v498 = vunpack.c.l.b16 %v401
      %v499 = vunpack.c.h.b16 %v401
      %v500 = vunpack.c.l.b16 %v402
      %v501 = vunpack.c.h.b16 %v402
      %v502 = vunpack.c.l.b16 %v403
      %v503 = vunpack.c.h.b16 %v403
      %v504 = vunpack.c.l.b16 %v404
      %v505 = vunpack.c.h.b16 %v404
      %v506 = vunpack.c.l.b16 %v405
      %v507 = vunpack.c.h.b16 %v405
      %v508 = vunpack.c.l.b16 %v406
      %v509 = vunpack.c.h.b16 %v406
      %v510 = vunpack.c.l.b16 %v407
      %v511 = vunpack.c.h.b16 %v407
      %v512 = vunpack.c.l.b16 %v408
      %v513 = vunpack.c.h.b16 %v408
      %v514 = vunpack.c.l.b16 %v409
      %v515 = vunpack.c.h.b16 %v409
      %v516 = vunpack.c.l.b16 %v410
      %v517 = vunpack.c.h.b16 %v410
      %v518 = vunpack.c.l.b16 %v411
      %v519 = vunpack.c.h.b16 %v411
      %v520 = vunpack.c.l.b16 %v412
      %v521 = vunpack.c.h.b16 %v412
      %v522 = vunpack.c.l.b16 %v413
      %v523 = vunpack.c.h.b16 %v413
      %v524 = vunpack.c.l.b16 %v414
      %v525 = vunpack.c.h.b16 %v414
      %v526 = vunpack.c.l.b16 %v415
      %v527 = vunpack.c.h.b16 %v415
      %v528 = vunpack.c.l.b16 %v416
      %v529 = vunpack.c.h.b16 %v416
      %v530 = vunpack.c.l.b16 %v417
      %v531 = vunpack.c.h.b16 %v417
      %v532 = vunpack.c.l.b16 %v418
      %v533 = vunpack.c.h.b16 %v418
      %v534 = vpack.c.b16 %v472, %v470
      %v535 = vpack.c.b16 %v473, %v471
      %v536 = vpack.c.b16 %v476, %v474
      %v537 = vpack.c.b16 %v477, %v475
      %v538 = vpack.c.b16 %v480, %v478
      %v539 = vpack.c.b16 %v481, %v479
      %v540 = vpack.c.b16 %v484, %v482
      %v541 = vpack.c.b16 %v485, %v483
      %v542 = vpack.c.b16 %v488, %v486
      %v543 = vpack.c.b16 %v489, %v487
      %v544 = vpack.c.b16 %v492, %v490
      %v545 = vpack.c.b16 %v493, %v491
      %v546 = vpack.c.b16 %v496, %v494
      %v547 = vpack.c.b16 %v497, %v495
      %v548 = vpack.c.b16 %v500, %v498
      %v549 = vpack.c.b16 %v501, %v499
      %v550 = vpack.c.b16 %v504, %v502
      %v551 = vpack.c.b16 %v505, %v503
      %v552 = vpack.c.b16 %v508, %v506
      %v553 = vpack.c.b16 %v509, %v507
      %v554 = vpack.c.b16 %v512, %v510
      %v555 = vpack.c.b16 %v513, %v511
      %v556 = vpack.c.b16 %v516, %v514
      %v557 = vpack.c.b16 %v517, %v515
      %v558 = vpack.c.b16 %v520, %v518
      %v559 = vpack.c.b16 %v521, %v519
      %v560 = vpack.c.b16 %v524, %v522
      %v561 = vpack.c.b16 %v525, %v523
      %v562 = vpack.c.b16 %v528, %v526
      %v563 = vpack.c.b16 %v529, %v527
      %v564 = vpack.c.b16 %v532, %v530
      %v565 = vpack.c.b16 %v533, %v531
      %v601 = vunpack.c.l.b16 %v419
      %v602 = vunpack.c.l.b16 %v420
      %v603 = vunpack.c.l.b16 %v421
      %v604 = vunpack.c.l.b16 %v422
      %v605 = vunpack.c.l.b16 %v423
      %v606 = vunpack.c.l.b16 %v424
      %v607 = vunpack.c.l.b16 %v425
      %v608 = vunpack.c.l.b16 %v426
      %v609 = vunpack.c.l.b16 %v427
      %v610 = vunpack.c.l.b16 %v428
      %v611 = vunpack.c.l.b16 %v429
      %v612 = vunpack.c.l.b16 %v430
      %v613 = vunpack.c.l.b16 %v431
      %v614 = vunpack.c.l.b16 %v432
      %v615 = vunpack.c.l.b16 %v433
      %v616 = vunpack.c.l.b16 %v434
      %v617 = vunpack.c.l.b16 %v435
      %v618 = vunpack.c.l.b16 %v436
      %v619 = vunpack.c.l.b16 %v437
      %v620 = vpack.c.b16 %v602, %v601
      %v621 = vpack.c.b16 %v604, %v603
      %v622 = vpack.c.b16 %v606, %v605
      %v623 = vpack.c.b16 %v608, %v607
      %v624 = vpack.c.b16 %v610, %v609
      %v625 = vpack.c.b16 %v612, %v611
      %v626 = vpack.c.b16 %v614, %v613
      %v627 = vpack.c.b16 %v616, %v615
      %v628 = vpack.c.b16 %v618, %v617
      %v629 = vpack.c.b16 %v619, %v619
      %vm639 = vcmask 154624
      %v641 = vsel %vm639, %v535, 0
      %v644 = vsel %vm639, %v537, 0
      %v647 = vsel %vm639, %v539, 0
      %v650 = vsel %vm639, %v541, 0
      %v653 = vsel %vm639, %v543, 0
      %v656 = vsel %vm639, %v545, 0
      %v659 = vsel %vm639, %v547, 0
      %v662 = vsel %vm639, %v549, 0
      %v665 = vsel %vm639, %v551, 0
      %v668 = vsel %vm639, %v553, 0
      %v671 = vsel %vm639, %v555, 0
      %v674 = vsel %vm639, %v557, 0
      %v677 = vsel %vm639, %v559, 0
      %v680 = vsel %vm639, %v561, 0
      %v683 = vsel %vm639, %v563, 0
      %v686 = vsel %vm639, %v565, 0
      %vm688 = vcmask 1040384
      %vm689 = vcmask 1041408
      %v690 = vsel %vm688, 4294967295, 65535
      %v691 = vsel %vm689, %v690, 0
      %v693 = vand.u32 %v629, %v691
      %695 = vmatprep.subr.bf16.mxu0 0
      %696 = vmatpush1.bf16.msra.mxu0 %v627
      %697 = vmatprep.subr.bf16.mxu0 0
      %698 = vmatpush1.bf16.msra.mxu0 %v626
      %699 = vmatprep.subr.bf16.mxu0 0
      %700 = vmatpush1.bf16.msra.mxu0 %v625
      %701 = vmatprep.subr.bf16.mxu0 0
      %702 = vmatpush1.bf16.msra.mxu0 %v624
      %703 = vmatprep.subr.bf16.mxu0 0
      %704 = vmatpush1.bf16.msra.mxu0 %v623
      %705 = vmatprep.subr.bf16.mxu0 0
      %706 = vmatpush1.bf16.msra.mxu0 %v622
      %707 = vmatprep.subr.bf16.mxu0 0
      %708 = vmatpush1.bf16.msra.mxu0 %v621
      %709 = vmatprep.subr.bf16.mxu0 0
      %710 = vmatpush1.bf16.msra.mxu0 %v620
      %711 = vmatprep.subr.bf16.mxu0 0
      %712 = vmatpush2.bf16.msra.mxu0 0
      %713 = vmatprep.subr.bf16.mxu0 0
      %714 = vmatpush2.bf16.msra.mxu0 0
      %715 = vmatprep.subr.bf16.mxu0 0
      %716 = vmatpush2.bf16.msra.mxu0 0
      %717 = vmatprep.subr.bf16.mxu0 0
      %718 = vmatpush2.bf16.msra.mxu0 0
      %719 = vmatprep.subr.bf16.mxu0 0
      %720 = vmatpush2.bf16.msra.mxu0 0
      %721 = vmatprep.subr.bf16.mxu0 0
      %722 = vmatpush2.bf16.msra.mxu0 0
      %723 = vmatprep.subr.bf16.mxu0 0
      %724 = vmatpush2.bf16.msra.mxu0 %v693
      %725 = vmatprep.subr.bf16.mxu0 0
      %726 = vmatpush2.bf16.msra.mxu0 %v628
      %727 = vmatprep.mubr.bf16.mxu0 %v641
      %728 = vmatmul.mubr.bf16.gmra.mxu0 %v534
      %v729 = vpop.f32.mrf.mxu0
      %v730 = vadd.f32 0.0, %v729
      %v731 = vpop.f32.mrf.mxu0
      %v732 = vpop.f32.mrf.mxu0
      %v733 = vadd.f32 0.0, %v732
      %v734 = vpop.f32.mrf.mxu0
      %735 = vmatprep.mubr.bf16.mxu0 %v644
      %736 = vmatmul.mubr.bf16.gmra.mxu0 %v536
      %v737 = vpop.f32.mrf.mxu0
      %v738 = vadd.f32 0.0, %v737
      %v739 = vpop.f32.mrf.mxu0
      %v740 = vpop.f32.mrf.mxu0
      %v741 = vadd.f32 0.0, %v740
      %v742 = vpop.f32.mrf.mxu0
      %743 = vmatprep.mubr.bf16.mxu0 %v647
      %744 = vmatmul.mubr.bf16.gmra.mxu0 %v538
      %v745 = vpop.f32.mrf.mxu0
      %v746 = vadd.f32 0.0, %v745
      %v747 = vpop.f32.mrf.mxu0
      %v748 = vpop.f32.mrf.mxu0
      %v749 = vadd.f32 0.0, %v748
      %v750 = vpop.f32.mrf.mxu0
      %751 = vmatprep.mubr.bf16.mxu0 %v650
      %752 = vmatmul.mubr.bf16.gmra.mxu0 %v540
      %v753 = vpop.f32.mrf.mxu0
      %v754 = vadd.f32 0.0, %v753
      %v755 = vpop.f32.mrf.mxu0
      %v756 = vpop.f32.mrf.mxu0
      %v757 = vadd.f32 0.0, %v756
      %v758 = vpop.f32.mrf.mxu0
      %759 = vmatprep.mubr.bf16.mxu0 %v653
      %760 = vmatmul.mubr.bf16.gmra.mxu0 %v542
      %v761 = vpop.f32.mrf.mxu0
      %v762 = vadd.f32 0.0, %v761
      %v763 = vpop.f32.mrf.mxu0
      %v764 = vpop.f32.mrf.mxu0
      %v765 = vadd.f32 0.0, %v764
      %v766 = vpop.f32.mrf.mxu0
      %767 = vmatprep.mubr.bf16.mxu0 %v656
      %768 = vmatmul.mubr.bf16.gmra.mxu0 %v544
      %v769 = vpop.f32.mrf.mxu0
      %v770 = vadd.f32 0.0, %v769
      %v771 = vpop.f32.mrf.mxu0
      %v772 = vpop.f32.mrf.mxu0
      %v773 = vadd.f32 0.0, %v772
      %v774 = vpop.f32.mrf.mxu0
      %775 = vmatprep.mubr.bf16.mxu0 %v659
      %776 = vmatmul.mubr.bf16.gmra.mxu0 %v546
      %v777 = vpop.f32.mrf.mxu0
      %v778 = vadd.f32 0.0, %v777
      %v779 = vpop.f32.mrf.mxu0
      %v780 = vpop.f32.mrf.mxu0
      %v781 = vadd.f32 0.0, %v780
      %v782 = vpop.f32.mrf.mxu0
      %783 = vmatprep.mubr.bf16.mxu0 %v662
      %784 = vmatmul.mubr.bf16.gmra.mxu0 %v548
      %v785 = vpop.f32.mrf.mxu0
      %v786 = vadd.f32 0.0, %v785
      %v787 = vpop.f32.mrf.mxu0
      %v788 = vpop.f32.mrf.mxu0
      %v789 = vadd.f32 0.0, %v788
      %v790 = vpop.f32.mrf.mxu0
      %791 = vmatprep.mubr.bf16.mxu0 %v665
      %792 = vmatmul.mubr.bf16.gmra.mxu0 %v550
      %v793 = vpop.f32.mrf.mxu0
      %v794 = vadd.f32 0.0, %v793
      %v795 = vpop.f32.mrf.mxu0
      %v796 = vpop.f32.mrf.mxu0
      %v797 = vadd.f32 0.0, %v796
      %v798 = vpop.f32.mrf.mxu0
      %799 = vmatprep.mubr.bf16.mxu0 %v668
      %800 = vmatmul.mubr.bf16.gmra.mxu0 %v552
      %v801 = vpop.f32.mrf.mxu0
      %v802 = vadd.f32 0.0, %v801
      %v803 = vpop.f32.mrf.mxu0
      %v804 = vpop.f32.mrf.mxu0
      %v805 = vadd.f32 0.0, %v804
      %v806 = vpop.f32.mrf.mxu0
      %807 = vmatprep.mubr.bf16.mxu0 %v671
      %808 = vmatmul.mubr.bf16.gmra.mxu0 %v554
      %v809 = vpop.f32.mrf.mxu0
      %v810 = vadd.f32 0.0, %v809
      %v811 = vpop.f32.mrf.mxu0
      %v812 = vpop.f32.mrf.mxu0
      %v813 = vadd.f32 0.0, %v812
      %v814 = vpop.f32.mrf.mxu0
      %815 = vmatprep.mubr.bf16.mxu0 %v674
      %816 = vmatmul.mubr.bf16.gmra.mxu0 %v556
      %v817 = vpop.f32.mrf.mxu0
      %v818 = vadd.f32 0.0, %v817
      %v819 = vpop.f32.mrf.mxu0
      %v820 = vpop.f32.mrf.mxu0
      %v821 = vadd.f32 0.0, %v820
      %v822 = vpop.f32.mrf.mxu0
      %823 = vmatprep.mubr.bf16.mxu0 %v677
      %824 = vmatmul.mubr.bf16.gmra.mxu0 %v558
      %v825 = vpop.f32.mrf.mxu0
      %v826 = vadd.f32 0.0, %v825
      %v827 = vpop.f32.mrf.mxu0
      %v828 = vpop.f32.mrf.mxu0
      %v829 = vadd.f32 0.0, %v828
      %v830 = vpop.f32.mrf.mxu0
      %831 = vmatprep.mubr.bf16.mxu0 %v680
      %832 = vmatmul.mubr.bf16.gmra.mxu0 %v560
      %v833 = vpop.f32.mrf.mxu0
      %v834 = vadd.f32 0.0, %v833
      %v835 = vpop.f32.mrf.mxu0
      %v836 = vpop.f32.mrf.mxu0
      %v837 = vadd.f32 0.0, %v836
      %v838 = vpop.f32.mrf.mxu0
      %839 = vmatprep.mubr.bf16.mxu0 %v683
      %840 = vmatmul.mubr.bf16.gmra.mxu0 %v562
      %v841 = vpop.f32.mrf.mxu0
      %v842 = vadd.f32 0.0, %v841
      %v843 = vpop.f32.mrf.mxu0
      %v844 = vpop.f32.mrf.mxu0
      %v845 = vadd.f32 0.0, %v844
      %v846 = vpop.f32.mrf.mxu0
      %847 = vmatprep.mubr.bf16.mxu0 %v686
      %848 = vmatmul.mubr.bf16.gmra.mxu0 %v564
      %v849 = vpop.f32.mrf.mxu0
      %v850 = vadd.f32 0.0, %v849
      %v851 = vpop.f32.mrf.mxu0
      %v852 = vpop.f32.mrf.mxu0
      %v853 = vadd.f32 0.0, %v852
      %v854 = vpop.f32.mrf.mxu0
      %855 = vdwg.mxu0
      %v856 = vadd.f32 %v355, %v730
      %v857 = vadd.f32 %v356, %v733
      %v858 = vadd.f32 %v357, %v738
      %v859 = vadd.f32 %v358, %v741
      %v860 = vadd.f32 %v359, %v746
      %v861 = vadd.f32 %v360, %v749
      %v862 = vadd.f32 %v361, %v754
      %v863 = vadd.f32 %v362, %v757
      %v864 = vadd.f32 %v363, %v762
      %v865 = vadd.f32 %v364, %v765
      %v866 = vadd.f32 %v365, %v770
      %v867 = vadd.f32 %v366, %v773
      %v868 = vadd.f32 %v367, %v778
      %v869 = vadd.f32 %v368, %v781
      %v870 = vadd.f32 %v369, %v786
      %v871 = vadd.f32 %v370, %v789
      %v872 = vadd.f32 %v371, %v794
      %v873 = vadd.f32 %v372, %v797
      %v874 = vadd.f32 %v373, %v802
      %v875 = vadd.f32 %v374, %v805
      %v876 = vadd.f32 %v375, %v810
      %v877 = vadd.f32 %v376, %v813
      %v878 = vadd.f32 %v377, %v818
      %v879 = vadd.f32 %v378, %v821
      %v880 = vadd.f32 %v379, %v826
      %v881 = vadd.f32 %v380, %v829
      %v882 = vadd.f32 %v381, %v834
      %v883 = vadd.f32 %v382, %v837
      %v884 = vadd.f32 %v383, %v842
      %v885 = vadd.f32 %v384, %v845
      %v886 = vadd.f32 %v385, %v850
      %v887 = vadd.f32 %v386, %v853
      %vm888 = vcmask 130048
      %889 = vst.msk [vmem:[#allocation2] sm:$0xff] %vm888, %v856
      %890 = vst.msk [vmem:[#allocation2 + $0x8] sm:$0xff] %vm888, %v857
      %891 = vst.msk [vmem:[#allocation2 + $0x10] sm:$0xff] %vm888, %v858
      %892 = vst.msk [vmem:[#allocation2 + $0x18] sm:$0xff] %vm888, %v859
      %893 = vst.msk [vmem:[#allocation2 + $0x20] sm:$0xff] %vm888, %v860
      %894 = vst.msk [vmem:[#allocation2 + $0x28] sm:$0xff] %vm888, %v861
      %895 = vst.msk [vmem:[#allocation2 + $0x30] sm:$0xff] %vm888, %v862
      %896 = vst.msk [vmem:[#allocation2 + $0x38] sm:$0xff] %vm888, %v863
      %897 = vst.msk [vmem:[#allocation2 + $0x40] sm:$0xff] %vm888, %v864
      %898 = vst.msk [vmem:[#allocation2 + $0x48] sm:$0xff] %vm888, %v865
      %899 = vst.msk [vmem:[#allocation2 + $0x50] sm:$0xff] %vm888, %v866
      %900 = vst.msk [vmem:[#allocation2 + $0x58] sm:$0xff] %vm888, %v867
      %901 = vst.msk [vmem:[#allocation2 + $0x60] sm:$0xff] %vm888, %v868
      %902 = vst.msk [vmem:[#allocation2 + $0x68] sm:$0xff] %vm888, %v869
      %903 = vst.msk [vmem:[#allocation2 + $0x70] sm:$0xff] %vm888, %v870
      %904 = vst.msk [vmem:[#allocation2 + $0x78] sm:$0xff] %vm888, %v871
      %905 = vst.msk [vmem:[#allocation2 + $0x80] sm:$0xff] %vm888, %v872
      %906 = vst.msk [vmem:[#allocation2 + $0x88] sm:$0xff] %vm888, %v873
      %907 = vst.msk [vmem:[#allocation2 + $0x90] sm:$0xff] %vm888, %v874
      %908 = vst.msk [vmem:[#allocation2 + $0x98] sm:$0xff] %vm888, %v875
      %909 = vst.msk [vmem:[#allocation2 + $0xa0] sm:$0xff] %vm888, %v876
      %910 = vst.msk [vmem:[#allocation2 + $0xa8] sm:$0xff] %vm888, %v877
      %911 = vst.msk [vmem:[#allocation2 + $0xb0] sm:$0xff] %vm888, %v878
      %912 = vst.msk [vmem:[#allocation2 + $0xb8] sm:$0xff] %vm888, %v879
      %913 = vst.msk [vmem:[#allocation2 + $0xc0] sm:$0xff] %vm888, %v880
      %914 = vst.msk [vmem:[#allocation2 + $0xc8] sm:$0xff] %vm888, %v881
      %915 = vst.msk [vmem:[#allocation2 + $0xd0] sm:$0xff] %vm888, %v882
      %916 = vst.msk [vmem:[#allocation2 + $0xd8] sm:$0xff] %vm888, %v883
      %917 = vst.msk [vmem:[#allocation2 + $0xe0] sm:$0xff] %vm888, %v884
      %918 = vst.msk [vmem:[#allocation2 + $0xe8] sm:$0xff] %vm888, %v885
      %919 = vst.msk [vmem:[#allocation2 + $0xf0] sm:$0xff] %vm888, %v886
      %920 = vst.msk [vmem:[#allocation2 + $0xf8] sm:$0xff] %vm888, %v887
      // Predicated region
      $region33: #{_lambda_.23} parent=27 // pred_check
        %p921 = pneg %p318
      $region34: #{_lambda_.23} parent=27 // pred_check_branch
        %923 = sbr.rel (%p921) target = $region36
      $region35: #{_lambda_.23} parent=27 // pred_region
        %v924 = vld [vmem:[#allocation2] sm:$0xff]
        %v925 = vld [vmem:[#allocation2 + $0x8] sm:$0xff]
        %v926 = vld [vmem:[#allocation2 + $0x10] sm:$0xff]
        %v927 = vld [vmem:[#allocation2 + $0x18] sm:$0xff]
        %v928 = vld [vmem:[#allocation2 + $0x20] sm:$0xff]
        %v929 = vld [vmem:[#allocation2 + $0x28] sm:$0xff]
        %v930 = vld [vmem:[#allocation2 + $0x30] sm:$0xff]
        %v931 = vld [vmem:[#allocation2 + $0x38] sm:$0xff]
        %v932 = vld [vmem:[#allocation2 + $0x40] sm:$0xff]
        %v933 = vld [vmem:[#allocation2 + $0x48] sm:$0xff]
        %v934 = vld [vmem:[#allocation2 + $0x50] sm:$0xff]
        %v935 = vld [vmem:[#allocation2 + $0x58] sm:$0xff]
        %v936 = vld [vmem:[#allocation2 + $0x60] sm:$0xff]
        %v937 = vld [vmem:[#allocation2 + $0x68] sm:$0xff]
        %v938 = vld [vmem:[#allocation2 + $0x70] sm:$0xff]
        %v939 = vld [vmem:[#allocation2 + $0x78] sm:$0xff]
        %v940 = vld [vmem:[#allocation2 + $0x80] sm:$0xff]
        %v941 = vld [vmem:[#allocation2 + $0x88] sm:$0xff]
        %v942 = vld [vmem:[#allocation2 + $0x90] sm:$0xff]
        %v943 = vld [vmem:[#allocation2 + $0x98] sm:$0xff]
        %v944 = vld [vmem:[#allocation2 + $0xa0] sm:$0xff]
        %v945 = vld [vmem:[#allocation2 + $0xa8] sm:$0xff]
        %v946 = vld [vmem:[#allocation2 + $0xb0] sm:$0xff]
        %v947 = vld [vmem:[#allocation2 + $0xb8] sm:$0xff]
        %v948 = vld [vmem:[#allocation2 + $0xc0] sm:$0xff]
        %v949 = vld [vmem:[#allocation2 + $0xc8] sm:$0xff]
        %v950 = vld [vmem:[#allocation2 + $0xd0] sm:$0xff]
        %v951 = vld [vmem:[#allocation2 + $0xd8] sm:$0xff]
        %v952 = vld [vmem:[#allocation2 + $0xe0] sm:$0xff]
        %v953 = vld [vmem:[#allocation2 + $0xe8] sm:$0xff]
        %v954 = vld [vmem:[#allocation2 + $0xf0] sm:$0xff]
        %v955 = vld [vmem:[#allocation2 + $0xf8] sm:$0xff]
        %v956 = vpack.c.bf16 %v925, %v924
        %v957 = vpack.c.bf16 %v927, %v926
        %v958 = vpack.c.bf16 %v929, %v928
        %v959 = vpack.c.bf16 %v931, %v930
        %v960 = vpack.c.bf16 %v933, %v932
        %v961 = vpack.c.bf16 %v935, %v934
        %v962 = vpack.c.bf16 %v937, %v936
        %v963 = vpack.c.bf16 %v939, %v938
        %v964 = vpack.c.bf16 %v941, %v940
        %v965 = vpack.c.bf16 %v943, %v942
        %v966 = vpack.c.bf16 %v945, %v944
        %v967 = vpack.c.bf16 %v947, %v946
        %v968 = vpack.c.bf16 %v949, %v948
        %v969 = vpack.c.bf16 %v951, %v950
        %v970 = vpack.c.bf16 %v953, %v952
        %v971 = vpack.c.bf16 %v955, %v954
        %v988 = vunpack.c.l.b16 %v956
        %v989 = vunpack.c.h.b16 %v956
        %v990 = vunpack.c.l.b16 %v957
        %v991 = vunpack.c.h.b16 %v957
        %v992 = vunpack.c.l.b16 %v958
        %v993 = vunpack.c.h.b16 %v958
        %v994 = vunpack.c.l.b16 %v959
        %v995 = vunpack.c.h.b16 %v959
        %v996 = vunpack.c.l.b16 %v960
        %v997 = vunpack.c.h.b16 %v960
        %v998 = vunpack.c.l.b16 %v961
        %v999 = vunpack.c.h.b16 %v961
        %v1000 = vunpack.c.l.b16 %v962
        %v1001 = vunpack.c.h.b16 %v962
        %v1002 = vunpack.c.l.b16 %v963
        %v1003 = vunpack.c.h.b16 %v963
        %v1004 = vunpack.c.l.b16 %v964
        %v1005 = vunpack.c.h.b16 %v964
        %v1006 = vunpack.c.l.b16 %v965
        %v1007 = vunpack.c.h.b16 %v965
        %v1008 = vunpack.c.l.b16 %v966
        %v1009 = vunpack.c.h.b16 %v966
        %v1010 = vunpack.c.l.b16 %v967
        %v1011 = vunpack.c.h.b16 %v967
        %v1012 = vunpack.c.l.b16 %v968
        %v1013 = vunpack.c.h.b16 %v968
        %v1014 = vunpack.c.l.b16 %v969
        %v1015 = vunpack.c.h.b16 %v969
        %v1016 = vunpack.c.l.b16 %v970
        %v1017 = vunpack.c.h.b16 %v970
        %v1018 = vunpack.c.l.b16 %v971
        %v1019 = vunpack.c.h.b16 %v971
        %v1020 = vpack.c.b16 %v988, %v988
        %v1021 = vpack.c.b16 %v989, %v989
        %v1022 = vpack.c.b16 %v990, %v990
        %v1023 = vpack.c.b16 %v991, %v991
        %v1024 = vpack.c.b16 %v992, %v992
        %v1025 = vpack.c.b16 %v993, %v993
        %v1026 = vpack.c.b16 %v994, %v994
        %v1027 = vpack.c.b16 %v995, %v995
        %v1028 = vpack.c.b16 %v996, %v996
        %v1029 = vpack.c.b16 %v997, %v997
        %v1030 = vpack.c.b16 %v998, %v998
        %v1031 = vpack.c.b16 %v999, %v999
        %v1032 = vpack.c.b16 %v1000, %v1000
        %v1033 = vpack.c.b16 %v1001, %v1001
        %v1034 = vpack.c.b16 %v1002, %v1002
        %v1035 = vpack.c.b16 %v1003, %v1003
        %v1036 = vpack.c.b16 %v1004, %v1004
        %v1037 = vpack.c.b16 %v1005, %v1005
        %v1038 = vpack.c.b16 %v1006, %v1006
        %v1039 = vpack.c.b16 %v1007, %v1007
        %v1040 = vpack.c.b16 %v1008, %v1008
        %v1041 = vpack.c.b16 %v1009, %v1009
        %v1042 = vpack.c.b16 %v1010, %v1010
        %v1043 = vpack.c.b16 %v1011, %v1011
        %v1044 = vpack.c.b16 %v1012, %v1012
        %v1045 = vpack.c.b16 %v1013, %v1013
        %v1046 = vpack.c.b16 %v1014, %v1014
        %v1047 = vpack.c.b16 %v1015, %v1015
        %v1048 = vpack.c.b16 %v1016, %v1016
        %v1049 = vpack.c.b16 %v1017, %v1017
        %v1050 = vpack.c.b16 %v1018, %v1018
        %v1051 = vpack.c.b16 %v1019, %v1019
        %vm1084 = vcmask 125952
        %1085 = vst.msk [vmem:[%s301] sm:$0xf] %vm1084, %v1020
        %1086 = vst.msk [vmem:[%s301 + $0x4] sm:$0xf] %vm1084, %v1021
        %1087 = vst.msk [vmem:[%s301 + $0x8] sm:$0xf] %vm1084, %v1022
        %1088 = vst.msk [vmem:[%s301 + $0xc] sm:$0xf] %vm1084, %v1023
        %1089 = vst.msk [vmem:[%s301 + $0x10] sm:$0xf] %vm1084, %v1024
        %1090 = vst.msk [vmem:[%s301 + $0x14] sm:$0xf] %vm1084, %v1025
        %1091 = vst.msk [vmem:[%s301 + $0x18] sm:$0xf] %vm1084, %v1026
        %1092 = vst.msk [vmem:[%s301 + $0x1c] sm:$0xf] %vm1084, %v1027
        %1093 = vst.msk [vmem:[%s301 + $0x20] sm:$0xf] %vm1084, %v1028
        %1094 = vst.msk [vmem:[%s301 + $0x24] sm:$0xf] %vm1084, %v1029
        %1095 = vst.msk [vmem:[%s301 + $0x28] sm:$0xf] %vm1084, %v1030
        %1096 = vst.msk [vmem:[%s301 + $0x2c] sm:$0xf] %vm1084, %v1031
        %1097 = vst.msk [vmem:[%s301 + $0x30] sm:$0xf] %vm1084, %v1032
        %1098 = vst.msk [vmem:[%s301 + $0x34] sm:$0xf] %vm1084, %v1033
        %1099 = vst.msk [vmem:[%s301 + $0x38] sm:$0xf] %vm1084, %v1034
        %1100 = vst.msk [vmem:[%s301 + $0x3c] sm:$0xf] %vm1084, %v1035
        %1101 = vst.msk [vmem:[%s301 + $0x40] sm:$0xf] %vm1084, %v1036
        %1102 = vst.msk [vmem:[%s301 + $0x44] sm:$0xf] %vm1084, %v1037
        %1103 = vst.msk [vmem:[%s301 + $0x48] sm:$0xf] %vm1084, %v1038
        %1104 = vst.msk [vmem:[%s301 + $0x4c] sm:$0xf] %vm1084, %v1039
        %1105 = vst.msk [vmem:[%s301 + $0x50] sm:$0xf] %vm1084, %v1040
        %1106 = vst.msk [vmem:[%s301 + $0x54] sm:$0xf] %vm1084, %v1041
        %1107 = vst.msk [vmem:[%s301 + $0x58] sm:$0xf] %vm1084, %v1042
        %1108 = vst.msk [vmem:[%s301 + $0x5c] sm:$0xf] %vm1084, %v1043
        %1109 = vst.msk [vmem:[%s301 + $0x60] sm:$0xf] %vm1084, %v1044
        %1110 = vst.msk [vmem:[%s301 + $0x64] sm:$0xf] %vm1084, %v1045
        %1111 = vst.msk [vmem:[%s301 + $0x68] sm:$0xf] %vm1084, %v1046
        %1112 = vst.msk [vmem:[%s301 + $0x6c] sm:$0xf] %vm1084, %v1047
        %1113 = vst.msk [vmem:[%s301 + $0x70] sm:$0xf] %vm1084, %v1048
        %1114 = vst.msk [vmem:[%s301 + $0x74] sm:$0xf] %vm1084, %v1049
        %1115 = vst.msk [vmem:[%s301 + $0x78] sm:$0xf] %vm1084, %v1050
        %1116 = vst.msk [vmem:[%s301 + $0x7c] sm:$0xf] %vm1084, %v1051
        %v1117 = vlaneseq
        %v1118 = vshrl.u32 %v1117, 7
        %vm1119 = vcmp.eq.s32.totalorder %v1118, 0
        %v1120 = vsel %vm888, %v924, 0.0
        %v1121 = vsel %vm888, %v925, 0.0
        %v1122 = vadd.f32 %v1120, %v1121
        %v1123 = vsel %vm888, %v926, 0.0
        %v1124 = vadd.f32 %v1122, %v1123
        %v1125 = vsel %vm888, %v927, 0.0
        %v1126 = vadd.f32 %v1124, %v1125
        %v1127 = vsel %vm888, %v928, 0.0
        %v1128 = vadd.f32 %v1126, %v1127
        %v1129 = vsel %vm888, %v929, 0.0
        %v1130 = vadd.f32 %v1128, %v1129
        %v1131 = vsel %vm888, %v930, 0.0
        %v1132 = vadd.f32 %v1130, %v1131
        %v1133 = vsel %vm888, %v931, 0.0
        %v1134 = vadd.f32 %v1132, %v1133
        %v1135 = vsel %vm888, %v932, 0.0
        %v1136 = vadd.f32 %v1134, %v1135
        %v1137 = vsel %vm888, %v933, 0.0
        %v1138 = vadd.f32 %v1136, %v1137
        %v1139 = vsel %vm888, %v934, 0.0
        %v1140 = vadd.f32 %v1138, %v1139
        %v1141 = vsel %vm888, %v935, 0.0
        %v1142 = vadd.f32 %v1140, %v1141
        %v1143 = vsel %vm888, %v936, 0.0
        %v1144 = vadd.f32 %v1142, %v1143
        %v1145 = vsel %vm888, %v937, 0.0
        %v1146 = vadd.f32 %v1144, %v1145
        %v1147 = vsel %vm888, %v938, 0.0
        %v1148 = vadd.f32 %v1146, %v1147
        %v1149 = vsel %vm888, %v939, 0.0
        %v1150 = vadd.f32 %v1148, %v1149
        %v1151 = vsel %vm888, %v940, 0.0
        %v1152 = vadd.f32 %v1150, %v1151
        %v1153 = vsel %vm888, %v941, 0.0
        %v1154 = vadd.f32 %v1152, %v1153
        %v1155 = vsel %vm888, %v942, 0.0
        %v1156 = vadd.f32 %v1154, %v1155
        %v1157 = vsel %vm888, %v943, 0.0
        %v1158 = vadd.f32 %v1156, %v1157
        %v1159 = vsel %vm888, %v944, 0.0
        %v1160 = vadd.f32 %v1158, %v1159
        %v1161 = vsel %vm888, %v945, 0.0
        %v1162 = vadd.f32 %v1160, %v1161
        %v1163 = vsel %vm888, %v946, 0.0
        %v1164 = vadd.f32 %v1162, %v1163
        %v1165 = vsel %vm888, %v947, 0.0
        %v1166 = vadd.f32 %v1164, %v1165
        %v1167 = vsel %vm888, %v948, 0.0
        %v1168 = vadd.f32 %v1166, %v1167
        %v1169 = vsel %vm888, %v949, 0.0
        %v1170 = vadd.f32 %v1168, %v1169
        %v1171 = vsel %vm888, %v950, 0.0
        %v1172 = vadd.f32 %v1170, %v1171
        %v1173 = vsel %vm888, %v951, 0.0
        %v1174 = vadd.f32 %v1172, %v1173
        %v1175 = vsel %vm888, %v952, 0.0
        %v1176 = vadd.f32 %v1174, %v1175
        %v1177 = vsel %vm888, %v953, 0.0
        %v1178 = vadd.f32 %v1176, %v1177
        %v1179 = vsel %vm888, %v954, 0.0
        %v1180 = vadd.f32 %v1178, %v1179
        %v1181 = vsel %vm888, %v955, 0.0
        %v1182 = vadd.f32 %v1180, %v1181
        %v1183 = vrot.slane %v1182, 4
        %v1184 = vadd.f32 %v1182, %v1183
        %v1185 = vrot.slane %v1184, 2
        %v1186 = vadd.f32 %v1184, %v1185
        %v1187 = vrot.slane %v1186, 1
        %v1188 = vadd.f32 %v1186, %v1187
        %v1189 = vmul.f32 %v924, %v924
        %v1190 = vmul.f32 %v925, %v925
        %v1191 = vmul.f32 %v926, %v926
        %v1192 = vmul.f32 %v927, %v927
        %v1193 = vmul.f32 %v928, %v928
        %v1194 = vmul.f32 %v929, %v929
        %v1195 = vmul.f32 %v930, %v930
        %v1196 = vmul.f32 %v931, %v931
        %v1197 = vmul.f32 %v932, %v932
        %v1198 = vmul.f32 %v933, %v933
        %v1199 = vmul.f32 %v934, %v934
        %v1200 = vmul.f32 %v935, %v935
        %v1201 = vmul.f32 %v936, %v936
        %v1202 = vmul.f32 %v937, %v937
        %v1203 = vmul.f32 %v938, %v938
        %v1204 = vmul.f32 %v939, %v939
        %v1205 = vmul.f32 %v940, %v940
        %v1206 = vmul.f32 %v941, %v941
        %v1207 = vmul.f32 %v942, %v942
        %v1208 = vmul.f32 %v943, %v943
        %v1209 = vmul.f32 %v944, %v944
        %v1210 = vmul.f32 %v945, %v945
        %v1211 = vmul.f32 %v946, %v946
        %v1212 = vmul.f32 %v947, %v947
        %v1213 = vmul.f32 %v948, %v948
        %v1214 = vmul.f32 %v949, %v949
        %v1215 = vmul.f32 %v950, %v950
        %v1216 = vmul.f32 %v951, %v951
        %v1217 = vmul.f32 %v952, %v952
        %v1218 = vmul.f32 %v953, %v953
        %v1219 = vmul.f32 %v954, %v954
        %v1220 = vmul.f32 %v955, %v955
        %v1221 = vsel %vm888, %v1189, 0.0
        %v1222 = vsel %vm888, %v1190, 0.0
        %v1223 = vadd.f32 %v1221, %v1222
        %v1224 = vsel %vm888, %v1191, 0.0
        %v1225 = vadd.f32 %v1223, %v1224
        %v1226 = vsel %vm888, %v1192, 0.0
        %v1227 = vadd.f32 %v1225, %v1226
        %v1228 = vsel %vm888, %v1193, 0.0
        %v1229 = vadd.f32 %v1227, %v1228
        %v1230 = vsel %vm888, %v1194, 0.0
        %v1231 = vadd.f32 %v1229, %v1230
        %v1232 = vsel %vm888, %v1195, 0.0
        %v1233 = vadd.f32 %v1231, %v1232
        %v1234 = vsel %vm888, %v1196, 0.0
        %v1235 = vadd.f32 %v1233, %v1234
        %v1236 = vsel %vm888, %v1197, 0.0
        %v1237 = vadd.f32 %v1235, %v1236
        %v1238 = vsel %vm888, %v1198, 0.0
        %v1239 = vadd.f32 %v1237, %v1238
        %v1240 = vsel %vm888, %v1199, 0.0
        %v1241 = vadd.f32 %v1239, %v1240
        %v1242 = vsel %vm888, %v1200, 0.0
        %v1243 = vadd.f32 %v1241, %v1242
        %v1244 = vsel %vm888, %v1201, 0.0
        %v1245 = vadd.f32 %v1243, %v1244
        %v1246 = vsel %vm888, %v1202, 0.0
        %v1247 = vadd.f32 %v1245, %v1246
        %v1248 = vsel %vm888, %v1203, 0.0
        %v1249 = vadd.f32 %v1247, %v1248
        %v1250 = vsel %vm888, %v1204, 0.0
        %v1251 = vadd.f32 %v1249, %v1250
        %v1252 = vsel %vm888, %v1205, 0.0
        %v1253 = vadd.f32 %v1251, %v1252
        %v1254 = vsel %vm888, %v1206, 0.0
        %v1255 = vadd.f32 %v1253, %v1254
        %v1256 = vsel %vm888, %v1207, 0.0
        %v1257 = vadd.f32 %v1255, %v1256
        %v1258 = vsel %vm888, %v1208, 0.0
        %v1259 = vadd.f32 %v1257, %v1258
        %v1260 = vsel %vm888, %v1209, 0.0
        %v1261 = vadd.f32 %v1259, %v1260
        %v1262 = vsel %vm888, %v1210, 0.0
        %v1263 = vadd.f32 %v1261, %v1262
        %v1264 = vsel %vm888, %v1211, 0.0
        %v1265 = vadd.f32 %v1263, %v1264
        %v1266 = vsel %vm888, %v1212, 0.0
        %v1267 = vadd.f32 %v1265, %v1266
        %v1268 = vsel %vm888, %v1213, 0.0
        %v1269 = vadd.f32 %v1267, %v1268
        %v1270 = vsel %vm888, %v1214, 0.0
        %v1271 = vadd.f32 %v1269, %v1270
        %v1272 = vsel %vm888, %v1215, 0.0
        %v1273 = vadd.f32 %v1271, %v1272
        %v1274 = vsel %vm888, %v1216, 0.0
        %v1275 = vadd.f32 %v1273, %v1274
        %v1276 = vsel %vm888, %v1217, 0.0
        %v1277 = vadd.f32 %v1275, %v1276
        %v1278 = vsel %vm888, %v1218, 0.0
        %v1279 = vadd.f32 %v1277, %v1278
        %v1280 = vsel %vm888, %v1219, 0.0
        %v1281 = vadd.f32 %v1279, %v1280
        %v1282 = vsel %vm888, %v1220, 0.0
        %v1283 = vadd.f32 %v1281, %v1282
        %v1284 = vrot.slane %v1283, 4
        %v1285 = vadd.f32 %v1283, %v1284
        %v1286 = vrot.slane %v1285, 2
        %v1287 = vadd.f32 %v1285, %v1286
        %v1288 = vrot.slane %v1287, 1
        %v1289 = vadd.f32 %v1287, %v1288
        %v1290 = vsel %vm1119, %v1188, 0.0
        %1291 = vst.msk [vmem:[%s309] sm:$0xff] %vm888, %v1290
        %v1292 = vsel %vm1119, %v1289, 0.0
        %1293 = vst.msk [vmem:[%s316] sm:$0xff] %vm888, %v1292
      $region36: #{_lambda_.23} parent=27 // pred_fallthru
        _
      %s1294 = smul.u32 32, %s21
      %p1295 = scmp.lt.s32.totalorder %s1294, 63
      %s1296 = scalar_select %p1295, %s1294, 63
      %p1297 = scmp.lt.s32.totalorder %s22, 0
      %s1298 = scalar_select %p1297, %s22, 0
      %s1299 = sadd.s32 %s1298, %s1296
      %s1300 = smul.addr %s1299, 4
      %s1301 = scalar_lea.vmem %s2, %s1300
      %p1302 = scmp.lt.s32.totalorder %s21, 1
      %s1303 = scalar_select %p1302, %s21, 1
      %p1304 = scmp.lt.s32.totalorder %s22, 0
      %s1305 = scalar_select %p1304, %s22, 0
      %s1306 = sadd.s32 %s1305, %s1303
      %s1307 = smul.addr %s1306, 8
      %s1308 = scalar_lea.vmem %s3, %s1307
      %p1309 = scmp.lt.s32.totalorder %s21, 1
      %s1310 = scalar_select %p1309, %s21, 1
      %p1311 = scmp.lt.s32.totalorder %s22, 0
      %s1312 = scalar_select %p1311, %s22, 0
      %s1313 = sadd.s32 %s1312, %s1310
      %s1314 = smul.addr %s1313, 8
      %s1315 = scalar_lea.vmem %s4, %s1314
      // Predicated region
      $region37: #{_lambda_.23} parent=27 // pred_check
        %p1316 = pneg %p111
      $region38: #{_lambda_.23} parent=27 // pred_check_branch
        %1318 = sbr.rel (%p1316) target = $region40
      $region39: #{_lambda_.23} parent=27 // pred_region
        %s1319 = smul.u32 32, %s21
      $region40: #{_lambda_.23} parent=27 // pred_fallthru
        _
      // Predicated region
      $region41: #{_lambda_.23} parent=27 // pred_check
        %p1320 = pneg %p139
      $region42: #{_lambda_.23} parent=27 // pred_check_branch
        %1322 = sbr.rel (%p1320) target = $region44
      $region43: #{_lambda_.23} parent=27 // pred_region
        _
      $region44: #{_lambda_.23} parent=27 // pred_fallthru
        _
      // Predicated region
      $region45: #{_lambda_.23} parent=27 // pred_check
        %p1323 = pneg %p167
      $region46: #{_lambda_.23} parent=27 // pred_check_branch
        %1325 = sbr.rel (%p1323) target = $region48
      $region47: #{_lambda_.23} parent=27 // pred_region
        _
      $region48: #{_lambda_.23} parent=27 // pred_fallthru
        _
    $region28: #{_lambda_.23} parent=5 // pred_fallthru
      _
    %p1326 = scmp.le.s32.totalorder 2, %s11
    // Predicated region
    $region49: #{_lambda_.23} parent=5 // pred_check
      %p1327 = pneg %p1326
    $region50: #{_lambda_.23} parent=5 // pred_check_branch
      %1329 = sbr.rel (%p1327) target = $region52
    $region51: #{_lambda_.23} parent=5 // pred_region
      %s1330 = ssub.s32 %s11, 2
      // Predicated region
      $region53: #{_lambda_.23} parent=51 // pred_check
        %p1331 = pneg %p117
      $region54: #{_lambda_.23} parent=51 // pred_check_branch
        %1333 = sbr.rel (%p1331) target = $region56
      $region55: #{_lambda_.23} parent=51 // pred_region
        %s1334 = smul.u32 32, %s24
        %p1335 = scmp.lt.s32.totalorder %s1334, 63
        %s1336 = scalar_select %p1335, %s1334, 63
        %p1337 = scmp.lt.s32.totalorder %s25, 0
        %s1338 = scalar_select %p1337, %s25, 0
        %s1339 = sadd.s32 %s1338, %s1336
        %s1340 = smul.addr %s1339, 4
        %s1341 = scalar_lea.vmem %s2, %s1340
      $region56: #{_lambda_.23} parent=51 // pred_fallthru
        _
      // Predicated region
      $region57: #{_lambda_.23} parent=51 // pred_check
        %p1342 = pneg %p145
      $region58: #{_lambda_.23} parent=51 // pred_check_branch
        %1344 = sbr.rel (%p1342) target = $region60
      $region59: #{_lambda_.23} parent=51 // pred_region
        %p1345 = scmp.lt.s32.totalorder %s24, 1
        %s1346 = scalar_select %p1345, %s24, 1
        %p1347 = scmp.lt.s32.totalorder %s25, 0
        %s1348 = scalar_select %p1347, %s25, 0
        %s1349 = sadd.s32 %s1348, %s1346
        %s1350 = smul.addr %s1349, 8
        %s1351 = scalar_lea.vmem %s3, %s1350
      $region60: #{_lambda_.23} parent=51 // pred_fallthru
        _
      // Predicated region
      $region61: #{_lambda_.23} parent=51 // pred_check
        %p1352 = pneg %p173
      $region62: #{_lambda_.23} parent=51 // pred_check_branch
        %1354 = sbr.rel (%p1352) target = $region64
      $region63: #{_lambda_.23} parent=51 // pred_region
        %p1355 = scmp.lt.s32.totalorder %s24, 1
        %s1356 = scalar_select %p1355, %s24, 1
        %p1357 = scmp.lt.s32.totalorder %s25, 0
        %s1358 = scalar_select %p1357, %s25, 0
        %s1359 = sadd.s32 %s1358, %s1356
        %s1360 = smul.addr %s1359, 8
        %s1361 = scalar_lea.vmem %s4, %s1360
      $region64: #{_lambda_.23} parent=51 // pred_fallthru
        _
    $region52: #{_lambda_.23} parent=5 // pred_fallthru
      _
  $region6: #{_lambda_.23} parent=0 // loop_footer
    %s15 = sadd.s32 1, %s11
  $region7: #{_lambda_.23} parent=0 // loop_footer_branch
    %10 = sbr.rel target = $region3
  $region8: #{_lambda_.23} parent=0 // loop_exit
    _

// kernel: _lambda_.25
$region0: #{_lambda_.25}
  #allocation0 [shape = 'u32[]', space=smem, size = 0x4, offset = 0x4, fixed_abs, tag = 'smem constant byte address 0x4 - core index']
  #allocation1 [shape = 'u32[144,128]{1,0:T(1,128)}', space=vmem, size = 0x12000, scoped, tag = 'internal scratch']
  %s0 = inlined_call_operand.vmem [shape: bf16[16,128], index: 0, kind: input, shape index: {}]
  %s1 = inlined_call_operand.vmem [shape: bf16[16,128], index: 1, kind: input, shape index: {}]
  %s2 = inlined_call_operand.vmem [shape: bf16[16,128], index: 2, kind: input, shape index: {}]
  %s3 = inlined_call_operand.vmem [shape: bf16[16,128], index: 3, kind: input, shape index: {}]
  %s4 = inlined_call_operand.vmem [shape: bf16[16,128], index: 4, kind: input, shape index: {}]
  %s5 = inlined_call_operand.vmem [shape: bf16[16,128], index: 5, kind: input, shape index: {}]
  %s6 = inlined_call_operand.vmem [shape: bf16[16,128], index: 6, kind: input, shape index: {}]
  %s7 = inlined_call_operand.vmem [shape: bf16[16,128], index: 7, kind: input, shape index: {}]
  %s8 = inlined_call_operand.vmem [shape: bf16[16,128], index: 8, kind: input, shape index: {}]
  %s9 = inlined_call_operand.vmem [shape: bf16[16,128], index: 9, kind: output, shape index: {}]
  %s10 = sld [smem:[#allocation0]]
  $region46: #{_lambda_.25} parent=0
    _
  %s12 = ssub.s32 1, %s10
  %s13 = scalar_select 0, %s12, %s10
  // Predicated region
  $region2: #{_lambda_.25} parent=0 // pred_check
    _
  $region3: #{_lambda_.25} parent=0 // pred_check_branch
    %15 = sbr.rel (0) target = $region5
  $region4: #{_lambda_.25} parent=0 // pred_region
    _
  $region5: #{_lambda_.25} parent=0 // pred_fallthru
    _
  // Predicated region
  $region6: #{_lambda_.25} parent=0 // pred_check
    _
  $region7: #{_lambda_.25} parent=0 // pred_check_branch
    %17 = sbr.rel (0) target = $region9
  $region8: #{_lambda_.25} parent=0 // pred_region
    _
  $region9: #{_lambda_.25} parent=0 // pred_fallthru
    _
  // Predicated region
  $region10: #{_lambda_.25} parent=0 // pred_check
    _
  $region11: #{_lambda_.25} parent=0 // pred_check_branch
    %19 = sbr.rel (0) target = $region13
  $region12: #{_lambda_.25} parent=0 // pred_region
    _
  $region13: #{_lambda_.25} parent=0 // pred_fallthru
    _
  // Predicated region
  $region14: #{_lambda_.25} parent=0 // pred_check
    _
  $region15: #{_lambda_.25} parent=0 // pred_check_branch
    %21 = sbr.rel (0) target = $region17
  $region16: #{_lambda_.25} parent=0 // pred_region
    _
  $region17: #{_lambda_.25} parent=0 // pred_fallthru
    _
  // Predicated region
  $region18: #{_lambda_.25} parent=0 // pred_check
    _
  $region19: #{_lambda_.25} parent=0 // pred_check_branch
    %23 = sbr.rel (0) target = $region21
  $region20: #{_lambda_.25} parent=0 // pred_region
    _
  $region21: #{_lambda_.25} parent=0 // pred_fallthru
    _
  // Predicated region
  $region22: #{_lambda_.25} parent=0 // pred_check
    _
  $region23: #{_lambda_.25} parent=0 // pred_check_branch
    %25 = sbr.rel (0) target = $region25
  $region24: #{_lambda_.25} parent=0 // pred_region
    _
  $region25: #{_lambda_.25} parent=0 // pred_fallthru
    _
  // Predicated region
  $region26: #{_lambda_.25} parent=0 // pred_check
    _
  $region27: #{_lambda_.25} parent=0 // pred_check_branch
    %27 = sbr.rel (0) target = $region29
  $region28: #{_lambda_.25} parent=0 // pred_region
    _
  $region29: #{_lambda_.25} parent=0 // pred_fallthru
    _
  // Predicated region
  $region30: #{_lambda_.25} parent=0 // pred_check
    _
  $region31: #{_lambda_.25} parent=0 // pred_check_branch
    %29 = sbr.rel (0) target = $region33
  $region32: #{_lambda_.25} parent=0 // pred_region
    _
  $region33: #{_lambda_.25} parent=0 // pred_fallthru
    _
  // Predicated region
  $region34: #{_lambda_.25} parent=0 // pred_check
    _
  $region35: #{_lambda_.25} parent=0 // pred_check_branch
    %31 = sbr.rel (0) target = $region37
  $region36: #{_lambda_.25} parent=0 // pred_region
    _
  $region37: #{_lambda_.25} parent=0 // pred_fallthru
    _
  %v32 = vld [vmem:[%s0] sm:$0xf]
  %v33 = vld [vmem:[%s0 + $0x4] sm:$0xf]
  %v34 = vld [vmem:[%s1] sm:$0xf]
  %v35 = vld [vmem:[%s1 + $0x4] sm:$0xf]
  %v36 = vmax.bf16 %v32, %v34
  %v37 = vmax.bf16 %v33, %v35
  %v38 = vld [vmem:[%s2] sm:$0xf]
  %v39 = vld [vmem:[%s2 + $0x4] sm:$0xf]
  %v40 = vmax.bf16 %v36, %v38
  %v41 = vmax.bf16 %v37, %v39
  %v42 = vld [vmem:[%s3] sm:$0xf]
  %v43 = vld [vmem:[%s3 + $0x4] sm:$0xf]
  %v44 = vmax.bf16 %v40, %v42
  %v45 = vmax.bf16 %v41, %v43
  %v46 = vld [vmem:[%s4] sm:$0xf]
  %v47 = vld [vmem:[%s4 + $0x4] sm:$0xf]
  %v48 = vmax.bf16 %v44, %v46
  %v49 = vmax.bf16 %v45, %v47
  %v50 = vld [vmem:[%s5] sm:$0xf]
  %v51 = vld [vmem:[%s5 + $0x4] sm:$0xf]
  %v52 = vmax.bf16 %v48, %v50
  %v53 = vmax.bf16 %v49, %v51
  %v54 = vld [vmem:[%s6] sm:$0xf]
  %v55 = vld [vmem:[%s6 + $0x4] sm:$0xf]
  %v56 = vmax.bf16 %v52, %v54
  %v57 = vmax.bf16 %v53, %v55
  %v58 = vld [vmem:[%s7] sm:$0xf]
  %v59 = vld [vmem:[%s7 + $0x4] sm:$0xf]
  %v60 = vmax.bf16 %v56, %v58
  %v61 = vmax.bf16 %v57, %v59
  %v62 = vld [vmem:[%s8] sm:$0xf]
  %v63 = vld [vmem:[%s8 + $0x4] sm:$0xf]
  %v64 = vmax.bf16 %v60, %v62
  %v65 = vmax.bf16 %v61, %v63
  %66 = vst [vmem:[%s9] sm:$0xf] %v64
  %67 = vst [vmem:[%s9 + $0x4] sm:$0xf] %v65
  // Predicated region
  $region38: #{_lambda_.25} parent=0 // pred_check
    _
  $region39: #{_lambda_.25} parent=0 // pred_check_branch
    %69 = sbr.rel (0) target = $region41
  $region40: #{_lambda_.25} parent=0 // pred_region
    _
  $region41: #{_lambda_.25} parent=0 // pred_fallthru
    _
  // Predicated region
  $region42: #{_lambda_.25} parent=0 // pred_check
    _
  $region43: #{_lambda_.25} parent=0 // pred_check_branch
    %71 = sbr.rel (0) target = $region45
  $region44: #{_lambda_.25} parent=0 // pred_region
    _
  $region45: #{_lambda_.25} parent=0 // pred_fallthru
    _

// kernel: tile.74
$region0: #{tile.74}
  #allocation0 [shape = 's32[1]{0}', space=sflag, size = 0x4, scoped, tag = 'scoped memory for tile.74']
  %s0 = inlined_call_operand.<no memory space> [shape: f32[], index: 0, kind: input, shape index: {}]
  %s1 = inlined_call_operand.vmem [shape: f32[1,128], index: 1, kind: output, shape index: {}]
  %v2 = vstv %s0
  %3 = vst [vmem:[%s1] sm:$0x1] %v2

// kernel: _lambda_.27
$region0: #{_lambda_.27}
  #allocation0 [shape = 'u32[]', space=smem, size = 0x4, offset = 0x4, fixed_abs, tag = 'smem constant byte address 0x4 - core index']
  #allocation1 [shape = 'u32[144,128]{1,0:T(1,128)}', space=vmem, size = 0x12000, scoped, tag = 'internal scratch']
  %s0 = inlined_call_operand.vmem [shape: bf16[16,128], index: 0, kind: input, shape index: {}]
  %s1 = inlined_call_operand.vmem [shape: f32[1,128], index: 1, kind: input, shape index: {}]
  %s2 = inlined_call_operand.vmem [shape: f32[1,128], index: 2, kind: input, shape index: {}]
  %s3 = inlined_call_operand.vmem [shape: bf16[16,128], index: 3, kind: output, shape index: {}]
  %s4 = sld [smem:[#allocation0]]
  $region22: #{_lambda_.27} parent=0
    _
  %s6 = ssub.s32 1, %s4
  %s7 = scalar_select 0, %s6, %s4
  // Predicated region
  $region2: #{_lambda_.27} parent=0 // pred_check
    _
  $region3: #{_lambda_.27} parent=0 // pred_check_branch
    %9 = sbr.rel (0) target = $region5
  $region4: #{_lambda_.27} parent=0 // pred_region
    _
  $region5: #{_lambda_.27} parent=0 // pred_fallthru
    _
  // Predicated region
  $region6: #{_lambda_.27} parent=0 // pred_check
    _
  $region7: #{_lambda_.27} parent=0 // pred_check_branch
    %11 = sbr.rel (0) target = $region9
  $region8: #{_lambda_.27} parent=0 // pred_region
    _
  $region9: #{_lambda_.27} parent=0 // pred_fallthru
    _
  // Predicated region
  $region10: #{_lambda_.27} parent=0 // pred_check
    _
  $region11: #{_lambda_.27} parent=0 // pred_check_branch
    %13 = sbr.rel (0) target = $region13
  $region12: #{_lambda_.27} parent=0 // pred_region
    _
  $region13: #{_lambda_.27} parent=0 // pred_fallthru
    _
  %v14 = vld [vmem:[%s0] sm:$0xf]
  %v15 = vld [vmem:[%s0 + $0x4] sm:$0xf]
  %v16 = vunpack.c.l.bf16 %v14
  %v17 = vunpack.c.l.bf16 %v15
  %v18 = vld [vmem:[%s1] sm:$0x1]
  %v20 = vlaneseq
  %v21 = vshrl.u32 %v20, 7
  %v22 = vsub.s32 0, %v21
  %v23 = vrot.slane %v18, %v22
  %v25 = vmul.f32 %v16, %v23
  %v26 = vmul.f32 %v17, %v23
  %v27 = vld [vmem:[%s2] sm:$0x1]
  %v29 = vlaneseq
  %v30 = vshrl.u32 %v29, 7
  %v31 = vsub.s32 0, %v30
  %v32 = vrot.slane %v27, %v31
  %v34 = vadd.f32 %v25, %v32
  %v35 = vadd.f32 %v26, %v32
  %v36 = vmax.f32 %v34, 0.0
  %v37 = vmax.f32 %v35, 0.0
  %v38 = vpack.c.bf16 %v37, %v36
  %v40 = vunpack.c.l.b16 %v38
  %v41 = vunpack.c.h.b16 %v38
  %v42 = vpack.c.b16 %v40, %v40
  %v43 = vpack.c.b16 %v41, %v41
  %46 = vst [vmem:[%s3] sm:$0xf] %v42
  %47 = vst [vmem:[%s3 + $0x4] sm:$0xf] %v43
  // Predicated region
  $region14: #{_lambda_.27} parent=0 // pred_check
    _
  $region15: #{_lambda_.27} parent=0 // pred_check_branch
    %49 = sbr.rel (0) target = $region17
  $region16: #{_lambda_.27} parent=0 // pred_region
    _
  $region17: #{_lambda_.27} parent=0 // pred_fallthru
    _
  // Predicated region
  $region18: #{_lambda_.27} parent=0 // pred_check
    _
  $region19: #{_lambda_.27} parent=0 // pred_check_branch
    %51 = sbr.rel (0) target = $region21
  $region20: #{_lambda_.27} parent=0 // pred_region
    _
  $region21: #{_lambda_.27} parent=0 // pred_fallthru
    _

// kernel: _lambda_.26
$region0: #{_lambda_.26}
  #allocation0 [shape = 'u32[]', space=smem, size = 0x4, offset = 0x4, fixed_abs, tag = 'smem constant byte address 0x4 - core index']
  #allocation1 [shape = 'u32[144,128]{1,0:T(1,128)}', space=vmem, size = 0x12000, scoped, tag = 'internal scratch']
  #allocation2 [shape = 'f32[64,16]{1,0:T(8,128)}', space=vmem, size = 0x8000, scoped, tag = 'scratch operand']
  %s0 = inlined_call_operand.vmem [shape: bf16[128,144], index: 0, kind: input, shape index: {}]
  %s1 = inlined_call_operand.vmem [shape: bf16[144,16], index: 1, kind: input, shape index: {}]
  %s2 = inlined_call_operand.vmem [shape: bf16[128,16], index: 2, kind: output, shape index: {0}]
  %s3 = inlined_call_operand.vmem [shape: f32[16,16], index: 3, kind: output, shape index: {1}]
  %s4 = inlined_call_operand.vmem [shape: f32[16,16], index: 4, kind: output, shape index: {2}]
  %5 = xla_tuple %s2, %s3, %s4
  %s6 = sld [smem:[#allocation0]]
  $region65: #{_lambda_.26} parent=0
    _
  %s8 = ssub.s32 1, %s6
  %s9 = scalar_select 0, %s8, %s6
  loop: start=0, step=1, limit=4
  $region2: #{_lambda_.26} parent=0 // loop_pre_header
    _
  $region3: #{_lambda_.26} parent=0 // loop_header
    %s11 = sphi 0, %s15
    %p12 = scmp.ge.s32.totalorder %s11, 4
    %s18 = sphi 0, %s37
    %s19 = sphi 0, %s33
    %s20 = sphi 0, %s29
    %s21 = sphi 0, %s18
    %s22 = sphi 0, %s19
    %s23 = sphi 0, %s20
    %s24 = sphi 0, %s21
    %s25 = sphi 0, %s22
    %s26 = sphi 0, %s23
    %s42 = sphi 0, %s44
    %s45 = sphi 0, %s42
    %s46 = sphi 0, %s45
    %s62 = sphi 0, %s46
    %s70 = sphi 0, %s72
    %s73 = sphi 0, %s70
    %s74 = sphi 0, %s73
    %s90 = sphi 0, %s74
    %s98 = sphi 0, %s100
    %s101 = sphi 0, %s98
    %s102 = sphi 0, %s101
    %s118 = sphi 0, %s102
    %s126 = sphi 0, %s128
    %s129 = sphi 0, %s126
    %s130 = sphi 0, %s129
    %s146 = sphi 0, %s130
    %s154 = sphi 0, %s156
    %s157 = sphi 0, %s154
    %s158 = sphi 0, %s157
    %s174 = sphi 0, %s158
  $region4: #{_lambda_.26} parent=0 // loop_header_branch
    %14 = sbr.rel (%p12) target = $region8
  $region5: #{_lambda_.26} parent=0 // loop_body
    %s16 = ssub.s32 %s11, 1
    %s17 = ssub.s32 %s11, 2
    %s27 = sadd.s32 1, %s20
    %p28 = scmp.ge.s32.totalorder %s27, 1
    %s29 = scalar_select %p28, 0, %s27
    %s30 = sadd.s32 1, %s19
    %s31 = scalar_select %p28, %s30, %s19
    %p32 = scmp.ge.s32.totalorder %s31, 1
    %s33 = scalar_select %p32, 0, %s31
    %s34 = sadd.s32 1, %s18
    %s35 = scalar_select %p32, %s34, %s18
    %p36 = scmp.ge.s32.totalorder %s35, 2
    %s37 = scalar_select %p36, 0, %s35
    %s38 = ssub.s32 %s18, %s37
    %s39 = ssub.s32 %s20, %s29
    %s40 = sor.u32 %s38, %s39
    %p41 = scmp.eq.s32.totalorder %s40, 0
    %s43 = sadd.s32 %s42, 1
    %s44 = scalar_select %p41, %s42, %s43
    %p47 = pneg %p41
    %p48 = scmp.eq.s32.totalorder %s11, 1
    %p49 = por %p47, %p48
    %p50 = scmp.ne.s32.totalorder %s42, %s45
    %p51 = scmp.eq.s32.totalorder %s11, 0
    %p52 = por %p50, %p51
    %p53 = scmp.ne.s32.totalorder %s42, %s45
    %p54 = scmp.eq.s32.totalorder %s16, 1
    %p55 = por %p53, %p54
    %p56 = scmp.ne.s32.totalorder %s45, %s46
    %p57 = scmp.eq.s32.totalorder %s16, 0
    %p58 = por %p56, %p57
    %p59 = scmp.ne.s32.totalorder %s45, %s46
    %p60 = scmp.eq.s32.totalorder %s17, 1
    %p61 = por %p59, %p60
    %p63 = scmp.ne.s32.totalorder %s46, %s62
    %p64 = scmp.eq.s32.totalorder %s17, 0
    %p65 = por %p63, %p64
    %s66 = ssub.s32 %s20, %s29
    %s67 = ssub.s32 %s19, %s33
    %s68 = sor.u32 %s66, %s67
    %p69 = scmp.eq.s32.totalorder %s68, 0
    %s71 = sadd.s32 %s70, 1
    %s72 = scalar_select %p69, %s70, %s71
    %p75 = pneg %p69
    %p76 = scmp.eq.s32.totalorder %s11, 1
    %p77 = por %p75, %p76
    %p78 = scmp.ne.s32.totalorder %s70, %s73
    %p79 = scmp.eq.s32.totalorder %s11, 0
    %p80 = por %p78, %p79
    %p81 = scmp.ne.s32.totalorder %s70, %s73
    %p82 = scmp.eq.s32.totalorder %s16, 1
    %p83 = por %p81, %p82
    %p84 = scmp.ne.s32.totalorder %s73, %s74
    %p85 = scmp.eq.s32.totalorder %s16, 0
    %p86 = por %p84, %p85
    %p87 = scmp.ne.s32.totalorder %s73, %s74
    %p88 = scmp.eq.s32.totalorder %s17, 1
    %p89 = por %p87, %p88
    %p91 = scmp.ne.s32.totalorder %s74, %s90
    %p92 = scmp.eq.s32.totalorder %s17, 0
    %p93 = por %p91, %p92
    %s94 = ssub.s32 %s18, %s37
    %s95 = ssub.s32 %s19, %s33
    %s96 = sor.u32 %s94, %s95
    %p97 = scmp.eq.s32.totalorder %s96, 0
    %s99 = sadd.s32 %s98, 1
    %s100 = scalar_select %p97, %s98, %s99
    %p103 = pneg %p97
    %p104 = scmp.eq.s32.totalorder %s11, 1
    %p105 = por %p103, %p104
    %p106 = scmp.ne.s32.totalorder %s98, %s101
    %p107 = scmp.eq.s32.totalorder %s11, 0
    %p108 = por %p106, %p107
    %p109 = scmp.ne.s32.totalorder %s98, %s101
    %p110 = scmp.eq.s32.totalorder %s16, 1
    %p111 = por %p109, %p110
    %p112 = scmp.ne.s32.totalorder %s101, %s102
    %p113 = scmp.eq.s32.totalorder %s16, 0
    %p114 = por %p112, %p113
    %p115 = scmp.ne.s32.totalorder %s101, %s102
    %p116 = scmp.eq.s32.totalorder %s17, 1
    %p117 = por %p115, %p116
    %p119 = scmp.ne.s32.totalorder %s102, %s118
    %p120 = scmp.eq.s32.totalorder %s17, 0
    %p121 = por %p119, %p120
    %s122 = ssub.s32 %s18, %s37
    %s123 = ssub.s32 %s19, %s33
    %s124 = sor.u32 %s122, %s123
    %p125 = scmp.eq.s32.totalorder %s124, 0
    %s127 = sadd.s32 %s126, 1
    %s128 = scalar_select %p125, %s126, %s127
    %p131 = pneg %p125
    %p132 = scmp.eq.s32.totalorder %s11, 1
    %p133 = por %p131, %p132
    %p134 = scmp.ne.s32.totalorder %s126, %s129
    %p135 = scmp.eq.s32.totalorder %s11, 0
    %p136 = por %p134, %p135
    %p137 = scmp.ne.s32.totalorder %s126, %s129
    %p138 = scmp.eq.s32.totalorder %s16, 1
    %p139 = por %p137, %p138
    %p140 = scmp.ne.s32.totalorder %s129, %s130
    %p141 = scmp.eq.s32.totalorder %s16, 0
    %p142 = por %p140, %p141
    %p143 = scmp.ne.s32.totalorder %s129, %s130
    %p144 = scmp.eq.s32.totalorder %s17, 1
    %p145 = por %p143, %p144
    %p147 = scmp.ne.s32.totalorder %s130, %s146
    %p148 = scmp.eq.s32.totalorder %s17, 0
    %p149 = por %p147, %p148
    %s150 = ssub.s32 %s18, %s37
    %s151 = ssub.s32 %s19, %s33
    %s152 = sor.u32 %s150, %s151
    %p153 = scmp.eq.s32.totalorder %s152, 0
    %s155 = sadd.s32 %s154, 1
    %s156 = scalar_select %p153, %s154, %s155
    %p159 = pneg %p153
    %p160 = scmp.eq.s32.totalorder %s11, 1
    %p161 = por %p159, %p160
    %p162 = scmp.ne.s32.totalorder %s154, %s157
    %p163 = scmp.eq.s32.totalorder %s11, 0
    %p164 = por %p162, %p163
    %p165 = scmp.ne.s32.totalorder %s154, %s157
    %p166 = scmp.eq.s32.totalorder %s16, 1
    %p167 = por %p165, %p166
    %p168 = scmp.ne.s32.totalorder %s157, %s158
    %p169 = scmp.eq.s32.totalorder %s16, 0
    %p170 = por %p168, %p169
    %p171 = scmp.ne.s32.totalorder %s157, %s158
    %p172 = scmp.eq.s32.totalorder %s17, 1
    %p173 = por %p171, %p172
    %p175 = scmp.ne.s32.totalorder %s158, %s174
    %p176 = scmp.eq.s32.totalorder %s17, 0
    %p177 = por %p175, %p176
    %p178 = scmp.le.s32.totalorder 1, %s11
    %p179 = scmp.lt.s32.totalorder %s11, 3
    %p180 = pnand %p178, %p179
    %p181 = pneg %p180
    // Predicated region
    $region9: #{_lambda_.26} parent=5 // pred_check
      _
    $region10: #{_lambda_.26} parent=5 // pred_check_branch
      %183 = sbr.rel (%p180) target = $region12
    $region11: #{_lambda_.26} parent=5 // pred_region
      %s184 = ssub.s32 %s11, 1
      // Predicated region
      $region13: #{_lambda_.26} parent=11 // pred_check
        %p185 = pneg %p86
      $region14: #{_lambda_.26} parent=11 // pred_check_branch
        %187 = sbr.rel (%p185) target = $region16
      $region15: #{_lambda_.26} parent=11 // pred_region
        %s188 = smul.u32 18, %s23
        %p189 = scmp.lt.s32.totalorder %s188, 17
        %s190 = scalar_select %p189, %s188, 17
        %p191 = scmp.lt.s32.totalorder %s22, 0
        %s192 = scalar_select %p191, %s22, 0
        %s193 = sadd.s32 %s192, %s190
        %s194 = smul.addr %s193, 4
        %s195 = scalar_lea.vmem %s1, %s194
        %s196 = smul.u32 18, %s23
      $region16: #{_lambda_.26} parent=11 // pred_fallthru
        _
    $region12: #{_lambda_.26} parent=5 // pred_fallthru
      _
    %p197 = scmp.lt.s32.totalorder %s11, 2
    // Predicated region
    $region17: #{_lambda_.26} parent=5 // pred_check
      %p198 = pneg %p197
    $region18: #{_lambda_.26} parent=5 // pred_check_branch
      %200 = sbr.rel (%p198) target = $region20
    $region19: #{_lambda_.26} parent=5 // pred_region
      // Predicated region
      $region21: #{_lambda_.26} parent=19 // pred_check
        %p201 = pneg %p52
      $region22: #{_lambda_.26} parent=19 // pred_check_branch
        %203 = sbr.rel (%p201) target = $region24
      $region23: #{_lambda_.26} parent=19 // pred_region
        %s204 = smul.u32 8, %s18
        %s205 = smul.u32 2, %s20
        %p206 = scmp.lt.s32.totalorder %s204, 15
        %s207 = scalar_select %p206, %s204, 15
        %p208 = scmp.lt.s32.totalorder %s205, 1
        %s209 = scalar_select %p208, %s205, 1
        %s210 = smul.addr %s207, 2
        %s211 = sadd.s32 %s209, %s210
        %s212 = smul.addr %s211, 4
        %s213 = scalar_lea.vmem %s0, %s212
        %s214 = smul.u32 8, %s18
        %s215 = smul.u32 2, %s20
      $region24: #{_lambda_.26} parent=19 // pred_fallthru
        _
    $region20: #{_lambda_.26} parent=5 // pred_fallthru
      _
    %p216 = scmp.le.s32.totalorder 1, %s11
    %p217 = scmp.lt.s32.totalorder %s11, 3
    %p218 = pnand %p216, %p217
    %p219 = pneg %p218
    // Predicated region
    $region25: #{_lambda_.26} parent=5 // pred_check
      _
    $region26: #{_lambda_.26} parent=5 // pred_check_branch
      %221 = sbr.rel (%p218) target = $region28
    $region27: #{_lambda_.26} parent=5 // pred_region
      %s222 = ssub.s32 %s11, 1
      %s223 = smul.u32 8, %s21
      %s224 = smul.u32 2, %s23
      %p225 = scmp.lt.s32.totalorder %s223, 15
      %s226 = scalar_select %p225, %s223, 15
      %p227 = scmp.lt.s32.totalorder %s224, 1
      %s228 = scalar_select %p227, %s224, 1
      %s229 = smul.addr %s226, 2
      %s230 = sadd.s32 %s228, %s229
      %s231 = smul.addr %s230, 4
      %s232 = scalar_lea.vmem %s0, %s231
      %p233 = pneg %p58
      %p234 = pneg %p55
      %s235 = smul.u32 18, %s23
      %p236 = scmp.lt.s32.totalorder %s235, 17
      %s237 = scalar_select %p236, %s235, 17
      %p238 = scmp.lt.s32.totalorder %s22, 0
      %s239 = scalar_select %p238, %s22, 0
      %s240 = sadd.s32 %s239, %s237
      %s241 = smul.addr %s240, 4
      %s242 = scalar_lea.vmem %s1, %s241
      %p243 = pneg %p86
      %p244 = pneg %p83
      %p245 = pneg %p114
      %p246 = pneg %p111
      %s247 = smul.u32 8, %s21
      %p248 = scmp.lt.s32.totalorder %s247, 15
      %s249 = scalar_select %p248, %s247, 15
      %p250 = scmp.lt.s32.totalorder %s22, 0
      %s251 = scalar_select %p250, %s22, 0
      %s252 = sadd.s32 %s251, %s249
      %s253 = smul.addr %s252, 4
      %s254 = scalar_lea.vmem %s2, %s253
      %p255 = pneg %p142
      %p256 = pneg %p139
      %p257 = scmp.lt.s32.totalorder %s21, 1
      %s258 = scalar_select %p257, %s21, 1
      %p259 = scmp.lt.s32.totalorder %s22, 0
      %s260 = scalar_select %p259, %s22, 0
      %s261 = sadd.s32 %s260, %s258
      %s262 = smul.addr %s261, 8
      %s263 = scalar_lea.vmem %s3, %s262
      %p264 = pneg %p170
      %p265 = pneg %p167
      %p266 = scmp.lt.s32.totalorder %s21, 1
      %s267 = scalar_select %p266, %s21, 1
      %p268 = scmp.lt.s32.totalorder %s22, 0
      %s269 = scalar_select %p268, %s22, 0
      %s270 = sadd.s32 %s269, %s267
      %s271 = smul.addr %s270, 8
      %s272 = scalar_lea.vmem %s4, %s271
      %s273 = smul.u32 8, %s21
      %s274 = smul.u32 2, %s23
      %p275 = scmp.lt.s32.totalorder %s273, 15
      %s276 = scalar_select %p275, %s273, 15
      %p277 = scmp.lt.s32.totalorder %s274, 1
      %s278 = scalar_select %p277, %s274, 1
      %s279 = smul.addr %s276, 2
      %s280 = sadd.s32 %s278, %s279
      %s281 = smul.addr %s280, 4
      %s282 = scalar_lea.vmem %s0, %s281
      %s283 = smul.u32 8, %s21
      %s284 = smul.u32 2, %s23
      %s285 = smul.u32 18, %s23
      %p286 = scmp.lt.s32.totalorder %s285, 17
      %s287 = scalar_select %p286, %s285, 17
      %p288 = scmp.lt.s32.totalorder %s22, 0
      %s289 = scalar_select %p288, %s22, 0
      %s290 = sadd.s32 %s289, %s287
      %s291 = smul.addr %s290, 4
      %s292 = scalar_lea.vmem %s1, %s291
      %s293 = smul.u32 18, %s23
      %s294 = smul.u32 8, %s21
      %p295 = scmp.lt.s32.totalorder %s294, 15
      %s296 = scalar_select %p295, %s294, 15
      %p297 = scmp.lt.s32.totalorder %s22, 0
      %s298 = scalar_select %p297, %s22, 0
      %s299 = sadd.s32 %s298, %s296
      %s300 = smul.addr %s299, 4
      %s301 = scalar_lea.vmem %s2, %s300
      %s302 = smul.u32 8, %s21
      %p303 = scmp.lt.s32.totalorder %s21, 1
      %s304 = scalar_select %p303, %s21, 1
      %p305 = scmp.lt.s32.totalorder %s22, 0
      %s306 = scalar_select %p305, %s22, 0
      %s307 = sadd.s32 %s306, %s304
      %s308 = smul.addr %s307, 8
      %s309 = scalar_lea.vmem %s3, %s308
      %p310 = scmp.lt.s32.totalorder %s21, 1
      %s311 = scalar_select %p310, %s21, 1
      %p312 = scmp.lt.s32.totalorder %s22, 0
      %s313 = scalar_select %p312, %s22, 0
      %s314 = sadd.s32 %s313, %s311
      %s315 = smul.addr %s314, 8
      %s316 = scalar_lea.vmem %s4, %s315
      %p318 = scmp.eq.s32.totalorder %s23, 0
      // Predicated region
      $region29: #{_lambda_.26} parent=27 // pred_check
        %p319 = pneg %p318
      $region30: #{_lambda_.26} parent=27 // pred_check_branch
        %321 = sbr.rel (%p319) target = $region32
      $region31: #{_lambda_.26} parent=27 // pred_region
        %vm322 = vcmask 130048
        %323 = vst.msk [vmem:[#allocation2] sm:$0xff] %vm322, 0.0
        %324 = vst.msk [vmem:[#allocation2 + $0x8] sm:$0xff] %vm322, 0.0
        %325 = vst.msk [vmem:[#allocation2 + $0x10] sm:$0xff] %vm322, 0.0
        %326 = vst.msk [vmem:[#allocation2 + $0x18] sm:$0xff] %vm322, 0.0
        %327 = vst.msk [vmem:[#allocation2 + $0x20] sm:$0xff] %vm322, 0.0
        %328 = vst.msk [vmem:[#allocation2 + $0x28] sm:$0xff] %vm322, 0.0
        %329 = vst.msk [vmem:[#allocation2 + $0x30] sm:$0xff] %vm322, 0.0
        %330 = vst.msk [vmem:[#allocation2 + $0x38] sm:$0xff] %vm322, 0.0
      $region32: #{_lambda_.26} parent=27 // pred_fallthru
        _
      %v331 = vld [vmem:[#allocation2] sm:$0xff]
      %v332 = vld [vmem:[#allocation2 + $0x8] sm:$0xff]
      %v333 = vld [vmem:[#allocation2 + $0x10] sm:$0xff]
      %v334 = vld [vmem:[#allocation2 + $0x18] sm:$0xff]
      %v335 = vld [vmem:[#allocation2 + $0x20] sm:$0xff]
      %v336 = vld [vmem:[#allocation2 + $0x28] sm:$0xff]
      %v337 = vld [vmem:[#allocation2 + $0x30] sm:$0xff]
      %v338 = vld [vmem:[#allocation2 + $0x38] sm:$0xff]
      %v339 = vld [vmem:[%s282] sm:$0xff]
      %v340 = vld [vmem:[%s282 + $0x8] sm:$0xff]
      %v341 = vld [vmem:[%s282 + $0x10] sm:$0xff]
      %v342 = vld [vmem:[%s282 + $0x18] sm:$0xff]
      %v343 = vld [vmem:[%s282 + $0x20] sm:$0xff]
      %v344 = vld [vmem:[%s282 + $0x28] sm:$0xff]
      %v345 = vld [vmem:[%s282 + $0x30] sm:$0xff]
      %v346 = vld [vmem:[%s282 + $0x38] sm:$0xff]
      %v347 = vld [vmem:[%s292] sm:$0xf]
      %v348 = vld [vmem:[%s292 + $0x4] sm:$0xf]
      %v349 = vld [vmem:[%s292 + $0x8] sm:$0xf]
      %v350 = vld [vmem:[%s292 + $0xc] sm:$0xf]
      %v351 = vld [vmem:[%s292 + $0x10] sm:$0xf]
      %v352 = vld [vmem:[%s292 + $0x14] sm:$0xf]
      %v353 = vld [vmem:[%s292 + $0x18] sm:$0xf]
      %v354 = vld [vmem:[%s292 + $0x1c] sm:$0xf]
      %v355 = vld [vmem:[%s292 + $0x20] sm:$0xf]
      %v356 = vld [vmem:[%s292 + $0x24] sm:$0xf]
      %v357 = vld [vmem:[%s292 + $0x28] sm:$0xf]
      %v358 = vld [vmem:[%s292 + $0x2c] sm:$0xf]
      %v359 = vld [vmem:[%s292 + $0x30] sm:$0xf]
      %v360 = vld [vmem:[%s292 + $0x34] sm:$0xf]
      %v361 = vld [vmem:[%s292 + $0x38] sm:$0xf]
      %v362 = vld [vmem:[%s292 + $0x3c] sm:$0xf]
      %v363 = vld [vmem:[%s292 + $0x40] sm:$0xf]
      %v364 = vld [vmem:[%s292 + $0x44] sm:$0xf]
      %v373 = vunpack.c.l.b16 %v339
      %v374 = vunpack.c.h.b16 %v339
      %v375 = vunpack.c.l.b16 %v340
      %v376 = vunpack.c.h.b16 %v340
      %v377 = vunpack.c.l.b16 %v341
      %v378 = vunpack.c.h.b16 %v341
      %v379 = vunpack.c.l.b16 %v342
      %v380 = vunpack.c.h.b16 %v342
      %v381 = vunpack.c.l.b16 %v343
      %v382 = vunpack.c.h.b16 %v343
      %v383 = vunpack.c.l.b16 %v344
      %v384 = vunpack.c.h.b16 %v344
      %v385 = vunpack.c.l.b16 %v345
      %v386 = vunpack.c.h.b16 %v345
      %v387 = vunpack.c.l.b16 %v346
      %v388 = vunpack.c.h.b16 %v346
      %v389 = vpack.c.b16 %v375, %v373
      %v390 = vpack.c.b16 %v376, %v374
      %v391 = vpack.c.b16 %v379, %v377
      %v392 = vpack.c.b16 %v380, %v378
      %v393 = vpack.c.b16 %v383, %v381
      %v394 = vpack.c.b16 %v384, %v382
      %v395 = vpack.c.b16 %v387, %v385
      %v396 = vpack.c.b16 %v388, %v386
      %v419 = vunpack.c.l.b16 %v347
      %v420 = vunpack.c.l.b16 %v348
      %v421 = vunpack.c.l.b16 %v349
      %v422 = vunpack.c.l.b16 %v350
      %v423 = vunpack.c.l.b16 %v351
      %v424 = vunpack.c.l.b16 %v352
      %v425 = vunpack.c.l.b16 %v353
      %v426 = vunpack.c.l.b16 %v354
      %v427 = vunpack.c.l.b16 %v355
      %v428 = vunpack.c.l.b16 %v356
      %v429 = vunpack.c.l.b16 %v357
      %v430 = vunpack.c.l.b16 %v358
      %v431 = vunpack.c.l.b16 %v359
      %v432 = vunpack.c.l.b16 %v360
      %v433 = vunpack.c.l.b16 %v361
      %v434 = vunpack.c.l.b16 %v362
      %v435 = vunpack.c.l.b16 %v363
      %v436 = vunpack.c.l.b16 %v364
      %v437 = vpack.c.b16 %v420, %v419
      %v438 = vpack.c.b16 %v422, %v421
      %v439 = vpack.c.b16 %v424, %v423
      %v440 = vpack.c.b16 %v426, %v425
      %v441 = vpack.c.b16 %v428, %v427
      %v442 = vpack.c.b16 %v430, %v429
      %v443 = vpack.c.b16 %v432, %v431
      %v444 = vpack.c.b16 %v434, %v433
      %v445 = vpack.c.b16 %v436, %v435
      %vm455 = vcmask 130048
      %v457 = vsel %vm455, %v390, 0
      %v460 = vsel %vm455, %v392, 0
      %v463 = vsel %vm455, %v394, 0
      %v466 = vsel %vm455, %v396, 0
      %468 = vmatprep.subr.bf16.mxu0 0
      %469 = vmatpush1.bf16.msra.mxu0 %v444
      %470 = vmatprep.subr.bf16.mxu0 0
      %471 = vmatpush1.bf16.msra.mxu0 %v443
      %472 = vmatprep.subr.bf16.mxu0 0
      %473 = vmatpush1.bf16.msra.mxu0 %v442
      %474 = vmatprep.subr.bf16.mxu0 0
      %475 = vmatpush1.bf16.msra.mxu0 %v441
      %476 = vmatprep.subr.bf16.mxu0 0
      %477 = vmatpush1.bf16.msra.mxu0 %v440
      %478 = vmatprep.subr.bf16.mxu0 0
      %479 = vmatpush1.bf16.msra.mxu0 %v439
      %480 = vmatprep.subr.bf16.mxu0 0
      %481 = vmatpush1.bf16.msra.mxu0 %v438
      %482 = vmatprep.subr.bf16.mxu0 0
      %483 = vmatpush1.bf16.msra.mxu0 %v437
      %484 = vmatprep.subr.bf16.mxu0 0
      %485 = vmatpush2.bf16.msra.mxu0 0
      %486 = vmatprep.subr.bf16.mxu0 0
      %487 = vmatpush2.bf16.msra.mxu0 0
      %488 = vmatprep.subr.bf16.mxu0 0
      %489 = vmatpush2.bf16.msra.mxu0 0
      %490 = vmatprep.subr.bf16.mxu0 0
      %491 = vmatpush2.bf16.msra.mxu0 0
      %492 = vmatprep.subr.bf16.mxu0 0
      %493 = vmatpush2.bf16.msra.mxu0 0
      %494 = vmatprep.subr.bf16.mxu0 0
      %495 = vmatpush2.bf16.msra.mxu0 0
      %496 = vmatprep.subr.bf16.mxu0 0
      %497 = vmatpush2.bf16.msra.mxu0 0
      %498 = vmatprep.subr.bf16.mxu0 0
      %499 = vmatpush2.bf16.msra.mxu0 %v445
      %500 = vmatprep.mubr.bf16.mxu0 %v457
      %501 = vmatmul.mubr.bf16.gmra.mxu0 %v389
      %v502 = vpop.f32.mrf.mxu0
      %v503 = vadd.f32 0.0, %v502
      %v504 = vpop.f32.mrf.mxu0
      %v505 = vpop.f32.mrf.mxu0
      %v506 = vadd.f32 0.0, %v505
      %v507 = vpop.f32.mrf.mxu0
      %508 = vmatprep.mubr.bf16.mxu0 %v460
      %509 = vmatmul.mubr.bf16.gmra.mxu0 %v391
      %v510 = vpop.f32.mrf.mxu0
      %v511 = vadd.f32 0.0, %v510
      %v512 = vpop.f32.mrf.mxu0
      %v513 = vpop.f32.mrf.mxu0
      %v514 = vadd.f32 0.0, %v513
      %v515 = vpop.f32.mrf.mxu0
      %516 = vmatprep.mubr.bf16.mxu0 %v463
      %517 = vmatmul.mubr.bf16.gmra.mxu0 %v393
      %v518 = vpop.f32.mrf.mxu0
      %v519 = vadd.f32 0.0, %v518
      %v520 = vpop.f32.mrf.mxu0
      %v521 = vpop.f32.mrf.mxu0
      %v522 = vadd.f32 0.0, %v521
      %v523 = vpop.f32.mrf.mxu0
      %524 = vmatprep.mubr.bf16.mxu0 %v466
      %525 = vmatmul.mubr.bf16.gmra.mxu0 %v395
      %v526 = vpop.f32.mrf.mxu0
      %v527 = vadd.f32 0.0, %v526
      %v528 = vpop.f32.mrf.mxu0
      %v529 = vpop.f32.mrf.mxu0
      %v530 = vadd.f32 0.0, %v529
      %v531 = vpop.f32.mrf.mxu0
      %532 = vdwg.mxu0
      %v533 = vadd.f32 %v331, %v503
      %v534 = vadd.f32 %v332, %v506
      %v535 = vadd.f32 %v333, %v511
      %v536 = vadd.f32 %v334, %v514
      %v537 = vadd.f32 %v335, %v519
      %v538 = vadd.f32 %v336, %v522
      %v539 = vadd.f32 %v337, %v527
      %v540 = vadd.f32 %v338, %v530
      %541 = vst.msk [vmem:[#allocation2] sm:$0xff] %vm455, %v533
      %542 = vst.msk [vmem:[#allocation2 + $0x8] sm:$0xff] %vm455, %v534
      %543 = vst.msk [vmem:[#allocation2 + $0x10] sm:$0xff] %vm455, %v535
      %544 = vst.msk [vmem:[#allocation2 + $0x18] sm:$0xff] %vm455, %v536
      %545 = vst.msk [vmem:[#allocation2 + $0x20] sm:$0xff] %vm455, %v537
      %546 = vst.msk [vmem:[#allocation2 + $0x28] sm:$0xff] %vm455, %v538
      %547 = vst.msk [vmem:[#allocation2 + $0x30] sm:$0xff] %vm455, %v539
      %548 = vst.msk [vmem:[#allocation2 + $0x38] sm:$0xff] %vm455, %v540
      // Predicated region
      $region33: #{_lambda_.26} parent=27 // pred_check
        %p549 = pneg %p318
      $region34: #{_lambda_.26} parent=27 // pred_check_branch
        %551 = sbr.rel (%p549) target = $region36
      $region35: #{_lambda_.26} parent=27 // pred_region
        %v552 = vld [vmem:[#allocation2] sm:$0xff]
        %v553 = vld [vmem:[#allocation2 + $0x8] sm:$0xff]
        %v554 = vld [vmem:[#allocation2 + $0x10] sm:$0xff]
        %v555 = vld [vmem:[#allocation2 + $0x18] sm:$0xff]
        %v556 = vld [vmem:[#allocation2 + $0x20] sm:$0xff]
        %v557 = vld [vmem:[#allocation2 + $0x28] sm:$0xff]
        %v558 = vld [vmem:[#allocation2 + $0x30] sm:$0xff]
        %v559 = vld [vmem:[#allocation2 + $0x38] sm:$0xff]
        %v560 = vpack.c.bf16 %v553, %v552
        %v561 = vpack.c.bf16 %v555, %v554
        %v562 = vpack.c.bf16 %v557, %v556
        %v563 = vpack.c.bf16 %v559, %v558
        %v568 = vunpack.c.l.b16 %v560
        %v569 = vunpack.c.h.b16 %v560
        %v570 = vunpack.c.l.b16 %v561
        %v571 = vunpack.c.h.b16 %v561
        %v572 = vunpack.c.l.b16 %v562
        %v573 = vunpack.c.h.b16 %v562
        %v574 = vunpack.c.l.b16 %v563
        %v575 = vunpack.c.h.b16 %v563
        %v576 = vpack.c.b16 %v568, %v568
        %v577 = vpack.c.b16 %v569, %v569
        %v578 = vpack.c.b16 %v570, %v570
        %v579 = vpack.c.b16 %v571, %v571
        %v580 = vpack.c.b16 %v572, %v572
        %v581 = vpack.c.b16 %v573, %v573
        %v582 = vpack.c.b16 %v574, %v574
        %v583 = vpack.c.b16 %v575, %v575
        %vm592 = vcmask 125952
        %593 = vst.msk [vmem:[%s301] sm:$0xf] %vm592, %v576
        %594 = vst.msk [vmem:[%s301 + $0x4] sm:$0xf] %vm592, %v577
        %595 = vst.msk [vmem:[%s301 + $0x8] sm:$0xf] %vm592, %v578
        %596 = vst.msk [vmem:[%s301 + $0xc] sm:$0xf] %vm592, %v579
        %597 = vst.msk [vmem:[%s301 + $0x10] sm:$0xf] %vm592, %v580
        %598 = vst.msk [vmem:[%s301 + $0x14] sm:$0xf] %vm592, %v581
        %599 = vst.msk [vmem:[%s301 + $0x18] sm:$0xf] %vm592, %v582
        %600 = vst.msk [vmem:[%s301 + $0x1c] sm:$0xf] %vm592, %v583
        %v601 = vlaneseq
        %v602 = vshrl.u32 %v601, 7
        %vm603 = vcmp.eq.s32.totalorder %v602, 0
        %v604 = vsel %vm455, %v552, 0.0
        %v605 = vsel %vm455, %v553, 0.0
        %v606 = vadd.f32 %v604, %v605
        %v607 = vsel %vm455, %v554, 0.0
        %v608 = vadd.f32 %v606, %v607
        %v609 = vsel %vm455, %v555, 0.0
        %v610 = vadd.f32 %v608, %v609
        %v611 = vsel %vm455, %v556, 0.0
        %v612 = vadd.f32 %v610, %v611
        %v613 = vsel %vm455, %v557, 0.0
        %v614 = vadd.f32 %v612, %v613
        %v615 = vsel %vm455, %v558, 0.0
        %v616 = vadd.f32 %v614, %v615
        %v617 = vsel %vm455, %v559, 0.0
        %v618 = vadd.f32 %v616, %v617
        %v619 = vrot.slane %v618, 4
        %v620 = vadd.f32 %v618, %v619
        %v621 = vrot.slane %v620, 2
        %v622 = vadd.f32 %v620, %v621
        %v623 = vrot.slane %v622, 1
        %v624 = vadd.f32 %v622, %v623
        %v625 = vmul.f32 %v552, %v552
        %v626 = vmul.f32 %v553, %v553
        %v627 = vmul.f32 %v554, %v554
        %v628 = vmul.f32 %v555, %v555
        %v629 = vmul.f32 %v556, %v556
        %v630 = vmul.f32 %v557, %v557
        %v631 = vmul.f32 %v558, %v558
        %v632 = vmul.f32 %v559, %v559
        %v633 = vsel %vm455, %v625, 0.0
        %v634 = vsel %vm455, %v626, 0.0
        %v635 = vadd.f32 %v633, %v634
        %v636 = vsel %vm455, %v627, 0.0
        %v637 = vadd.f32 %v635, %v636
        %v638 = vsel %vm455, %v628, 0.0
        %v639 = vadd.f32 %v637, %v638
        %v640 = vsel %vm455, %v629, 0.0
        %v641 = vadd.f32 %v639, %v640
        %v642 = vsel %vm455, %v630, 0.0
        %v643 = vadd.f32 %v641, %v642
        %v644 = vsel %vm455, %v631, 0.0
        %v645 = vadd.f32 %v643, %v644
        %v646 = vsel %vm455, %v632, 0.0
        %v647 = vadd.f32 %v645, %v646
        %v648 = vrot.slane %v647, 4
        %v649 = vadd.f32 %v647, %v648
        %v650 = vrot.slane %v649, 2
        %v651 = vadd.f32 %v649, %v650
        %v652 = vrot.slane %v651, 1
        %v653 = vadd.f32 %v651, %v652
        %v654 = vsel %vm603, %v624, 0.0
        %655 = vst.msk [vmem:[%s309] sm:$0xff] %vm455, %v654
        %v656 = vsel %vm603, %v653, 0.0
        %657 = vst.msk [vmem:[%s316] sm:$0xff] %vm455, %v656
      $region36: #{_lambda_.26} parent=27 // pred_fallthru
        _
      %s658 = smul.u32 8, %s21
      %p659 = scmp.lt.s32.totalorder %s658, 15
      %s660 = scalar_select %p659, %s658, 15
      %p661 = scmp.lt.s32.totalorder %s22, 0
      %s662 = scalar_select %p661, %s22, 0
      %s663 = sadd.s32 %s662, %s660
      %s664 = smul.addr %s663, 4
      %s665 = scalar_lea.vmem %s2, %s664
      %p666 = scmp.lt.s32.totalorder %s21, 1
      %s667 = scalar_select %p666, %s21, 1
      %p668 = scmp.lt.s32.totalorder %s22, 0
      %s669 = scalar_select %p668, %s22, 0
      %s670 = sadd.s32 %s669, %s667
      %s671 = smul.addr %s670, 8
      %s672 = scalar_lea.vmem %s3, %s671
      %p673 = scmp.lt.s32.totalorder %s21, 1
      %s674 = scalar_select %p673, %s21, 1
      %p675 = scmp.lt.s32.totalorder %s22, 0
      %s676 = scalar_select %p675, %s22, 0
      %s677 = sadd.s32 %s676, %s674
      %s678 = smul.addr %s677, 8
      %s679 = scalar_lea.vmem %s4, %s678
      // Predicated region
      $region37: #{_lambda_.26} parent=27 // pred_check
        %p680 = pneg %p111
      $region38: #{_lambda_.26} parent=27 // pred_check_branch
        %682 = sbr.rel (%p680) target = $region40
      $region39: #{_lambda_.26} parent=27 // pred_region
        %s683 = smul.u32 8, %s21
      $region40: #{_lambda_.26} parent=27 // pred_fallthru
        _
      // Predicated region
      $region41: #{_lambda_.26} parent=27 // pred_check
        %p684 = pneg %p139
      $region42: #{_lambda_.26} parent=27 // pred_check_branch
        %686 = sbr.rel (%p684) target = $region44
      $region43: #{_lambda_.26} parent=27 // pred_region
        _
      $region44: #{_lambda_.26} parent=27 // pred_fallthru
        _
      // Predicated region
      $region45: #{_lambda_.26} parent=27 // pred_check
        %p687 = pneg %p167
      $region46: #{_lambda_.26} parent=27 // pred_check_branch
        %689 = sbr.rel (%p687) target = $region48
      $region47: #{_lambda_.26} parent=27 // pred_region
        _
      $region48: #{_lambda_.26} parent=27 // pred_fallthru
        _
    $region28: #{_lambda_.26} parent=5 // pred_fallthru
      _
    %p690 = scmp.le.s32.totalorder 2, %s11
    // Predicated region
    $region49: #{_lambda_.26} parent=5 // pred_check
      %p691 = pneg %p690
    $region50: #{_lambda_.26} parent=5 // pred_check_branch
      %693 = sbr.rel (%p691) target = $region52
    $region51: #{_lambda_.26} parent=5 // pred_region
      %s694 = ssub.s32 %s11, 2
      // Predicated region
      $region53: #{_lambda_.26} parent=51 // pred_check
        %p695 = pneg %p117
      $region54: #{_lambda_.26} parent=51 // pred_check_branch
        %697 = sbr.rel (%p695) target = $region56
      $region55: #{_lambda_.26} parent=51 // pred_region
        %s698 = smul.u32 8, %s24
        %p699 = scmp.lt.s32.totalorder %s698, 15
        %s700 = scalar_select %p699, %s698, 15
        %p701 = scmp.lt.s32.totalorder %s25, 0
        %s702 = scalar_select %p701, %s25, 0
        %s703 = sadd.s32 %s702, %s700
        %s704 = smul.addr %s703, 4
        %s705 = scalar_lea.vmem %s2, %s704
      $region56: #{_lambda_.26} parent=51 // pred_fallthru
        _
      // Predicated region
      $region57: #{_lambda_.26} parent=51 // pred_check
        %p706 = pneg %p145
      $region58: #{_lambda_.26} parent=51 // pred_check_branch
        %708 = sbr.rel (%p706) target = $region60
      $region59: #{_lambda_.26} parent=51 // pred_region
        %p709 = scmp.lt.s32.totalorder %s24, 1
        %s710 = scalar_select %p709, %s24, 1
        %p711 = scmp.lt.s32.totalorder %s25, 0
        %s712 = scalar_select %p711, %s25, 0
        %s713 = sadd.s32 %s712, %s710
        %s714 = smul.addr %s713, 8
        %s715 = scalar_lea.vmem %s3, %s714
      $region60: #{_lambda_.26} parent=51 // pred_fallthru
        _
      // Predicated region
      $region61: #{_lambda_.26} parent=51 // pred_check
        %p716 = pneg %p173
      $region62: #{_lambda_.26} parent=51 // pred_check_branch
        %718 = sbr.rel (%p716) target = $region64
      $region63: #{_lambda_.26} parent=51 // pred_region
        %p719 = scmp.lt.s32.totalorder %s24, 1
        %s720 = scalar_select %p719, %s24, 1
        %p721 = scmp.lt.s32.totalorder %s25, 0
        %s722 = scalar_select %p721, %s25, 0
        %s723 = sadd.s32 %s722, %s720
        %s724 = smul.addr %s723, 8
        %s725 = scalar_lea.vmem %s4, %s724
      $region64: #{_lambda_.26} parent=51 // pred_fallthru
        _
    $region52: #{_lambda_.26} parent=5 // pred_fallthru
      _
  $region6: #{_lambda_.26} parent=0 // loop_footer
    %s15 = sadd.s32 1, %s11
  $region7: #{_lambda_.26} parent=0 // loop_footer_branch
    %10 = sbr.rel target = $region3
  $region8: #{_lambda_.26} parent=0 // loop_exit
    _

// kernel: _lambda_.29
$region0: #{_lambda_.29}
  #allocation0 [shape = 'u32[]', space=smem, size = 0x4, offset = 0x4, fixed_abs, tag = 'smem constant byte address 0x4 - core index']
  #allocation1 [shape = 'u32[144,128]{1,0:T(1,128)}', space=vmem, size = 0x12000, scoped, tag = 'internal scratch']
  %s0 = inlined_call_operand.vmem [shape: bf16[16,128], index: 0, kind: input, shape index: {}]
  %s1 = inlined_call_operand.vmem [shape: f32[1,128], index: 1, kind: input, shape index: {}]
  %s2 = inlined_call_operand.vmem [shape: f32[1,128], index: 2, kind: input, shape index: {}]
  %s3 = inlined_call_operand.vmem [shape: bf16[16,128], index: 3, kind: input, shape index: {}]
  %s4 = inlined_call_operand.vmem [shape: f32[1,128], index: 4, kind: input, shape index: {}]
  %s5 = inlined_call_operand.vmem [shape: f32[1,128], index: 5, kind: input, shape index: {}]
  %s6 = inlined_call_operand.vmem [shape: bf16[16,128], index: 6, kind: output, shape index: {}]
  %s7 = sld [smem:[#allocation0]]
  $region34: #{_lambda_.29} parent=0
    _
  %s9 = ssub.s32 1, %s7
  %s10 = scalar_select 0, %s9, %s7
  // Predicated region
  $region2: #{_lambda_.29} parent=0 // pred_check
    _
  $region3: #{_lambda_.29} parent=0 // pred_check_branch
    %12 = sbr.rel (0) target = $region5
  $region4: #{_lambda_.29} parent=0 // pred_region
    _
  $region5: #{_lambda_.29} parent=0 // pred_fallthru
    _
  // Predicated region
  $region6: #{_lambda_.29} parent=0 // pred_check
    _
  $region7: #{_lambda_.29} parent=0 // pred_check_branch
    %14 = sbr.rel (0) target = $region9
  $region8: #{_lambda_.29} parent=0 // pred_region
    _
  $region9: #{_lambda_.29} parent=0 // pred_fallthru
    _
  // Predicated region
  $region10: #{_lambda_.29} parent=0 // pred_check
    _
  $region11: #{_lambda_.29} parent=0 // pred_check_branch
    %16 = sbr.rel (0) target = $region13
  $region12: #{_lambda_.29} parent=0 // pred_region
    _
  $region13: #{_lambda_.29} parent=0 // pred_fallthru
    _
  // Predicated region
  $region14: #{_lambda_.29} parent=0 // pred_check
    _
  $region15: #{_lambda_.29} parent=0 // pred_check_branch
    %18 = sbr.rel (0) target = $region17
  $region16: #{_lambda_.29} parent=0 // pred_region
    _
  $region17: #{_lambda_.29} parent=0 // pred_fallthru
    _
  // Predicated region
  $region18: #{_lambda_.29} parent=0 // pred_check
    _
  $region19: #{_lambda_.29} parent=0 // pred_check_branch
    %20 = sbr.rel (0) target = $region21
  $region20: #{_lambda_.29} parent=0 // pred_region
    _
  $region21: #{_lambda_.29} parent=0 // pred_fallthru
    _
  // Predicated region
  $region22: #{_lambda_.29} parent=0 // pred_check
    _
  $region23: #{_lambda_.29} parent=0 // pred_check_branch
    %22 = sbr.rel (0) target = $region25
  $region24: #{_lambda_.29} parent=0 // pred_region
    _
  $region25: #{_lambda_.29} parent=0 // pred_fallthru
    _
  %v23 = vld [vmem:[%s0] sm:$0xf]
  %v24 = vld [vmem:[%s0 + $0x4] sm:$0xf]
  %v25 = vunpack.c.l.bf16 %v23
  %v26 = vunpack.c.l.bf16 %v24
  %v27 = vld [vmem:[%s1] sm:$0x1]
  %v29 = vlaneseq
  %v30 = vshrl.u32 %v29, 7
  %v31 = vsub.s32 0, %v30
  %v32 = vrot.slane %v27, %v31
  %v34 = vmul.f32 %v25, %v32
  %v35 = vmul.f32 %v26, %v32
  %v36 = vld [vmem:[%s2] sm:$0x1]
  %v38 = vlaneseq
  %v39 = vshrl.u32 %v38, 7
  %v40 = vsub.s32 0, %v39
  %v41 = vrot.slane %v36, %v40
  %v43 = vadd.f32 %v34, %v41
  %v44 = vadd.f32 %v35, %v41
  %v45 = vld [vmem:[%s3] sm:$0xf]
  %v46 = vld [vmem:[%s3 + $0x4] sm:$0xf]
  %v47 = vunpack.c.l.bf16 %v45
  %v48 = vunpack.c.l.bf16 %v46
  %v49 = vld [vmem:[%s4] sm:$0x1]
  %v51 = vlaneseq
  %v52 = vshrl.u32 %v51, 7
  %v53 = vsub.s32 0, %v52
  %v54 = vrot.slane %v49, %v53
  %v56 = vmul.f32 %v47, %v54
  %v57 = vmul.f32 %v48, %v54
  %v58 = vadd.f32 %v43, %v56
  %v59 = vadd.f32 %v44, %v57
  %v60 = vld [vmem:[%s5] sm:$0x1]
  %v62 = vlaneseq
  %v63 = vshrl.u32 %v62, 7
  %v64 = vsub.s32 0, %v63
  %v65 = vrot.slane %v60, %v64
  %v67 = vadd.f32 %v58, %v65
  %v68 = vadd.f32 %v59, %v65
  %v69 = vmax.f32 %v67, 0.0
  %v70 = vmax.f32 %v68, 0.0
  %v71 = vpack.c.bf16 %v70, %v69
  %v73 = vunpack.c.l.b16 %v71
  %v74 = vunpack.c.h.b16 %v71
  %v75 = vpack.c.b16 %v73, %v73
  %v76 = vpack.c.b16 %v74, %v74
  %79 = vst [vmem:[%s6] sm:$0xf] %v75
  %80 = vst [vmem:[%s6 + $0x4] sm:$0xf] %v76
  // Predicated region
  $region26: #{_lambda_.29} parent=0 // pred_check
    _
  $region27: #{_lambda_.29} parent=0 // pred_check_branch
    %82 = sbr.rel (0) target = $region29
  $region28: #{_lambda_.29} parent=0 // pred_region
    _
  $region29: #{_lambda_.29} parent=0 // pred_fallthru
    _
  // Predicated region
  $region30: #{_lambda_.29} parent=0 // pred_check
    _
  $region31: #{_lambda_.29} parent=0 // pred_check_branch
    %84 = sbr.rel (0) target = $region33
  $region32: #{_lambda_.29} parent=0 // pred_region
    _
  $region33: #{_lambda_.29} parent=0 // pred_fallthru
    _

// kernel: _lambda_.33
$region0: #{_lambda_.33}
  #allocation0 [shape = 'u32[]', space=smem, size = 0x4, offset = 0x4, fixed_abs, tag = 'smem constant byte address 0x4 - core index']
  #allocation1 [shape = 'u32[144,128]{1,0:T(1,128)}', space=vmem, size = 0x12000, scoped, tag = 'internal scratch']
  #allocation2 [shape = 'f32[32,32]{1,0:T(8,128)}', space=vmem, size = 0x4000, scoped, tag = 'scratch operand']
  %s0 = inlined_call_operand.vmem [shape: bf16[32,16], index: 0, kind: input, shape index: {}]
  %s1 = inlined_call_operand.vmem [shape: bf16[16,32], index: 1, kind: input, shape index: {}]
  %s2 = inlined_call_operand.vmem [shape: bf16[32,32], index: 2, kind: output, shape index: {0}]
  %s3 = inlined_call_operand.vmem [shape: f32[8,32], index: 3, kind: output, shape index: {1}]
  %s4 = inlined_call_operand.vmem [shape: f32[8,32], index: 4, kind: output, shape index: {2}]
  %5 = xla_tuple %s2, %s3, %s4
  %s6 = sld [smem:[#allocation0]]
  $region42: #{_lambda_.33} parent=0
    _
  %s8 = ssub.s32 1, %s6
  %s9 = scalar_select 0, %s8, %s6
  // Predicated region
  $region2: #{_lambda_.33} parent=0 // pred_check
    _
  $region3: #{_lambda_.33} parent=0 // pred_check_branch
    %11 = sbr.rel (0) target = $region5
  $region4: #{_lambda_.33} parent=0 // pred_region
    _
  $region5: #{_lambda_.33} parent=0 // pred_fallthru
    _
  // Predicated region
  $region6: #{_lambda_.33} parent=0 // pred_check
    _
  $region7: #{_lambda_.33} parent=0 // pred_check_branch
    %13 = sbr.rel (0) target = $region9
  $region8: #{_lambda_.33} parent=0 // pred_region
    _
  $region9: #{_lambda_.33} parent=0 // pred_fallthru
    _
  %p15 = scmp.eq.s32.totalorder 0, 0
  // Predicated region
  $region10: #{_lambda_.33} parent=0 // pred_check
    %p16 = pneg %p15
  $region11: #{_lambda_.33} parent=0 // pred_check_branch
    %18 = sbr.rel (%p16) target = $region13
  $region12: #{_lambda_.33} parent=0 // pred_region
    %vm19 = vcmask 261120
    %20 = vst.msk [vmem:[#allocation2] sm:$0xff] %vm19, 0.0
    %21 = vst.msk [vmem:[#allocation2 + $0x8] sm:$0xff] %vm19, 0.0
    %22 = vst.msk [vmem:[#allocation2 + $0x10] sm:$0xff] %vm19, 0.0
    %23 = vst.msk [vmem:[#allocation2 + $0x18] sm:$0xff] %vm19, 0.0
  $region13: #{_lambda_.33} parent=0 // pred_fallthru
    _
  %v24 = vld [vmem:[#allocation2] sm:$0xff]
  %v25 = vld [vmem:[#allocation2 + $0x8] sm:$0xff]
  %v26 = vld [vmem:[#allocation2 + $0x10] sm:$0xff]
  %v27 = vld [vmem:[#allocation2 + $0x18] sm:$0xff]
  %v28 = vld [vmem:[%s0] sm:$0xf]
  %v29 = vld [vmem:[%s0 + $0x4] sm:$0xf]
  %v30 = vld [vmem:[%s0 + $0x8] sm:$0xf]
  %v31 = vld [vmem:[%s0 + $0xc] sm:$0xf]
  %v32 = vld [vmem:[%s1] sm:$0xf]
  %v33 = vld [vmem:[%s1 + $0x4] sm:$0xf]
  %v38 = vunpack.c.l.b16 %v28
  %v39 = vunpack.c.l.b16 %v29
  %v40 = vunpack.c.l.b16 %v30
  %v41 = vunpack.c.l.b16 %v31
  %v42 = vpack.c.b16 %v39, %v38
  %v43 = vpack.c.b16 %v41, %v40
  %v46 = vunpack.c.l.b16 %v32
  %v47 = vunpack.c.l.b16 %v33
  %v48 = vpack.c.b16 %v47, %v46
  %vm50 = vcmask 130048
  %v52 = vsel %vm50, %v42, 0
  %v55 = vsel %vm50, %v43, 0
  %57 = vmatprep.subr.bf16.mxu0 0
  %58 = vmatpush1.bf16.msra.mxu0 0
  %59 = vmatprep.subr.bf16.mxu0 0
  %60 = vmatpush1.bf16.msra.mxu0 0
  %61 = vmatprep.subr.bf16.mxu0 0
  %62 = vmatpush1.bf16.msra.mxu0 0
  %63 = vmatprep.subr.bf16.mxu0 0
  %64 = vmatpush1.bf16.msra.mxu0 0
  %65 = vmatprep.subr.bf16.mxu0 0
  %66 = vmatpush1.bf16.msra.mxu0 0
  %67 = vmatprep.subr.bf16.mxu0 0
  %68 = vmatpush1.bf16.msra.mxu0 0
  %69 = vmatprep.subr.bf16.mxu0 0
  %70 = vmatpush1.bf16.msra.mxu0 0
  %71 = vmatprep.subr.bf16.mxu0 0
  %72 = vmatpush1.bf16.msra.mxu0 %v48
  %73 = vmatprep.subr.bf16.mxu0 0
  %74 = vmatpush2.bf16.msra.mxu0 0
  %75 = vmatprep.subr.bf16.mxu0 0
  %76 = vmatpush2.bf16.msra.mxu0 0
  %77 = vmatprep.subr.bf16.mxu0 0
  %78 = vmatpush2.bf16.msra.mxu0 0
  %79 = vmatprep.subr.bf16.mxu0 0
  %80 = vmatpush2.bf16.msra.mxu0 0
  %81 = vmatprep.subr.bf16.mxu0 0
  %82 = vmatpush2.bf16.msra.mxu0 0
  %83 = vmatprep.subr.bf16.mxu0 0
  %84 = vmatpush2.bf16.msra.mxu0 0
  %85 = vmatprep.subr.bf16.mxu0 0
  %86 = vmatpush2.bf16.msra.mxu0 0
  %87 = vmatprep.subr.bf16.mxu0 0
  %88 = vmatpush2.bf16.msra.mxu0 0
  %89 = vmatprep.mubr.bf16.mxu0 0
  %90 = vmatmul.mubr.bf16.gmra.mxu0 %v52
  %v91 = vpop.f32.mrf.mxu0
  %v92 = vadd.f32 0.0, %v91
  %v93 = vpop.f32.mrf.mxu0
  %v94 = vpop.f32.mrf.mxu0
  %v95 = vadd.f32 0.0, %v94
  %v96 = vpop.f32.mrf.mxu0
  %97 = vmatprep.mubr.bf16.mxu0 0
  %98 = vmatmul.mubr.bf16.gmra.mxu0 %v55
  %v99 = vpop.f32.mrf.mxu0
  %v100 = vadd.f32 0.0, %v99
  %v101 = vpop.f32.mrf.mxu0
  %v102 = vpop.f32.mrf.mxu0
  %v103 = vadd.f32 0.0, %v102
  %v104 = vpop.f32.mrf.mxu0
  %105 = vdwg.mxu0
  %v106 = vadd.f32 %v24, %v92
  %v107 = vadd.f32 %v25, %v95
  %v108 = vadd.f32 %v26, %v100
  %v109 = vadd.f32 %v27, %v103
  %vm110 = vcmask 261120
  %111 = vst.msk [vmem:[#allocation2] sm:$0xff] %vm110, %v106
  %112 = vst.msk [vmem:[#allocation2 + $0x8] sm:$0xff] %vm110, %v107
  %113 = vst.msk [vmem:[#allocation2 + $0x10] sm:$0xff] %vm110, %v108
  %114 = vst.msk [vmem:[#allocation2 + $0x18] sm:$0xff] %vm110, %v109
  // Predicated region
  $region14: #{_lambda_.33} parent=0 // pred_check
    %p115 = pneg %p15
  $region15: #{_lambda_.33} parent=0 // pred_check_branch
    %117 = sbr.rel (%p115) target = $region17
  $region16: #{_lambda_.33} parent=0 // pred_region
    %v118 = vld [vmem:[#allocation2] sm:$0xff]
    %v119 = vld [vmem:[#allocation2 + $0x8] sm:$0xff]
    %v120 = vld [vmem:[#allocation2 + $0x10] sm:$0xff]
    %v121 = vld [vmem:[#allocation2 + $0x18] sm:$0xff]
    %v122 = vpack.c.bf16 %v119, %v118
    %v123 = vpack.c.bf16 %v121, %v120
    %v126 = vunpack.c.l.b16 %v122
    %v127 = vunpack.c.h.b16 %v122
    %v128 = vunpack.c.l.b16 %v123
    %v129 = vunpack.c.h.b16 %v123
    %v130 = vpack.c.b16 %v126, %v126
    %v131 = vpack.c.b16 %v127, %v127
    %v132 = vpack.c.b16 %v128, %v128
    %v133 = vpack.c.b16 %v129, %v129
    %vm138 = vcmask 257024
    %139 = vst.msk [vmem:[%s2] sm:$0xf] %vm138, %v130
    %140 = vst.msk [vmem:[%s2 + $0x4] sm:$0xf] %vm138, %v131
    %141 = vst.msk [vmem:[%s2 + $0x8] sm:$0xf] %vm138, %v132
    %142 = vst.msk [vmem:[%s2 + $0xc] sm:$0xf] %vm138, %v133
    %v143 = vlaneseq
    %v144 = vshrl.u32 %v143, 7
    %vm145 = vcmp.eq.s32.totalorder %v144, 0
    %v146 = vsel %vm110, %v118, 0.0
    %v147 = vsel %vm110, %v119, 0.0
    %v148 = vadd.f32 %v146, %v147
    %v149 = vsel %vm110, %v120, 0.0
    %v150 = vadd.f32 %v148, %v149
    %v151 = vsel %vm110, %v121, 0.0
    %v152 = vadd.f32 %v150, %v151
    %v153 = vrot.slane %v152, 4
    %v154 = vadd.f32 %v152, %v153
    %v155 = vrot.slane %v154, 2
    %v156 = vadd.f32 %v154, %v155
    %v157 = vrot.slane %v156, 1
    %v158 = vadd.f32 %v156, %v157
    %v159 = vmul.f32 %v118, %v118
    %v160 = vmul.f32 %v119, %v119
    %v161 = vmul.f32 %v120, %v120
    %v162 = vmul.f32 %v121, %v121
    %v163 = vsel %vm110, %v159, 0.0
    %v164 = vsel %vm110, %v160, 0.0
    %v165 = vadd.f32 %v163, %v164
    %v166 = vsel %vm110, %v161, 0.0
    %v167 = vadd.f32 %v165, %v166
    %v168 = vsel %vm110, %v162, 0.0
    %v169 = vadd.f32 %v167, %v168
    %v170 = vrot.slane %v169, 4
    %v171 = vadd.f32 %v169, %v170
    %v172 = vrot.slane %v171, 2
    %v173 = vadd.f32 %v171, %v172
    %v174 = vrot.slane %v173, 1
    %v175 = vadd.f32 %v173, %v174
    %v176 = vsel %vm145, %v158, 0.0
    %177 = vst.msk [vmem:[%s3] sm:$0xff] %vm110, %v176
    %v178 = vsel %vm145, %v175, 0.0
    %179 = vst.msk [vmem:[%s4] sm:$0xff] %vm110, %v178
  $region17: #{_lambda_.33} parent=0 // pred_fallthru
    _
  // Predicated region
  $region18: #{_lambda_.33} parent=0 // pred_check
    _
  $region19: #{_lambda_.33} parent=0 // pred_check_branch
    %181 = sbr.rel (0) target = $region21
  $region20: #{_lambda_.33} parent=0 // pred_region
    _
  $region21: #{_lambda_.33} parent=0 // pred_fallthru
    _
  // Predicated region
  $region22: #{_lambda_.33} parent=0 // pred_check
    _
  $region23: #{_lambda_.33} parent=0 // pred_check_branch
    %183 = sbr.rel (0) target = $region25
  $region24: #{_lambda_.33} parent=0 // pred_region
    _
  $region25: #{_lambda_.33} parent=0 // pred_fallthru
    _
  // Predicated region
  $region26: #{_lambda_.33} parent=0 // pred_check
    _
  $region27: #{_lambda_.33} parent=0 // pred_check_branch
    %185 = sbr.rel (0) target = $region29
  $region28: #{_lambda_.33} parent=0 // pred_region
    _
  $region29: #{_lambda_.33} parent=0 // pred_fallthru
    _
  // Predicated region
  $region30: #{_lambda_.33} parent=0 // pred_check
    _
  $region31: #{_lambda_.33} parent=0 // pred_check_branch
    %187 = sbr.rel (0) target = $region33
  $region32: #{_lambda_.33} parent=0 // pred_region
    _
  $region33: #{_lambda_.33} parent=0 // pred_fallthru
    _
  // Predicated region
  $region34: #{_lambda_.33} parent=0 // pred_check
    _
  $region35: #{_lambda_.33} parent=0 // pred_check_branch
    %189 = sbr.rel (0) target = $region37
  $region36: #{_lambda_.33} parent=0 // pred_region
    _
  $region37: #{_lambda_.33} parent=0 // pred_fallthru
    _
  // Predicated region
  $region38: #{_lambda_.33} parent=0 // pred_check
    _
  $region39: #{_lambda_.33} parent=0 // pred_check_branch
    %191 = sbr.rel (0) target = $region41
  $region40: #{_lambda_.33} parent=0 // pred_region
    _
  $region41: #{_lambda_.33} parent=0 // pred_fallthru
    _

// kernel: _lambda_.30
$region0: #{_lambda_.30}
  #allocation0 [shape = 'u32[]', space=smem, size = 0x4, offset = 0x4, fixed_abs, tag = 'smem constant byte address 0x4 - core index']
  #allocation1 [shape = 'u32[144,128]{1,0:T(1,128)}', space=vmem, size = 0x12000, scoped, tag = 'internal scratch']
  #allocation2 [shape = 'f32[32,32]{1,0:T(8,128)}', space=vmem, size = 0x4000, scoped, tag = 'scratch operand']
  %s0 = inlined_call_operand.vmem [shape: bf16[32,144], index: 0, kind: input, shape index: {}]
  %s1 = inlined_call_operand.vmem [shape: bf16[144,32], index: 1, kind: input, shape index: {}]
  %s2 = inlined_call_operand.vmem [shape: bf16[32,32], index: 2, kind: output, shape index: {0}]
  %s3 = inlined_call_operand.vmem [shape: f32[8,32], index: 3, kind: output, shape index: {1}]
  %s4 = inlined_call_operand.vmem [shape: f32[8,32], index: 4, kind: output, shape index: {2}]
  %5 = xla_tuple %s2, %s3, %s4
  %s6 = sld [smem:[#allocation0]]
  $region42: #{_lambda_.30} parent=0
    _
  %s8 = ssub.s32 1, %s6
  %s9 = scalar_select 0, %s8, %s6
  // Predicated region
  $region2: #{_lambda_.30} parent=0 // pred_check
    _
  $region3: #{_lambda_.30} parent=0 // pred_check_branch
    %11 = sbr.rel (0) target = $region5
  $region4: #{_lambda_.30} parent=0 // pred_region
    _
  $region5: #{_lambda_.30} parent=0 // pred_fallthru
    _
  // Predicated region
  $region6: #{_lambda_.30} parent=0 // pred_check
    _
  $region7: #{_lambda_.30} parent=0 // pred_check_branch
    %13 = sbr.rel (0) target = $region9
  $region8: #{_lambda_.30} parent=0 // pred_region
    _
  $region9: #{_lambda_.30} parent=0 // pred_fallthru
    _
  %p15 = scmp.eq.s32.totalorder 0, 0
  // Predicated region
  $region10: #{_lambda_.30} parent=0 // pred_check
    %p16 = pneg %p15
  $region11: #{_lambda_.30} parent=0 // pred_check_branch
    %18 = sbr.rel (%p16) target = $region13
  $region12: #{_lambda_.30} parent=0 // pred_region
    %vm19 = vcmask 261120
    %20 = vst.msk [vmem:[#allocation2] sm:$0xff] %vm19, 0.0
    %21 = vst.msk [vmem:[#allocation2 + $0x8] sm:$0xff] %vm19, 0.0
    %22 = vst.msk [vmem:[#allocation2 + $0x10] sm:$0xff] %vm19, 0.0
    %23 = vst.msk [vmem:[#allocation2 + $0x18] sm:$0xff] %vm19, 0.0
  $region13: #{_lambda_.30} parent=0 // pred_fallthru
    _
  %v24 = vld [vmem:[#allocation2] sm:$0xff]
  %v25 = vld [vmem:[#allocation2 + $0x8] sm:$0xff]
  %v26 = vld [vmem:[#allocation2 + $0x10] sm:$0xff]
  %v27 = vld [vmem:[#allocation2 + $0x18] sm:$0xff]
  %v28 = vld [vmem:[%s0] sm:$0xff]
  %v29 = vld [vmem:[%s0 + $0x8] sm:$0xff]
  %v30 = vld [vmem:[%s0 + $0x10] sm:$0xff]
  %v31 = vld [vmem:[%s0 + $0x18] sm:$0xff]
  %v32 = vld [vmem:[%s1] sm:$0xf]
  %v33 = vld [vmem:[%s1 + $0x4] sm:$0xf]
  %v34 = vld [vmem:[%s1 + $0x8] sm:$0xf]
  %v35 = vld [vmem:[%s1 + $0xc] sm:$0xf]
  %v36 = vld [vmem:[%s1 + $0x10] sm:$0xf]
  %v37 = vld [vmem:[%s1 + $0x14] sm:$0xf]
  %v38 = vld [vmem:[%s1 + $0x18] sm:$0xf]
  %v39 = vld [vmem:[%s1 + $0x1c] sm:$0xf]
  %v40 = vld [vmem:[%s1 + $0x20] sm:$0xf]
  %v41 = vld [vmem:[%s1 + $0x24] sm:$0xf]
  %v42 = vld [vmem:[%s1 + $0x28] sm:$0xf]
  %v43 = vld [vmem:[%s1 + $0x2c] sm:$0xf]
  %v44 = vld [vmem:[%s1 + $0x30] sm:$0xf]
  %v45 = vld [vmem:[%s1 + $0x34] sm:$0xf]
  %v46 = vld [vmem:[%s1 + $0x38] sm:$0xf]
  %v47 = vld [vmem:[%s1 + $0x3c] sm:$0xf]
  %v48 = vld [vmem:[%s1 + $0x40] sm:$0xf]
  %v49 = vld [vmem:[%s1 + $0x44] sm:$0xf]
  %v54 = vunpack.c.l.b16 %v28
  %v55 = vunpack.c.h.b16 %v28
  %v56 = vunpack.c.l.b16 %v29
  %v57 = vunpack.c.h.b16 %v29
  %v58 = vunpack.c.l.b16 %v30
  %v59 = vunpack.c.h.b16 %v30
  %v60 = vunpack.c.l.b16 %v31
  %v61 = vunpack.c.h.b16 %v31
  %v62 = vpack.c.b16 %v56, %v54
  %v63 = vpack.c.b16 %v57, %v55
  %v64 = vpack.c.b16 %v60, %v58
  %v65 = vpack.c.b16 %v61, %v59
  %v86 = vunpack.c.l.b16 %v32
  %v87 = vunpack.c.l.b16 %v33
  %v88 = vunpack.c.l.b16 %v34
  %v89 = vunpack.c.l.b16 %v35
  %v90 = vunpack.c.l.b16 %v36
  %v91 = vunpack.c.l.b16 %v37
  %v92 = vunpack.c.l.b16 %v38
  %v93 = vunpack.c.l.b16 %v39
  %v94 = vunpack.c.l.b16 %v40
  %v95 = vunpack.c.l.b16 %v41
  %v96 = vunpack.c.l.b16 %v42
  %v97 = vunpack.c.l.b16 %v43
  %v98 = vunpack.c.l.b16 %v44
  %v99 = vunpack.c.l.b16 %v45
  %v100 = vunpack.c.l.b16 %v46
  %v101 = vunpack.c.l.b16 %v47
  %v102 = vunpack.c.l.b16 %v48
  %v103 = vunpack.c.l.b16 %v49
  %v104 = vpack.c.b16 %v87, %v86
  %v105 = vpack.c.b16 %v89, %v88
  %v106 = vpack.c.b16 %v91, %v90
  %v107 = vpack.c.b16 %v93, %v92
  %v108 = vpack.c.b16 %v95, %v94
  %v109 = vpack.c.b16 %v97, %v96
  %v110 = vpack.c.b16 %v99, %v98
  %v111 = vpack.c.b16 %v101, %v100
  %v112 = vpack.c.b16 %v103, %v102
  %vm122 = vcmask 130048
  %v124 = vsel %vm122, %v63, 0
  %v127 = vsel %vm122, %v65, 0
  %129 = vmatprep.subr.bf16.mxu0 0
  %130 = vmatpush1.bf16.msra.mxu0 %v111
  %131 = vmatprep.subr.bf16.mxu0 0
  %132 = vmatpush1.bf16.msra.mxu0 %v110
  %133 = vmatprep.subr.bf16.mxu0 0
  %134 = vmatpush1.bf16.msra.mxu0 %v109
  %135 = vmatprep.subr.bf16.mxu0 0
  %136 = vmatpush1.bf16.msra.mxu0 %v108
  %137 = vmatprep.subr.bf16.mxu0 0
  %138 = vmatpush1.bf16.msra.mxu0 %v107
  %139 = vmatprep.subr.bf16.mxu0 0
  %140 = vmatpush1.bf16.msra.mxu0 %v106
  %141 = vmatprep.subr.bf16.mxu0 0
  %142 = vmatpush1.bf16.msra.mxu0 %v105
  %143 = vmatprep.subr.bf16.mxu0 0
  %144 = vmatpush1.bf16.msra.mxu0 %v104
  %145 = vmatprep.subr.bf16.mxu0 0
  %146 = vmatpush2.bf16.msra.mxu0 0
  %147 = vmatprep.subr.bf16.mxu0 0
  %148 = vmatpush2.bf16.msra.mxu0 0
  %149 = vmatprep.subr.bf16.mxu0 0
  %150 = vmatpush2.bf16.msra.mxu0 0
  %151 = vmatprep.subr.bf16.mxu0 0
  %152 = vmatpush2.bf16.msra.mxu0 0
  %153 = vmatprep.subr.bf16.mxu0 0
  %154 = vmatpush2.bf16.msra.mxu0 0
  %155 = vmatprep.subr.bf16.mxu0 0
  %156 = vmatpush2.bf16.msra.mxu0 0
  %157 = vmatprep.subr.bf16.mxu0 0
  %158 = vmatpush2.bf16.msra.mxu0 0
  %159 = vmatprep.subr.bf16.mxu0 0
  %160 = vmatpush2.bf16.msra.mxu0 %v112
  %161 = vmatprep.mubr.bf16.mxu0 %v124
  %162 = vmatmul.mubr.bf16.gmra.mxu0 %v62
  %v163 = vpop.f32.mrf.mxu0
  %v164 = vadd.f32 0.0, %v163
  %v165 = vpop.f32.mrf.mxu0
  %v166 = vpop.f32.mrf.mxu0
  %v167 = vadd.f32 0.0, %v166
  %v168 = vpop.f32.mrf.mxu0
  %169 = vmatprep.mubr.bf16.mxu0 %v127
  %170 = vmatmul.mubr.bf16.gmra.mxu0 %v64
  %v171 = vpop.f32.mrf.mxu0
  %v172 = vadd.f32 0.0, %v171
  %v173 = vpop.f32.mrf.mxu0
  %v174 = vpop.f32.mrf.mxu0
  %v175 = vadd.f32 0.0, %v174
  %v176 = vpop.f32.mrf.mxu0
  %177 = vdwg.mxu0
  %v178 = vadd.f32 %v24, %v164
  %v179 = vadd.f32 %v25, %v167
  %v180 = vadd.f32 %v26, %v172
  %v181 = vadd.f32 %v27, %v175
  %vm182 = vcmask 261120
  %183 = vst.msk [vmem:[#allocation2] sm:$0xff] %vm182, %v178
  %184 = vst.msk [vmem:[#allocation2 + $0x8] sm:$0xff] %vm182, %v179
  %185 = vst.msk [vmem:[#allocation2 + $0x10] sm:$0xff] %vm182, %v180
  %186 = vst.msk [vmem:[#allocation2 + $0x18] sm:$0xff] %vm182, %v181
  // Predicated region
  $region14: #{_lambda_.30} parent=0 // pred_check
    %p187 = pneg %p15
  $region15: #{_lambda_.30} parent=0 // pred_check_branch
    %189 = sbr.rel (%p187) target = $region17
  $region16: #{_lambda_.30} parent=0 // pred_region
    %v190 = vld [vmem:[#allocation2] sm:$0xff]
    %v191 = vld [vmem:[#allocation2 + $0x8] sm:$0xff]
    %v192 = vld [vmem:[#allocation2 + $0x10] sm:$0xff]
    %v193 = vld [vmem:[#allocation2 + $0x18] sm:$0xff]
    %v194 = vpack.c.bf16 %v191, %v190
    %v195 = vpack.c.bf16 %v193, %v192
    %v198 = vunpack.c.l.b16 %v194
    %v199 = vunpack.c.h.b16 %v194
    %v200 = vunpack.c.l.b16 %v195
    %v201 = vunpack.c.h.b16 %v195
    %v202 = vpack.c.b16 %v198, %v198
    %v203 = vpack.c.b16 %v199, %v199
    %v204 = vpack.c.b16 %v200, %v200
    %v205 = vpack.c.b16 %v201, %v201
    %vm210 = vcmask 257024
    %211 = vst.msk [vmem:[%s2] sm:$0xf] %vm210, %v202
    %212 = vst.msk [vmem:[%s2 + $0x4] sm:$0xf] %vm210, %v203
    %213 = vst.msk [vmem:[%s2 + $0x8] sm:$0xf] %vm210, %v204
    %214 = vst.msk [vmem:[%s2 + $0xc] sm:$0xf] %vm210, %v205
    %v215 = vlaneseq
    %v216 = vshrl.u32 %v215, 7
    %vm217 = vcmp.eq.s32.totalorder %v216, 0
    %v218 = vsel %vm182, %v190, 0.0
    %v219 = vsel %vm182, %v191, 0.0
    %v220 = vadd.f32 %v218, %v219
    %v221 = vsel %vm182, %v192, 0.0
    %v222 = vadd.f32 %v220, %v221
    %v223 = vsel %vm182, %v193, 0.0
    %v224 = vadd.f32 %v222, %v223
    %v225 = vrot.slane %v224, 4
    %v226 = vadd.f32 %v224, %v225
    %v227 = vrot.slane %v226, 2
    %v228 = vadd.f32 %v226, %v227
    %v229 = vrot.slane %v228, 1
    %v230 = vadd.f32 %v228, %v229
    %v231 = vmul.f32 %v190, %v190
    %v232 = vmul.f32 %v191, %v191
    %v233 = vmul.f32 %v192, %v192
    %v234 = vmul.f32 %v193, %v193
    %v235 = vsel %vm182, %v231, 0.0
    %v236 = vsel %vm182, %v232, 0.0
    %v237 = vadd.f32 %v235, %v236
    %v238 = vsel %vm182, %v233, 0.0
    %v239 = vadd.f32 %v237, %v238
    %v240 = vsel %vm182, %v234, 0.0
    %v241 = vadd.f32 %v239, %v240
    %v242 = vrot.slane %v241, 4
    %v243 = vadd.f32 %v241, %v242
    %v244 = vrot.slane %v243, 2
    %v245 = vadd.f32 %v243, %v244
    %v246 = vrot.slane %v245, 1
    %v247 = vadd.f32 %v245, %v246
    %v248 = vsel %vm217, %v230, 0.0
    %249 = vst.msk [vmem:[%s3] sm:$0xff] %vm182, %v248
    %v250 = vsel %vm217, %v247, 0.0
    %251 = vst.msk [vmem:[%s4] sm:$0xff] %vm182, %v250
  $region17: #{_lambda_.30} parent=0 // pred_fallthru
    _
  // Predicated region
  $region18: #{_lambda_.30} parent=0 // pred_check
    _
  $region19: #{_lambda_.30} parent=0 // pred_check_branch
    %253 = sbr.rel (0) target = $region21
  $region20: #{_lambda_.30} parent=0 // pred_region
    _
  $region21: #{_lambda_.30} parent=0 // pred_fallthru
    _
  // Predicated region
  $region22: #{_lambda_.30} parent=0 // pred_check
    _
  $region23: #{_lambda_.30} parent=0 // pred_check_branch
    %255 = sbr.rel (0) target = $region25
  $region24: #{_lambda_.30} parent=0 // pred_region
    _
  $region25: #{_lambda_.30} parent=0 // pred_fallthru
    _
  // Predicated region
  $region26: #{_lambda_.30} parent=0 // pred_check
    _
  $region27: #{_lambda_.30} parent=0 // pred_check_branch
    %257 = sbr.rel (0) target = $region29
  $region28: #{_lambda_.30} parent=0 // pred_region
    _
  $region29: #{_lambda_.30} parent=0 // pred_fallthru
    _
  // Predicated region
  $region30: #{_lambda_.30} parent=0 // pred_check
    _
  $region31: #{_lambda_.30} parent=0 // pred_check_branch
    %259 = sbr.rel (0) target = $region33
  $region32: #{_lambda_.30} parent=0 // pred_region
    _
  $region33: #{_lambda_.30} parent=0 // pred_fallthru
    _
  // Predicated region
  $region34: #{_lambda_.30} parent=0 // pred_check
    _
  $region35: #{_lambda_.30} parent=0 // pred_check_branch
    %261 = sbr.rel (0) target = $region37
  $region36: #{_lambda_.30} parent=0 // pred_region
    _
  $region37: #{_lambda_.30} parent=0 // pred_fallthru
    _
  // Predicated region
  $region38: #{_lambda_.30} parent=0 // pred_check
    _
  $region39: #{_lambda_.30} parent=0 // pred_check_branch
    %263 = sbr.rel (0) target = $region41
  $region40: #{_lambda_.30} parent=0 // pred_region
    _
  $region41: #{_lambda_.30} parent=0 // pred_fallthru
    _

// kernel: _lambda_.31
$region0: #{_lambda_.31}
  #allocation0 [shape = 'u32[]', space=smem, size = 0x4, offset = 0x4, fixed_abs, tag = 'smem constant byte address 0x4 - core index']
  #allocation1 [shape = 'u32[144,128]{1,0:T(1,128)}', space=vmem, size = 0x12000, scoped, tag = 'internal scratch']
  %s0 = inlined_call_operand.vmem [shape: bf16[8,128], index: 0, kind: input, shape index: {}]
  %s1 = inlined_call_operand.vmem [shape: f32[1,128], index: 1, kind: input, shape index: {}]
  %s2 = inlined_call_operand.vmem [shape: f32[1,128], index: 2, kind: input, shape index: {}]
  %s3 = inlined_call_operand.vmem [shape: bf16[8,128], index: 3, kind: output, shape index: {}]
  %s4 = sld [smem:[#allocation0]]
  $region22: #{_lambda_.31} parent=0
    _
  %s6 = ssub.s32 1, %s4
  %s7 = scalar_select 0, %s6, %s4
  // Predicated region
  $region2: #{_lambda_.31} parent=0 // pred_check
    _
  $region3: #{_lambda_.31} parent=0 // pred_check_branch
    %9 = sbr.rel (0) target = $region5
  $region4: #{_lambda_.31} parent=0 // pred_region
    _
  $region5: #{_lambda_.31} parent=0 // pred_fallthru
    _
  // Predicated region
  $region6: #{_lambda_.31} parent=0 // pred_check
    _
  $region7: #{_lambda_.31} parent=0 // pred_check_branch
    %11 = sbr.rel (0) target = $region9
  $region8: #{_lambda_.31} parent=0 // pred_region
    _
  $region9: #{_lambda_.31} parent=0 // pred_fallthru
    _
  // Predicated region
  $region10: #{_lambda_.31} parent=0 // pred_check
    _
  $region11: #{_lambda_.31} parent=0 // pred_check_branch
    %13 = sbr.rel (0) target = $region13
  $region12: #{_lambda_.31} parent=0 // pred_region
    _
  $region13: #{_lambda_.31} parent=0 // pred_fallthru
    _
  %v14 = vld [vmem:[%s0] sm:$0xf]
  %v15 = vunpack.c.l.bf16 %v14
  %v16 = vld [vmem:[%s1] sm:$0x1]
  %v18 = vlaneseq
  %v19 = vshrl.u32 %v18, 7
  %v20 = vsub.s32 0, %v19
  %v21 = vrot.slane %v16, %v20
  %v23 = vmul.f32 %v15, %v21
  %v24 = vld [vmem:[%s2] sm:$0x1]
  %v26 = vlaneseq
  %v27 = vshrl.u32 %v26, 7
  %v28 = vsub.s32 0, %v27
  %v29 = vrot.slane %v24, %v28
  %v31 = vadd.f32 %v23, %v29
  %v32 = vmax.f32 %v31, 0.0
  %v33 = vpack.c.bf16 %v32, %v32
  %34 = vst [vmem:[%s3] sm:$0xf] %v33
  // Predicated region
  $region14: #{_lambda_.31} parent=0 // pred_check
    _
  $region15: #{_lambda_.31} parent=0 // pred_check_branch
    %36 = sbr.rel (0) target = $region17
  $region16: #{_lambda_.31} parent=0 // pred_region
    _
  $region17: #{_lambda_.31} parent=0 // pred_fallthru
    _
  // Predicated region
  $region18: #{_lambda_.31} parent=0 // pred_check
    _
  $region19: #{_lambda_.31} parent=0 // pred_check_branch
    %38 = sbr.rel (0) target = $region21
  $region20: #{_lambda_.31} parent=0 // pred_region
    _
  $region21: #{_lambda_.31} parent=0 // pred_fallthru
    _

// kernel: _lambda_.32
$region0: #{_lambda_.32}
  #allocation0 [shape = 'u32[]', space=smem, size = 0x4, offset = 0x4, fixed_abs, tag = 'smem constant byte address 0x4 - core index']
  #allocation1 [shape = 'u32[144,128]{1,0:T(1,128)}', space=vmem, size = 0x12000, scoped, tag = 'internal scratch']
  #allocation2 [shape = 'f32[32,32]{1,0:T(8,128)}', space=vmem, size = 0x4000, scoped, tag = 'scratch operand']
  %s0 = inlined_call_operand.vmem [shape: bf16[32,288], index: 0, kind: input, shape index: {}]
  %s1 = inlined_call_operand.vmem [shape: bf16[288,32], index: 1, kind: input, shape index: {}]
  %s2 = inlined_call_operand.vmem [shape: bf16[32,32], index: 2, kind: output, shape index: {0}]
  %s3 = inlined_call_operand.vmem [shape: f32[8,32], index: 3, kind: output, shape index: {1}]
  %s4 = inlined_call_operand.vmem [shape: f32[8,32], index: 4, kind: output, shape index: {2}]
  %5 = xla_tuple %s2, %s3, %s4
  %s6 = sld [smem:[#allocation0]]
  $region42: #{_lambda_.32} parent=0
    _
  %s8 = ssub.s32 1, %s6
  %s9 = scalar_select 0, %s8, %s6
  // Predicated region
  $region2: #{_lambda_.32} parent=0 // pred_check
    _
  $region3: #{_lambda_.32} parent=0 // pred_check_branch
    %11 = sbr.rel (0) target = $region5
  $region4: #{_lambda_.32} parent=0 // pred_region
    _
  $region5: #{_lambda_.32} parent=0 // pred_fallthru
    _
  // Predicated region
  $region6: #{_lambda_.32} parent=0 // pred_check
    _
  $region7: #{_lambda_.32} parent=0 // pred_check_branch
    %13 = sbr.rel (0) target = $region9
  $region8: #{_lambda_.32} parent=0 // pred_region
    _
  $region9: #{_lambda_.32} parent=0 // pred_fallthru
    _
  %p15 = scmp.eq.s32.totalorder 0, 0
  // Predicated region
  $region10: #{_lambda_.32} parent=0 // pred_check
    %p16 = pneg %p15
  $region11: #{_lambda_.32} parent=0 // pred_check_branch
    %18 = sbr.rel (%p16) target = $region13
  $region12: #{_lambda_.32} parent=0 // pred_region
    %vm19 = vcmask 261120
    %20 = vst.msk [vmem:[#allocation2] sm:$0xff] %vm19, 0.0
    %21 = vst.msk [vmem:[#allocation2 + $0x8] sm:$0xff] %vm19, 0.0
    %22 = vst.msk [vmem:[#allocation2 + $0x10] sm:$0xff] %vm19, 0.0
    %23 = vst.msk [vmem:[#allocation2 + $0x18] sm:$0xff] %vm19, 0.0
  $region13: #{_lambda_.32} parent=0 // pred_fallthru
    _
  %v24 = vld [vmem:[#allocation2] sm:$0xff]
  %v25 = vld [vmem:[#allocation2 + $0x8] sm:$0xff]
  %v26 = vld [vmem:[#allocation2 + $0x10] sm:$0xff]
  %v27 = vld [vmem:[#allocation2 + $0x18] sm:$0xff]
  %v28 = vld [vmem:[%s0] sm:$0xff]
  %v29 = vld [vmem:[%s0 + $0x8] sm:$0xf]
  %v30 = vld [vmem:[%s0 + $0xc] sm:$0xff]
  %v31 = vld [vmem:[%s0 + $0x14] sm:$0xf]
  %v32 = vld [vmem:[%s0 + $0x18] sm:$0xff]
  %v33 = vld [vmem:[%s0 + $0x20] sm:$0xf]
  %v34 = vld [vmem:[%s0 + $0x24] sm:$0xff]
  %v35 = vld [vmem:[%s0 + $0x2c] sm:$0xf]
  %v36 = vld [vmem:[%s1] sm:$0xf]
  %v37 = vld [vmem:[%s1 + $0x4] sm:$0xf]
  %v38 = vld [vmem:[%s1 + $0x8] sm:$0xf]
  %v39 = vld [vmem:[%s1 + $0xc] sm:$0xf]
  %v40 = vld [vmem:[%s1 + $0x10] sm:$0xf]
  %v41 = vld [vmem:[%s1 + $0x14] sm:$0xf]
  %v42 = vld [vmem:[%s1 + $0x18] sm:$0xf]
  %v43 = vld [vmem:[%s1 + $0x1c] sm:$0xf]
  %v44 = vld [vmem:[%s1 + $0x20] sm:$0xf]
  %v45 = vld [vmem:[%s1 + $0x24] sm:$0xf]
  %v46 = vld [vmem:[%s1 + $0x28] sm:$0xf]
  %v47 = vld [vmem:[%s1 + $0x2c] sm:$0xf]
  %v48 = vld [vmem:[%s1 + $0x30] sm:$0xf]
  %v49 = vld [vmem:[%s1 + $0x34] sm:$0xf]
  %v50 = vld [vmem:[%s1 + $0x38] sm:$0xf]
  %v51 = vld [vmem:[%s1 + $0x3c] sm:$0xf]
  %v52 = vld [vmem:[%s1 + $0x40] sm:$0xf]
  %v53 = vld [vmem:[%s1 + $0x44] sm:$0xf]
  %v54 = vld [vmem:[%s1 + $0x48] sm:$0xf]
  %v55 = vld [vmem:[%s1 + $0x4c] sm:$0xf]
  %v56 = vld [vmem:[%s1 + $0x50] sm:$0xf]
  %v57 = vld [vmem:[%s1 + $0x54] sm:$0xf]
  %v58 = vld [vmem:[%s1 + $0x58] sm:$0xf]
  %v59 = vld [vmem:[%s1 + $0x5c] sm:$0xf]
  %v60 = vld [vmem:[%s1 + $0x60] sm:$0xf]
  %v61 = vld [vmem:[%s1 + $0x64] sm:$0xf]
  %v62 = vld [vmem:[%s1 + $0x68] sm:$0xf]
  %v63 = vld [vmem:[%s1 + $0x6c] sm:$0xf]
  %v64 = vld [vmem:[%s1 + $0x70] sm:$0xf]
  %v65 = vld [vmem:[%s1 + $0x74] sm:$0xf]
  %v66 = vld [vmem:[%s1 + $0x78] sm:$0xf]
  %v67 = vld [vmem:[%s1 + $0x7c] sm:$0xf]
  %v68 = vld [vmem:[%s1 + $0x80] sm:$0xf]
  %v69 = vld [vmem:[%s1 + $0x84] sm:$0xf]
  %v70 = vld [vmem:[%s1 + $0x88] sm:$0xf]
  %v71 = vld [vmem:[%s1 + $0x8c] sm:$0xf]
  %v80 = vunpack.c.l.b16 %v28
  %v81 = vunpack.c.h.b16 %v28
  %v82 = vunpack.c.l.b16 %v29
  %v83 = vunpack.c.l.b16 %v30
  %v84 = vunpack.c.h.b16 %v30
  %v85 = vunpack.c.l.b16 %v31
  %v86 = vunpack.c.l.b16 %v32
  %v87 = vunpack.c.h.b16 %v32
  %v88 = vunpack.c.l.b16 %v33
  %v89 = vunpack.c.l.b16 %v34
  %v90 = vunpack.c.h.b16 %v34
  %v91 = vunpack.c.l.b16 %v35
  %v92 = vpack.c.b16 %v83, %v80
  %v93 = vpack.c.b16 %v84, %v81
  %v94 = vpack.c.b16 %v85, %v82
  %v95 = vpack.c.b16 %v89, %v86
  %v96 = vpack.c.b16 %v90, %v87
  %v97 = vpack.c.b16 %v91, %v88
  %v138 = vunpack.c.l.b16 %v36
  %v139 = vunpack.c.l.b16 %v37
  %v140 = vunpack.c.l.b16 %v38
  %v141 = vunpack.c.l.b16 %v39
  %v142 = vunpack.c.l.b16 %v40
  %v143 = vunpack.c.l.b16 %v41
  %v144 = vunpack.c.l.b16 %v42
  %v145 = vunpack.c.l.b16 %v43
  %v146 = vunpack.c.l.b16 %v44
  %v147 = vunpack.c.l.b16 %v45
  %v148 = vunpack.c.l.b16 %v46
  %v149 = vunpack.c.l.b16 %v47
  %v150 = vunpack.c.l.b16 %v48
  %v151 = vunpack.c.l.b16 %v49
  %v152 = vunpack.c.l.b16 %v50
  %v153 = vunpack.c.l.b16 %v51
  %v154 = vunpack.c.l.b16 %v52
  %v155 = vunpack.c.l.b16 %v53
  %v156 = vunpack.c.l.b16 %v54
  %v157 = vunpack.c.l.b16 %v55
  %v158 = vunpack.c.l.b16 %v56
  %v159 = vunpack.c.l.b16 %v57
  %v160 = vunpack.c.l.b16 %v58
  %v161 = vunpack.c.l.b16 %v59
  %v162 = vunpack.c.l.b16 %v60
  %v163 = vunpack.c.l.b16 %v61
  %v164 = vunpack.c.l.b16 %v62
  %v165 = vunpack.c.l.b16 %v63
  %v166 = vunpack.c.l.b16 %v64
  %v167 = vunpack.c.l.b16 %v65
  %v168 = vunpack.c.l.b16 %v66
  %v169 = vunpack.c.l.b16 %v67
  %v170 = vunpack.c.l.b16 %v68
  %v171 = vunpack.c.l.b16 %v69
  %v172 = vunpack.c.l.b16 %v70
  %v173 = vunpack.c.l.b16 %v71
  %v174 = vpack.c.b16 %v139, %v138
  %v175 = vpack.c.b16 %v141, %v140
  %v176 = vpack.c.b16 %v143, %v142
  %v177 = vpack.c.b16 %v145, %v144
  %v178 = vpack.c.b16 %v147, %v146
  %v179 = vpack.c.b16 %v149, %v148
  %v180 = vpack.c.b16 %v151, %v150
  %v181 = vpack.c.b16 %v153, %v152
  %v182 = vpack.c.b16 %v155, %v154
  %v183 = vpack.c.b16 %v157, %v156
  %v184 = vpack.c.b16 %v159, %v158
  %v185 = vpack.c.b16 %v161, %v160
  %v186 = vpack.c.b16 %v163, %v162
  %v187 = vpack.c.b16 %v165, %v164
  %v188 = vpack.c.b16 %v167, %v166
  %v189 = vpack.c.b16 %v169, %v168
  %v190 = vpack.c.b16 %v171, %v170
  %v191 = vpack.c.b16 %v173, %v172
  %vm210 = vcmask 261120
  %v212 = vsel %vm210, %v94, 0
  %v215 = vsel %vm210, %v97, 0
  %217 = vmatprep.subr.bf16.mxu0 0
  %218 = vmatpush1.bf16.msra.mxu0 %v181
  %219 = vmatprep.subr.bf16.mxu0 0
  %220 = vmatpush1.bf16.msra.mxu0 %v180
  %221 = vmatprep.subr.bf16.mxu0 0
  %222 = vmatpush1.bf16.msra.mxu0 %v179
  %223 = vmatprep.subr.bf16.mxu0 0
  %224 = vmatpush1.bf16.msra.mxu0 %v178
  %225 = vmatprep.subr.bf16.mxu0 0
  %226 = vmatpush1.bf16.msra.mxu0 %v177
  %227 = vmatprep.subr.bf16.mxu0 0
  %228 = vmatpush1.bf16.msra.mxu0 %v176
  %229 = vmatprep.subr.bf16.mxu0 0
  %230 = vmatpush1.bf16.msra.mxu0 %v175
  %231 = vmatprep.subr.bf16.mxu0 0
  %232 = vmatpush1.bf16.msra.mxu0 %v174
  %233 = vmatprep.subr.bf16.mxu0 0
  %234 = vmatpush2.bf16.msra.mxu0 %v189
  %235 = vmatprep.subr.bf16.mxu0 0
  %236 = vmatpush2.bf16.msra.mxu0 %v188
  %237 = vmatprep.subr.bf16.mxu0 0
  %238 = vmatpush2.bf16.msra.mxu0 %v187
  %239 = vmatprep.subr.bf16.mxu0 0
  %240 = vmatpush2.bf16.msra.mxu0 %v186
  %241 = vmatprep.subr.bf16.mxu0 0
  %242 = vmatpush2.bf16.msra.mxu0 %v185
  %243 = vmatprep.subr.bf16.mxu0 0
  %244 = vmatpush2.bf16.msra.mxu0 %v184
  %245 = vmatprep.subr.bf16.mxu0 0
  %246 = vmatpush2.bf16.msra.mxu0 %v183
  %247 = vmatprep.subr.bf16.mxu0 0
  %248 = vmatpush2.bf16.msra.mxu0 %v182
  %249 = vmatprep.mubr.bf16.mxu0 %v93
  %250 = vmatmul.mubr.bf16.gmra.mxu0 %v92
  %v251 = vpop.f32.mrf.mxu0
  %v252 = vadd.f32 0.0, %v251
  %v253 = vpop.f32.mrf.mxu0
  %v254 = vpop.f32.mrf.mxu0
  %v255 = vadd.f32 0.0, %v254
  %v256 = vpop.f32.mrf.mxu0
  %257 = vmatprep.mubr.bf16.mxu0 %v96
  %258 = vmatmul.mubr.bf16.gmra.mxu0 %v95
  %v259 = vpop.f32.mrf.mxu0
  %v260 = vadd.f32 0.0, %v259
  %v261 = vpop.f32.mrf.mxu0
  %v262 = vpop.f32.mrf.mxu0
  %v263 = vadd.f32 0.0, %v262
  %v264 = vpop.f32.mrf.mxu0
  %265 = vdwg.mxu0
  %266 = vmatprep.subr.bf16.mxu0 0
  %267 = vmatpush1.bf16.msra.mxu0 0
  %268 = vmatprep.subr.bf16.mxu0 0
  %269 = vmatpush1.bf16.msra.mxu0 0
  %270 = vmatprep.subr.bf16.mxu0 0
  %271 = vmatpush1.bf16.msra.mxu0 0
  %272 = vmatprep.subr.bf16.mxu0 0
  %273 = vmatpush1.bf16.msra.mxu0 0
  %274 = vmatprep.subr.bf16.mxu0 0
  %275 = vmatpush1.bf16.msra.mxu0 0
  %276 = vmatprep.subr.bf16.mxu0 0
  %277 = vmatpush1.bf16.msra.mxu0 0
  %278 = vmatprep.subr.bf16.mxu0 0
  %279 = vmatpush1.bf16.msra.mxu0 %v191
  %280 = vmatprep.subr.bf16.mxu0 0
  %281 = vmatpush1.bf16.msra.mxu0 %v190
  %282 = vmatprep.subr.bf16.mxu0 0
  %283 = vmatpush2.bf16.msra.mxu0 0
  %284 = vmatprep.subr.bf16.mxu0 0
  %285 = vmatpush2.bf16.msra.mxu0 0
  %286 = vmatprep.subr.bf16.mxu0 0
  %287 = vmatpush2.bf16.msra.mxu0 0
  %288 = vmatprep.subr.bf16.mxu0 0
  %289 = vmatpush2.bf16.msra.mxu0 0
  %290 = vmatprep.subr.bf16.mxu0 0
  %291 = vmatpush2.bf16.msra.mxu0 0
  %292 = vmatprep.subr.bf16.mxu0 0
  %293 = vmatpush2.bf16.msra.mxu0 0
  %294 = vmatprep.subr.bf16.mxu0 0
  %295 = vmatpush2.bf16.msra.mxu0 0
  %296 = vmatprep.subr.bf16.mxu0 0
  %297 = vmatpush2.bf16.msra.mxu0 0
  %298 = vmatprep.mubr.bf16.mxu0 0
  %299 = vmatmul.mubr.bf16.gmra.mxu0 %v212
  %v300 = vpop.f32.mrf.mxu0
  %v301 = vadd.f32 %v252, %v300
  %v302 = vpop.f32.mrf.mxu0
  %v303 = vpop.f32.mrf.mxu0
  %v304 = vadd.f32 %v255, %v303
  %v305 = vpop.f32.mrf.mxu0
  %306 = vmatprep.mubr.bf16.mxu0 0
  %307 = vmatmul.mubr.bf16.gmra.mxu0 %v215
  %v308 = vpop.f32.mrf.mxu0
  %v309 = vadd.f32 %v260, %v308
  %v310 = vpop.f32.mrf.mxu0
  %v311 = vpop.f32.mrf.mxu0
  %v312 = vadd.f32 %v263, %v311
  %v313 = vpop.f32.mrf.mxu0
  %314 = vdwg.mxu0
  %v315 = vadd.f32 %v24, %v301
  %v316 = vadd.f32 %v25, %v304
  %v317 = vadd.f32 %v26, %v309
  %v318 = vadd.f32 %v27, %v312
  %319 = vst.msk [vmem:[#allocation2] sm:$0xff] %vm210, %v315
  %320 = vst.msk [vmem:[#allocation2 + $0x8] sm:$0xff] %vm210, %v316
  %321 = vst.msk [vmem:[#allocation2 + $0x10] sm:$0xff] %vm210, %v317
  %322 = vst.msk [vmem:[#allocation2 + $0x18] sm:$0xff] %vm210, %v318
  // Predicated region
  $region14: #{_lambda_.32} parent=0 // pred_check
    %p323 = pneg %p15
  $region15: #{_lambda_.32} parent=0 // pred_check_branch
    %325 = sbr.rel (%p323) target = $region17
  $region16: #{_lambda_.32} parent=0 // pred_region
    %v326 = vld [vmem:[#allocation2] sm:$0xff]
    %v327 = vld [vmem:[#allocation2 + $0x8] sm:$0xff]
    %v328 = vld [vmem:[#allocation2 + $0x10] sm:$0xff]
    %v329 = vld [vmem:[#allocation2 + $0x18] sm:$0xff]
    %v330 = vpack.c.bf16 %v327, %v326
    %v331 = vpack.c.bf16 %v329, %v328
    %v334 = vunpack.c.l.b16 %v330
    %v335 = vunpack.c.h.b16 %v330
    %v336 = vunpack.c.l.b16 %v331
    %v337 = vunpack.c.h.b16 %v331
    %v338 = vpack.c.b16 %v334, %v334
    %v339 = vpack.c.b16 %v335, %v335
    %v340 = vpack.c.b16 %v336, %v336
    %v341 = vpack.c.b16 %v337, %v337
    %vm346 = vcmask 257024
    %347 = vst.msk [vmem:[%s2] sm:$0xf] %vm346, %v338
    %348 = vst.msk [vmem:[%s2 + $0x4] sm:$0xf] %vm346, %v339
    %349 = vst.msk [vmem:[%s2 + $0x8] sm:$0xf] %vm346, %v340
    %350 = vst.msk [vmem:[%s2 + $0xc] sm:$0xf] %vm346, %v341
    %v351 = vlaneseq
    %v352 = vshrl.u32 %v351, 7
    %vm353 = vcmp.eq.s32.totalorder %v352, 0
    %v354 = vsel %vm210, %v326, 0.0
    %v355 = vsel %vm210, %v327, 0.0
    %v356 = vadd.f32 %v354, %v355
    %v357 = vsel %vm210, %v328, 0.0
    %v358 = vadd.f32 %v356, %v357
    %v359 = vsel %vm210, %v329, 0.0
    %v360 = vadd.f32 %v358, %v359
    %v361 = vrot.slane %v360, 4
    %v362 = vadd.f32 %v360, %v361
    %v363 = vrot.slane %v362, 2
    %v364 = vadd.f32 %v362, %v363
    %v365 = vrot.slane %v364, 1
    %v366 = vadd.f32 %v364, %v365
    %v367 = vmul.f32 %v326, %v326
    %v368 = vmul.f32 %v327, %v327
    %v369 = vmul.f32 %v328, %v328
    %v370 = vmul.f32 %v329, %v329
    %v371 = vsel %vm210, %v367, 0.0
    %v372 = vsel %vm210, %v368, 0.0
    %v373 = vadd.f32 %v371, %v372
    %v374 = vsel %vm210, %v369, 0.0
    %v375 = vadd.f32 %v373, %v374
    %v376 = vsel %vm210, %v370, 0.0
    %v377 = vadd.f32 %v375, %v376
    %v378 = vrot.slane %v377, 4
    %v379 = vadd.f32 %v377, %v378
    %v380 = vrot.slane %v379, 2
    %v381 = vadd.f32 %v379, %v380
    %v382 = vrot.slane %v381, 1
    %v383 = vadd.f32 %v381, %v382
    %v384 = vsel %vm353, %v366, 0.0
    %385 = vst.msk [vmem:[%s3] sm:$0xff] %vm210, %v384
    %v386 = vsel %vm353, %v383, 0.0
    %387 = vst.msk [vmem:[%s4] sm:$0xff] %vm210, %v386
  $region17: #{_lambda_.32} parent=0 // pred_fallthru
    _
  // Predicated region
  $region18: #{_lambda_.32} parent=0 // pred_check
    _
  $region19: #{_lambda_.32} parent=0 // pred_check_branch
    %389 = sbr.rel (0) target = $region21
  $region20: #{_lambda_.32} parent=0 // pred_region
    _
  $region21: #{_lambda_.32} parent=0 // pred_fallthru
    _
  // Predicated region
  $region22: #{_lambda_.32} parent=0 // pred_check
    _
  $region23: #{_lambda_.32} parent=0 // pred_check_branch
    %391 = sbr.rel (0) target = $region25
  $region24: #{_lambda_.32} parent=0 // pred_region
    _
  $region25: #{_lambda_.32} parent=0 // pred_fallthru
    _
  // Predicated region
  $region26: #{_lambda_.32} parent=0 // pred_check
    _
  $region27: #{_lambda_.32} parent=0 // pred_check_branch
    %393 = sbr.rel (0) target = $region29
  $region28: #{_lambda_.32} parent=0 // pred_region
    _
  $region29: #{_lambda_.32} parent=0 // pred_fallthru
    _
  // Predicated region
  $region30: #{_lambda_.32} parent=0 // pred_check
    _
  $region31: #{_lambda_.32} parent=0 // pred_check_branch
    %395 = sbr.rel (0) target = $region33
  $region32: #{_lambda_.32} parent=0 // pred_region
    _
  $region33: #{_lambda_.32} parent=0 // pred_fallthru
    _
  // Predicated region
  $region34: #{_lambda_.32} parent=0 // pred_check
    _
  $region35: #{_lambda_.32} parent=0 // pred_check_branch
    %397 = sbr.rel (0) target = $region37
  $region36: #{_lambda_.32} parent=0 // pred_region
    _
  $region37: #{_lambda_.32} parent=0 // pred_fallthru
    _
  // Predicated region
  $region38: #{_lambda_.32} parent=0 // pred_check
    _
  $region39: #{_lambda_.32} parent=0 // pred_check_branch
    %399 = sbr.rel (0) target = $region41
  $region40: #{_lambda_.32} parent=0 // pred_region
    _
  $region41: #{_lambda_.32} parent=0 // pred_fallthru
    _

// kernel: _lambda_.34
$region0: #{_lambda_.34}
  #allocation0 [shape = 'u32[]', space=smem, size = 0x4, offset = 0x4, fixed_abs, tag = 'smem constant byte address 0x4 - core index']
  #allocation1 [shape = 'u32[144,128]{1,0:T(1,128)}', space=vmem, size = 0x12000, scoped, tag = 'internal scratch']
  %s0 = inlined_call_operand.vmem [shape: bf16[8,128], index: 0, kind: input, shape index: {}]
  %s1 = inlined_call_operand.vmem [shape: f32[1,128], index: 1, kind: input, shape index: {}]
  %s2 = inlined_call_operand.vmem [shape: f32[1,128], index: 2, kind: input, shape index: {}]
  %s3 = inlined_call_operand.vmem [shape: bf16[8,128], index: 3, kind: input, shape index: {}]
  %s4 = inlined_call_operand.vmem [shape: f32[1,128], index: 4, kind: input, shape index: {}]
  %s5 = inlined_call_operand.vmem [shape: f32[1,128], index: 5, kind: input, shape index: {}]
  %s6 = inlined_call_operand.vmem [shape: bf16[8,128], index: 6, kind: output, shape index: {}]
  %s7 = sld [smem:[#allocation0]]
  $region34: #{_lambda_.34} parent=0
    _
  %s9 = ssub.s32 1, %s7
  %s10 = scalar_select 0, %s9, %s7
  // Predicated region
  $region2: #{_lambda_.34} parent=0 // pred_check
    _
  $region3: #{_lambda_.34} parent=0 // pred_check_branch
    %12 = sbr.rel (0) target = $region5
  $region4: #{_lambda_.34} parent=0 // pred_region
    _
  $region5: #{_lambda_.34} parent=0 // pred_fallthru
    _
  // Predicated region
  $region6: #{_lambda_.34} parent=0 // pred_check
    _
  $region7: #{_lambda_.34} parent=0 // pred_check_branch
    %14 = sbr.rel (0) target = $region9
  $region8: #{_lambda_.34} parent=0 // pred_region
    _
  $region9: #{_lambda_.34} parent=0 // pred_fallthru
    _
  // Predicated region
  $region10: #{_lambda_.34} parent=0 // pred_check
    _
  $region11: #{_lambda_.34} parent=0 // pred_check_branch
    %16 = sbr.rel (0) target = $region13
  $region12: #{_lambda_.34} parent=0 // pred_region
    _
  $region13: #{_lambda_.34} parent=0 // pred_fallthru
    _
  // Predicated region
  $region14: #{_lambda_.34} parent=0 // pred_check
    _
  $region15: #{_lambda_.34} parent=0 // pred_check_branch
    %18 = sbr.rel (0) target = $region17
  $region16: #{_lambda_.34} parent=0 // pred_region
    _
  $region17: #{_lambda_.34} parent=0 // pred_fallthru
    _
  // Predicated region
  $region18: #{_lambda_.34} parent=0 // pred_check
    _
  $region19: #{_lambda_.34} parent=0 // pred_check_branch
    %20 = sbr.rel (0) target = $region21
  $region20: #{_lambda_.34} parent=0 // pred_region
    _
  $region21: #{_lambda_.34} parent=0 // pred_fallthru
    _
  // Predicated region
  $region22: #{_lambda_.34} parent=0 // pred_check
    _
  $region23: #{_lambda_.34} parent=0 // pred_check_branch
    %22 = sbr.rel (0) target = $region25
  $region24: #{_lambda_.34} parent=0 // pred_region
    _
  $region25: #{_lambda_.34} parent=0 // pred_fallthru
    _
  %v23 = vld [vmem:[%s0] sm:$0xf]
  %v24 = vunpack.c.l.bf16 %v23
  %v25 = vld [vmem:[%s1] sm:$0x1]
  %v27 = vlaneseq
  %v28 = vshrl.u32 %v27, 7
  %v29 = vsub.s32 0, %v28
  %v30 = vrot.slane %v25, %v29
  %v32 = vmul.f32 %v24, %v30
  %v33 = vld [vmem:[%s2] sm:$0x1]
  %v35 = vlaneseq
  %v36 = vshrl.u32 %v35, 7
  %v37 = vsub.s32 0, %v36
  %v38 = vrot.slane %v33, %v37
  %v40 = vadd.f32 %v32, %v38
  %v41 = vld [vmem:[%s3] sm:$0xf]
  %v42 = vunpack.c.l.bf16 %v41
  %v43 = vld [vmem:[%s4] sm:$0x1]
  %v45 = vlaneseq
  %v46 = vshrl.u32 %v45, 7
  %v47 = vsub.s32 0, %v46
  %v48 = vrot.slane %v43, %v47
  %v50 = vmul.f32 %v42, %v48
  %v51 = vadd.f32 %v40, %v50
  %v52 = vld [vmem:[%s5] sm:$0x1]
  %v54 = vlaneseq
  %v55 = vshrl.u32 %v54, 7
  %v56 = vsub.s32 0, %v55
  %v57 = vrot.slane %v52, %v56
  %v59 = vadd.f32 %v51, %v57
  %v60 = vmax.f32 %v59, 0.0
  %v61 = vpack.c.bf16 %v60, %v60
  %62 = vst [vmem:[%s6] sm:$0xf] %v61
  // Predicated region
  $region26: #{_lambda_.34} parent=0 // pred_check
    _
  $region27: #{_lambda_.34} parent=0 // pred_check_branch
    %64 = sbr.rel (0) target = $region29
  $region28: #{_lambda_.34} parent=0 // pred_region
    _
  $region29: #{_lambda_.34} parent=0 // pred_fallthru
    _
  // Predicated region
  $region30: #{_lambda_.34} parent=0 // pred_check
    _
  $region31: #{_lambda_.34} parent=0 // pred_check_branch
    %66 = sbr.rel (0) target = $region33
  $region32: #{_lambda_.34} parent=0 // pred_region
    _
  $region33: #{_lambda_.34} parent=0 // pred_fallthru
    _

// kernel: _lambda_.38
$region0: #{_lambda_.38}
  #allocation0 [shape = 'u32[]', space=smem, size = 0x4, offset = 0x4, fixed_abs, tag = 'smem constant byte address 0x4 - core index']
  #allocation1 [shape = 'u32[144,128]{1,0:T(1,128)}', space=vmem, size = 0x12000, scoped, tag = 'internal scratch']
  #allocation2 [shape = 'f32[8,64]{1,0:T(8,128)}', space=vmem, size = 0x1000, scoped, tag = 'scratch operand']
  %s0 = inlined_call_operand.vmem [shape: bf16[8,32], index: 0, kind: input, shape index: {}]
  %s1 = inlined_call_operand.vmem [shape: bf16[32,64], index: 1, kind: input, shape index: {}]
  %s2 = inlined_call_operand.vmem [shape: bf16[8,64], index: 2, kind: output, shape index: {0}]
  %s3 = inlined_call_operand.vmem [shape: f32[8,64], index: 3, kind: output, shape index: {1}]
  %s4 = inlined_call_operand.vmem [shape: f32[8,64], index: 4, kind: output, shape index: {2}]
  %5 = xla_tuple %s2, %s3, %s4
  %s6 = sld [smem:[#allocation0]]
  $region42: #{_lambda_.38} parent=0
    _
  %s8 = ssub.s32 1, %s6
  %s9 = scalar_select 0, %s8, %s6
  // Predicated region
  $region2: #{_lambda_.38} parent=0 // pred_check
    _
  $region3: #{_lambda_.38} parent=0 // pred_check_branch
    %11 = sbr.rel (0) target = $region5
  $region4: #{_lambda_.38} parent=0 // pred_region
    _
  $region5: #{_lambda_.38} parent=0 // pred_fallthru
    _
  // Predicated region
  $region6: #{_lambda_.38} parent=0 // pred_check
    _
  $region7: #{_lambda_.38} parent=0 // pred_check_branch
    %13 = sbr.rel (0) target = $region9
  $region8: #{_lambda_.38} parent=0 // pred_region
    _
  $region9: #{_lambda_.38} parent=0 // pred_fallthru
    _
  %p15 = scmp.eq.s32.totalorder 0, 0
  // Predicated region
  $region10: #{_lambda_.38} parent=0 // pred_check
    %p16 = pneg %p15
  $region11: #{_lambda_.38} parent=0 // pred_check_branch
    %18 = sbr.rel (%p16) target = $region13
  $region12: #{_lambda_.38} parent=0 // pred_region
    %vm19 = vcmask 523264
    %20 = vst.msk [vmem:[#allocation2] sm:$0xff] %vm19, 0.0
  $region13: #{_lambda_.38} parent=0 // pred_fallthru
    _
  %v21 = vld [vmem:[#allocation2] sm:$0xff]
  %v22 = vld [vmem:[%s0] sm:$0xf]
  %v23 = vld [vmem:[%s1] sm:$0xf]
  %v24 = vld [vmem:[%s1 + $0x4] sm:$0xf]
  %v25 = vld [vmem:[%s1 + $0x8] sm:$0xf]
  %v26 = vld [vmem:[%s1 + $0xc] sm:$0xf]
  %v31 = vunpack.c.l.b16 %v23
  %v32 = vunpack.c.l.b16 %v24
  %v33 = vunpack.c.l.b16 %v25
  %v34 = vunpack.c.l.b16 %v26
  %v35 = vpack.c.b16 %v32, %v31
  %v36 = vpack.c.b16 %v34, %v33
  %vm39 = vcmask 261120
  %v41 = vsel %vm39, %v22, 0
  %43 = vmatprep.subr.bf16.mxu0 0
  %44 = vmatpush1.bf16.msra.mxu0 0
  %45 = vmatprep.subr.bf16.mxu0 0
  %46 = vmatpush1.bf16.msra.mxu0 0
  %47 = vmatprep.subr.bf16.mxu0 0
  %48 = vmatpush1.bf16.msra.mxu0 0
  %49 = vmatprep.subr.bf16.mxu0 0
  %50 = vmatpush1.bf16.msra.mxu0 0
  %51 = vmatprep.subr.bf16.mxu0 0
  %52 = vmatpush1.bf16.msra.mxu0 0
  %53 = vmatprep.subr.bf16.mxu0 0
  %54 = vmatpush1.bf16.msra.mxu0 0
  %55 = vmatprep.subr.bf16.mxu0 0
  %56 = vmatpush1.bf16.msra.mxu0 %v36
  %57 = vmatprep.subr.bf16.mxu0 0
  %58 = vmatpush1.bf16.msra.mxu0 %v35
  %59 = vmatprep.subr.bf16.mxu0 0
  %60 = vmatpush2.bf16.msra.mxu0 0
  %61 = vmatprep.subr.bf16.mxu0 0
  %62 = vmatpush2.bf16.msra.mxu0 0
  %63 = vmatprep.subr.bf16.mxu0 0
  %64 = vmatpush2.bf16.msra.mxu0 0
  %65 = vmatprep.subr.bf16.mxu0 0
  %66 = vmatpush2.bf16.msra.mxu0 0
  %67 = vmatprep.subr.bf16.mxu0 0
  %68 = vmatpush2.bf16.msra.mxu0 0
  %69 = vmatprep.subr.bf16.mxu0 0
  %70 = vmatpush2.bf16.msra.mxu0 0
  %71 = vmatprep.subr.bf16.mxu0 0
  %72 = vmatpush2.bf16.msra.mxu0 0
  %73 = vmatprep.subr.bf16.mxu0 0
  %74 = vmatpush2.bf16.msra.mxu0 0
  %75 = vmatprep.mubr.bf16.mxu0 0
  %76 = vmatmul.mubr.bf16.gmra.mxu0 %v41
  %v77 = vpop.f32.mrf.mxu0
  %v78 = vadd.f32 0.0, %v77
  %v79 = vpop.f32.mrf.mxu0
  %v80 = vpop.f32.mrf.mxu0
  %v81 = vpop.f32.mrf.mxu0
  %82 = vdwg.mxu0
  %v83 = vadd.f32 %v21, %v78
  %vm84 = vcmask 523264
  %85 = vst.msk [vmem:[#allocation2] sm:$0xff] %vm84, %v83
  // Predicated region
  $region14: #{_lambda_.38} parent=0 // pred_check
    %p86 = pneg %p15
  $region15: #{_lambda_.38} parent=0 // pred_check_branch
    %88 = sbr.rel (%p86) target = $region17
  $region16: #{_lambda_.38} parent=0 // pred_region
    %v89 = vld [vmem:[#allocation2] sm:$0xff]
    %v90 = vpack.c.bf16 %v89, %v89
    %vm91 = vcmask 519168
    %92 = vst.msk [vmem:[%s2] sm:$0xf] %vm91, %v90
    %v93 = vlaneseq
    %v94 = vshrl.u32 %v93, 7
    %vm95 = vcmp.eq.s32.totalorder %v94, 0
    %v96 = vsel %vm84, %v89, 0.0
    %v97 = vrot.slane %v96, 4
    %v98 = vadd.f32 %v96, %v97
    %v99 = vrot.slane %v98, 2
    %v100 = vadd.f32 %v98, %v99
    %v101 = vrot.slane %v100, 1
    %v102 = vadd.f32 %v100, %v101
    %v103 = vmul.f32 %v89, %v89
    %v104 = vsel %vm84, %v103, 0.0
    %v105 = vrot.slane %v104, 4
    %v106 = vadd.f32 %v104, %v105
    %v107 = vrot.slane %v106, 2
    %v108 = vadd.f32 %v106, %v107
    %v109 = vrot.slane %v108, 1
    %v110 = vadd.f32 %v108, %v109
    %v111 = vsel %vm95, %v102, 0.0
    %112 = vst.msk [vmem:[%s3] sm:$0xff] %vm84, %v111
    %v113 = vsel %vm95, %v110, 0.0
    %114 = vst.msk [vmem:[%s4] sm:$0xff] %vm84, %v113
  $region17: #{_lambda_.38} parent=0 // pred_fallthru
    _
  // Predicated region
  $region18: #{_lambda_.38} parent=0 // pred_check
    _
  $region19: #{_lambda_.38} parent=0 // pred_check_branch
    %116 = sbr.rel (0) target = $region21
  $region20: #{_lambda_.38} parent=0 // pred_region
    _
  $region21: #{_lambda_.38} parent=0 // pred_fallthru
    _
  // Predicated region
  $region22: #{_lambda_.38} parent=0 // pred_check
    _
  $region23: #{_lambda_.38} parent=0 // pred_check_branch
    %118 = sbr.rel (0) target = $region25
  $region24: #{_lambda_.38} parent=0 // pred_region
    _
  $region25: #{_lambda_.38} parent=0 // pred_fallthru
    _
  // Predicated region
  $region26: #{_lambda_.38} parent=0 // pred_check
    _
  $region27: #{_lambda_.38} parent=0 // pred_check_branch
    %120 = sbr.rel (0) target = $region29
  $region28: #{_lambda_.38} parent=0 // pred_region
    _
  $region29: #{_lambda_.38} parent=0 // pred_fallthru
    _
  // Predicated region
  $region30: #{_lambda_.38} parent=0 // pred_check
    _
  $region31: #{_lambda_.38} parent=0 // pred_check_branch
    %122 = sbr.rel (0) target = $region33
  $region32: #{_lambda_.38} parent=0 // pred_region
    _
  $region33: #{_lambda_.38} parent=0 // pred_fallthru
    _
  // Predicated region
  $region34: #{_lambda_.38} parent=0 // pred_check
    _
  $region35: #{_lambda_.38} parent=0 // pred_check_branch
    %124 = sbr.rel (0) target = $region37
  $region36: #{_lambda_.38} parent=0 // pred_region
    _
  $region37: #{_lambda_.38} parent=0 // pred_fallthru
    _
  // Predicated region
  $region38: #{_lambda_.38} parent=0 // pred_check
    _
  $region39: #{_lambda_.38} parent=0 // pred_check_branch
    %126 = sbr.rel (0) target = $region41
  $region40: #{_lambda_.38} parent=0 // pred_region
    _
  $region41: #{_lambda_.38} parent=0 // pred_fallthru
    _

// kernel: _lambda_.36
$region0: #{_lambda_.36}
  #allocation0 [shape = 'u32[]', space=smem, size = 0x4, offset = 0x4, fixed_abs, tag = 'smem constant byte address 0x4 - core index']
  #allocation1 [shape = 'u32[144,128]{1,0:T(1,128)}', space=vmem, size = 0x12000, scoped, tag = 'internal scratch']
  %s0 = inlined_call_operand.vmem [shape: bf16[4,128], index: 0, kind: input, shape index: {}]
  %s1 = inlined_call_operand.vmem [shape: f32[1,128], index: 1, kind: input, shape index: {}]
  %s2 = inlined_call_operand.vmem [shape: f32[1,128], index: 2, kind: input, shape index: {}]
  %s3 = inlined_call_operand.vmem [shape: bf16[4,128], index: 3, kind: output, shape index: {}]
  %s4 = sld [smem:[#allocation0]]
  $region22: #{_lambda_.36} parent=0
    _
  %s6 = ssub.s32 1, %s4
  %s7 = scalar_select 0, %s6, %s4
  // Predicated region
  $region2: #{_lambda_.36} parent=0 // pred_check
    _
  $region3: #{_lambda_.36} parent=0 // pred_check_branch
    %9 = sbr.rel (0) target = $region5
  $region4: #{_lambda_.36} parent=0 // pred_region
    _
  $region5: #{_lambda_.36} parent=0 // pred_fallthru
    _
  // Predicated region
  $region6: #{_lambda_.36} parent=0 // pred_check
    _
  $region7: #{_lambda_.36} parent=0 // pred_check_branch
    %11 = sbr.rel (0) target = $region9
  $region8: #{_lambda_.36} parent=0 // pred_region
    _
  $region9: #{_lambda_.36} parent=0 // pred_fallthru
    _
  // Predicated region
  $region10: #{_lambda_.36} parent=0 // pred_check
    _
  $region11: #{_lambda_.36} parent=0 // pred_check_branch
    %13 = sbr.rel (0) target = $region13
  $region12: #{_lambda_.36} parent=0 // pred_region
    _
  $region13: #{_lambda_.36} parent=0 // pred_fallthru
    _
  %v14 = vld [vmem:[%s0] sm:$0x3]
  %v15 = vunpack.c.l.bf16 %v14
  %v16 = vld [vmem:[%s1] sm:$0x1]
  %v18 = vlaneseq
  %v19 = vshrl.u32 %v18, 7
  %v20 = vsub.s32 0, %v19
  %v21 = vrot.slane %v16, %v20
  %v23 = vmul.f32 %v15, %v21
  %v24 = vld [vmem:[%s2] sm:$0x1]
  %v26 = vlaneseq
  %v27 = vshrl.u32 %v26, 7
  %v28 = vsub.s32 0, %v27
  %v29 = vrot.slane %v24, %v28
  %v31 = vadd.f32 %v23, %v29
  %v32 = vmax.f32 %v31, 0.0
  %v33 = vpack.c.bf16 %v32, %v32
  %34 = vst [vmem:[%s3] sm:$0x3] %v33
  // Predicated region
  $region14: #{_lambda_.36} parent=0 // pred_check
    _
  $region15: #{_lambda_.36} parent=0 // pred_check_branch
    %36 = sbr.rel (0) target = $region17
  $region16: #{_lambda_.36} parent=0 // pred_region
    _
  $region17: #{_lambda_.36} parent=0 // pred_fallthru
    _
  // Predicated region
  $region18: #{_lambda_.36} parent=0 // pred_check
    _
  $region19: #{_lambda_.36} parent=0 // pred_check_branch
    %38 = sbr.rel (0) target = $region21
  $region20: #{_lambda_.36} parent=0 // pred_region
    _
  $region21: #{_lambda_.36} parent=0 // pred_fallthru
    _

// kernel: _lambda_.35
$region0: #{_lambda_.35}
  #allocation0 [shape = 'u32[]', space=smem, size = 0x4, offset = 0x4, fixed_abs, tag = 'smem constant byte address 0x4 - core index']
  #allocation1 [shape = 'u32[144,128]{1,0:T(1,128)}', space=vmem, size = 0x12000, scoped, tag = 'internal scratch']
  #allocation2 [shape = 'f32[8,64]{1,0:T(8,128)}', space=vmem, size = 0x1000, scoped, tag = 'scratch operand']
  %s0 = inlined_call_operand.vmem [shape: bf16[8,288], index: 0, kind: input, shape index: {}]
  %s1 = inlined_call_operand.vmem [shape: bf16[288,64], index: 1, kind: input, shape index: {}]
  %s2 = inlined_call_operand.vmem [shape: bf16[8,64], index: 2, kind: output, shape index: {0}]
  %s3 = inlined_call_operand.vmem [shape: f32[8,64], index: 3, kind: output, shape index: {1}]
  %s4 = inlined_call_operand.vmem [shape: f32[8,64], index: 4, kind: output, shape index: {2}]
  %5 = xla_tuple %s2, %s3, %s4
  %s6 = sld [smem:[#allocation0]]
  $region42: #{_lambda_.35} parent=0
    _
  %s8 = ssub.s32 1, %s6
  %s9 = scalar_select 0, %s8, %s6
  // Predicated region
  $region2: #{_lambda_.35} parent=0 // pred_check
    _
  $region3: #{_lambda_.35} parent=0 // pred_check_branch
    %11 = sbr.rel (0) target = $region5
  $region4: #{_lambda_.35} parent=0 // pred_region
    _
  $region5: #{_lambda_.35} parent=0 // pred_fallthru
    _
  // Predicated region
  $region6: #{_lambda_.35} parent=0 // pred_check
    _
  $region7: #{_lambda_.35} parent=0 // pred_check_branch
    %13 = sbr.rel (0) target = $region9
  $region8: #{_lambda_.35} parent=0 // pred_region
    _
  $region9: #{_lambda_.35} parent=0 // pred_fallthru
    _
  %p15 = scmp.eq.s32.totalorder 0, 0
  // Predicated region
  $region10: #{_lambda_.35} parent=0 // pred_check
    %p16 = pneg %p15
  $region11: #{_lambda_.35} parent=0 // pred_check_branch
    %18 = sbr.rel (%p16) target = $region13
  $region12: #{_lambda_.35} parent=0 // pred_region
    %vm19 = vcmask 523264
    %20 = vst.msk [vmem:[#allocation2] sm:$0xff] %vm19, 0.0
  $region13: #{_lambda_.35} parent=0 // pred_fallthru
    _
  %v21 = vld [vmem:[#allocation2] sm:$0xff]
  %v22 = vld [vmem:[%s0] sm:$0xff]
  %v23 = vld [vmem:[%s0 + $0x8] sm:$0xf]
  %v24 = vld [vmem:[%s1] sm:$0xf]
  %v25 = vld [vmem:[%s1 + $0x4] sm:$0xf]
  %v26 = vld [vmem:[%s1 + $0x8] sm:$0xf]
  %v27 = vld [vmem:[%s1 + $0xc] sm:$0xf]
  %v28 = vld [vmem:[%s1 + $0x10] sm:$0xf]
  %v29 = vld [vmem:[%s1 + $0x14] sm:$0xf]
  %v30 = vld [vmem:[%s1 + $0x18] sm:$0xf]
  %v31 = vld [vmem:[%s1 + $0x1c] sm:$0xf]
  %v32 = vld [vmem:[%s1 + $0x20] sm:$0xf]
  %v33 = vld [vmem:[%s1 + $0x24] sm:$0xf]
  %v34 = vld [vmem:[%s1 + $0x28] sm:$0xf]
  %v35 = vld [vmem:[%s1 + $0x2c] sm:$0xf]
  %v36 = vld [vmem:[%s1 + $0x30] sm:$0xf]
  %v37 = vld [vmem:[%s1 + $0x34] sm:$0xf]
  %v38 = vld [vmem:[%s1 + $0x38] sm:$0xf]
  %v39 = vld [vmem:[%s1 + $0x3c] sm:$0xf]
  %v40 = vld [vmem:[%s1 + $0x40] sm:$0xf]
  %v41 = vld [vmem:[%s1 + $0x44] sm:$0xf]
  %v42 = vld [vmem:[%s1 + $0x48] sm:$0xf]
  %v43 = vld [vmem:[%s1 + $0x4c] sm:$0xf]
  %v44 = vld [vmem:[%s1 + $0x50] sm:$0xf]
  %v45 = vld [vmem:[%s1 + $0x54] sm:$0xf]
  %v46 = vld [vmem:[%s1 + $0x58] sm:$0xf]
  %v47 = vld [vmem:[%s1 + $0x5c] sm:$0xf]
  %v48 = vld [vmem:[%s1 + $0x60] sm:$0xf]
  %v49 = vld [vmem:[%s1 + $0x64] sm:$0xf]
  %v50 = vld [vmem:[%s1 + $0x68] sm:$0xf]
  %v51 = vld [vmem:[%s1 + $0x6c] sm:$0xf]
  %v52 = vld [vmem:[%s1 + $0x70] sm:$0xf]
  %v53 = vld [vmem:[%s1 + $0x74] sm:$0xf]
  %v54 = vld [vmem:[%s1 + $0x78] sm:$0xf]
  %v55 = vld [vmem:[%s1 + $0x7c] sm:$0xf]
  %v56 = vld [vmem:[%s1 + $0x80] sm:$0xf]
  %v57 = vld [vmem:[%s1 + $0x84] sm:$0xf]
  %v58 = vld [vmem:[%s1 + $0x88] sm:$0xf]
  %v59 = vld [vmem:[%s1 + $0x8c] sm:$0xf]
  %v62 = vunpack.c.l.b16 %v22
  %v63 = vunpack.c.h.b16 %v22
  %v64 = vunpack.c.l.b16 %v23
  %v65 = vpack.c.b16 %v62, %v62
  %v66 = vpack.c.b16 %v63, %v63
  %v67 = vpack.c.b16 %v64, %v64
  %v106 = vunpack.c.l.b16 %v24
  %v107 = vunpack.c.l.b16 %v25
  %v108 = vunpack.c.l.b16 %v26
  %v109 = vunpack.c.l.b16 %v27
  %v110 = vunpack.c.l.b16 %v28
  %v111 = vunpack.c.l.b16 %v29
  %v112 = vunpack.c.l.b16 %v30
  %v113 = vunpack.c.l.b16 %v31
  %v114 = vunpack.c.l.b16 %v32
  %v115 = vunpack.c.l.b16 %v33
  %v116 = vunpack.c.l.b16 %v34
  %v117 = vunpack.c.l.b16 %v35
  %v118 = vunpack.c.l.b16 %v36
  %v119 = vunpack.c.l.b16 %v37
  %v120 = vunpack.c.l.b16 %v38
  %v121 = vunpack.c.l.b16 %v39
  %v122 = vunpack.c.l.b16 %v40
  %v123 = vunpack.c.l.b16 %v41
  %v124 = vunpack.c.l.b16 %v42
  %v125 = vunpack.c.l.b16 %v43
  %v126 = vunpack.c.l.b16 %v44
  %v127 = vunpack.c.l.b16 %v45
  %v128 = vunpack.c.l.b16 %v46
  %v129 = vunpack.c.l.b16 %v47
  %v130 = vunpack.c.l.b16 %v48
  %v131 = vunpack.c.l.b16 %v49
  %v132 = vunpack.c.l.b16 %v50
  %v133 = vunpack.c.l.b16 %v51
  %v134 = vunpack.c.l.b16 %v52
  %v135 = vunpack.c.l.b16 %v53
  %v136 = vunpack.c.l.b16 %v54
  %v137 = vunpack.c.l.b16 %v55
  %v138 = vunpack.c.l.b16 %v56
  %v139 = vunpack.c.l.b16 %v57
  %v140 = vunpack.c.l.b16 %v58
  %v141 = vunpack.c.l.b16 %v59
  %v142 = vpack.c.b16 %v107, %v106
  %v143 = vpack.c.b16 %v109, %v108
  %v144 = vpack.c.b16 %v111, %v110
  %v145 = vpack.c.b16 %v113, %v112
  %v146 = vpack.c.b16 %v115, %v114
  %v147 = vpack.c.b16 %v117, %v116
  %v148 = vpack.c.b16 %v119, %v118
  %v149 = vpack.c.b16 %v121, %v120
  %v150 = vpack.c.b16 %v123, %v122
  %v151 = vpack.c.b16 %v125, %v124
  %v152 = vpack.c.b16 %v127, %v126
  %v153 = vpack.c.b16 %v129, %v128
  %v154 = vpack.c.b16 %v131, %v130
  %v155 = vpack.c.b16 %v133, %v132
  %v156 = vpack.c.b16 %v135, %v134
  %v157 = vpack.c.b16 %v137, %v136
  %v158 = vpack.c.b16 %v139, %v138
  %v159 = vpack.c.b16 %v141, %v140
  %vm178 = vcmask 261120
  %v180 = vsel %vm178, %v67, 0
  %182 = vmatprep.subr.bf16.mxu0 0
  %183 = vmatpush1.bf16.msra.mxu0 %v149
  %184 = vmatprep.subr.bf16.mxu0 0
  %185 = vmatpush1.bf16.msra.mxu0 %v148
  %186 = vmatprep.subr.bf16.mxu0 0
  %187 = vmatpush1.bf16.msra.mxu0 %v147
  %188 = vmatprep.subr.bf16.mxu0 0
  %189 = vmatpush1.bf16.msra.mxu0 %v146
  %190 = vmatprep.subr.bf16.mxu0 0
  %191 = vmatpush1.bf16.msra.mxu0 %v145
  %192 = vmatprep.subr.bf16.mxu0 0
  %193 = vmatpush1.bf16.msra.mxu0 %v144
  %194 = vmatprep.subr.bf16.mxu0 0
  %195 = vmatpush1.bf16.msra.mxu0 %v143
  %196 = vmatprep.subr.bf16.mxu0 0
  %197 = vmatpush1.bf16.msra.mxu0 %v142
  %198 = vmatprep.subr.bf16.mxu0 0
  %199 = vmatpush2.bf16.msra.mxu0 %v157
  %200 = vmatprep.subr.bf16.mxu0 0
  %201 = vmatpush2.bf16.msra.mxu0 %v156
  %202 = vmatprep.subr.bf16.mxu0 0
  %203 = vmatpush2.bf16.msra.mxu0 %v155
  %204 = vmatprep.subr.bf16.mxu0 0
  %205 = vmatpush2.bf16.msra.mxu0 %v154
  %206 = vmatprep.subr.bf16.mxu0 0
  %207 = vmatpush2.bf16.msra.mxu0 %v153
  %208 = vmatprep.subr.bf16.mxu0 0
  %209 = vmatpush2.bf16.msra.mxu0 %v152
  %210 = vmatprep.subr.bf16.mxu0 0
  %211 = vmatpush2.bf16.msra.mxu0 %v151
  %212 = vmatprep.subr.bf16.mxu0 0
  %213 = vmatpush2.bf16.msra.mxu0 %v150
  %214 = vmatprep.mubr.bf16.mxu0 %v66
  %215 = vmatmul.mubr.bf16.gmra.mxu0 %v65
  %v216 = vpop.f32.mrf.mxu0
  %v217 = vadd.f32 0.0, %v216
  %v218 = vpop.f32.mrf.mxu0
  %v219 = vpop.f32.mrf.mxu0
  %v220 = vpop.f32.mrf.mxu0
  %221 = vdwg.mxu0
  %222 = vmatprep.subr.bf16.mxu0 0
  %223 = vmatpush1.bf16.msra.mxu0 0
  %224 = vmatprep.subr.bf16.mxu0 0
  %225 = vmatpush1.bf16.msra.mxu0 0
  %226 = vmatprep.subr.bf16.mxu0 0
  %227 = vmatpush1.bf16.msra.mxu0 0
  %228 = vmatprep.subr.bf16.mxu0 0
  %229 = vmatpush1.bf16.msra.mxu0 0
  %230 = vmatprep.subr.bf16.mxu0 0
  %231 = vmatpush1.bf16.msra.mxu0 0
  %232 = vmatprep.subr.bf16.mxu0 0
  %233 = vmatpush1.bf16.msra.mxu0 0
  %234 = vmatprep.subr.bf16.mxu0 0
  %235 = vmatpush1.bf16.msra.mxu0 %v159
  %236 = vmatprep.subr.bf16.mxu0 0
  %237 = vmatpush1.bf16.msra.mxu0 %v158
  %238 = vmatprep.subr.bf16.mxu0 0
  %239 = vmatpush2.bf16.msra.mxu0 0
  %240 = vmatprep.subr.bf16.mxu0 0
  %241 = vmatpush2.bf16.msra.mxu0 0
  %242 = vmatprep.subr.bf16.mxu0 0
  %243 = vmatpush2.bf16.msra.mxu0 0
  %244 = vmatprep.subr.bf16.mxu0 0
  %245 = vmatpush2.bf16.msra.mxu0 0
  %246 = vmatprep.subr.bf16.mxu0 0
  %247 = vmatpush2.bf16.msra.mxu0 0
  %248 = vmatprep.subr.bf16.mxu0 0
  %249 = vmatpush2.bf16.msra.mxu0 0
  %250 = vmatprep.subr.bf16.mxu0 0
  %251 = vmatpush2.bf16.msra.mxu0 0
  %252 = vmatprep.subr.bf16.mxu0 0
  %253 = vmatpush2.bf16.msra.mxu0 0
  %254 = vmatprep.mubr.bf16.mxu0 0
  %255 = vmatmul.mubr.bf16.gmra.mxu0 %v180
  %v256 = vpop.f32.mrf.mxu0
  %v257 = vadd.f32 %v217, %v256
  %v258 = vpop.f32.mrf.mxu0
  %v259 = vpop.f32.mrf.mxu0
  %v260 = vpop.f32.mrf.mxu0
  %261 = vdwg.mxu0
  %v262 = vadd.f32 %v21, %v257
  %vm263 = vcmask 523264
  %264 = vst.msk [vmem:[#allocation2] sm:$0xff] %vm263, %v262
  // Predicated region
  $region14: #{_lambda_.35} parent=0 // pred_check
    %p265 = pneg %p15
  $region15: #{_lambda_.35} parent=0 // pred_check_branch
    %267 = sbr.rel (%p265) target = $region17
  $region16: #{_lambda_.35} parent=0 // pred_region
    %v268 = vld [vmem:[#allocation2] sm:$0xff]
    %v269 = vpack.c.bf16 %v268, %v268
    %vm270 = vcmask 519168
    %271 = vst.msk [vmem:[%s2] sm:$0xf] %vm270, %v269
    %v272 = vlaneseq
    %v273 = vshrl.u32 %v272, 7
    %vm274 = vcmp.eq.s32.totalorder %v273, 0
    %v275 = vsel %vm263, %v268, 0.0
    %v276 = vrot.slane %v275, 4
    %v277 = vadd.f32 %v275, %v276
    %v278 = vrot.slane %v277, 2
    %v279 = vadd.f32 %v277, %v278
    %v280 = vrot.slane %v279, 1
    %v281 = vadd.f32 %v279, %v280
    %v282 = vmul.f32 %v268, %v268
    %v283 = vsel %vm263, %v282, 0.0
    %v284 = vrot.slane %v283, 4
    %v285 = vadd.f32 %v283, %v284
    %v286 = vrot.slane %v285, 2
    %v287 = vadd.f32 %v285, %v286
    %v288 = vrot.slane %v287, 1
    %v289 = vadd.f32 %v287, %v288
    %v290 = vsel %vm274, %v281, 0.0
    %291 = vst.msk [vmem:[%s3] sm:$0xff] %vm263, %v290
    %v292 = vsel %vm274, %v289, 0.0
    %293 = vst.msk [vmem:[%s4] sm:$0xff] %vm263, %v292
  $region17: #{_lambda_.35} parent=0 // pred_fallthru
    _
  // Predicated region
  $region18: #{_lambda_.35} parent=0 // pred_check
    _
  $region19: #{_lambda_.35} parent=0 // pred_check_branch
    %295 = sbr.rel (0) target = $region21
  $region20: #{_lambda_.35} parent=0 // pred_region
    _
  $region21: #{_lambda_.35} parent=0 // pred_fallthru
    _
  // Predicated region
  $region22: #{_lambda_.35} parent=0 // pred_check
    _
  $region23: #{_lambda_.35} parent=0 // pred_check_branch
    %297 = sbr.rel (0) target = $region25
  $region24: #{_lambda_.35} parent=0 // pred_region
    _
  $region25: #{_lambda_.35} parent=0 // pred_fallthru
    _
  // Predicated region
  $region26: #{_lambda_.35} parent=0 // pred_check
    _
  $region27: #{_lambda_.35} parent=0 // pred_check_branch
    %299 = sbr.rel (0) target = $region29
  $region28: #{_lambda_.35} parent=0 // pred_region
    _
  $region29: #{_lambda_.35} parent=0 // pred_fallthru
    _
  // Predicated region
  $region30: #{_lambda_.35} parent=0 // pred_check
    _
  $region31: #{_lambda_.35} parent=0 // pred_check_branch
    %301 = sbr.rel (0) target = $region33
  $region32: #{_lambda_.35} parent=0 // pred_region
    _
  $region33: #{_lambda_.35} parent=0 // pred_fallthru
    _
  // Predicated region
  $region34: #{_lambda_.35} parent=0 // pred_check
    _
  $region35: #{_lambda_.35} parent=0 // pred_check_branch
    %303 = sbr.rel (0) target = $region37
  $region36: #{_lambda_.35} parent=0 // pred_region
    _
  $region37: #{_lambda_.35} parent=0 // pred_fallthru
    _
  // Predicated region
  $region38: #{_lambda_.35} parent=0 // pred_check
    _
  $region39: #{_lambda_.35} parent=0 // pred_check_branch
    %305 = sbr.rel (0) target = $region41
  $region40: #{_lambda_.35} parent=0 // pred_region
    _
  $region41: #{_lambda_.35} parent=0 // pred_fallthru
    _

// kernel: _lambda_.39
$region0: #{_lambda_.39}
  #allocation0 [shape = 'u32[]', space=smem, size = 0x4, offset = 0x4, fixed_abs, tag = 'smem constant byte address 0x4 - core index']
  #allocation1 [shape = 'u32[144,128]{1,0:T(1,128)}', space=vmem, size = 0x12000, scoped, tag = 'internal scratch']
  %s0 = inlined_call_operand.vmem [shape: bf16[4,128], index: 0, kind: input, shape index: {}]
  %s1 = inlined_call_operand.vmem [shape: f32[1,128], index: 1, kind: input, shape index: {}]
  %s2 = inlined_call_operand.vmem [shape: f32[1,128], index: 2, kind: input, shape index: {}]
  %s3 = inlined_call_operand.vmem [shape: bf16[4,128], index: 3, kind: input, shape index: {}]
  %s4 = inlined_call_operand.vmem [shape: f32[1,128], index: 4, kind: input, shape index: {}]
  %s5 = inlined_call_operand.vmem [shape: f32[1,128], index: 5, kind: input, shape index: {}]
  %s6 = inlined_call_operand.vmem [shape: bf16[4,128], index: 6, kind: output, shape index: {}]
  %s7 = sld [smem:[#allocation0]]
  $region34: #{_lambda_.39} parent=0
    _
  %s9 = ssub.s32 1, %s7
  %s10 = scalar_select 0, %s9, %s7
  // Predicated region
  $region2: #{_lambda_.39} parent=0 // pred_check
    _
  $region3: #{_lambda_.39} parent=0 // pred_check_branch
    %12 = sbr.rel (0) target = $region5
  $region4: #{_lambda_.39} parent=0 // pred_region
    _
  $region5: #{_lambda_.39} parent=0 // pred_fallthru
    _
  // Predicated region
  $region6: #{_lambda_.39} parent=0 // pred_check
    _
  $region7: #{_lambda_.39} parent=0 // pred_check_branch
    %14 = sbr.rel (0) target = $region9
  $region8: #{_lambda_.39} parent=0 // pred_region
    _
  $region9: #{_lambda_.39} parent=0 // pred_fallthru
    _
  // Predicated region
  $region10: #{_lambda_.39} parent=0 // pred_check
    _
  $region11: #{_lambda_.39} parent=0 // pred_check_branch
    %16 = sbr.rel (0) target = $region13
  $region12: #{_lambda_.39} parent=0 // pred_region
    _
  $region13: #{_lambda_.39} parent=0 // pred_fallthru
    _
  // Predicated region
  $region14: #{_lambda_.39} parent=0 // pred_check
    _
  $region15: #{_lambda_.39} parent=0 // pred_check_branch
    %18 = sbr.rel (0) target = $region17
  $region16: #{_lambda_.39} parent=0 // pred_region
    _
  $region17: #{_lambda_.39} parent=0 // pred_fallthru
    _
  // Predicated region
  $region18: #{_lambda_.39} parent=0 // pred_check
    _
  $region19: #{_lambda_.39} parent=0 // pred_check_branch
    %20 = sbr.rel (0) target = $region21
  $region20: #{_lambda_.39} parent=0 // pred_region
    _
  $region21: #{_lambda_.39} parent=0 // pred_fallthru
    _
  // Predicated region
  $region22: #{_lambda_.39} parent=0 // pred_check
    _
  $region23: #{_lambda_.39} parent=0 // pred_check_branch
    %22 = sbr.rel (0) target = $region25
  $region24: #{_lambda_.39} parent=0 // pred_region
    _
  $region25: #{_lambda_.39} parent=0 // pred_fallthru
    _
  %v23 = vld [vmem:[%s0] sm:$0x3]
  %v24 = vunpack.c.l.bf16 %v23
  %v25 = vld [vmem:[%s1] sm:$0x1]
  %v27 = vlaneseq
  %v28 = vshrl.u32 %v27, 7
  %v29 = vsub.s32 0, %v28
  %v30 = vrot.slane %v25, %v29
  %v32 = vmul.f32 %v24, %v30
  %v33 = vld [vmem:[%s2] sm:$0x1]
  %v35 = vlaneseq
  %v36 = vshrl.u32 %v35, 7
  %v37 = vsub.s32 0, %v36
  %v38 = vrot.slane %v33, %v37
  %v40 = vadd.f32 %v32, %v38
  %v41 = vld [vmem:[%s3] sm:$0x3]
  %v42 = vunpack.c.l.bf16 %v41
  %v43 = vld [vmem:[%s4] sm:$0x1]
  %v45 = vlaneseq
  %v46 = vshrl.u32 %v45, 7
  %v47 = vsub.s32 0, %v46
  %v48 = vrot.slane %v43, %v47
  %v50 = vmul.f32 %v42, %v48
  %v51 = vadd.f32 %v40, %v50
  %v52 = vld [vmem:[%s5] sm:$0x1]
  %v54 = vlaneseq
  %v55 = vshrl.u32 %v54, 7
  %v56 = vsub.s32 0, %v55
  %v57 = vrot.slane %v52, %v56
  %v59 = vadd.f32 %v51, %v57
  %v60 = vmax.f32 %v59, 0.0
  %v61 = vpack.c.bf16 %v60, %v60
  %62 = vst [vmem:[%s6] sm:$0x3] %v61
  // Predicated region
  $region26: #{_lambda_.39} parent=0 // pred_check
    _
  $region27: #{_lambda_.39} parent=0 // pred_check_branch
    %64 = sbr.rel (0) target = $region29
  $region28: #{_lambda_.39} parent=0 // pred_region
    _
  $region29: #{_lambda_.39} parent=0 // pred_fallthru
    _
  // Predicated region
  $region30: #{_lambda_.39} parent=0 // pred_check
    _
  $region31: #{_lambda_.39} parent=0 // pred_check_branch
    %66 = sbr.rel (0) target = $region33
  $region32: #{_lambda_.39} parent=0 // pred_region
    _
  $region33: #{_lambda_.39} parent=0 // pred_fallthru
    _

// kernel: _lambda_.37
$region0: #{_lambda_.37}
  #allocation0 [shape = 'u32[]', space=smem, size = 0x4, offset = 0x4, fixed_abs, tag = 'smem constant byte address 0x4 - core index']
  #allocation1 [shape = 'u32[144,128]{1,0:T(1,128)}', space=vmem, size = 0x12000, scoped, tag = 'internal scratch']
  #allocation2 [shape = 'f32[8,64]{1,0:T(8,128)}', space=vmem, size = 0x1000, scoped, tag = 'scratch operand']
  %s0 = inlined_call_operand.vmem [shape: bf16[8,576], index: 0, kind: input, shape index: {}]
  %s1 = inlined_call_operand.vmem [shape: bf16[576,64], index: 1, kind: input, shape index: {}]
  %s2 = inlined_call_operand.vmem [shape: bf16[8,64], index: 2, kind: output, shape index: {0}]
  %s3 = inlined_call_operand.vmem [shape: f32[8,64], index: 3, kind: output, shape index: {1}]
  %s4 = inlined_call_operand.vmem [shape: f32[8,64], index: 4, kind: output, shape index: {2}]
  %5 = xla_tuple %s2, %s3, %s4
  %s6 = sld [smem:[#allocation0]]
  $region42: #{_lambda_.37} parent=0
    _
  %s8 = ssub.s32 1, %s6
  %s9 = scalar_select 0, %s8, %s6
  // Predicated region
  $region2: #{_lambda_.37} parent=0 // pred_check
    _
  $region3: #{_lambda_.37} parent=0 // pred_check_branch
    %11 = sbr.rel (0) target = $region5
  $region4: #{_lambda_.37} parent=0 // pred_region
    _
  $region5: #{_lambda_.37} parent=0 // pred_fallthru
    _
  // Predicated region
  $region6: #{_lambda_.37} parent=0 // pred_check
    _
  $region7: #{_lambda_.37} parent=0 // pred_check_branch
    %13 = sbr.rel (0) target = $region9
  $region8: #{_lambda_.37} parent=0 // pred_region
    _
  $region9: #{_lambda_.37} parent=0 // pred_fallthru
    _
  %p15 = scmp.eq.s32.totalorder 0, 0
  // Predicated region
  $region10: #{_lambda_.37} parent=0 // pred_check
    %p16 = pneg %p15
  $region11: #{_lambda_.37} parent=0 // pred_check_branch
    %18 = sbr.rel (%p16) target = $region13
  $region12: #{_lambda_.37} parent=0 // pred_region
    %vm19 = vcmask 523264
    %20 = vst.msk [vmem:[#allocation2] sm:$0xff] %vm19, 0.0
  $region13: #{_lambda_.37} parent=0 // pred_fallthru
    _
  %v21 = vld [vmem:[#allocation2] sm:$0xff]
  %v22 = vld [vmem:[%s0] sm:$0xff]
  %v23 = vld [vmem:[%s0 + $0x8] sm:$0xff]
  %v24 = vld [vmem:[%s0 + $0x10] sm:$0xf]
  %v25 = vld [vmem:[%s1] sm:$0xf]
  %v26 = vld [vmem:[%s1 + $0x4] sm:$0xf]
  %v27 = vld [vmem:[%s1 + $0x8] sm:$0xf]
  %v28 = vld [vmem:[%s1 + $0xc] sm:$0xf]
  %v29 = vld [vmem:[%s1 + $0x10] sm:$0xf]
  %v30 = vld [vmem:[%s1 + $0x14] sm:$0xf]
  %v31 = vld [vmem:[%s1 + $0x18] sm:$0xf]
  %v32 = vld [vmem:[%s1 + $0x1c] sm:$0xf]
  %v33 = vld [vmem:[%s1 + $0x20] sm:$0xf]
  %v34 = vld [vmem:[%s1 + $0x24] sm:$0xf]
  %v35 = vld [vmem:[%s1 + $0x28] sm:$0xf]
  %v36 = vld [vmem:[%s1 + $0x2c] sm:$0xf]
  %v37 = vld [vmem:[%s1 + $0x30] sm:$0xf]
  %v38 = vld [vmem:[%s1 + $0x34] sm:$0xf]
  %v39 = vld [vmem:[%s1 + $0x38] sm:$0xf]
  %v40 = vld [vmem:[%s1 + $0x3c] sm:$0xf]
  %v41 = vld [vmem:[%s1 + $0x40] sm:$0xf]
  %v42 = vld [vmem:[%s1 + $0x44] sm:$0xf]
  %v43 = vld [vmem:[%s1 + $0x48] sm:$0xf]
  %v44 = vld [vmem:[%s1 + $0x4c] sm:$0xf]
  %v45 = vld [vmem:[%s1 + $0x50] sm:$0xf]
  %v46 = vld [vmem:[%s1 + $0x54] sm:$0xf]
  %v47 = vld [vmem:[%s1 + $0x58] sm:$0xf]
  %v48 = vld [vmem:[%s1 + $0x5c] sm:$0xf]
  %v49 = vld [vmem:[%s1 + $0x60] sm:$0xf]
  %v50 = vld [vmem:[%s1 + $0x64] sm:$0xf]
  %v51 = vld [vmem:[%s1 + $0x68] sm:$0xf]
  %v52 = vld [vmem:[%s1 + $0x6c] sm:$0xf]
  %v53 = vld [vmem:[%s1 + $0x70] sm:$0xf]
  %v54 = vld [vmem:[%s1 + $0x74] sm:$0xf]
  %v55 = vld [vmem:[%s1 + $0x78] sm:$0xf]
  %v56 = vld [vmem:[%s1 + $0x7c] sm:$0xf]
  %v57 = vld [vmem:[%s1 + $0x80] sm:$0xf]
  %v58 = vld [vmem:[%s1 + $0x84] sm:$0xf]
  %v59 = vld [vmem:[%s1 + $0x88] sm:$0xf]
  %v60 = vld [vmem:[%s1 + $0x8c] sm:$0xf]
  %v61 = vld [vmem:[%s1 + $0x90] sm:$0xf]
  %v62 = vld [vmem:[%s1 + $0x94] sm:$0xf]
  %v63 = vld [vmem:[%s1 + $0x98] sm:$0xf]
  %v64 = vld [vmem:[%s1 + $0x9c] sm:$0xf]
  %v65 = vld [vmem:[%s1 + $0xa0] sm:$0xf]
  %v66 = vld [vmem:[%s1 + $0xa4] sm:$0xf]
  %v67 = vld [vmem:[%s1 + $0xa8] sm:$0xf]
  %v68 = vld [vmem:[%s1 + $0xac] sm:$0xf]
  %v69 = vld [vmem:[%s1 + $0xb0] sm:$0xf]
  %v70 = vld [vmem:[%s1 + $0xb4] sm:$0xf]
  %v71 = vld [vmem:[%s1 + $0xb8] sm:$0xf]
  %v72 = vld [vmem:[%s1 + $0xbc] sm:$0xf]
  %v73 = vld [vmem:[%s1 + $0xc0] sm:$0xf]
  %v74 = vld [vmem:[%s1 + $0xc4] sm:$0xf]
  %v75 = vld [vmem:[%s1 + $0xc8] sm:$0xf]
  %v76 = vld [vmem:[%s1 + $0xcc] sm:$0xf]
  %v77 = vld [vmem:[%s1 + $0xd0] sm:$0xf]
  %v78 = vld [vmem:[%s1 + $0xd4] sm:$0xf]
  %v79 = vld [vmem:[%s1 + $0xd8] sm:$0xf]
  %v80 = vld [vmem:[%s1 + $0xdc] sm:$0xf]
  %v81 = vld [vmem:[%s1 + $0xe0] sm:$0xf]
  %v82 = vld [vmem:[%s1 + $0xe4] sm:$0xf]
  %v83 = vld [vmem:[%s1 + $0xe8] sm:$0xf]
  %v84 = vld [vmem:[%s1 + $0xec] sm:$0xf]
  %v85 = vld [vmem:[%s1 + $0xf0] sm:$0xf]
  %v86 = vld [vmem:[%s1 + $0xf4] sm:$0xf]
  %v87 = vld [vmem:[%s1 + $0xf8] sm:$0xf]
  %v88 = vld [vmem:[%s1 + $0xfc] sm:$0xf]
  %v89 = vld [vmem:[%s1 + $0x100] sm:$0xf]
  %v90 = vld [vmem:[%s1 + $0x104] sm:$0xf]
  %v91 = vld [vmem:[%s1 + $0x108] sm:$0xf]
  %v92 = vld [vmem:[%s1 + $0x10c] sm:$0xf]
  %v93 = vld [vmem:[%s1 + $0x110] sm:$0xf]
  %v94 = vld [vmem:[%s1 + $0x114] sm:$0xf]
  %v95 = vld [vmem:[%s1 + $0x118] sm:$0xf]
  %v96 = vld [vmem:[%s1 + $0x11c] sm:$0xf]
  %v100 = vunpack.c.l.b16 %v22
  %v101 = vunpack.c.h.b16 %v22
  %v102 = vunpack.c.l.b16 %v23
  %v103 = vunpack.c.h.b16 %v23
  %v104 = vunpack.c.l.b16 %v24
  %v105 = vpack.c.b16 %v100, %v100
  %v106 = vpack.c.b16 %v101, %v101
  %v107 = vpack.c.b16 %v102, %v102
  %v108 = vpack.c.b16 %v103, %v103
  %v109 = vpack.c.b16 %v104, %v104
  %v186 = vunpack.c.l.b16 %v25
  %v187 = vunpack.c.l.b16 %v26
  %v188 = vunpack.c.l.b16 %v27
  %v189 = vunpack.c.l.b16 %v28
  %v190 = vunpack.c.l.b16 %v29
  %v191 = vunpack.c.l.b16 %v30
  %v192 = vunpack.c.l.b16 %v31
  %v193 = vunpack.c.l.b16 %v32
  %v194 = vunpack.c.l.b16 %v33
  %v195 = vunpack.c.l.b16 %v34
  %v196 = vunpack.c.l.b16 %v35
  %v197 = vunpack.c.l.b16 %v36
  %v198 = vunpack.c.l.b16 %v37
  %v199 = vunpack.c.l.b16 %v38
  %v200 = vunpack.c.l.b16 %v39
  %v201 = vunpack.c.l.b16 %v40
  %v202 = vunpack.c.l.b16 %v41
  %v203 = vunpack.c.l.b16 %v42
  %v204 = vunpack.c.l.b16 %v43
  %v205 = vunpack.c.l.b16 %v44
  %v206 = vunpack.c.l.b16 %v45
  %v207 = vunpack.c.l.b16 %v46
  %v208 = vunpack.c.l.b16 %v47
  %v209 = vunpack.c.l.b16 %v48
  %v210 = vunpack.c.l.b16 %v49
  %v211 = vunpack.c.l.b16 %v50
  %v212 = vunpack.c.l.b16 %v51
  %v213 = vunpack.c.l.b16 %v52
  %v214 = vunpack.c.l.b16 %v53
  %v215 = vunpack.c.l.b16 %v54
  %v216 = vunpack.c.l.b16 %v55
  %v217 = vunpack.c.l.b16 %v56
  %v218 = vunpack.c.l.b16 %v57
  %v219 = vunpack.c.l.b16 %v58
  %v220 = vunpack.c.l.b16 %v59
  %v221 = vunpack.c.l.b16 %v60
  %v222 = vunpack.c.l.b16 %v61
  %v223 = vunpack.c.l.b16 %v62
  %v224 = vunpack.c.l.b16 %v63
  %v225 = vunpack.c.l.b16 %v64
  %v226 = vunpack.c.l.b16 %v65
  %v227 = vunpack.c.l.b16 %v66
  %v228 = vunpack.c.l.b16 %v67
  %v229 = vunpack.c.l.b16 %v68
  %v230 = vunpack.c.l.b16 %v69
  %v231 = vunpack.c.l.b16 %v70
  %v232 = vunpack.c.l.b16 %v71
  %v233 = vunpack.c.l.b16 %v72
  %v234 = vunpack.c.l.b16 %v73
  %v235 = vunpack.c.l.b16 %v74
  %v236 = vunpack.c.l.b16 %v75
  %v237 = vunpack.c.l.b16 %v76
  %v238 = vunpack.c.l.b16 %v77
  %v239 = vunpack.c.l.b16 %v78
  %v240 = vunpack.c.l.b16 %v79
  %v241 = vunpack.c.l.b16 %v80
  %v242 = vunpack.c.l.b16 %v81
  %v243 = vunpack.c.l.b16 %v82
  %v244 = vunpack.c.l.b16 %v83
  %v245 = vunpack.c.l.b16 %v84
  %v246 = vunpack.c.l.b16 %v85
  %v247 = vunpack.c.l.b16 %v86
  %v248 = vunpack.c.l.b16 %v87
  %v249 = vunpack.c.l.b16 %v88
  %v250 = vunpack.c.l.b16 %v89
  %v251 = vunpack.c.l.b16 %v90
  %v252 = vunpack.c.l.b16 %v91
  %v253 = vunpack.c.l.b16 %v92
  %v254 = vunpack.c.l.b16 %v93
  %v255 = vunpack.c.l.b16 %v94
  %v256 = vunpack.c.l.b16 %v95
  %v257 = vunpack.c.l.b16 %v96
  %v258 = vpack.c.b16 %v187, %v186
  %v259 = vpack.c.b16 %v189, %v188
  %v260 = vpack.c.b16 %v191, %v190
  %v261 = vpack.c.b16 %v193, %v192
  %v262 = vpack.c.b16 %v195, %v194
  %v263 = vpack.c.b16 %v197, %v196
  %v264 = vpack.c.b16 %v199, %v198
  %v265 = vpack.c.b16 %v201, %v200
  %v266 = vpack.c.b16 %v203, %v202
  %v267 = vpack.c.b16 %v205, %v204
  %v268 = vpack.c.b16 %v207, %v206
  %v269 = vpack.c.b16 %v209, %v208
  %v270 = vpack.c.b16 %v211, %v210
  %v271 = vpack.c.b16 %v213, %v212
  %v272 = vpack.c.b16 %v215, %v214
  %v273 = vpack.c.b16 %v217, %v216
  %v274 = vpack.c.b16 %v219, %v218
  %v275 = vpack.c.b16 %v221, %v220
  %v276 = vpack.c.b16 %v223, %v222
  %v277 = vpack.c.b16 %v225, %v224
  %v278 = vpack.c.b16 %v227, %v226
  %v279 = vpack.c.b16 %v229, %v228
  %v280 = vpack.c.b16 %v231, %v230
  %v281 = vpack.c.b16 %v233, %v232
  %v282 = vpack.c.b16 %v235, %v234
  %v283 = vpack.c.b16 %v237, %v236
  %v284 = vpack.c.b16 %v239, %v238
  %v285 = vpack.c.b16 %v241, %v240
  %v286 = vpack.c.b16 %v243, %v242
  %v287 = vpack.c.b16 %v245, %v244
  %v288 = vpack.c.b16 %v247, %v246
  %v289 = vpack.c.b16 %v249, %v248
  %v290 = vpack.c.b16 %v251, %v250
  %v291 = vpack.c.b16 %v253, %v252
  %v292 = vpack.c.b16 %v255, %v254
  %v293 = vpack.c.b16 %v257, %v256
  %vm330 = vcmask 523264
  %v332 = vsel %vm330, %v109, 0
  %334 = vmatprep.subr.bf16.mxu0 0
  %335 = vmatpush1.bf16.msra.mxu0 %v265
  %336 = vmatprep.subr.bf16.mxu0 0
  %337 = vmatpush1.bf16.msra.mxu0 %v264
  %338 = vmatprep.subr.bf16.mxu0 0
  %339 = vmatpush1.bf16.msra.mxu0 %v263
  %340 = vmatprep.subr.bf16.mxu0 0
  %341 = vmatpush1.bf16.msra.mxu0 %v262
  %342 = vmatprep.subr.bf16.mxu0 0
  %343 = vmatpush1.bf16.msra.mxu0 %v261
  %344 = vmatprep.subr.bf16.mxu0 0
  %345 = vmatpush1.bf16.msra.mxu0 %v260
  %346 = vmatprep.subr.bf16.mxu0 0
  %347 = vmatpush1.bf16.msra.mxu0 %v259
  %348 = vmatprep.subr.bf16.mxu0 0
  %349 = vmatpush1.bf16.msra.mxu0 %v258
  %350 = vmatprep.subr.bf16.mxu0 0
  %351 = vmatpush2.bf16.msra.mxu0 %v273
  %352 = vmatprep.subr.bf16.mxu0 0
  %353 = vmatpush2.bf16.msra.mxu0 %v272
  %354 = vmatprep.subr.bf16.mxu0 0
  %355 = vmatpush2.bf16.msra.mxu0 %v271
  %356 = vmatprep.subr.bf16.mxu0 0
  %357 = vmatpush2.bf16.msra.mxu0 %v270
  %358 = vmatprep.subr.bf16.mxu0 0
  %359 = vmatpush2.bf16.msra.mxu0 %v269
  %360 = vmatprep.subr.bf16.mxu0 0
  %361 = vmatpush2.bf16.msra.mxu0 %v268
  %362 = vmatprep.subr.bf16.mxu0 0
  %363 = vmatpush2.bf16.msra.mxu0 %v267
  %364 = vmatprep.subr.bf16.mxu0 0
  %365 = vmatpush2.bf16.msra.mxu0 %v266
  %366 = vmatprep.mubr.bf16.mxu0 %v106
  %367 = vmatmul.mubr.bf16.gmra.mxu0 %v105
  %v368 = vpop.f32.mrf.mxu0
  %v369 = vadd.f32 0.0, %v368
  %v370 = vpop.f32.mrf.mxu0
  %v371 = vpop.f32.mrf.mxu0
  %v372 = vpop.f32.mrf.mxu0
  %373 = vdwg.mxu0
  %374 = vmatprep.subr.bf16.mxu0 0
  %375 = vmatpush1.bf16.msra.mxu0 %v281
  %376 = vmatprep.subr.bf16.mxu0 0
  %377 = vmatpush1.bf16.msra.mxu0 %v280
  %378 = vmatprep.subr.bf16.mxu0 0
  %379 = vmatpush1.bf16.msra.mxu0 %v279
  %380 = vmatprep.subr.bf16.mxu0 0
  %381 = vmatpush1.bf16.msra.mxu0 %v278
  %382 = vmatprep.subr.bf16.mxu0 0
  %383 = vmatpush1.bf16.msra.mxu0 %v277
  %384 = vmatprep.subr.bf16.mxu0 0
  %385 = vmatpush1.bf16.msra.mxu0 %v276
  %386 = vmatprep.subr.bf16.mxu0 0
  %387 = vmatpush1.bf16.msra.mxu0 %v275
  %388 = vmatprep.subr.bf16.mxu0 0
  %389 = vmatpush1.bf16.msra.mxu0 %v274
  %390 = vmatprep.subr.bf16.mxu0 0
  %391 = vmatpush2.bf16.msra.mxu0 %v289
  %392 = vmatprep.subr.bf16.mxu0 0
  %393 = vmatpush2.bf16.msra.mxu0 %v288
  %394 = vmatprep.subr.bf16.mxu0 0
  %395 = vmatpush2.bf16.msra.mxu0 %v287
  %396 = vmatprep.subr.bf16.mxu0 0
  %397 = vmatpush2.bf16.msra.mxu0 %v286
  %398 = vmatprep.subr.bf16.mxu0 0
  %399 = vmatpush2.bf16.msra.mxu0 %v285
  %400 = vmatprep.subr.bf16.mxu0 0
  %401 = vmatpush2.bf16.msra.mxu0 %v284
  %402 = vmatprep.subr.bf16.mxu0 0
  %403 = vmatpush2.bf16.msra.mxu0 %v283
  %404 = vmatprep.subr.bf16.mxu0 0
  %405 = vmatpush2.bf16.msra.mxu0 %v282
  %406 = vmatprep.mubr.bf16.mxu0 %v108
  %407 = vmatmul.mubr.bf16.gmra.mxu0 %v107
  %v408 = vpop.f32.mrf.mxu0
  %v409 = vadd.f32 %v369, %v408
  %v410 = vpop.f32.mrf.mxu0
  %v411 = vpop.f32.mrf.mxu0
  %v412 = vpop.f32.mrf.mxu0
  %413 = vdwg.mxu0
  %414 = vmatprep.subr.bf16.mxu0 0
  %415 = vmatpush1.bf16.msra.mxu0 0
  %416 = vmatprep.subr.bf16.mxu0 0
  %417 = vmatpush1.bf16.msra.mxu0 0
  %418 = vmatprep.subr.bf16.mxu0 0
  %419 = vmatpush1.bf16.msra.mxu0 0
  %420 = vmatprep.subr.bf16.mxu0 0
  %421 = vmatpush1.bf16.msra.mxu0 0
  %422 = vmatprep.subr.bf16.mxu0 0
  %423 = vmatpush1.bf16.msra.mxu0 %v293
  %424 = vmatprep.subr.bf16.mxu0 0
  %425 = vmatpush1.bf16.msra.mxu0 %v292
  %426 = vmatprep.subr.bf16.mxu0 0
  %427 = vmatpush1.bf16.msra.mxu0 %v291
  %428 = vmatprep.subr.bf16.mxu0 0
  %429 = vmatpush1.bf16.msra.mxu0 %v290
  %430 = vmatprep.subr.bf16.mxu0 0
  %431 = vmatpush2.bf16.msra.mxu0 0
  %432 = vmatprep.subr.bf16.mxu0 0
  %433 = vmatpush2.bf16.msra.mxu0 0
  %434 = vmatprep.subr.bf16.mxu0 0
  %435 = vmatpush2.bf16.msra.mxu0 0
  %436 = vmatprep.subr.bf16.mxu0 0
  %437 = vmatpush2.bf16.msra.mxu0 0
  %438 = vmatprep.subr.bf16.mxu0 0
  %439 = vmatpush2.bf16.msra.mxu0 0
  %440 = vmatprep.subr.bf16.mxu0 0
  %441 = vmatpush2.bf16.msra.mxu0 0
  %442 = vmatprep.subr.bf16.mxu0 0
  %443 = vmatpush2.bf16.msra.mxu0 0
  %444 = vmatprep.subr.bf16.mxu0 0
  %445 = vmatpush2.bf16.msra.mxu0 0
  %446 = vmatprep.mubr.bf16.mxu0 0
  %447 = vmatmul.mubr.bf16.gmra.mxu0 %v332
  %v448 = vpop.f32.mrf.mxu0
  %v449 = vadd.f32 %v409, %v448
  %v450 = vpop.f32.mrf.mxu0
  %v451 = vpop.f32.mrf.mxu0
  %v452 = vpop.f32.mrf.mxu0
  %453 = vdwg.mxu0
  %v454 = vadd.f32 %v21, %v449
  %455 = vst.msk [vmem:[#allocation2] sm:$0xff] %vm330, %v454
  // Predicated region
  $region14: #{_lambda_.37} parent=0 // pred_check
    %p456 = pneg %p15
  $region15: #{_lambda_.37} parent=0 // pred_check_branch
    %458 = sbr.rel (%p456) target = $region17
  $region16: #{_lambda_.37} parent=0 // pred_region
    %v459 = vld [vmem:[#allocation2] sm:$0xff]
    %v460 = vpack.c.bf16 %v459, %v459
    %vm461 = vcmask 519168
    %462 = vst.msk [vmem:[%s2] sm:$0xf] %vm461, %v460
    %v463 = vlaneseq
    %v464 = vshrl.u32 %v463, 7
    %vm465 = vcmp.eq.s32.totalorder %v464, 0
    %v466 = vsel %vm330, %v459, 0.0
    %v467 = vrot.slane %v466, 4
    %v468 = vadd.f32 %v466, %v467
    %v469 = vrot.slane %v468, 2
    %v470 = vadd.f32 %v468, %v469
    %v471 = vrot.slane %v470, 1
    %v472 = vadd.f32 %v470, %v471
    %v473 = vmul.f32 %v459, %v459
    %v474 = vsel %vm330, %v473, 0.0
    %v475 = vrot.slane %v474, 4
    %v476 = vadd.f32 %v474, %v475
    %v477 = vrot.slane %v476, 2
    %v478 = vadd.f32 %v476, %v477
    %v479 = vrot.slane %v478, 1
    %v480 = vadd.f32 %v478, %v479
    %v481 = vsel %vm465, %v472, 0.0
    %482 = vst.msk [vmem:[%s3] sm:$0xff] %vm330, %v481
    %v483 = vsel %vm465, %v480, 0.0
    %484 = vst.msk [vmem:[%s4] sm:$0xff] %vm330, %v483
  $region17: #{_lambda_.37} parent=0 // pred_fallthru
    _
  // Predicated region
  $region18: #{_lambda_.37} parent=0 // pred_check
    _
  $region19: #{_lambda_.37} parent=0 // pred_check_branch
    %486 = sbr.rel (0) target = $region21
  $region20: #{_lambda_.37} parent=0 // pred_region
    _
  $region21: #{_lambda_.37} parent=0 // pred_fallthru
    _
  // Predicated region
  $region22: #{_lambda_.37} parent=0 // pred_check
    _
  $region23: #{_lambda_.37} parent=0 // pred_check_branch
    %488 = sbr.rel (0) target = $region25
  $region24: #{_lambda_.37} parent=0 // pred_region
    _
  $region25: #{_lambda_.37} parent=0 // pred_fallthru
    _
  // Predicated region
  $region26: #{_lambda_.37} parent=0 // pred_check
    _
  $region27: #{_lambda_.37} parent=0 // pred_check_branch
    %490 = sbr.rel (0) target = $region29
  $region28: #{_lambda_.37} parent=0 // pred_region
    _
  $region29: #{_lambda_.37} parent=0 // pred_fallthru
    _
  // Predicated region
  $region30: #{_lambda_.37} parent=0 // pred_check
    _
  $region31: #{_lambda_.37} parent=0 // pred_check_branch
    %492 = sbr.rel (0) target = $region33
  $region32: #{_lambda_.37} parent=0 // pred_region
    _
  $region33: #{_lambda_.37} parent=0 // pred_fallthru
    _
  // Predicated region
  $region34: #{_lambda_.37} parent=0 // pred_check
    _
  $region35: #{_lambda_.37} parent=0 // pred_check_branch
    %494 = sbr.rel (0) target = $region37
  $region36: #{_lambda_.37} parent=0 // pred_region
    _
  $region37: #{_lambda_.37} parent=0 // pred_fallthru
    _
  // Predicated region
  $region38: #{_lambda_.37} parent=0 // pred_check
    _
  $region39: #{_lambda_.37} parent=0 // pred_check_branch
    %496 = sbr.rel (0) target = $region41
  $region40: #{_lambda_.37} parent=0 // pred_region
    _
  $region41: #{_lambda_.37} parent=0 // pred_fallthru
    _

// kernel: _lambda_.41
$region0: #{_lambda_.41}
  #allocation0 [shape = 'u32[]', space=smem, size = 0x4, offset = 0x4, fixed_abs, tag = 'smem constant byte address 0x4 - core index']
  #allocation1 [shape = 'u32[144,128]{1,0:T(1,128)}', space=vmem, size = 0x12000, scoped, tag = 'internal scratch']
  %s0 = inlined_call_operand.vmem [shape: bf16[2,128], index: 0, kind: input, shape index: {}]
  %s1 = inlined_call_operand.vmem [shape: f32[1,128], index: 1, kind: input, shape index: {}]
  %s2 = inlined_call_operand.vmem [shape: f32[1,128], index: 2, kind: input, shape index: {}]
  %s3 = inlined_call_operand.vmem [shape: bf16[2,128], index: 3, kind: output, shape index: {}]
  %s4 = sld [smem:[#allocation0]]
  $region22: #{_lambda_.41} parent=0
    _
  %s6 = ssub.s32 1, %s4
  %s7 = scalar_select 0, %s6, %s4
  // Predicated region
  $region2: #{_lambda_.41} parent=0 // pred_check
    _
  $region3: #{_lambda_.41} parent=0 // pred_check_branch
    %9 = sbr.rel (0) target = $region5
  $region4: #{_lambda_.41} parent=0 // pred_region
    _
  $region5: #{_lambda_.41} parent=0 // pred_fallthru
    _
  // Predicated region
  $region6: #{_lambda_.41} parent=0 // pred_check
    _
  $region7: #{_lambda_.41} parent=0 // pred_check_branch
    %11 = sbr.rel (0) target = $region9
  $region8: #{_lambda_.41} parent=0 // pred_region
    _
  $region9: #{_lambda_.41} parent=0 // pred_fallthru
    _
  // Predicated region
  $region10: #{_lambda_.41} parent=0 // pred_check
    _
  $region11: #{_lambda_.41} parent=0 // pred_check_branch
    %13 = sbr.rel (0) target = $region13
  $region12: #{_lambda_.41} parent=0 // pred_region
    _
  $region13: #{_lambda_.41} parent=0 // pred_fallthru
    _
  %v14 = vld [vmem:[%s0] sm:$0x1]
  %v15 = vunpack.c.l.bf16 %v14
  %v16 = vld [vmem:[%s1] sm:$0x1]
  %v18 = vlaneseq
  %v19 = vshrl.u32 %v18, 7
  %v20 = vsub.s32 0, %v19
  %v21 = vrot.slane %v16, %v20
  %v23 = vmul.f32 %v15, %v21
  %v24 = vld [vmem:[%s2] sm:$0x1]
  %v26 = vlaneseq
  %v27 = vshrl.u32 %v26, 7
  %v28 = vsub.s32 0, %v27
  %v29 = vrot.slane %v24, %v28
  %v31 = vadd.f32 %v23, %v29
  %v32 = vmax.f32 %v31, 0.0
  %v33 = vpack.c.bf16 %v32, %v32
  %34 = vst [vmem:[%s3] sm:$0x1] %v33
  // Predicated region
  $region14: #{_lambda_.41} parent=0 // pred_check
    _
  $region15: #{_lambda_.41} parent=0 // pred_check_branch
    %36 = sbr.rel (0) target = $region17
  $region16: #{_lambda_.41} parent=0 // pred_region
    _
  $region17: #{_lambda_.41} parent=0 // pred_fallthru
    _
  // Predicated region
  $region18: #{_lambda_.41} parent=0 // pred_check
    _
  $region19: #{_lambda_.41} parent=0 // pred_check_branch
    %38 = sbr.rel (0) target = $region21
  $region20: #{_lambda_.41} parent=0 // pred_region
    _
  $region21: #{_lambda_.41} parent=0 // pred_fallthru
    _

// kernel: _lambda_.40
$region0: #{_lambda_.40}
  #allocation0 [shape = 'u32[]', space=smem, size = 0x4, offset = 0x4, fixed_abs, tag = 'smem constant byte address 0x4 - core index']
  #allocation1 [shape = 'u32[144,128]{1,0:T(1,128)}', space=vmem, size = 0x12000, scoped, tag = 'internal scratch']
  #allocation2 [shape = 'f32[2,128]{1,0:T(2,128)}', space=vmem, size = 0x400, scoped, tag = 'scratch operand']
  %s0 = inlined_call_operand.vmem [shape: bf16[2,576], index: 0, kind: input, shape index: {}]
  %s1 = inlined_call_operand.vmem [shape: bf16[576,128], index: 1, kind: input, shape index: {}]
  %s2 = inlined_call_operand.vmem [shape: bf16[2,128], index: 2, kind: output, shape index: {0}]
  %s3 = inlined_call_operand.vmem [shape: f32[8,128], index: 3, kind: output, shape index: {1}]
  %s4 = inlined_call_operand.vmem [shape: f32[8,128], index: 4, kind: output, shape index: {2}]
  %5 = xla_tuple %s2, %s3, %s4
  %s6 = sld [smem:[#allocation0]]
  $region42: #{_lambda_.40} parent=0
    _
  %s8 = ssub.s32 1, %s6
  %s9 = scalar_select 0, %s8, %s6
  // Predicated region
  $region2: #{_lambda_.40} parent=0 // pred_check
    _
  $region3: #{_lambda_.40} parent=0 // pred_check_branch
    %11 = sbr.rel (0) target = $region5
  $region4: #{_lambda_.40} parent=0 // pred_region
    _
  $region5: #{_lambda_.40} parent=0 // pred_fallthru
    _
  // Predicated region
  $region6: #{_lambda_.40} parent=0 // pred_check
    _
  $region7: #{_lambda_.40} parent=0 // pred_check_branch
    %13 = sbr.rel (0) target = $region9
  $region8: #{_lambda_.40} parent=0 // pred_region
    _
  $region9: #{_lambda_.40} parent=0 // pred_fallthru
    _
  %p15 = scmp.eq.s32.totalorder 0, 0
  // Predicated region
  $region10: #{_lambda_.40} parent=0 // pred_check
    %p16 = pneg %p15
  $region11: #{_lambda_.40} parent=0 // pred_check_branch
    %18 = sbr.rel (%p16) target = $region13
  $region12: #{_lambda_.40} parent=0 // pred_region
    %19 = vst [vmem:[#allocation2] sm:$0x3] 0.0
  $region13: #{_lambda_.40} parent=0 // pred_fallthru
    _
  %v20 = vld [vmem:[#allocation2] sm:$0x3]
  %v21 = vld [vmem:[%s0] sm:$0x1f]
  %v22 = vld [vmem:[%s1] sm:$0xf]
  %v23 = vld [vmem:[%s1 + $0x4] sm:$0xf]
  %v24 = vld [vmem:[%s1 + $0x8] sm:$0xf]
  %v25 = vld [vmem:[%s1 + $0xc] sm:$0xf]
  %v26 = vld [vmem:[%s1 + $0x10] sm:$0xf]
  %v27 = vld [vmem:[%s1 + $0x14] sm:$0xf]
  %v28 = vld [vmem:[%s1 + $0x18] sm:$0xf]
  %v29 = vld [vmem:[%s1 + $0x1c] sm:$0xf]
  %v30 = vld [vmem:[%s1 + $0x20] sm:$0xf]
  %v31 = vld [vmem:[%s1 + $0x24] sm:$0xf]
  %v32 = vld [vmem:[%s1 + $0x28] sm:$0xf]
  %v33 = vld [vmem:[%s1 + $0x2c] sm:$0xf]
  %v34 = vld [vmem:[%s1 + $0x30] sm:$0xf]
  %v35 = vld [vmem:[%s1 + $0x34] sm:$0xf]
  %v36 = vld [vmem:[%s1 + $0x38] sm:$0xf]
  %v37 = vld [vmem:[%s1 + $0x3c] sm:$0xf]
  %v38 = vld [vmem:[%s1 + $0x40] sm:$0xf]
  %v39 = vld [vmem:[%s1 + $0x44] sm:$0xf]
  %v40 = vld [vmem:[%s1 + $0x48] sm:$0xf]
  %v41 = vld [vmem:[%s1 + $0x4c] sm:$0xf]
  %v42 = vld [vmem:[%s1 + $0x50] sm:$0xf]
  %v43 = vld [vmem:[%s1 + $0x54] sm:$0xf]
  %v44 = vld [vmem:[%s1 + $0x58] sm:$0xf]
  %v45 = vld [vmem:[%s1 + $0x5c] sm:$0xf]
  %v46 = vld [vmem:[%s1 + $0x60] sm:$0xf]
  %v47 = vld [vmem:[%s1 + $0x64] sm:$0xf]
  %v48 = vld [vmem:[%s1 + $0x68] sm:$0xf]
  %v49 = vld [vmem:[%s1 + $0x6c] sm:$0xf]
  %v50 = vld [vmem:[%s1 + $0x70] sm:$0xf]
  %v51 = vld [vmem:[%s1 + $0x74] sm:$0xf]
  %v52 = vld [vmem:[%s1 + $0x78] sm:$0xf]
  %v53 = vld [vmem:[%s1 + $0x7c] sm:$0xf]
  %v54 = vld [vmem:[%s1 + $0x80] sm:$0xf]
  %v55 = vld [vmem:[%s1 + $0x84] sm:$0xf]
  %v56 = vld [vmem:[%s1 + $0x88] sm:$0xf]
  %v57 = vld [vmem:[%s1 + $0x8c] sm:$0xf]
  %v58 = vld [vmem:[%s1 + $0x90] sm:$0xf]
  %v59 = vld [vmem:[%s1 + $0x94] sm:$0xf]
  %v60 = vld [vmem:[%s1 + $0x98] sm:$0xf]
  %v61 = vld [vmem:[%s1 + $0x9c] sm:$0xf]
  %v62 = vld [vmem:[%s1 + $0xa0] sm:$0xf]
  %v63 = vld [vmem:[%s1 + $0xa4] sm:$0xf]
  %v64 = vld [vmem:[%s1 + $0xa8] sm:$0xf]
  %v65 = vld [vmem:[%s1 + $0xac] sm:$0xf]
  %v66 = vld [vmem:[%s1 + $0xb0] sm:$0xf]
  %v67 = vld [vmem:[%s1 + $0xb4] sm:$0xf]
  %v68 = vld [vmem:[%s1 + $0xb8] sm:$0xf]
  %v69 = vld [vmem:[%s1 + $0xbc] sm:$0xf]
  %v70 = vld [vmem:[%s1 + $0xc0] sm:$0xf]
  %v71 = vld [vmem:[%s1 + $0xc4] sm:$0xf]
  %v72 = vld [vmem:[%s1 + $0xc8] sm:$0xf]
  %v73 = vld [vmem:[%s1 + $0xcc] sm:$0xf]
  %v74 = vld [vmem:[%s1 + $0xd0] sm:$0xf]
  %v75 = vld [vmem:[%s1 + $0xd4] sm:$0xf]
  %v76 = vld [vmem:[%s1 + $0xd8] sm:$0xf]
  %v77 = vld [vmem:[%s1 + $0xdc] sm:$0xf]
  %v78 = vld [vmem:[%s1 + $0xe0] sm:$0xf]
  %v79 = vld [vmem:[%s1 + $0xe4] sm:$0xf]
  %v80 = vld [vmem:[%s1 + $0xe8] sm:$0xf]
  %v81 = vld [vmem:[%s1 + $0xec] sm:$0xf]
  %v82 = vld [vmem:[%s1 + $0xf0] sm:$0xf]
  %v83 = vld [vmem:[%s1 + $0xf4] sm:$0xf]
  %v84 = vld [vmem:[%s1 + $0xf8] sm:$0xf]
  %v85 = vld [vmem:[%s1 + $0xfc] sm:$0xf]
  %v86 = vld [vmem:[%s1 + $0x100] sm:$0xf]
  %v87 = vld [vmem:[%s1 + $0x104] sm:$0xf]
  %v88 = vld [vmem:[%s1 + $0x108] sm:$0xf]
  %v89 = vld [vmem:[%s1 + $0x10c] sm:$0xf]
  %v90 = vld [vmem:[%s1 + $0x110] sm:$0xf]
  %v91 = vld [vmem:[%s1 + $0x114] sm:$0xf]
  %v92 = vld [vmem:[%s1 + $0x118] sm:$0xf]
  %v93 = vld [vmem:[%s1 + $0x11c] sm:$0xf]
  %v95 = vcombine.high %v21, %v21
  %v97 = vunpack.c.l.s4 1966171168
  %v98 = vunpack.c.0.s8 %v97
  %v99 = vlaneseq
  %v100 = vshrl.u32 %v99, 7
  %v101 = vsub.s32 %v98, %v100
  %v102 = vrot.slane %v21, %v101
  %v104 = vunpack.c.l.s4 1966171168
  %v105 = vunpack.c.0.s8 %v104
  %v106 = vlaneseq
  %v107 = vshrl.u32 %v106, 7
  %v108 = vsub.s32 %v105, %v107
  %v109 = vrot.slane %v95, %v108
  %v110 = vcombine.high %v102, %v102
  %v112 = vunpack.c.l.s4 1966171168
  %v113 = vunpack.c.0.s8 %v112
  %v114 = vlaneseq
  %v115 = vshrl.u32 %v114, 7
  %v116 = vsub.s32 %v113, %v115
  %v117 = vrot.slane %v102, %v116
  %v119 = vunpack.c.l.s4 1966171168
  %v120 = vunpack.c.0.s8 %v119
  %v121 = vlaneseq
  %v122 = vshrl.u32 %v121, 7
  %v123 = vsub.s32 %v120, %v122
  %v124 = vrot.slane %v109, %v123
  %v126 = vunpack.c.l.s4 1966171168
  %v127 = vunpack.c.0.s8 %v126
  %v128 = vlaneseq
  %v129 = vshrl.u32 %v128, 7
  %v130 = vsub.s32 %v127, %v129
  %v131 = vrot.slane %v110, %v130
  %v132 = vcombine.high %v117, %v117
  %v133 = vcombine.high %v131, %v131
  %v210 = vunpack.c.l.b16 %v22
  %v211 = vunpack.c.l.b16 %v23
  %v212 = vunpack.c.l.b16 %v24
  %v213 = vunpack.c.l.b16 %v25
  %v214 = vunpack.c.l.b16 %v26
  %v215 = vunpack.c.l.b16 %v27
  %v216 = vunpack.c.l.b16 %v28
  %v217 = vunpack.c.l.b16 %v29
  %v218 = vunpack.c.l.b16 %v30
  %v219 = vunpack.c.l.b16 %v31
  %v220 = vunpack.c.l.b16 %v32
  %v221 = vunpack.c.l.b16 %v33
  %v222 = vunpack.c.l.b16 %v34
  %v223 = vunpack.c.l.b16 %v35
  %v224 = vunpack.c.l.b16 %v36
  %v225 = vunpack.c.l.b16 %v37
  %v226 = vunpack.c.l.b16 %v38
  %v227 = vunpack.c.l.b16 %v39
  %v228 = vunpack.c.l.b16 %v40
  %v229 = vunpack.c.l.b16 %v41
  %v230 = vunpack.c.l.b16 %v42
  %v231 = vunpack.c.l.b16 %v43
  %v232 = vunpack.c.l.b16 %v44
  %v233 = vunpack.c.l.b16 %v45
  %v234 = vunpack.c.l.b16 %v46
  %v235 = vunpack.c.l.b16 %v47
  %v236 = vunpack.c.l.b16 %v48
  %v237 = vunpack.c.l.b16 %v49
  %v238 = vunpack.c.l.b16 %v50
  %v239 = vunpack.c.l.b16 %v51
  %v240 = vunpack.c.l.b16 %v52
  %v241 = vunpack.c.l.b16 %v53
  %v242 = vunpack.c.l.b16 %v54
  %v243 = vunpack.c.l.b16 %v55
  %v244 = vunpack.c.l.b16 %v56
  %v245 = vunpack.c.l.b16 %v57
  %v246 = vunpack.c.l.b16 %v58
  %v247 = vunpack.c.l.b16 %v59
  %v248 = vunpack.c.l.b16 %v60
  %v249 = vunpack.c.l.b16 %v61
  %v250 = vunpack.c.l.b16 %v62
  %v251 = vunpack.c.l.b16 %v63
  %v252 = vunpack.c.l.b16 %v64
  %v253 = vunpack.c.l.b16 %v65
  %v254 = vunpack.c.l.b16 %v66
  %v255 = vunpack.c.l.b16 %v67
  %v256 = vunpack.c.l.b16 %v68
  %v257 = vunpack.c.l.b16 %v69
  %v258 = vunpack.c.l.b16 %v70
  %v259 = vunpack.c.l.b16 %v71
  %v260 = vunpack.c.l.b16 %v72
  %v261 = vunpack.c.l.b16 %v73
  %v262 = vunpack.c.l.b16 %v74
  %v263 = vunpack.c.l.b16 %v75
  %v264 = vunpack.c.l.b16 %v76
  %v265 = vunpack.c.l.b16 %v77
  %v266 = vunpack.c.l.b16 %v78
  %v267 = vunpack.c.l.b16 %v79
  %v268 = vunpack.c.l.b16 %v80
  %v269 = vunpack.c.l.b16 %v81
  %v270 = vunpack.c.l.b16 %v82
  %v271 = vunpack.c.l.b16 %v83
  %v272 = vunpack.c.l.b16 %v84
  %v273 = vunpack.c.l.b16 %v85
  %v274 = vunpack.c.l.b16 %v86
  %v275 = vunpack.c.l.b16 %v87
  %v276 = vunpack.c.l.b16 %v88
  %v277 = vunpack.c.l.b16 %v89
  %v278 = vunpack.c.l.b16 %v90
  %v279 = vunpack.c.l.b16 %v91
  %v280 = vunpack.c.l.b16 %v92
  %v281 = vunpack.c.l.b16 %v93
  %v282 = vpack.c.b16 %v211, %v210
  %v283 = vpack.c.b16 %v213, %v212
  %v284 = vpack.c.b16 %v215, %v214
  %v285 = vpack.c.b16 %v217, %v216
  %v286 = vpack.c.b16 %v219, %v218
  %v287 = vpack.c.b16 %v221, %v220
  %v288 = vpack.c.b16 %v223, %v222
  %v289 = vpack.c.b16 %v225, %v224
  %v290 = vpack.c.b16 %v227, %v226
  %v291 = vpack.c.b16 %v229, %v228
  %v292 = vpack.c.b16 %v231, %v230
  %v293 = vpack.c.b16 %v233, %v232
  %v294 = vpack.c.b16 %v235, %v234
  %v295 = vpack.c.b16 %v237, %v236
  %v296 = vpack.c.b16 %v239, %v238
  %v297 = vpack.c.b16 %v241, %v240
  %v298 = vpack.c.b16 %v243, %v242
  %v299 = vpack.c.b16 %v245, %v244
  %v300 = vpack.c.b16 %v247, %v246
  %v301 = vpack.c.b16 %v249, %v248
  %v302 = vpack.c.b16 %v251, %v250
  %v303 = vpack.c.b16 %v253, %v252
  %v304 = vpack.c.b16 %v255, %v254
  %v305 = vpack.c.b16 %v257, %v256
  %v306 = vpack.c.b16 %v259, %v258
  %v307 = vpack.c.b16 %v261, %v260
  %v308 = vpack.c.b16 %v263, %v262
  %v309 = vpack.c.b16 %v265, %v264
  %v310 = vpack.c.b16 %v267, %v266
  %v311 = vpack.c.b16 %v269, %v268
  %v312 = vpack.c.b16 %v271, %v270
  %v313 = vpack.c.b16 %v273, %v272
  %v314 = vpack.c.b16 %v275, %v274
  %v315 = vpack.c.b16 %v277, %v276
  %v316 = vpack.c.b16 %v279, %v278
  %v317 = vpack.c.b16 %v281, %v280
  %vm354 = vcmask 523264
  %v356 = vsel %vm354, %v124, 0
  %358 = vmatprep.subr.bf16.mxu0 0
  %359 = vmatpush1.bf16.msra.mxu0 %v289
  %360 = vmatprep.subr.bf16.mxu0 0
  %361 = vmatpush1.bf16.msra.mxu0 %v288
  %362 = vmatprep.subr.bf16.mxu0 0
  %363 = vmatpush1.bf16.msra.mxu0 %v287
  %364 = vmatprep.subr.bf16.mxu0 0
  %365 = vmatpush1.bf16.msra.mxu0 %v286
  %366 = vmatprep.subr.bf16.mxu0 0
  %367 = vmatpush1.bf16.msra.mxu0 %v285
  %368 = vmatprep.subr.bf16.mxu0 0
  %369 = vmatpush1.bf16.msra.mxu0 %v284
  %370 = vmatprep.subr.bf16.mxu0 0
  %371 = vmatpush1.bf16.msra.mxu0 %v283
  %372 = vmatprep.subr.bf16.mxu0 0
  %373 = vmatpush1.bf16.msra.mxu0 %v282
  %374 = vmatprep.subr.bf16.mxu0 0
  %375 = vmatpush2.bf16.msra.mxu0 %v297
  %376 = vmatprep.subr.bf16.mxu0 0
  %377 = vmatpush2.bf16.msra.mxu0 %v296
  %378 = vmatprep.subr.bf16.mxu0 0
  %379 = vmatpush2.bf16.msra.mxu0 %v295
  %380 = vmatprep.subr.bf16.mxu0 0
  %381 = vmatpush2.bf16.msra.mxu0 %v294
  %382 = vmatprep.subr.bf16.mxu0 0
  %383 = vmatpush2.bf16.msra.mxu0 %v293
  %384 = vmatprep.subr.bf16.mxu0 0
  %385 = vmatpush2.bf16.msra.mxu0 %v292
  %386 = vmatprep.subr.bf16.mxu0 0
  %387 = vmatpush2.bf16.msra.mxu0 %v291
  %388 = vmatprep.subr.bf16.mxu0 0
  %389 = vmatpush2.bf16.msra.mxu0 %v290
  %390 = vmatprep.mubr.bf16.mxu0 %v131
  %391 = vmatmul.mubr.bf16.gmra.mxu0 %v117
  %v392 = vpop.f32.mrf.mxu0
  %v393 = vadd.f32 0.0, %v392
  %v394 = vpop.f32.mrf.mxu0
  %v395 = vpop.f32.mrf.mxu0
  %v396 = vpop.f32.mrf.mxu0
  %397 = vdwg.mxu0
  %398 = vmatprep.subr.bf16.mxu0 0
  %399 = vmatpush1.bf16.msra.mxu0 %v305
  %400 = vmatprep.subr.bf16.mxu0 0
  %401 = vmatpush1.bf16.msra.mxu0 %v304
  %402 = vmatprep.subr.bf16.mxu0 0
  %403 = vmatpush1.bf16.msra.mxu0 %v303
  %404 = vmatprep.subr.bf16.mxu0 0
  %405 = vmatpush1.bf16.msra.mxu0 %v302
  %406 = vmatprep.subr.bf16.mxu0 0
  %407 = vmatpush1.bf16.msra.mxu0 %v301
  %408 = vmatprep.subr.bf16.mxu0 0
  %409 = vmatpush1.bf16.msra.mxu0 %v300
  %410 = vmatprep.subr.bf16.mxu0 0
  %411 = vmatpush1.bf16.msra.mxu0 %v299
  %412 = vmatprep.subr.bf16.mxu0 0
  %413 = vmatpush1.bf16.msra.mxu0 %v298
  %414 = vmatprep.subr.bf16.mxu0 0
  %415 = vmatpush2.bf16.msra.mxu0 %v313
  %416 = vmatprep.subr.bf16.mxu0 0
  %417 = vmatpush2.bf16.msra.mxu0 %v312
  %418 = vmatprep.subr.bf16.mxu0 0
  %419 = vmatpush2.bf16.msra.mxu0 %v311
  %420 = vmatprep.subr.bf16.mxu0 0
  %421 = vmatpush2.bf16.msra.mxu0 %v310
  %422 = vmatprep.subr.bf16.mxu0 0
  %423 = vmatpush2.bf16.msra.mxu0 %v309
  %424 = vmatprep.subr.bf16.mxu0 0
  %425 = vmatpush2.bf16.msra.mxu0 %v308
  %426 = vmatprep.subr.bf16.mxu0 0
  %427 = vmatpush2.bf16.msra.mxu0 %v307
  %428 = vmatprep.subr.bf16.mxu0 0
  %429 = vmatpush2.bf16.msra.mxu0 %v306
  %430 = vmatprep.mubr.bf16.mxu0 %v133
  %431 = vmatmul.mubr.bf16.gmra.mxu0 %v132
  %v432 = vpop.f32.mrf.mxu0
  %v433 = vadd.f32 %v393, %v432
  %v434 = vpop.f32.mrf.mxu0
  %v435 = vpop.f32.mrf.mxu0
  %v436 = vpop.f32.mrf.mxu0
  %437 = vdwg.mxu0
  %438 = vmatprep.subr.bf16.mxu0 0
  %439 = vmatpush1.bf16.msra.mxu0 0
  %440 = vmatprep.subr.bf16.mxu0 0
  %441 = vmatpush1.bf16.msra.mxu0 0
  %442 = vmatprep.subr.bf16.mxu0 0
  %443 = vmatpush1.bf16.msra.mxu0 0
  %444 = vmatprep.subr.bf16.mxu0 0
  %445 = vmatpush1.bf16.msra.mxu0 0
  %446 = vmatprep.subr.bf16.mxu0 0
  %447 = vmatpush1.bf16.msra.mxu0 %v317
  %448 = vmatprep.subr.bf16.mxu0 0
  %449 = vmatpush1.bf16.msra.mxu0 %v316
  %450 = vmatprep.subr.bf16.mxu0 0
  %451 = vmatpush1.bf16.msra.mxu0 %v315
  %452 = vmatprep.subr.bf16.mxu0 0
  %453 = vmatpush1.bf16.msra.mxu0 %v314
  %454 = vmatprep.subr.bf16.mxu0 0
  %455 = vmatpush2.bf16.msra.mxu0 0
  %456 = vmatprep.subr.bf16.mxu0 0
  %457 = vmatpush2.bf16.msra.mxu0 0
  %458 = vmatprep.subr.bf16.mxu0 0
  %459 = vmatpush2.bf16.msra.mxu0 0
  %460 = vmatprep.subr.bf16.mxu0 0
  %461 = vmatpush2.bf16.msra.mxu0 0
  %462 = vmatprep.subr.bf16.mxu0 0
  %463 = vmatpush2.bf16.msra.mxu0 0
  %464 = vmatprep.subr.bf16.mxu0 0
  %465 = vmatpush2.bf16.msra.mxu0 0
  %466 = vmatprep.subr.bf16.mxu0 0
  %467 = vmatpush2.bf16.msra.mxu0 0
  %468 = vmatprep.subr.bf16.mxu0 0
  %469 = vmatpush2.bf16.msra.mxu0 0
  %470 = vmatprep.mubr.bf16.mxu0 0
  %471 = vmatmul.mubr.bf16.gmra.mxu0 %v356
  %v472 = vpop.f32.mrf.mxu0
  %v473 = vadd.f32 %v433, %v472
  %v474 = vpop.f32.mrf.mxu0
  %v475 = vpop.f32.mrf.mxu0
  %v476 = vpop.f32.mrf.mxu0
  %477 = vdwg.mxu0
  %v478 = vadd.f32 %v20, %v473
  %479 = vst [vmem:[#allocation2] sm:$0x3] %v478
  // Predicated region
  $region14: #{_lambda_.40} parent=0 // pred_check
    %p480 = pneg %p15
  $region15: #{_lambda_.40} parent=0 // pred_check_branch
    %482 = sbr.rel (%p480) target = $region17
  $region16: #{_lambda_.40} parent=0 // pred_region
    %v483 = vld [vmem:[#allocation2] sm:$0x3]
    %v484 = vpack.c.bf16 %v483, %v483
    %485 = vst [vmem:[%s2] sm:$0x1] %v484
    %v486 = vlaneseq
    %v487 = vshrl.u32 %v486, 7
    %vm488 = vcmp.eq.s32.totalorder %v487, 0
    %vm489 = vcmask 1041408
    %v490 = vsel %vm489, %v483, 0.0
    %v491 = vrot.slane %v490, 4
    %v492 = vadd.f32 %v490, %v491
    %v493 = vrot.slane %v492, 2
    %v494 = vadd.f32 %v492, %v493
    %v495 = vrot.slane %v494, 1
    %v496 = vadd.f32 %v494, %v495
    %v497 = vmul.f32 %v483, %v483
    %v498 = vsel %vm489, %v497, 0.0
    %v499 = vrot.slane %v498, 4
    %v500 = vadd.f32 %v498, %v499
    %v501 = vrot.slane %v500, 2
    %v502 = vadd.f32 %v500, %v501
    %v503 = vrot.slane %v502, 1
    %v504 = vadd.f32 %v502, %v503
    %v505 = vsel %vm488, %v496, 0.0
    %506 = vst [vmem:[%s3] sm:$0xff] %v505
    %v507 = vsel %vm488, %v504, 0.0
    %508 = vst [vmem:[%s4] sm:$0xff] %v507
  $region17: #{_lambda_.40} parent=0 // pred_fallthru
    _
  // Predicated region
  $region18: #{_lambda_.40} parent=0 // pred_check
    _
  $region19: #{_lambda_.40} parent=0 // pred_check_branch
    %510 = sbr.rel (0) target = $region21
  $region20: #{_lambda_.40} parent=0 // pred_region
    _
  $region21: #{_lambda_.40} parent=0 // pred_fallthru
    _
  // Predicated region
  $region22: #{_lambda_.40} parent=0 // pred_check
    _
  $region23: #{_lambda_.40} parent=0 // pred_check_branch
    %512 = sbr.rel (0) target = $region25
  $region24: #{_lambda_.40} parent=0 // pred_region
    _
  $region25: #{_lambda_.40} parent=0 // pred_fallthru
    _
  // Predicated region
  $region26: #{_lambda_.40} parent=0 // pred_check
    _
  $region27: #{_lambda_.40} parent=0 // pred_check_branch
    %514 = sbr.rel (0) target = $region29
  $region28: #{_lambda_.40} parent=0 // pred_region
    _
  $region29: #{_lambda_.40} parent=0 // pred_fallthru
    _
  // Predicated region
  $region30: #{_lambda_.40} parent=0 // pred_check
    _
  $region31: #{_lambda_.40} parent=0 // pred_check_branch
    %516 = sbr.rel (0) target = $region33
  $region32: #{_lambda_.40} parent=0 // pred_region
    _
  $region33: #{_lambda_.40} parent=0 // pred_fallthru
    _
  // Predicated region
  $region34: #{_lambda_.40} parent=0 // pred_check
    _
  $region35: #{_lambda_.40} parent=0 // pred_check_branch
    %518 = sbr.rel (0) target = $region37
  $region36: #{_lambda_.40} parent=0 // pred_region
    _
  $region37: #{_lambda_.40} parent=0 // pred_fallthru
    _
  // Predicated region
  $region38: #{_lambda_.40} parent=0 // pred_check
    _
  $region39: #{_lambda_.40} parent=0 // pred_check_branch
    %520 = sbr.rel (0) target = $region41
  $region40: #{_lambda_.40} parent=0 // pred_region
    _
  $region41: #{_lambda_.40} parent=0 // pred_fallthru
    _

// kernel: _lambda_.43
$region0: #{_lambda_.43}
  #allocation0 [shape = 'u32[]', space=smem, size = 0x4, offset = 0x4, fixed_abs, tag = 'smem constant byte address 0x4 - core index']
  #allocation1 [shape = 'u32[144,128]{1,0:T(1,128)}', space=vmem, size = 0x12000, scoped, tag = 'internal scratch']
  #allocation2 [shape = 'f32[2,128]{1,0:T(2,128)}', space=vmem, size = 0x400, scoped, tag = 'scratch operand']
  %s0 = inlined_call_operand.vmem [shape: bf16[2,64], index: 0, kind: input, shape index: {}]
  %s1 = inlined_call_operand.vmem [shape: bf16[64,128], index: 1, kind: input, shape index: {}]
  %s2 = inlined_call_operand.vmem [shape: bf16[2,128], index: 2, kind: output, shape index: {0}]
  %s3 = inlined_call_operand.vmem [shape: f32[8,128], index: 3, kind: output, shape index: {1}]
  %s4 = inlined_call_operand.vmem [shape: f32[8,128], index: 4, kind: output, shape index: {2}]
  %5 = xla_tuple %s2, %s3, %s4
  %s6 = sld [smem:[#allocation0]]
  $region42: #{_lambda_.43} parent=0
    _
  %s8 = ssub.s32 1, %s6
  %s9 = scalar_select 0, %s8, %s6
  // Predicated region
  $region2: #{_lambda_.43} parent=0 // pred_check
    _
  $region3: #{_lambda_.43} parent=0 // pred_check_branch
    %11 = sbr.rel (0) target = $region5
  $region4: #{_lambda_.43} parent=0 // pred_region
    _
  $region5: #{_lambda_.43} parent=0 // pred_fallthru
    _
  // Predicated region
  $region6: #{_lambda_.43} parent=0 // pred_check
    _
  $region7: #{_lambda_.43} parent=0 // pred_check_branch
    %13 = sbr.rel (0) target = $region9
  $region8: #{_lambda_.43} parent=0 // pred_region
    _
  $region9: #{_lambda_.43} parent=0 // pred_fallthru
    _
  %p15 = scmp.eq.s32.totalorder 0, 0
  // Predicated region
  $region10: #{_lambda_.43} parent=0 // pred_check
    %p16 = pneg %p15
  $region11: #{_lambda_.43} parent=0 // pred_check_branch
    %18 = sbr.rel (%p16) target = $region13
  $region12: #{_lambda_.43} parent=0 // pred_region
    %19 = vst [vmem:[#allocation2] sm:$0x3] 0.0
  $region13: #{_lambda_.43} parent=0 // pred_fallthru
    _
  %v20 = vld [vmem:[#allocation2] sm:$0x3]
  %v21 = vld [vmem:[%s0] sm:$0x1]
  %v22 = vld [vmem:[%s1] sm:$0xf]
  %v23 = vld [vmem:[%s1 + $0x4] sm:$0xf]
  %v24 = vld [vmem:[%s1 + $0x8] sm:$0xf]
  %v25 = vld [vmem:[%s1 + $0xc] sm:$0xf]
  %v26 = vld [vmem:[%s1 + $0x10] sm:$0xf]
  %v27 = vld [vmem:[%s1 + $0x14] sm:$0xf]
  %v28 = vld [vmem:[%s1 + $0x18] sm:$0xf]
  %v29 = vld [vmem:[%s1 + $0x1c] sm:$0xf]
  %v38 = vunpack.c.l.b16 %v22
  %v39 = vunpack.c.l.b16 %v23
  %v40 = vunpack.c.l.b16 %v24
  %v41 = vunpack.c.l.b16 %v25
  %v42 = vunpack.c.l.b16 %v26
  %v43 = vunpack.c.l.b16 %v27
  %v44 = vunpack.c.l.b16 %v28
  %v45 = vunpack.c.l.b16 %v29
  %v46 = vpack.c.b16 %v39, %v38
  %v47 = vpack.c.b16 %v41, %v40
  %v48 = vpack.c.b16 %v43, %v42
  %v49 = vpack.c.b16 %v45, %v44
  %vm54 = vcmask 523264
  %v56 = vsel %vm54, %v21, 0
  %58 = vmatprep.subr.bf16.mxu0 0
  %59 = vmatpush1.bf16.msra.mxu0 0
  %60 = vmatprep.subr.bf16.mxu0 0
  %61 = vmatpush1.bf16.msra.mxu0 0
  %62 = vmatprep.subr.bf16.mxu0 0
  %63 = vmatpush1.bf16.msra.mxu0 0
  %64 = vmatprep.subr.bf16.mxu0 0
  %65 = vmatpush1.bf16.msra.mxu0 0
  %66 = vmatprep.subr.bf16.mxu0 0
  %67 = vmatpush1.bf16.msra.mxu0 %v49
  %68 = vmatprep.subr.bf16.mxu0 0
  %69 = vmatpush1.bf16.msra.mxu0 %v48
  %70 = vmatprep.subr.bf16.mxu0 0
  %71 = vmatpush1.bf16.msra.mxu0 %v47
  %72 = vmatprep.subr.bf16.mxu0 0
  %73 = vmatpush1.bf16.msra.mxu0 %v46
  %74 = vmatprep.subr.bf16.mxu0 0
  %75 = vmatpush2.bf16.msra.mxu0 0
  %76 = vmatprep.subr.bf16.mxu0 0
  %77 = vmatpush2.bf16.msra.mxu0 0
  %78 = vmatprep.subr.bf16.mxu0 0
  %79 = vmatpush2.bf16.msra.mxu0 0
  %80 = vmatprep.subr.bf16.mxu0 0
  %81 = vmatpush2.bf16.msra.mxu0 0
  %82 = vmatprep.subr.bf16.mxu0 0
  %83 = vmatpush2.bf16.msra.mxu0 0
  %84 = vmatprep.subr.bf16.mxu0 0
  %85 = vmatpush2.bf16.msra.mxu0 0
  %86 = vmatprep.subr.bf16.mxu0 0
  %87 = vmatpush2.bf16.msra.mxu0 0
  %88 = vmatprep.subr.bf16.mxu0 0
  %89 = vmatpush2.bf16.msra.mxu0 0
  %90 = vmatprep.mubr.bf16.mxu0 0
  %91 = vmatmul.mubr.bf16.gmra.mxu0 %v56
  %v92 = vpop.f32.mrf.mxu0
  %v93 = vadd.f32 0.0, %v92
  %v94 = vpop.f32.mrf.mxu0
  %v95 = vpop.f32.mrf.mxu0
  %v96 = vpop.f32.mrf.mxu0
  %97 = vdwg.mxu0
  %v98 = vadd.f32 %v20, %v93
  %99 = vst [vmem:[#allocation2] sm:$0x3] %v98
  // Predicated region
  $region14: #{_lambda_.43} parent=0 // pred_check
    %p100 = pneg %p15
  $region15: #{_lambda_.43} parent=0 // pred_check_branch
    %102 = sbr.rel (%p100) target = $region17
  $region16: #{_lambda_.43} parent=0 // pred_region
    %v103 = vld [vmem:[#allocation2] sm:$0x3]
    %v104 = vpack.c.bf16 %v103, %v103
    %105 = vst [vmem:[%s2] sm:$0x1] %v104
    %v106 = vlaneseq
    %v107 = vshrl.u32 %v106, 7
    %vm108 = vcmp.eq.s32.totalorder %v107, 0
    %vm109 = vcmask 1041408
    %v110 = vsel %vm109, %v103, 0.0
    %v111 = vrot.slane %v110, 4
    %v112 = vadd.f32 %v110, %v111
    %v113 = vrot.slane %v112, 2
    %v114 = vadd.f32 %v112, %v113
    %v115 = vrot.slane %v114, 1
    %v116 = vadd.f32 %v114, %v115
    %v117 = vmul.f32 %v103, %v103
    %v118 = vsel %vm109, %v117, 0.0
    %v119 = vrot.slane %v118, 4
    %v120 = vadd.f32 %v118, %v119
    %v121 = vrot.slane %v120, 2
    %v122 = vadd.f32 %v120, %v121
    %v123 = vrot.slane %v122, 1
    %v124 = vadd.f32 %v122, %v123
    %v125 = vsel %vm108, %v116, 0.0
    %126 = vst [vmem:[%s3] sm:$0xff] %v125
    %v127 = vsel %vm108, %v124, 0.0
    %128 = vst [vmem:[%s4] sm:$0xff] %v127
  $region17: #{_lambda_.43} parent=0 // pred_fallthru
    _
  // Predicated region
  $region18: #{_lambda_.43} parent=0 // pred_check
    _
  $region19: #{_lambda_.43} parent=0 // pred_check_branch
    %130 = sbr.rel (0) target = $region21
  $region20: #{_lambda_.43} parent=0 // pred_region
    _
  $region21: #{_lambda_.43} parent=0 // pred_fallthru
    _
  // Predicated region
  $region22: #{_lambda_.43} parent=0 // pred_check
    _
  $region23: #{_lambda_.43} parent=0 // pred_check_branch
    %132 = sbr.rel (0) target = $region25
  $region24: #{_lambda_.43} parent=0 // pred_region
    _
  $region25: #{_lambda_.43} parent=0 // pred_fallthru
    _
  // Predicated region
  $region26: #{_lambda_.43} parent=0 // pred_check
    _
  $region27: #{_lambda_.43} parent=0 // pred_check_branch
    %134 = sbr.rel (0) target = $region29
  $region28: #{_lambda_.43} parent=0 // pred_region
    _
  $region29: #{_lambda_.43} parent=0 // pred_fallthru
    _
  // Predicated region
  $region30: #{_lambda_.43} parent=0 // pred_check
    _
  $region31: #{_lambda_.43} parent=0 // pred_check_branch
    %136 = sbr.rel (0) target = $region33
  $region32: #{_lambda_.43} parent=0 // pred_region
    _
  $region33: #{_lambda_.43} parent=0 // pred_fallthru
    _
  // Predicated region
  $region34: #{_lambda_.43} parent=0 // pred_check
    _
  $region35: #{_lambda_.43} parent=0 // pred_check_branch
    %138 = sbr.rel (0) target = $region37
  $region36: #{_lambda_.43} parent=0 // pred_region
    _
  $region37: #{_lambda_.43} parent=0 // pred_fallthru
    _
  // Predicated region
  $region38: #{_lambda_.43} parent=0 // pred_check
    _
  $region39: #{_lambda_.43} parent=0 // pred_check_branch
    %140 = sbr.rel (0) target = $region41
  $region40: #{_lambda_.43} parent=0 // pred_region
    _
  $region41: #{_lambda_.43} parent=0 // pred_fallthru
    _

// kernel: _lambda_.44
$region0: #{_lambda_.44}
  #allocation0 [shape = 'u32[]', space=smem, size = 0x4, offset = 0x4, fixed_abs, tag = 'smem constant byte address 0x4 - core index']
  #allocation1 [shape = 'u32[144,128]{1,0:T(1,128)}', space=vmem, size = 0x12000, scoped, tag = 'internal scratch']
  %s0 = inlined_call_operand.vmem [shape: bf16[2,128], index: 0, kind: input, shape index: {}]
  %s1 = inlined_call_operand.vmem [shape: f32[1,128], index: 1, kind: input, shape index: {}]
  %s2 = inlined_call_operand.vmem [shape: f32[1,128], index: 2, kind: input, shape index: {}]
  %s3 = inlined_call_operand.vmem [shape: bf16[2,128], index: 3, kind: input, shape index: {}]
  %s4 = inlined_call_operand.vmem [shape: f32[1,128], index: 4, kind: input, shape index: {}]
  %s5 = inlined_call_operand.vmem [shape: f32[1,128], index: 5, kind: input, shape index: {}]
  %s6 = inlined_call_operand.vmem [shape: bf16[2,128], index: 6, kind: output, shape index: {}]
  %s7 = sld [smem:[#allocation0]]
  $region34: #{_lambda_.44} parent=0
    _
  %s9 = ssub.s32 1, %s7
  %s10 = scalar_select 0, %s9, %s7
  // Predicated region
  $region2: #{_lambda_.44} parent=0 // pred_check
    _
  $region3: #{_lambda_.44} parent=0 // pred_check_branch
    %12 = sbr.rel (0) target = $region5
  $region4: #{_lambda_.44} parent=0 // pred_region
    _
  $region5: #{_lambda_.44} parent=0 // pred_fallthru
    _
  // Predicated region
  $region6: #{_lambda_.44} parent=0 // pred_check
    _
  $region7: #{_lambda_.44} parent=0 // pred_check_branch
    %14 = sbr.rel (0) target = $region9
  $region8: #{_lambda_.44} parent=0 // pred_region
    _
  $region9: #{_lambda_.44} parent=0 // pred_fallthru
    _
  // Predicated region
  $region10: #{_lambda_.44} parent=0 // pred_check
    _
  $region11: #{_lambda_.44} parent=0 // pred_check_branch
    %16 = sbr.rel (0) target = $region13
  $region12: #{_lambda_.44} parent=0 // pred_region
    _
  $region13: #{_lambda_.44} parent=0 // pred_fallthru
    _
  // Predicated region
  $region14: #{_lambda_.44} parent=0 // pred_check
    _
  $region15: #{_lambda_.44} parent=0 // pred_check_branch
    %18 = sbr.rel (0) target = $region17
  $region16: #{_lambda_.44} parent=0 // pred_region
    _
  $region17: #{_lambda_.44} parent=0 // pred_fallthru
    _
  // Predicated region
  $region18: #{_lambda_.44} parent=0 // pred_check
    _
  $region19: #{_lambda_.44} parent=0 // pred_check_branch
    %20 = sbr.rel (0) target = $region21
  $region20: #{_lambda_.44} parent=0 // pred_region
    _
  $region21: #{_lambda_.44} parent=0 // pred_fallthru
    _
  // Predicated region
  $region22: #{_lambda_.44} parent=0 // pred_check
    _
  $region23: #{_lambda_.44} parent=0 // pred_check_branch
    %22 = sbr.rel (0) target = $region25
  $region24: #{_lambda_.44} parent=0 // pred_region
    _
  $region25: #{_lambda_.44} parent=0 // pred_fallthru
    _
  %v23 = vld [vmem:[%s0] sm:$0x1]
  %v24 = vunpack.c.l.bf16 %v23
  %v25 = vld [vmem:[%s1] sm:$0x1]
  %v27 = vlaneseq
  %v28 = vshrl.u32 %v27, 7
  %v29 = vsub.s32 0, %v28
  %v30 = vrot.slane %v25, %v29
  %v32 = vmul.f32 %v24, %v30
  %v33 = vld [vmem:[%s2] sm:$0x1]
  %v35 = vlaneseq
  %v36 = vshrl.u32 %v35, 7
  %v37 = vsub.s32 0, %v36
  %v38 = vrot.slane %v33, %v37
  %v40 = vadd.f32 %v32, %v38
  %v41 = vld [vmem:[%s3] sm:$0x1]
  %v42 = vunpack.c.l.bf16 %v41
  %v43 = vld [vmem:[%s4] sm:$0x1]
  %v45 = vlaneseq
  %v46 = vshrl.u32 %v45, 7
  %v47 = vsub.s32 0, %v46
  %v48 = vrot.slane %v43, %v47
  %v50 = vmul.f32 %v42, %v48
  %v51 = vadd.f32 %v40, %v50
  %v52 = vld [vmem:[%s5] sm:$0x1]
  %v54 = vlaneseq
  %v55 = vshrl.u32 %v54, 7
  %v56 = vsub.s32 0, %v55
  %v57 = vrot.slane %v52, %v56
  %v59 = vadd.f32 %v51, %v57
  %v60 = vmax.f32 %v59, 0.0
  %v61 = vpack.c.bf16 %v60, %v60
  %62 = vst [vmem:[%s6] sm:$0x1] %v61
  // Predicated region
  $region26: #{_lambda_.44} parent=0 // pred_check
    _
  $region27: #{_lambda_.44} parent=0 // pred_check_branch
    %64 = sbr.rel (0) target = $region29
  $region28: #{_lambda_.44} parent=0 // pred_region
    _
  $region29: #{_lambda_.44} parent=0 // pred_fallthru
    _
  // Predicated region
  $region30: #{_lambda_.44} parent=0 // pred_check
    _
  $region31: #{_lambda_.44} parent=0 // pred_check_branch
    %66 = sbr.rel (0) target = $region33
  $region32: #{_lambda_.44} parent=0 // pred_region
    _
  $region33: #{_lambda_.44} parent=0 // pred_fallthru
    _

// kernel: _lambda_.42
$region0: #{_lambda_.42}
  #allocation0 [shape = 'u32[]', space=smem, size = 0x4, offset = 0x4, fixed_abs, tag = 'smem constant byte address 0x4 - core index']
  #allocation1 [shape = 'u32[144,128]{1,0:T(1,128)}', space=vmem, size = 0x12000, scoped, tag = 'internal scratch']
  #allocation2 [shape = 'f32[2,128]{1,0:T(2,128)}', space=vmem, size = 0x400, scoped, tag = 'scratch operand']
  %s0 = inlined_call_operand.vmem [shape: bf16[2,1152], index: 0, kind: input, shape index: {}]
  %s1 = inlined_call_operand.vmem [shape: bf16[1152,128], index: 1, kind: input, shape index: {}]
  %s2 = inlined_call_operand.vmem [shape: bf16[2,128], index: 2, kind: output, shape index: {0}]
  %s3 = inlined_call_operand.vmem [shape: f32[8,128], index: 3, kind: output, shape index: {1}]
  %s4 = inlined_call_operand.vmem [shape: f32[8,128], index: 4, kind: output, shape index: {2}]
  %5 = xla_tuple %s2, %s3, %s4
  %s6 = sld [smem:[#allocation0]]
  $region42: #{_lambda_.42} parent=0
    _
  %s8 = ssub.s32 1, %s6
  %s9 = scalar_select 0, %s8, %s6
  // Predicated region
  $region2: #{_lambda_.42} parent=0 // pred_check
    _
  $region3: #{_lambda_.42} parent=0 // pred_check_branch
    %11 = sbr.rel (0) target = $region5
  $region4: #{_lambda_.42} parent=0 // pred_region
    _
  $region5: #{_lambda_.42} parent=0 // pred_fallthru
    _
  // Predicated region
  $region6: #{_lambda_.42} parent=0 // pred_check
    _
  $region7: #{_lambda_.42} parent=0 // pred_check_branch
    %13 = sbr.rel (0) target = $region9
  $region8: #{_lambda_.42} parent=0 // pred_region
    _
  $region9: #{_lambda_.42} parent=0 // pred_fallthru
    _
  %p15 = scmp.eq.s32.totalorder 0, 0
  // Predicated region
  $region10: #{_lambda_.42} parent=0 // pred_check
    %p16 = pneg %p15
  $region11: #{_lambda_.42} parent=0 // pred_check_branch
    %18 = sbr.rel (%p16) target = $region13
  $region12: #{_lambda_.42} parent=0 // pred_region
    %19 = vst [vmem:[#allocation2] sm:$0x3] 0.0
  $region13: #{_lambda_.42} parent=0 // pred_fallthru
    _
  %v20 = vld [vmem:[#allocation2] sm:$0x3]
  %v21 = vld [vmem:[%s0] sm:$0xff]
  %v22 = vld [vmem:[%s0 + $0x8] sm:$0x1]
  %v23 = vld [vmem:[%s1] sm:$0xf]
  %v24 = vld [vmem:[%s1 + $0x4] sm:$0xf]
  %v25 = vld [vmem:[%s1 + $0x8] sm:$0xf]
  %v26 = vld [vmem:[%s1 + $0xc] sm:$0xf]
  %v27 = vld [vmem:[%s1 + $0x10] sm:$0xf]
  %v28 = vld [vmem:[%s1 + $0x14] sm:$0xf]
  %v29 = vld [vmem:[%s1 + $0x18] sm:$0xf]
  %v30 = vld [vmem:[%s1 + $0x1c] sm:$0xf]
  %v31 = vld [vmem:[%s1 + $0x20] sm:$0xf]
  %v32 = vld [vmem:[%s1 + $0x24] sm:$0xf]
  %v33 = vld [vmem:[%s1 + $0x28] sm:$0xf]
  %v34 = vld [vmem:[%s1 + $0x2c] sm:$0xf]
  %v35 = vld [vmem:[%s1 + $0x30] sm:$0xf]
  %v36 = vld [vmem:[%s1 + $0x34] sm:$0xf]
  %v37 = vld [vmem:[%s1 + $0x38] sm:$0xf]
  %v38 = vld [vmem:[%s1 + $0x3c] sm:$0xf]
  %v39 = vld [vmem:[%s1 + $0x40] sm:$0xf]
  %v40 = vld [vmem:[%s1 + $0x44] sm:$0xf]
  %v41 = vld [vmem:[%s1 + $0x48] sm:$0xf]
  %v42 = vld [vmem:[%s1 + $0x4c] sm:$0xf]
  %v43 = vld [vmem:[%s1 + $0x50] sm:$0xf]
  %v44 = vld [vmem:[%s1 + $0x54] sm:$0xf]
  %v45 = vld [vmem:[%s1 + $0x58] sm:$0xf]
  %v46 = vld [vmem:[%s1 + $0x5c] sm:$0xf]
  %v47 = vld [vmem:[%s1 + $0x60] sm:$0xf]
  %v48 = vld [vmem:[%s1 + $0x64] sm:$0xf]
  %v49 = vld [vmem:[%s1 + $0x68] sm:$0xf]
  %v50 = vld [vmem:[%s1 + $0x6c] sm:$0xf]
  %v51 = vld [vmem:[%s1 + $0x70] sm:$0xf]
  %v52 = vld [vmem:[%s1 + $0x74] sm:$0xf]
  %v53 = vld [vmem:[%s1 + $0x78] sm:$0xf]
  %v54 = vld [vmem:[%s1 + $0x7c] sm:$0xf]
  %v55 = vld [vmem:[%s1 + $0x80] sm:$0xf]
  %v56 = vld [vmem:[%s1 + $0x84] sm:$0xf]
  %v57 = vld [vmem:[%s1 + $0x88] sm:$0xf]
  %v58 = vld [vmem:[%s1 + $0x8c] sm:$0xf]
  %v59 = vld [vmem:[%s1 + $0x90] sm:$0xf]
  %v60 = vld [vmem:[%s1 + $0x94] sm:$0xf]
  %v61 = vld [vmem:[%s1 + $0x98] sm:$0xf]
  %v62 = vld [vmem:[%s1 + $0x9c] sm:$0xf]
  %v63 = vld [vmem:[%s1 + $0xa0] sm:$0xf]
  %v64 = vld [vmem:[%s1 + $0xa4] sm:$0xf]
  %v65 = vld [vmem:[%s1 + $0xa8] sm:$0xf]
  %v66 = vld [vmem:[%s1 + $0xac] sm:$0xf]
  %v67 = vld [vmem:[%s1 + $0xb0] sm:$0xf]
  %v68 = vld [vmem:[%s1 + $0xb4] sm:$0xf]
  %v69 = vld [vmem:[%s1 + $0xb8] sm:$0xf]
  %v70 = vld [vmem:[%s1 + $0xbc] sm:$0xf]
  %v71 = vld [vmem:[%s1 + $0xc0] sm:$0xf]
  %v72 = vld [vmem:[%s1 + $0xc4] sm:$0xf]
  %v73 = vld [vmem:[%s1 + $0xc8] sm:$0xf]
  %v74 = vld [vmem:[%s1 + $0xcc] sm:$0xf]
  %v75 = vld [vmem:[%s1 + $0xd0] sm:$0xf]
  %v76 = vld [vmem:[%s1 + $0xd4] sm:$0xf]
  %v77 = vld [vmem:[%s1 + $0xd8] sm:$0xf]
  %v78 = vld [vmem:[%s1 + $0xdc] sm:$0xf]
  %v79 = vld [vmem:[%s1 + $0xe0] sm:$0xf]
  %v80 = vld [vmem:[%s1 + $0xe4] sm:$0xf]
  %v81 = vld [vmem:[%s1 + $0xe8] sm:$0xf]
  %v82 = vld [vmem:[%s1 + $0xec] sm:$0xf]
  %v83 = vld [vmem:[%s1 + $0xf0] sm:$0xf]
  %v84 = vld [vmem:[%s1 + $0xf4] sm:$0xf]
  %v85 = vld [vmem:[%s1 + $0xf8] sm:$0xf]
  %v86 = vld [vmem:[%s1 + $0xfc] sm:$0xf]
  %v87 = vld [vmem:[%s1 + $0x100] sm:$0xf]
  %v88 = vld [vmem:[%s1 + $0x104] sm:$0xf]
  %v89 = vld [vmem:[%s1 + $0x108] sm:$0xf]
  %v90 = vld [vmem:[%s1 + $0x10c] sm:$0xf]
  %v91 = vld [vmem:[%s1 + $0x110] sm:$0xf]
  %v92 = vld [vmem:[%s1 + $0x114] sm:$0xf]
  %v93 = vld [vmem:[%s1 + $0x118] sm:$0xf]
  %v94 = vld [vmem:[%s1 + $0x11c] sm:$0xf]
  %v95 = vld [vmem:[%s1 + $0x120] sm:$0xf]
  %v96 = vld [vmem:[%s1 + $0x124] sm:$0xf]
  %v97 = vld [vmem:[%s1 + $0x128] sm:$0xf]
  %v98 = vld [vmem:[%s1 + $0x12c] sm:$0xf]
  %v99 = vld [vmem:[%s1 + $0x130] sm:$0xf]
  %v100 = vld [vmem:[%s1 + $0x134] sm:$0xf]
  %v101 = vld [vmem:[%s1 + $0x138] sm:$0xf]
  %v102 = vld [vmem:[%s1 + $0x13c] sm:$0xf]
  %v103 = vld [vmem:[%s1 + $0x140] sm:$0xf]
  %v104 = vld [vmem:[%s1 + $0x144] sm:$0xf]
  %v105 = vld [vmem:[%s1 + $0x148] sm:$0xf]
  %v106 = vld [vmem:[%s1 + $0x14c] sm:$0xf]
  %v107 = vld [vmem:[%s1 + $0x150] sm:$0xf]
  %v108 = vld [vmem:[%s1 + $0x154] sm:$0xf]
  %v109 = vld [vmem:[%s1 + $0x158] sm:$0xf]
  %v110 = vld [vmem:[%s1 + $0x15c] sm:$0xf]
  %v111 = vld [vmem:[%s1 + $0x160] sm:$0xf]
  %v112 = vld [vmem:[%s1 + $0x164] sm:$0xf]
  %v113 = vld [vmem:[%s1 + $0x168] sm:$0xf]
  %v114 = vld [vmem:[%s1 + $0x16c] sm:$0xf]
  %v115 = vld [vmem:[%s1 + $0x170] sm:$0xf]
  %v116 = vld [vmem:[%s1 + $0x174] sm:$0xf]
  %v117 = vld [vmem:[%s1 + $0x178] sm:$0xf]
  %v118 = vld [vmem:[%s1 + $0x17c] sm:$0xf]
  %v119 = vld [vmem:[%s1 + $0x180] sm:$0xf]
  %v120 = vld [vmem:[%s1 + $0x184] sm:$0xf]
  %v121 = vld [vmem:[%s1 + $0x188] sm:$0xf]
  %v122 = vld [vmem:[%s1 + $0x18c] sm:$0xf]
  %v123 = vld [vmem:[%s1 + $0x190] sm:$0xf]
  %v124 = vld [vmem:[%s1 + $0x194] sm:$0xf]
  %v125 = vld [vmem:[%s1 + $0x198] sm:$0xf]
  %v126 = vld [vmem:[%s1 + $0x19c] sm:$0xf]
  %v127 = vld [vmem:[%s1 + $0x1a0] sm:$0xf]
  %v128 = vld [vmem:[%s1 + $0x1a4] sm:$0xf]
  %v129 = vld [vmem:[%s1 + $0x1a8] sm:$0xf]
  %v130 = vld [vmem:[%s1 + $0x1ac] sm:$0xf]
  %v131 = vld [vmem:[%s1 + $0x1b0] sm:$0xf]
  %v132 = vld [vmem:[%s1 + $0x1b4] sm:$0xf]
  %v133 = vld [vmem:[%s1 + $0x1b8] sm:$0xf]
  %v134 = vld [vmem:[%s1 + $0x1bc] sm:$0xf]
  %v135 = vld [vmem:[%s1 + $0x1c0] sm:$0xf]
  %v136 = vld [vmem:[%s1 + $0x1c4] sm:$0xf]
  %v137 = vld [vmem:[%s1 + $0x1c8] sm:$0xf]
  %v138 = vld [vmem:[%s1 + $0x1cc] sm:$0xf]
  %v139 = vld [vmem:[%s1 + $0x1d0] sm:$0xf]
  %v140 = vld [vmem:[%s1 + $0x1d4] sm:$0xf]
  %v141 = vld [vmem:[%s1 + $0x1d8] sm:$0xf]
  %v142 = vld [vmem:[%s1 + $0x1dc] sm:$0xf]
  %v143 = vld [vmem:[%s1 + $0x1e0] sm:$0xf]
  %v144 = vld [vmem:[%s1 + $0x1e4] sm:$0xf]
  %v145 = vld [vmem:[%s1 + $0x1e8] sm:$0xf]
  %v146 = vld [vmem:[%s1 + $0x1ec] sm:$0xf]
  %v147 = vld [vmem:[%s1 + $0x1f0] sm:$0xf]
  %v148 = vld [vmem:[%s1 + $0x1f4] sm:$0xf]
  %v149 = vld [vmem:[%s1 + $0x1f8] sm:$0xf]
  %v150 = vld [vmem:[%s1 + $0x1fc] sm:$0xf]
  %v151 = vld [vmem:[%s1 + $0x200] sm:$0xf]
  %v152 = vld [vmem:[%s1 + $0x204] sm:$0xf]
  %v153 = vld [vmem:[%s1 + $0x208] sm:$0xf]
  %v154 = vld [vmem:[%s1 + $0x20c] sm:$0xf]
  %v155 = vld [vmem:[%s1 + $0x210] sm:$0xf]
  %v156 = vld [vmem:[%s1 + $0x214] sm:$0xf]
  %v157 = vld [vmem:[%s1 + $0x218] sm:$0xf]
  %v158 = vld [vmem:[%s1 + $0x21c] sm:$0xf]
  %v159 = vld [vmem:[%s1 + $0x220] sm:$0xf]
  %v160 = vld [vmem:[%s1 + $0x224] sm:$0xf]
  %v161 = vld [vmem:[%s1 + $0x228] sm:$0xf]
  %v162 = vld [vmem:[%s1 + $0x22c] sm:$0xf]
  %v163 = vld [vmem:[%s1 + $0x230] sm:$0xf]
  %v164 = vld [vmem:[%s1 + $0x234] sm:$0xf]
  %v165 = vld [vmem:[%s1 + $0x238] sm:$0xf]
  %v166 = vld [vmem:[%s1 + $0x23c] sm:$0xf]
  %v169 = vcombine.high %v21, %v21
  %v171 = vunpack.c.l.s4 1966171168
  %v172 = vunpack.c.0.s8 %v171
  %v173 = vlaneseq
  %v174 = vshrl.u32 %v173, 7
  %v175 = vsub.s32 %v172, %v174
  %v176 = vrot.slane %v21, %v175
  %v178 = vunpack.c.l.s4 1966171168
  %v179 = vunpack.c.0.s8 %v178
  %v180 = vlaneseq
  %v181 = vshrl.u32 %v180, 7
  %v182 = vsub.s32 %v179, %v181
  %v183 = vrot.slane %v169, %v182
  %v184 = vcombine.high %v176, %v176
  %v185 = vcombine.high %v183, %v183
  %v187 = vunpack.c.l.s4 1966171168
  %v188 = vunpack.c.0.s8 %v187
  %v189 = vlaneseq
  %v190 = vshrl.u32 %v189, 7
  %v191 = vsub.s32 %v188, %v190
  %v192 = vrot.slane %v176, %v191
  %v194 = vunpack.c.l.s4 1966171168
  %v195 = vunpack.c.0.s8 %v194
  %v196 = vlaneseq
  %v197 = vshrl.u32 %v196, 7
  %v198 = vsub.s32 %v195, %v197
  %v199 = vrot.slane %v183, %v198
  %v201 = vunpack.c.l.s4 1966171168
  %v202 = vunpack.c.0.s8 %v201
  %v203 = vlaneseq
  %v204 = vshrl.u32 %v203, 7
  %v205 = vsub.s32 %v202, %v204
  %v206 = vrot.slane %v184, %v205
  %v208 = vunpack.c.l.s4 1966171168
  %v209 = vunpack.c.0.s8 %v208
  %v210 = vlaneseq
  %v211 = vshrl.u32 %v210, 7
  %v212 = vsub.s32 %v209, %v211
  %v213 = vrot.slane %v185, %v212
  %v214 = vcombine.high %v192, %v192
  %v215 = vcombine.high %v199, %v199
  %v216 = vcombine.high %v206, %v206
  %v217 = vcombine.high %v213, %v213
  %v219 = vunpack.c.l.s4 1966171168
  %v220 = vunpack.c.0.s8 %v219
  %v221 = vlaneseq
  %v222 = vshrl.u32 %v221, 7
  %v223 = vsub.s32 %v220, %v222
  %v224 = vrot.slane %v22, %v223
  %v226 = vunpack.c.l.s4 1966171168
  %v227 = vunpack.c.0.s8 %v226
  %v228 = vlaneseq
  %v229 = vshrl.u32 %v228, 7
  %v230 = vsub.s32 %v227, %v229
  %v231 = vrot.slane %v224, %v230
  %v385 = vunpack.c.l.b16 %v23
  %v386 = vunpack.c.l.b16 %v24
  %v387 = vunpack.c.l.b16 %v25
  %v388 = vunpack.c.l.b16 %v26
  %v389 = vunpack.c.l.b16 %v27
  %v390 = vunpack.c.l.b16 %v28
  %v391 = vunpack.c.l.b16 %v29
  %v392 = vunpack.c.l.b16 %v30
  %v393 = vunpack.c.l.b16 %v31
  %v394 = vunpack.c.l.b16 %v32
  %v395 = vunpack.c.l.b16 %v33
  %v396 = vunpack.c.l.b16 %v34
  %v397 = vunpack.c.l.b16 %v35
  %v398 = vunpack.c.l.b16 %v36
  %v399 = vunpack.c.l.b16 %v37
  %v400 = vunpack.c.l.b16 %v38
  %v401 = vunpack.c.l.b16 %v39
  %v402 = vunpack.c.l.b16 %v40
  %v403 = vunpack.c.l.b16 %v41
  %v404 = vunpack.c.l.b16 %v42
  %v405 = vunpack.c.l.b16 %v43
  %v406 = vunpack.c.l.b16 %v44
  %v407 = vunpack.c.l.b16 %v45
  %v408 = vunpack.c.l.b16 %v46
  %v409 = vunpack.c.l.b16 %v47
  %v410 = vunpack.c.l.b16 %v48
  %v411 = vunpack.c.l.b16 %v49
  %v412 = vunpack.c.l.b16 %v50
  %v413 = vunpack.c.l.b16 %v51
  %v414 = vunpack.c.l.b16 %v52
  %v415 = vunpack.c.l.b16 %v53
  %v416 = vunpack.c.l.b16 %v54
  %v417 = vunpack.c.l.b16 %v55
  %v418 = vunpack.c.l.b16 %v56
  %v419 = vunpack.c.l.b16 %v57
  %v420 = vunpack.c.l.b16 %v58
  %v421 = vunpack.c.l.b16 %v59
  %v422 = vunpack.c.l.b16 %v60
  %v423 = vunpack.c.l.b16 %v61
  %v424 = vunpack.c.l.b16 %v62
  %v425 = vunpack.c.l.b16 %v63
  %v426 = vunpack.c.l.b16 %v64
  %v427 = vunpack.c.l.b16 %v65
  %v428 = vunpack.c.l.b16 %v66
  %v429 = vunpack.c.l.b16 %v67
  %v430 = vunpack.c.l.b16 %v68
  %v431 = vunpack.c.l.b16 %v69
  %v432 = vunpack.c.l.b16 %v70
  %v433 = vunpack.c.l.b16 %v71
  %v434 = vunpack.c.l.b16 %v72
  %v435 = vunpack.c.l.b16 %v73
  %v436 = vunpack.c.l.b16 %v74
  %v437 = vunpack.c.l.b16 %v75
  %v438 = vunpack.c.l.b16 %v76
  %v439 = vunpack.c.l.b16 %v77
  %v440 = vunpack.c.l.b16 %v78
  %v441 = vunpack.c.l.b16 %v79
  %v442 = vunpack.c.l.b16 %v80
  %v443 = vunpack.c.l.b16 %v81
  %v444 = vunpack.c.l.b16 %v82
  %v445 = vunpack.c.l.b16 %v83
  %v446 = vunpack.c.l.b16 %v84
  %v447 = vunpack.c.l.b16 %v85
  %v448 = vunpack.c.l.b16 %v86
  %v449 = vunpack.c.l.b16 %v87
  %v450 = vunpack.c.l.b16 %v88
  %v451 = vunpack.c.l.b16 %v89
  %v452 = vunpack.c.l.b16 %v90
  %v453 = vunpack.c.l.b16 %v91
  %v454 = vunpack.c.l.b16 %v92
  %v455 = vunpack.c.l.b16 %v93
  %v456 = vunpack.c.l.b16 %v94
  %v457 = vunpack.c.l.b16 %v95
  %v458 = vunpack.c.l.b16 %v96
  %v459 = vunpack.c.l.b16 %v97
  %v460 = vunpack.c.l.b16 %v98
  %v461 = vunpack.c.l.b16 %v99
  %v462 = vunpack.c.l.b16 %v100
  %v463 = vunpack.c.l.b16 %v101
  %v464 = vunpack.c.l.b16 %v102
  %v465 = vunpack.c.l.b16 %v103
  %v466 = vunpack.c.l.b16 %v104
  %v467 = vunpack.c.l.b16 %v105
  %v468 = vunpack.c.l.b16 %v106
  %v469 = vunpack.c.l.b16 %v107
  %v470 = vunpack.c.l.b16 %v108
  %v471 = vunpack.c.l.b16 %v109
  %v472 = vunpack.c.l.b16 %v110
  %v473 = vunpack.c.l.b16 %v111
  %v474 = vunpack.c.l.b16 %v112
  %v475 = vunpack.c.l.b16 %v113
  %v476 = vunpack.c.l.b16 %v114
  %v477 = vunpack.c.l.b16 %v115
  %v478 = vunpack.c.l.b16 %v116
  %v479 = vunpack.c.l.b16 %v117
  %v480 = vunpack.c.l.b16 %v118
  %v481 = vunpack.c.l.b16 %v119
  %v482 = vunpack.c.l.b16 %v120
  %v483 = vunpack.c.l.b16 %v121
  %v484 = vunpack.c.l.b16 %v122
  %v485 = vunpack.c.l.b16 %v123
  %v486 = vunpack.c.l.b16 %v124
  %v487 = vunpack.c.l.b16 %v125
  %v488 = vunpack.c.l.b16 %v126
  %v489 = vunpack.c.l.b16 %v127
  %v490 = vunpack.c.l.b16 %v128
  %v491 = vunpack.c.l.b16 %v129
  %v492 = vunpack.c.l.b16 %v130
  %v493 = vunpack.c.l.b16 %v131
  %v494 = vunpack.c.l.b16 %v132
  %v495 = vunpack.c.l.b16 %v133
  %v496 = vunpack.c.l.b16 %v134
  %v497 = vunpack.c.l.b16 %v135
  %v498 = vunpack.c.l.b16 %v136
  %v499 = vunpack.c.l.b16 %v137
  %v500 = vunpack.c.l.b16 %v138
  %v501 = vunpack.c.l.b16 %v139
  %v502 = vunpack.c.l.b16 %v140
  %v503 = vunpack.c.l.b16 %v141
  %v504 = vunpack.c.l.b16 %v142
  %v505 = vunpack.c.l.b16 %v143
  %v506 = vunpack.c.l.b16 %v144
  %v507 = vunpack.c.l.b16 %v145
  %v508 = vunpack.c.l.b16 %v146
  %v509 = vunpack.c.l.b16 %v147
  %v510 = vunpack.c.l.b16 %v148
  %v511 = vunpack.c.l.b16 %v149
  %v512 = vunpack.c.l.b16 %v150
  %v513 = vunpack.c.l.b16 %v151
  %v514 = vunpack.c.l.b16 %v152
  %v515 = vunpack.c.l.b16 %v153
  %v516 = vunpack.c.l.b16 %v154
  %v517 = vunpack.c.l.b16 %v155
  %v518 = vunpack.c.l.b16 %v156
  %v519 = vunpack.c.l.b16 %v157
  %v520 = vunpack.c.l.b16 %v158
  %v521 = vunpack.c.l.b16 %v159
  %v522 = vunpack.c.l.b16 %v160
  %v523 = vunpack.c.l.b16 %v161
  %v524 = vunpack.c.l.b16 %v162
  %v525 = vunpack.c.l.b16 %v163
  %v526 = vunpack.c.l.b16 %v164
  %v527 = vunpack.c.l.b16 %v165
  %v528 = vunpack.c.l.b16 %v166
  %v529 = vpack.c.b16 %v386, %v385
  %v530 = vpack.c.b16 %v388, %v387
  %v531 = vpack.c.b16 %v390, %v389
  %v532 = vpack.c.b16 %v392, %v391
  %v533 = vpack.c.b16 %v394, %v393
  %v534 = vpack.c.b16 %v396, %v395
  %v535 = vpack.c.b16 %v398, %v397
  %v536 = vpack.c.b16 %v400, %v399
  %v537 = vpack.c.b16 %v402, %v401
  %v538 = vpack.c.b16 %v404, %v403
  %v539 = vpack.c.b16 %v406, %v405
  %v540 = vpack.c.b16 %v408, %v407
  %v541 = vpack.c.b16 %v410, %v409
  %v542 = vpack.c.b16 %v412, %v411
  %v543 = vpack.c.b16 %v414, %v413
  %v544 = vpack.c.b16 %v416, %v415
  %v545 = vpack.c.b16 %v418, %v417
  %v546 = vpack.c.b16 %v420, %v419
  %v547 = vpack.c.b16 %v422, %v421
  %v548 = vpack.c.b16 %v424, %v423
  %v549 = vpack.c.b16 %v426, %v425
  %v550 = vpack.c.b16 %v428, %v427
  %v551 = vpack.c.b16 %v430, %v429
  %v552 = vpack.c.b16 %v432, %v431
  %v553 = vpack.c.b16 %v434, %v433
  %v554 = vpack.c.b16 %v436, %v435
  %v555 = vpack.c.b16 %v438, %v437
  %v556 = vpack.c.b16 %v440, %v439
  %v557 = vpack.c.b16 %v442, %v441
  %v558 = vpack.c.b16 %v444, %v443
  %v559 = vpack.c.b16 %v446, %v445
  %v560 = vpack.c.b16 %v448, %v447
  %v561 = vpack.c.b16 %v450, %v449
  %v562 = vpack.c.b16 %v452, %v451
  %v563 = vpack.c.b16 %v454, %v453
  %v564 = vpack.c.b16 %v456, %v455
  %v565 = vpack.c.b16 %v458, %v457
  %v566 = vpack.c.b16 %v460, %v459
  %v567 = vpack.c.b16 %v462, %v461
  %v568 = vpack.c.b16 %v464, %v463
  %v569 = vpack.c.b16 %v466, %v465
  %v570 = vpack.c.b16 %v468, %v467
  %v571 = vpack.c.b16 %v470, %v469
  %v572 = vpack.c.b16 %v472, %v471
  %v573 = vpack.c.b16 %v474, %v473
  %v574 = vpack.c.b16 %v476, %v475
  %v575 = vpack.c.b16 %v478, %v477
  %v576 = vpack.c.b16 %v480, %v479
  %v577 = vpack.c.b16 %v482, %v481
  %v578 = vpack.c.b16 %v484, %v483
  %v579 = vpack.c.b16 %v486, %v485
  %v580 = vpack.c.b16 %v488, %v487
  %v581 = vpack.c.b16 %v490, %v489
  %v582 = vpack.c.b16 %v492, %v491
  %v583 = vpack.c.b16 %v494, %v493
  %v584 = vpack.c.b16 %v496, %v495
  %v585 = vpack.c.b16 %v498, %v497
  %v586 = vpack.c.b16 %v500, %v499
  %v587 = vpack.c.b16 %v502, %v501
  %v588 = vpack.c.b16 %v504, %v503
  %v589 = vpack.c.b16 %v506, %v505
  %v590 = vpack.c.b16 %v508, %v507
  %v591 = vpack.c.b16 %v510, %v509
  %v592 = vpack.c.b16 %v512, %v511
  %v593 = vpack.c.b16 %v514, %v513
  %v594 = vpack.c.b16 %v516, %v515
  %v595 = vpack.c.b16 %v518, %v517
  %v596 = vpack.c.b16 %v520, %v519
  %v597 = vpack.c.b16 %v522, %v521
  %v598 = vpack.c.b16 %v524, %v523
  %v599 = vpack.c.b16 %v526, %v525
  %v600 = vpack.c.b16 %v528, %v527
  %673 = vmatprep.subr.bf16.mxu0 0
  %674 = vmatpush1.bf16.msra.mxu0 %v536
  %675 = vmatprep.subr.bf16.mxu0 0
  %676 = vmatpush1.bf16.msra.mxu0 %v535
  %677 = vmatprep.subr.bf16.mxu0 0
  %678 = vmatpush1.bf16.msra.mxu0 %v534
  %679 = vmatprep.subr.bf16.mxu0 0
  %680 = vmatpush1.bf16.msra.mxu0 %v533
  %681 = vmatprep.subr.bf16.mxu0 0
  %682 = vmatpush1.bf16.msra.mxu0 %v532
  %683 = vmatprep.subr.bf16.mxu0 0
  %684 = vmatpush1.bf16.msra.mxu0 %v531
  %685 = vmatprep.subr.bf16.mxu0 0
  %686 = vmatpush1.bf16.msra.mxu0 %v530
  %687 = vmatprep.subr.bf16.mxu0 0
  %688 = vmatpush1.bf16.msra.mxu0 %v529
  %689 = vmatprep.subr.bf16.mxu0 0
  %690 = vmatpush2.bf16.msra.mxu0 %v544
  %691 = vmatprep.subr.bf16.mxu0 0
  %692 = vmatpush2.bf16.msra.mxu0 %v543
  %693 = vmatprep.subr.bf16.mxu0 0
  %694 = vmatpush2.bf16.msra.mxu0 %v542
  %695 = vmatprep.subr.bf16.mxu0 0
  %696 = vmatpush2.bf16.msra.mxu0 %v541
  %697 = vmatprep.subr.bf16.mxu0 0
  %698 = vmatpush2.bf16.msra.mxu0 %v540
  %699 = vmatprep.subr.bf16.mxu0 0
  %700 = vmatpush2.bf16.msra.mxu0 %v539
  %701 = vmatprep.subr.bf16.mxu0 0
  %702 = vmatpush2.bf16.msra.mxu0 %v538
  %703 = vmatprep.subr.bf16.mxu0 0
  %704 = vmatpush2.bf16.msra.mxu0 %v537
  %705 = vmatprep.mubr.bf16.mxu0 %v206
  %706 = vmatmul.mubr.bf16.gmra.mxu0 %v192
  %v707 = vpop.f32.mrf.mxu0
  %v708 = vadd.f32 0.0, %v707
  %v709 = vpop.f32.mrf.mxu0
  %v710 = vpop.f32.mrf.mxu0
  %v711 = vpop.f32.mrf.mxu0
  %712 = vdwg.mxu0
  %713 = vmatprep.subr.bf16.mxu0 0
  %714 = vmatpush1.bf16.msra.mxu0 %v552
  %715 = vmatprep.subr.bf16.mxu0 0
  %716 = vmatpush1.bf16.msra.mxu0 %v551
  %717 = vmatprep.subr.bf16.mxu0 0
  %718 = vmatpush1.bf16.msra.mxu0 %v550
  %719 = vmatprep.subr.bf16.mxu0 0
  %720 = vmatpush1.bf16.msra.mxu0 %v549
  %721 = vmatprep.subr.bf16.mxu0 0
  %722 = vmatpush1.bf16.msra.mxu0 %v548
  %723 = vmatprep.subr.bf16.mxu0 0
  %724 = vmatpush1.bf16.msra.mxu0 %v547
  %725 = vmatprep.subr.bf16.mxu0 0
  %726 = vmatpush1.bf16.msra.mxu0 %v546
  %727 = vmatprep.subr.bf16.mxu0 0
  %728 = vmatpush1.bf16.msra.mxu0 %v545
  %729 = vmatprep.subr.bf16.mxu0 0
  %730 = vmatpush2.bf16.msra.mxu0 %v560
  %731 = vmatprep.subr.bf16.mxu0 0
  %732 = vmatpush2.bf16.msra.mxu0 %v559
  %733 = vmatprep.subr.bf16.mxu0 0
  %734 = vmatpush2.bf16.msra.mxu0 %v558
  %735 = vmatprep.subr.bf16.mxu0 0
  %736 = vmatpush2.bf16.msra.mxu0 %v557
  %737 = vmatprep.subr.bf16.mxu0 0
  %738 = vmatpush2.bf16.msra.mxu0 %v556
  %739 = vmatprep.subr.bf16.mxu0 0
  %740 = vmatpush2.bf16.msra.mxu0 %v555
  %741 = vmatprep.subr.bf16.mxu0 0
  %742 = vmatpush2.bf16.msra.mxu0 %v554
  %743 = vmatprep.subr.bf16.mxu0 0
  %744 = vmatpush2.bf16.msra.mxu0 %v553
  %745 = vmatprep.mubr.bf16.mxu0 %v216
  %746 = vmatmul.mubr.bf16.gmra.mxu0 %v214
  %v747 = vpop.f32.mrf.mxu0
  %v748 = vadd.f32 %v708, %v747
  %v749 = vpop.f32.mrf.mxu0
  %v750 = vpop.f32.mrf.mxu0
  %v751 = vpop.f32.mrf.mxu0
  %752 = vdwg.mxu0
  %753 = vmatprep.subr.bf16.mxu0 0
  %754 = vmatpush1.bf16.msra.mxu0 %v568
  %755 = vmatprep.subr.bf16.mxu0 0
  %756 = vmatpush1.bf16.msra.mxu0 %v567
  %757 = vmatprep.subr.bf16.mxu0 0
  %758 = vmatpush1.bf16.msra.mxu0 %v566
  %759 = vmatprep.subr.bf16.mxu0 0
  %760 = vmatpush1.bf16.msra.mxu0 %v565
  %761 = vmatprep.subr.bf16.mxu0 0
  %762 = vmatpush1.bf16.msra.mxu0 %v564
  %763 = vmatprep.subr.bf16.mxu0 0
  %764 = vmatpush1.bf16.msra.mxu0 %v563
  %765 = vmatprep.subr.bf16.mxu0 0
  %766 = vmatpush1.bf16.msra.mxu0 %v562
  %767 = vmatprep.subr.bf16.mxu0 0
  %768 = vmatpush1.bf16.msra.mxu0 %v561
  %769 = vmatprep.subr.bf16.mxu0 0
  %770 = vmatpush2.bf16.msra.mxu0 %v576
  %771 = vmatprep.subr.bf16.mxu0 0
  %772 = vmatpush2.bf16.msra.mxu0 %v575
  %773 = vmatprep.subr.bf16.mxu0 0
  %774 = vmatpush2.bf16.msra.mxu0 %v574
  %775 = vmatprep.subr.bf16.mxu0 0
  %776 = vmatpush2.bf16.msra.mxu0 %v573
  %777 = vmatprep.subr.bf16.mxu0 0
  %778 = vmatpush2.bf16.msra.mxu0 %v572
  %779 = vmatprep.subr.bf16.mxu0 0
  %780 = vmatpush2.bf16.msra.mxu0 %v571
  %781 = vmatprep.subr.bf16.mxu0 0
  %782 = vmatpush2.bf16.msra.mxu0 %v570
  %783 = vmatprep.subr.bf16.mxu0 0
  %784 = vmatpush2.bf16.msra.mxu0 %v569
  %785 = vmatprep.mubr.bf16.mxu0 %v213
  %786 = vmatmul.mubr.bf16.gmra.mxu0 %v199
  %v787 = vpop.f32.mrf.mxu0
  %v788 = vadd.f32 %v748, %v787
  %v789 = vpop.f32.mrf.mxu0
  %v790 = vpop.f32.mrf.mxu0
  %v791 = vpop.f32.mrf.mxu0
  %792 = vdwg.mxu0
  %793 = vmatprep.subr.bf16.mxu0 0
  %794 = vmatpush1.bf16.msra.mxu0 %v584
  %795 = vmatprep.subr.bf16.mxu0 0
  %796 = vmatpush1.bf16.msra.mxu0 %v583
  %797 = vmatprep.subr.bf16.mxu0 0
  %798 = vmatpush1.bf16.msra.mxu0 %v582
  %799 = vmatprep.subr.bf16.mxu0 0
  %800 = vmatpush1.bf16.msra.mxu0 %v581
  %801 = vmatprep.subr.bf16.mxu0 0
  %802 = vmatpush1.bf16.msra.mxu0 %v580
  %803 = vmatprep.subr.bf16.mxu0 0
  %804 = vmatpush1.bf16.msra.mxu0 %v579
  %805 = vmatprep.subr.bf16.mxu0 0
  %806 = vmatpush1.bf16.msra.mxu0 %v578
  %807 = vmatprep.subr.bf16.mxu0 0
  %808 = vmatpush1.bf16.msra.mxu0 %v577
  %809 = vmatprep.subr.bf16.mxu0 0
  %810 = vmatpush2.bf16.msra.mxu0 %v592
  %811 = vmatprep.subr.bf16.mxu0 0
  %812 = vmatpush2.bf16.msra.mxu0 %v591
  %813 = vmatprep.subr.bf16.mxu0 0
  %814 = vmatpush2.bf16.msra.mxu0 %v590
  %815 = vmatprep.subr.bf16.mxu0 0
  %816 = vmatpush2.bf16.msra.mxu0 %v589
  %817 = vmatprep.subr.bf16.mxu0 0
  %818 = vmatpush2.bf16.msra.mxu0 %v588
  %819 = vmatprep.subr.bf16.mxu0 0
  %820 = vmatpush2.bf16.msra.mxu0 %v587
  %821 = vmatprep.subr.bf16.mxu0 0
  %822 = vmatpush2.bf16.msra.mxu0 %v586
  %823 = vmatprep.subr.bf16.mxu0 0
  %824 = vmatpush2.bf16.msra.mxu0 %v585
  %825 = vmatprep.mubr.bf16.mxu0 %v217
  %826 = vmatmul.mubr.bf16.gmra.mxu0 %v215
  %v827 = vpop.f32.mrf.mxu0
  %v828 = vadd.f32 %v788, %v827
  %v829 = vpop.f32.mrf.mxu0
  %v830 = vpop.f32.mrf.mxu0
  %v831 = vpop.f32.mrf.mxu0
  %832 = vdwg.mxu0
  %833 = vmatprep.subr.bf16.mxu0 0
  %834 = vmatpush1.bf16.msra.mxu0 %v600
  %835 = vmatprep.subr.bf16.mxu0 0
  %836 = vmatpush1.bf16.msra.mxu0 %v599
  %837 = vmatprep.subr.bf16.mxu0 0
  %838 = vmatpush1.bf16.msra.mxu0 %v598
  %839 = vmatprep.subr.bf16.mxu0 0
  %840 = vmatpush1.bf16.msra.mxu0 %v597
  %841 = vmatprep.subr.bf16.mxu0 0
  %842 = vmatpush1.bf16.msra.mxu0 %v596
  %843 = vmatprep.subr.bf16.mxu0 0
  %844 = vmatpush1.bf16.msra.mxu0 %v595
  %845 = vmatprep.subr.bf16.mxu0 0
  %846 = vmatpush1.bf16.msra.mxu0 %v594
  %847 = vmatprep.subr.bf16.mxu0 0
  %848 = vmatpush1.bf16.msra.mxu0 %v593
  %849 = vmatprep.subr.bf16.mxu0 0
  %850 = vmatpush2.bf16.msra.mxu0 0
  %851 = vmatprep.subr.bf16.mxu0 0
  %852 = vmatpush2.bf16.msra.mxu0 0
  %853 = vmatprep.subr.bf16.mxu0 0
  %854 = vmatpush2.bf16.msra.mxu0 0
  %855 = vmatprep.subr.bf16.mxu0 0
  %856 = vmatpush2.bf16.msra.mxu0 0
  %857 = vmatprep.subr.bf16.mxu0 0
  %858 = vmatpush2.bf16.msra.mxu0 0
  %859 = vmatprep.subr.bf16.mxu0 0
  %860 = vmatpush2.bf16.msra.mxu0 0
  %861 = vmatprep.subr.bf16.mxu0 0
  %862 = vmatpush2.bf16.msra.mxu0 0
  %863 = vmatprep.subr.bf16.mxu0 0
  %864 = vmatpush2.bf16.msra.mxu0 0
  %865 = vmatprep.mubr.bf16.mxu0 0
  %866 = vmatmul.mubr.bf16.gmra.mxu0 %v231
  %v867 = vpop.f32.mrf.mxu0
  %v868 = vadd.f32 %v828, %v867
  %v869 = vpop.f32.mrf.mxu0
  %v870 = vpop.f32.mrf.mxu0
  %v871 = vpop.f32.mrf.mxu0
  %872 = vdwg.mxu0
  %v873 = vadd.f32 %v20, %v868
  %874 = vst [vmem:[#allocation2] sm:$0x3] %v873
  // Predicated region
  $region14: #{_lambda_.42} parent=0 // pred_check
    %p875 = pneg %p15
  $region15: #{_lambda_.42} parent=0 // pred_check_branch
    %877 = sbr.rel (%p875) target = $region17
  $region16: #{_lambda_.42} parent=0 // pred_region
    %v878 = vld [vmem:[#allocation2] sm:$0x3]
    %v879 = vpack.c.bf16 %v878, %v878
    %880 = vst [vmem:[%s2] sm:$0x1] %v879
    %v881 = vlaneseq
    %v882 = vshrl.u32 %v881, 7
    %vm883 = vcmp.eq.s32.totalorder %v882, 0
    %vm884 = vcmask 1041408
    %v885 = vsel %vm884, %v878, 0.0
    %v886 = vrot.slane %v885, 4
    %v887 = vadd.f32 %v885, %v886
    %v888 = vrot.slane %v887, 2
    %v889 = vadd.f32 %v887, %v888
    %v890 = vrot.slane %v889, 1
    %v891 = vadd.f32 %v889, %v890
    %v892 = vmul.f32 %v878, %v878
    %v893 = vsel %vm884, %v892, 0.0
    %v894 = vrot.slane %v893, 4
    %v895 = vadd.f32 %v893, %v894
    %v896 = vrot.slane %v895, 2
    %v897 = vadd.f32 %v895, %v896
    %v898 = vrot.slane %v897, 1
    %v899 = vadd.f32 %v897, %v898
    %v900 = vsel %vm883, %v891, 0.0
    %901 = vst [vmem:[%s3] sm:$0xff] %v900
    %v902 = vsel %vm883, %v899, 0.0
    %903 = vst [vmem:[%s4] sm:$0xff] %v902
  $region17: #{_lambda_.42} parent=0 // pred_fallthru
    _
  // Predicated region
  $region18: #{_lambda_.42} parent=0 // pred_check
    _
  $region19: #{_lambda_.42} parent=0 // pred_check_branch
    %905 = sbr.rel (0) target = $region21
  $region20: #{_lambda_.42} parent=0 // pred_region
    _
  $region21: #{_lambda_.42} parent=0 // pred_fallthru
    _
  // Predicated region
  $region22: #{_lambda_.42} parent=0 // pred_check
    _
  $region23: #{_lambda_.42} parent=0 // pred_check_branch
    %907 = sbr.rel (0) target = $region25
  $region24: #{_lambda_.42} parent=0 // pred_region
    _
  $region25: #{_lambda_.42} parent=0 // pred_fallthru
    _
  // Predicated region
  $region26: #{_lambda_.42} parent=0 // pred_check
    _
  $region27: #{_lambda_.42} parent=0 // pred_check_branch
    %909 = sbr.rel (0) target = $region29
  $region28: #{_lambda_.42} parent=0 // pred_region
    _
  $region29: #{_lambda_.42} parent=0 // pred_fallthru
    _
  // Predicated region
  $region30: #{_lambda_.42} parent=0 // pred_check
    _
  $region31: #{_lambda_.42} parent=0 // pred_check_branch
    %911 = sbr.rel (0) target = $region33
  $region32: #{_lambda_.42} parent=0 // pred_region
    _
  $region33: #{_lambda_.42} parent=0 // pred_fallthru
    _
  // Predicated region
  $region34: #{_lambda_.42} parent=0 // pred_check
    _
  $region35: #{_lambda_.42} parent=0 // pred_check_branch
    %913 = sbr.rel (0) target = $region37
  $region36: #{_lambda_.42} parent=0 // pred_region
    _
  $region37: #{_lambda_.42} parent=0 // pred_fallthru
    _
  // Predicated region
  $region38: #{_lambda_.42} parent=0 // pred_check
    _
  $region39: #{_lambda_.42} parent=0 // pred_check_branch
    %915 = sbr.rel (0) target = $region41
  $region40: #{_lambda_.42} parent=0 // pred_region
    _
  $region41: #{_lambda_.42} parent=0 // pred_fallthru
    _

// kernel: _lambda_.45
$region0: #{_lambda_.45}
  #allocation0 [shape = 'u32[]', space=smem, size = 0x4, offset = 0x4, fixed_abs, tag = 'smem constant byte address 0x4 - core index']
  #allocation1 [shape = 'u32[144,128]{1,0:T(1,128)}', space=vmem, size = 0x12000, scoped, tag = 'internal scratch']
  #allocation2 [shape = 'f32[2,10]{1,0:T(2,128)}', space=vmem, size = 0x400, scoped, tag = 'scratch operand']
  %s0 = inlined_call_operand.vmem [shape: bf16[2,128], index: 0, kind: input, shape index: {}]
  %s1 = inlined_call_operand.vmem [shape: bf16[128,10], index: 1, kind: input, shape index: {}]
  %s2 = inlined_call_operand.vmem [shape: f32[1,10], index: 2, kind: input, shape index: {}]
  %s3 = inlined_call_operand.hbm [shape: f32[2,10], index: 3, kind: output, shape index: {}]
  %s4 = sld [smem:[#allocation0]]
  $region30: #{_lambda_.45} parent=0
    _
  %s6 = ssub.s32 1, %s4
  %s7 = scalar_select 0, %s6, %s4
  $region1: #{_lambda_.45} parent=0
    #allocation3 [shape = 'u8[1024]{0}', space=vmem, size = 0x400, scoped, tag = 'output window, operand 0, single buffered']
    #allocation4 [shape = 's32[1]{0}', space=sflag, size = 0x4, scoped, tag = 'scoped memory for _lambda_.45']
    %8 = vsyncpa [#allocation4], 0
    // Predicated region
    $region2: #{_lambda_.45} parent=1 // pred_check
      _
    $region3: #{_lambda_.45} parent=1 // pred_check_branch
      %10 = sbr.rel (0) target = $region5
    $region4: #{_lambda_.45} parent=1 // pred_region
      _
    $region5: #{_lambda_.45} parent=1 // pred_fallthru
      _
    // Predicated region
    $region6: #{_lambda_.45} parent=1 // pred_check
      _
    $region7: #{_lambda_.45} parent=1 // pred_check_branch
      %12 = sbr.rel (0) target = $region9
    $region8: #{_lambda_.45} parent=1 // pred_region
      _
    $region9: #{_lambda_.45} parent=1 // pred_fallthru
      _
    // Predicated region
    $region10: #{_lambda_.45} parent=1 // pred_check
      _
    $region11: #{_lambda_.45} parent=1 // pred_check_branch
      %14 = sbr.rel (0) target = $region13
    $region12: #{_lambda_.45} parent=1 // pred_region
      _
    $region13: #{_lambda_.45} parent=1 // pred_fallthru
      _
    %p16 = scmp.eq.s32.totalorder 0, 0
    // Predicated region
    $region14: #{_lambda_.45} parent=1 // pred_check
      %p17 = pneg %p16
    $region15: #{_lambda_.45} parent=1 // pred_check_branch
      %19 = sbr.rel (%p17) target = $region17
    $region16: #{_lambda_.45} parent=1 // pred_region
      %vm20 = vcmask 74752
      %21 = vst.msk [vmem:[#allocation2] sm:$0x3] %vm20, 0.0
    $region17: #{_lambda_.45} parent=1 // pred_fallthru
      _
    %v22 = vld [vmem:[#allocation2] sm:$0x3]
    %v23 = vld [vmem:[%s0] sm:$0x1]
    %v24 = vld [vmem:[%s1] sm:$0xf]
    %v25 = vld [vmem:[%s1 + $0x4] sm:$0xf]
    %v26 = vld [vmem:[%s1 + $0x8] sm:$0xf]
    %v27 = vld [vmem:[%s1 + $0xc] sm:$0xf]
    %v28 = vld [vmem:[%s1 + $0x10] sm:$0xf]
    %v29 = vld [vmem:[%s1 + $0x14] sm:$0xf]
    %v30 = vld [vmem:[%s1 + $0x18] sm:$0xf]
    %v31 = vld [vmem:[%s1 + $0x1c] sm:$0xf]
    %v32 = vld [vmem:[%s1 + $0x20] sm:$0xf]
    %v33 = vld [vmem:[%s1 + $0x24] sm:$0xf]
    %v34 = vld [vmem:[%s1 + $0x28] sm:$0xf]
    %v35 = vld [vmem:[%s1 + $0x2c] sm:$0xf]
    %v36 = vld [vmem:[%s1 + $0x30] sm:$0xf]
    %v37 = vld [vmem:[%s1 + $0x34] sm:$0xf]
    %v38 = vld [vmem:[%s1 + $0x38] sm:$0xf]
    %v39 = vld [vmem:[%s1 + $0x3c] sm:$0xf]
    %v56 = vunpack.c.l.b16 %v24
    %v57 = vunpack.c.l.b16 %v25
    %v58 = vunpack.c.l.b16 %v26
    %v59 = vunpack.c.l.b16 %v27
    %v60 = vunpack.c.l.b16 %v28
    %v61 = vunpack.c.l.b16 %v29
    %v62 = vunpack.c.l.b16 %v30
    %v63 = vunpack.c.l.b16 %v31
    %v64 = vunpack.c.l.b16 %v32
    %v65 = vunpack.c.l.b16 %v33
    %v66 = vunpack.c.l.b16 %v34
    %v67 = vunpack.c.l.b16 %v35
    %v68 = vunpack.c.l.b16 %v36
    %v69 = vunpack.c.l.b16 %v37
    %v70 = vunpack.c.l.b16 %v38
    %v71 = vunpack.c.l.b16 %v39
    %v72 = vpack.c.b16 %v57, %v56
    %v73 = vpack.c.b16 %v59, %v58
    %v74 = vpack.c.b16 %v61, %v60
    %v75 = vpack.c.b16 %v63, %v62
    %v76 = vpack.c.b16 %v65, %v64
    %v77 = vpack.c.b16 %v67, %v66
    %v78 = vpack.c.b16 %v69, %v68
    %v79 = vpack.c.b16 %v71, %v70
    %88 = vmatprep.subr.bf16.mxu0 0
    %89 = vmatpush1.bf16.msra.mxu0 %v79
    %90 = vmatprep.subr.bf16.mxu0 0
    %91 = vmatpush1.bf16.msra.mxu0 %v78
    %92 = vmatprep.subr.bf16.mxu0 0
    %93 = vmatpush1.bf16.msra.mxu0 %v77
    %94 = vmatprep.subr.bf16.mxu0 0
    %95 = vmatpush1.bf16.msra.mxu0 %v76
    %96 = vmatprep.subr.bf16.mxu0 0
    %97 = vmatpush1.bf16.msra.mxu0 %v75
    %98 = vmatprep.subr.bf16.mxu0 0
    %99 = vmatpush1.bf16.msra.mxu0 %v74
    %100 = vmatprep.subr.bf16.mxu0 0
    %101 = vmatpush1.bf16.msra.mxu0 %v73
    %102 = vmatprep.subr.bf16.mxu0 0
    %103 = vmatpush1.bf16.msra.mxu0 %v72
    %104 = vmatprep.subr.bf16.mxu0 0
    %105 = vmatpush2.bf16.msra.mxu0 0
    %106 = vmatprep.subr.bf16.mxu0 0
    %107 = vmatpush2.bf16.msra.mxu0 0
    %108 = vmatprep.subr.bf16.mxu0 0
    %109 = vmatpush2.bf16.msra.mxu0 0
    %110 = vmatprep.subr.bf16.mxu0 0
    %111 = vmatpush2.bf16.msra.mxu0 0
    %112 = vmatprep.subr.bf16.mxu0 0
    %113 = vmatpush2.bf16.msra.mxu0 0
    %114 = vmatprep.subr.bf16.mxu0 0
    %115 = vmatpush2.bf16.msra.mxu0 0
    %116 = vmatprep.subr.bf16.mxu0 0
    %117 = vmatpush2.bf16.msra.mxu0 0
    %118 = vmatprep.subr.bf16.mxu0 0
    %119 = vmatpush2.bf16.msra.mxu0 0
    %120 = vmatprep.mubr.bf16.mxu0 0
    %121 = vmatmul.mubr.bf16.gmra.mxu0 %v23
    %v122 = vpop.f32.mrf.mxu0
    %v123 = vadd.f32 0.0, %v122
    %v124 = vpop.f32.mrf.mxu0
    %v125 = vpop.f32.mrf.mxu0
    %v126 = vpop.f32.mrf.mxu0
    %127 = vdwg.mxu0
    %v128 = vadd.f32 %v22, %v123
    %vm129 = vcmask 74752
    %130 = vst.msk [vmem:[#allocation2] sm:$0x3] %vm129, %v128
    // Predicated region
    $region18: #{_lambda_.45} parent=1 // pred_check
      %p131 = pneg %p16
    $region19: #{_lambda_.45} parent=1 // pred_check_branch
      %133 = sbr.rel (%p131) target = $region21
    $region20: #{_lambda_.45} parent=1 // pred_region
      %v134 = vld [vmem:[#allocation2] sm:$0x3]
      %v135 = vld [vmem:[%s2] sm:$0x1]
      %v137 = vlaneseq
      %v138 = vshrl.u32 %v137, 7
      %v139 = vsub.s32 0, %v138
      %v140 = vrot.slane %v135, %v139
      %v142 = vadd.f32 %v134, %v140
      %143 = vst.msk [vmem:[#allocation3] sm:$0x3] %vm129, %v142
    $region21: #{_lambda_.45} parent=1 // pred_fallthru
      _
    // Predicated region
    $region22: #{_lambda_.45} parent=1 // pred_check
      _
    $region23: #{_lambda_.45} parent=1 // pred_check_branch
      %145 = sbr.rel (0) target = $region25
    $region24: #{_lambda_.45} parent=1 // pred_region
      %s147 = ssub.s32 32, 32
      %148 = vsyncadd [#allocation4], %s147
      %s150 = sshll.u32 [#allocation3], 4
      %s151 = int_to_ptr.vmem [resolvable:$true] %s150
      %153 = dma.vmem_to_hbm [thread:$0]  %s151, 32, %s3, [#allocation4]
    $region25: #{_lambda_.45} parent=1 // pred_fallthru
      _
    // Predicated region
    $region26: #{_lambda_.45} parent=1 // pred_check
      _
    $region27: #{_lambda_.45} parent=1 // pred_check_branch
      %155 = sbr.rel (0) target = $region29
    $region28: #{_lambda_.45} parent=1 // pred_region
      %156 = dma.done [#allocation4], 32
    $region29: #{_lambda_.45} parent=1 // pred_fallthru
      _
    %157 = vsyncpa [#allocation4], 1

</llo_original>
